<compile_context>
chip_gen: v6e
topology: v6e:2x2x1
jax: 0.10.0
libtpu: 0.0.40
codegen_flags: <defaults>
</compile_context>

<pallas_src>
import jax
import jax.numpy as jnp
from jax.experimental import pallas as pl
from jax.experimental.pallas import tpu as pltpu


NUM_CHANNELS = 5
C1 = C2 = C3 = 30        # conv output channels
FC1_OUT = 50
FC2_OUT = 2
TB = 8                   # batch elements per grid step (multiple of 8)


# ----------------------------------------------------------------------------
# Fused kernel: conv1 -> conv2 -> conv3 -> flatten -> fc1 -> fc2 (one grid step
# = TB batch elements; everything stays in VMEM/vregs).
# ----------------------------------------------------------------------------
def _cnn_fused_kernel(x_ref, w1_ref, b1_ref, w2_ref, b2_ref, w3_ref, b3_ref,
                      fw1_ref, fb1_ref, fw2_ref, fb2_ref, o_ref, feat_ref):
    """Shapes (S = h3*w3 = 66 conv3 output pixels):
       x_ref   : (4*S*TB, 80)  packed input; row = (j3*S + s)*TB + n_local,
                 lane = j2*20 + (kh1*2 + kw1)*Cin + cin,
                 with j2 = 2*kh2+kw2, j3 = 2*kh3+kw3, s = oh3*w3 + ow3.
       w1_ref  : (80, 120)   conv1 weight, block-diagonal over j2 (4 x (20,30))
       b1_ref  : (1, 120)    conv1 bias tiled over j2
       w2_ref  : (120, 30)   conv2 weight stacked over j2, (in, out)
       b2_ref  : (1, 30)
       w3_ref  : (4, 30, 30) conv3 weight per j3 offset, (in, out)
       b3_ref  : (1, 30)
       fw1_ref : (S*30, 50)  fc1 weight pre-permuted to (s*30 + c) feature order
       fb1_ref : (1, 50)
       fw2_ref : (50, 2)
       fb2_ref : (1, 2)
       o_ref   : (TB, 2)
       feat_ref: (TB, S*30)  VMEM scratch holding the flattened conv3 output
    """
    tb = o_ref.shape[0]
    rows = x_ref.shape[0]
    m = rows // 4                       # S*TB rows per j3 offset

    # conv1 + ReLU: all 16 window offsets in ONE matmul (j2 packed in lanes,
    # j3 packed in row blocks).
    a1 = jnp.dot(x_ref[...], w1_ref[...], preferred_element_type=jnp.float32)
    a1 = jnp.maximum(a1 + b1_ref[...], 0.0)                    # (4*S*TB, 120)

    # conv2 + ReLU: the sum over the 4 (kh2,kw2) offsets is ONE K=120 matmul.
    a2 = jnp.dot(a1, w2_ref[...], preferred_element_type=jnp.float32)
    a2 = jnp.maximum(a2 + b2_ref[...], 0.0)                    # (4*S*TB, 30)

    # conv3 + ReLU: sum over the 4 (kh3,kw3) offsets = 4 accumulating matmuls
    # over the 8-aligned row blocks of a2.
    acc3 = jnp.dot(a2[0:m], w3_ref[0], preferred_element_type=jnp.float32)
    for j3 in range(1, 4):
        acc3 = acc3 + jnp.dot(a2[j3 * m:(j3 + 1) * m], w3_ref[j3],
                              preferred_element_type=jnp.float32)
    a3 = jnp.maximum(acc3 + b3_ref[...], 0.0)                  # (S*TB, 30)

    # torch.nn.Flatten: feat[n, s*30 + c] = a3[s*TB + n, c].
    # 66 static stores (8-row-aligned source slices) into a lane-dense VMEM
    # scratch; fc1's weight was pre-permuted once to this feature order.
    n_s = m // tb
    c3 = a3.shape[1]
    for s in range(n_s):
        feat_ref[:, s * c3:(s + 1) * c3] = a3[s * tb:(s + 1) * tb, :]

    # fc1 + ReLU + Dropout(eval = identity) + fc2.
    h = jnp.dot(feat_ref[...], fw1_ref[...], preferred_element_type=jnp.float32)
    h = jnp.maximum(h + fb1_ref[...], 0.0)
    # TODO(synk): training-mode Dropout(0.5) (stateful PRNG mask) not
    # implemented; eval/inference mode == identity, matching model.eval().
    o = jnp.dot(h, fw2_ref[...], preferred_element_type=jnp.float32) + fb2_ref[...]
    o_ref[...] = o.astype(o_ref.dtype)


# ----------------------------------------------------------------------------
# Glue: one-time packing of the (small) network input into parity rows/lanes.
# ----------------------------------------------------------------------------
def _pack_input(x_nchw, nb):
    """NCHW (nb*TB, C, H, W) -> (nb*4*S*TB, 80) parity-packed rows."""
    _, C, H, W = x_nchw.shape
    h3, w3 = H // 8, W // 8
    x = jnp.transpose(x_nchw, (0, 2, 3, 1))                    # NHWC
    x = x.reshape(nb, TB, h3, 2, 2, 2, w3, 2, 2, 2, C)
    # axes: b, nl, oh3, kh3, kh2, kh1, ow3, kw3, kw2, kw1, c
    x = jnp.transpose(x, (0, 3, 7, 2, 6, 1, 4, 8, 5, 9, 10))
    # axes: b, kh3, kw3, oh3, ow3, nl, kh2, kw2, kh1, kw1, c
    return x.reshape(nb * 4 * h3 * w3 * TB, 4 * 4 * C)


# ----------------------------------------------------------------------------
# Forward pass (input is NCHW like PyTorch)
# ----------------------------------------------------------------------------
@jax.jit
def cnn_forward(x_nchw, kp):
    """kp: kernel-layout params from prepare_params() (converted once)."""
    N, _, H, W = x_nchw.shape
    assert H % 8 == 0 and W % 8 == 0, "three stride-2 2x2 convs need H,W % 8 == 0"
    h3, w3 = H // 8, W // 8
    S = h3 * w3
    assert S * C3 == kp["fc1_w"].shape[0], \
        "fc1 weight was permuted for a different spatial size"

    nb = -(-N // TB)                       # ceil(N / TB) batch blocks
    n_pad = nb * TB - N
    if n_pad:
        x_nchw = jnp.pad(x_nchw, ((0, n_pad), (0, 0), (0, 0), (0, 0)))
    xs = _pack_input(x_nchw, nb)
    rows_blk = 4 * S * TB

    out = pl.pallas_call(
        _cnn_fused_kernel,
        out_shape=jax.ShapeDtypeStruct((nb * TB, FC2_OUT), jnp.float32),
        grid=(nb,),
        in_specs=[
            pl.BlockSpec((rows_blk, 16 * NUM_CHANNELS), lambda b: (b, 0)),
            pl.BlockSpec((16 * NUM_CHANNELS, 4 * C1), lambda b: (0, 0)),
            pl.BlockSpec((1, 4 * C1), lambda b: (0, 0)),
            pl.BlockSpec((4 * C1, C2), lambda b: (0, 0)),
            pl.BlockSpec((1, C2), lambda b: (0, 0)),
            pl.BlockSpec((4, C2, C3), lambda b: (0, 0, 0)),
            pl.BlockSpec((1, C3), lambda b: (0, 0)),
            pl.BlockSpec((S * C3, FC1_OUT), lambda b: (0, 0)),
            pl.BlockSpec((1, FC1_OUT), lambda b: (0, 0)),
            pl.BlockSpec((FC1_OUT, FC2_OUT), lambda b: (0, 0)),
            pl.BlockSpec((1, FC2_OUT), lambda b: (0, 0)),
        ],
        out_specs=pl.BlockSpec((TB, FC2_OUT), lambda b: (b, 0)),
        scratch_shapes=[pltpu.VMEM((TB, S * C3), jnp.float32)],
        compiler_params=pltpu.CompilerParams(
            dimension_semantics=("parallel",)),
    )(xs, kp["w1bd"], kp["b1t"], kp["w2s"], kp["b2"], kp["w3"], kp["b3"],
      kp["fc1_w"], kp["fc1_b"], kp["fc2_w"], kp["fc2_b"])
    return out[:N]


# ----------------------------------------------------------------------------
# Parameter init (PyTorch layout) + one-time layout conversion for the kernel
# ----------------------------------------------------------------------------
def _xavier_normal(key, shape, fan_in, fan_out):
    std = (2.0 / (fan_in + fan_out)) ** 0.5
    return std * jax.random.normal(key, shape, dtype=jnp.float32)


def init_params(key):
    """Parameters in the PyTorch module's native layout."""
    ks = jax.random.split(key, 10)
    p = {}
    p["w1"] = _xavier_normal(ks[0], (C1, NUM_CHANNELS, 2, 2),
                             NUM_CHANNELS * 4, C1 * 4)
    p["b1"] = 0.01 * jax.random.normal(ks[1], (C1,), dtype=jnp.float32)
    p["w2"] = _xavier_normal(ks[2], (C2, C1, 2, 2), C1 * 4, C2 * 4)
    p["b2"] = 0.01 * jax.random.normal(ks[3], (C2,), dtype=jnp.float32)
    p["w3"] = _xavier_normal(ks[4], (C3, C2, 2, 2), C2 * 4, C3 * 4)
    p["b3"] = 0.01 * jax.random.normal(ks[5], (C3,), dtype=jnp.float32)
    p["fc1_w"] = _xavier_normal(ks[6], (FC1_OUT, 1980), 1980, FC1_OUT)
    p["fc1_b"] = 0.01 * jax.random.normal(ks[7], (FC1_OUT,), dtype=jnp.float32)
    p["fc2_w"] = _xavier_normal(ks[8], (FC2_OUT, FC1_OUT), FC1_OUT, FC2_OUT)
    p["fc2_b"] = 0.01 * jax.random.normal(ks[9], (FC2_OUT,), dtype=jnp.float32)
    return p


def prepare_params(p, spatial=(6, 11)):
    """One-time conversion to the kernel-friendly packed layout (no per-call
    transposes inside the jitted forward)."""
    h3, w3 = spatial
    s = h3 * w3
    q = {}
    # conv1: (Cout,Cin,kh,kw) -> (kh1,kw1,cin)x(cout) matrix, block-diag over j2.
    w1m = jnp.transpose(p["w1"], (2, 3, 1, 0)).reshape(4 * NUM_CHANNELS, C1)
    q["w1bd"] = jnp.kron(jnp.eye(4, dtype=w1m.dtype), w1m)       # (80, 120)
    q["b1t"] = jnp.tile(p["b1"], 4).reshape(1, 4 * C1)           # (1, 120)
    # conv2: stacked over j2 -> (120, 30), rows ordered (j2, c1).
    q["w2s"] = jnp.transpose(p["w2"], (2, 3, 1, 0)).reshape(4 * C1, C2)
    q["b2"] = p["b2"].reshape(1, C2)
    # conv3: per-j3 (Cin, Cout) matrices.
    q["w3"] = jnp.transpose(p["w3"], (2, 3, 1, 0)).reshape(4, C2, C3)
    q["b3"] = p["b3"].reshape(1, C3)
    # fc1: permute input features from torch's (c*S + s) order to the kernel's
    # (s*C3 + c) order, stored as (in, out).
    q["fc1_w"] = jnp.transpose(p["fc1_w"].reshape(FC1_OUT, C3, s),
                               (2, 1, 0)).reshape(s * C3, FC1_OUT)
    q["fc1_b"] = p["fc1_b"].reshape(1, FC1_OUT)
    q["fc2_w"] = p["fc2_w"].T                                    # (50, 2)
    q["fc2_b"] = p["fc2_b"].reshape(1, FC2_OUT)
    return q


# ----------------------------------------------------------------------------
# Pure-JAX reference (PyTorch layout) for a correctness self-check
# ----------------------------------------------------------------------------
def reference_forward(x_nchw, p):
    dn = ("NCHW", "OIHW", "NCHW")
    y = x_nchw
    for w, b in ((p["w1"], p["b1"]), (p["w2"], p["b2"]), (p["w3"], p["b3"])):
        y = jax.lax.conv_general_dilated(
            y, w, window_strides=(2, 2), padding="VALID",
            dimension_numbers=dn, precision=jax.lax.Precision.HIGHEST)
        y = jnp.maximum(y + b.reshape(1, -1, 1, 1), 0.0)
    y = y.reshape(y.shape[0], -1)                   # torch.nn.Flatten (NCHW)
    y = jnp.maximum(
        jnp.dot(y, p["fc1_w"].T, precision=jax.lax.Precision.HIGHEST)
        + p["fc1_b"], 0.0)
    y = jnp.dot(y, p["fc2_w"].T, precision=jax.lax.Precision.HIGHEST) + p["fc2_b"]
    return y


if __name__ == "__main__":
    key = jax.random.PRNGKey(0)
    k_in, k_par = jax.random.split(key)
    # MJO input: 5 channels, 48 x 88 so that 30 * 6 * 11 = 1980 matches fc1.
    x = jax.random.normal(k_in, (2, NUM_CHANNELS, 48, 88), dtype=jnp.float32)
    params = init_params(k_par)
    kparams = prepare_params(params)            # one-time layout conversion

    out = cnn_forward(x, kparams)
    jax.block_until_ready(out)
    assert out.shape == (2, FC2_OUT) and out.dtype == jnp.float32

    ref = reference_forward(x, params)
    max_err = float(jnp.max(jnp.abs(out - ref)))
    assert jnp.allclose(out, ref, rtol=1e-2, atol=1e-2), (
        f"mismatch vs reference: max abs err = {max_err}")
    print("KERNEL_OK")
</pallas_src>

<mosaic_0001>
module attributes {stable_mosaic.version = 11 : i64} {
  func.func @_cnn_fused_kernel(%arg0: i32, %arg1: memref<2112x80xf32, #tpu.memory_space<vmem>>, %arg2: memref<80x120xf32, #tpu.memory_space<vmem>>, %arg3: memref<1x120xf32, #tpu.memory_space<vmem>>, %arg4: memref<120x30xf32, #tpu.memory_space<vmem>>, %arg5: memref<1x30xf32, #tpu.memory_space<vmem>>, %arg6: memref<4x30x30xf32, #tpu.memory_space<vmem>>, %arg7: memref<1x30xf32, #tpu.memory_space<vmem>>, %arg8: memref<1980x50xf32, #tpu.memory_space<vmem>>, %arg9: memref<1x50xf32, #tpu.memory_space<vmem>>, %arg10: memref<50x2xf32, #tpu.memory_space<vmem>>, %arg11: memref<1x2xf32, #tpu.memory_space<vmem>>, %arg12: memref<8x2xf32, #tpu.memory_space<vmem>>, %arg13: memref<8x1980xf32, #tpu.memory_space<vmem>>) attributes {dimension_semantics = [#tpu.dimension_semantics<parallel>], iteration_bounds = array<i64: 1>, scalar_prefetch = 0 : i64, scratch_operands = 1 : i64, tpu.core_type = #tpu.core_type<tc>, window_params = [{transform_indices = @transform_0, window_bounds = array<i64: 2112, 80>}, {pipeline_mode = #tpu.pipeline_mode<synchronous>, transform_indices = @transform_1, window_bounds = array<i64: 80, 120>}, {pipeline_mode = #tpu.pipeline_mode<synchronous>, transform_indices = @transform_2, window_bounds = array<i64: 1, 120>}, {pipeline_mode = #tpu.pipeline_mode<synchronous>, transform_indices = @transform_3, window_bounds = array<i64: 120, 30>}, {pipeline_mode = #tpu.pipeline_mode<synchronous>, transform_indices = @transform_4, window_bounds = array<i64: 1, 30>}, {pipeline_mode = #tpu.pipeline_mode<synchronous>, transform_indices = @transform_5, window_bounds = array<i64: 4, 30, 30>}, {pipeline_mode = #tpu.pipeline_mode<synchronous>, transform_indices = @transform_6, window_bounds = array<i64: 1, 30>}, {pipeline_mode = #tpu.pipeline_mode<synchronous>, transform_indices = @transform_7, window_bounds = array<i64: 1980, 50>}, {pipeline_mode = #tpu.pipeline_mode<synchronous>, transform_indices = @transform_8, window_bounds = array<i64: 1, 50>}, {pipeline_mode = #tpu.pipeline_mode<synchronous>, transform_indices = @transform_9, window_bounds = array<i64: 50, 2>}, {pipeline_mode = #tpu.pipeline_mode<synchronous>, transform_indices = @transform_10, window_bounds = array<i64: 1, 2>}, {transform_indices = @transform_11, window_bounds = array<i64: 8, 2>}]} {
    %c0 = arith.constant 0 : index
    %c0_0 = arith.constant 0 : index
    %0 = vector.load %arg1[%c0, %c0_0] : memref<2112x80xf32, #tpu.memory_space<vmem>>, vector<2112x80xf32>
    %c0_1 = arith.constant 0 : index
    %c0_2 = arith.constant 0 : index
    %1 = vector.load %arg2[%c0_1, %c0_2] : memref<80x120xf32, #tpu.memory_space<vmem>>, vector<80x120xf32>
    %cst = arith.constant dense<0.000000e+00> : vector<2112x120xf32>
    %2 = tpu.matmul %0, %1, %cst {dimension_numbers = #tpu.dot_dimension_numbers<[1], [0], [0], [1], [0, 0, 1, 1], [], []>} : vector<2112x80xf32>, vector<80x120xf32>, vector<2112x120xf32> -> vector<2112x120xf32>
    %c0_3 = arith.constant 0 : index
    %c0_4 = arith.constant 0 : index
    %3 = vector.load %arg3[%c0_3, %c0_4] : memref<1x120xf32, #tpu.memory_space<vmem>>, vector<1x120xf32>
    %4 = vector.broadcast %3 : vector<1x120xf32> to vector<2112x120xf32>
    %5 = arith.addf %2, %4 : vector<2112x120xf32>
    %cst_5 = arith.constant 0.000000e+00 : f32
    %6 = vector.broadcast %cst_5 : f32 to vector<2112x120xf32>
    %7 = arith.maximumf %5, %6 : vector<2112x120xf32>
    %c0_6 = arith.constant 0 : index
    %c0_7 = arith.constant 0 : index
    %8 = vector.load %arg4[%c0_6, %c0_7] : memref<120x30xf32, #tpu.memory_space<vmem>>, vector<120x30xf32>
    %cst_8 = arith.constant dense<0.000000e+00> : vector<2112x30xf32>
    %9 = tpu.matmul %7, %8, %cst_8 {dimension_numbers = #tpu.dot_dimension_numbers<[1], [0], [0], [1], [0, 0, 1, 1], [], []>} : vector<2112x120xf32>, vector<120x30xf32>, vector<2112x30xf32> -> vector<2112x30xf32>
    %c0_9 = arith.constant 0 : index
    %c0_10 = arith.constant 0 : index
    %10 = vector.load %arg5[%c0_9, %c0_10] : memref<1x30xf32, #tpu.memory_space<vmem>>, vector<1x30xf32>
    %11 = vector.broadcast %10 : vector<1x30xf32> to vector<2112x30xf32>
    %12 = arith.addf %9, %11 : vector<2112x30xf32>
    %cst_11 = arith.constant 0.000000e+00 : f32
    %13 = vector.broadcast %cst_11 : f32 to vector<2112x30xf32>
    %14 = arith.maximumf %12, %13 : vector<2112x30xf32>
    %15 = vector.extract_strided_slice %14 {offsets = [0, 0], sizes = [528, 30], strides = [1, 1]} : vector<2112x30xf32> to vector<528x30xf32>
    %c0_12 = arith.constant 0 : index
    %c0_13 = arith.constant 0 : index
    %c0_14 = arith.constant 0 : index
    %16 = vector.load %arg6[%c0_12, %c0_13, %c0_14] : memref<4x30x30xf32, #tpu.memory_space<vmem>>, vector<1x30x30xf32>
    %17 = vector.shape_cast %16 : vector<1x30x30xf32> to vector<30x30xf32>
    %cst_15 = arith.constant dense<0.000000e+00> : vector<528x30xf32>
    %18 = tpu.matmul %15, %17, %cst_15 {dimension_numbers = #tpu.dot_dimension_numbers<[1], [0], [0], [1], [0, 0, 1, 1], [], []>} : vector<528x30xf32>, vector<30x30xf32>, vector<528x30xf32> -> vector<528x30xf32>
    %19 = vector.extract_strided_slice %14 {offsets = [528, 0], sizes = [528, 30], strides = [1, 1]} : vector<2112x30xf32> to vector<528x30xf32>
    %c1 = arith.constant 1 : index
    %c0_16 = arith.constant 0 : index
    %c0_17 = arith.constant 0 : index
    %20 = vector.load %arg6[%c1, %c0_16, %c0_17] : memref<4x30x30xf32, #tpu.memory_space<vmem>>, vector<1x30x30xf32>
    %21 = vector.shape_cast %20 : vector<1x30x30xf32> to vector<30x30xf32>
    %cst_18 = arith.constant dense<0.000000e+00> : vector<528x30xf32>
    %22 = tpu.matmul %19, %21, %cst_18 {dimension_numbers = #tpu.dot_dimension_numbers<[1], [0], [0], [1], [0, 0, 1, 1], [], []>} : vector<528x30xf32>, vector<30x30xf32>, vector<528x30xf32> -> vector<528x30xf32>
    %23 = arith.addf %18, %22 : vector<528x30xf32>
    %24 = vector.extract_strided_slice %14 {offsets = [1056, 0], sizes = [528, 30], strides = [1, 1]} : vector<2112x30xf32> to vector<528x30xf32>
    %c2 = arith.constant 2 : index
    %c0_19 = arith.constant 0 : index
    %c0_20 = arith.constant 0 : index
    %25 = vector.load %arg6[%c2, %c0_19, %c0_20] : memref<4x30x30xf32, #tpu.memory_space<vmem>>, vector<1x30x30xf32>
    %26 = vector.shape_cast %25 : vector<1x30x30xf32> to vector<30x30xf32>
    %cst_21 = arith.constant dense<0.000000e+00> : vector<528x30xf32>
    %27 = tpu.matmul %24, %26, %cst_21 {dimension_numbers = #tpu.dot_dimension_numbers<[1], [0], [0], [1], [0, 0, 1, 1], [], []>} : vector<528x30xf32>, vector<30x30xf32>, vector<528x30xf32> -> vector<528x30xf32>
    %28 = arith.addf %23, %27 : vector<528x30xf32>
    %29 = vector.extract_strided_slice %14 {offsets = [1584, 0], sizes = [528, 30], strides = [1, 1]} : vector<2112x30xf32> to vector<528x30xf32>
    %c3 = arith.constant 3 : index
    %c0_22 = arith.constant 0 : index
    %c0_23 = arith.constant 0 : index
    %30 = vector.load %arg6[%c3, %c0_22, %c0_23] : memref<4x30x30xf32, #tpu.memory_space<vmem>>, vector<1x30x30xf32>
    %31 = vector.shape_cast %30 : vector<1x30x30xf32> to vector<30x30xf32>
    %cst_24 = arith.constant dense<0.000000e+00> : vector<528x30xf32>
    %32 = tpu.matmul %29, %31, %cst_24 {dimension_numbers = #tpu.dot_dimension_numbers<[1], [0], [0], [1], [0, 0, 1, 1], [], []>} : vector<528x30xf32>, vector<30x30xf32>, vector<528x30xf32> -> vector<528x30xf32>
    %33 = arith.addf %28, %32 : vector<528x30xf32>
    %c0_25 = arith.constant 0 : index
    %c0_26 = arith.constant 0 : index
    %34 = vector.load %arg7[%c0_25, %c0_26] : memref<1x30xf32, #tpu.memory_space<vmem>>, vector<1x30xf32>
    %35 = vector.broadcast %34 : vector<1x30xf32> to vector<528x30xf32>
    %36 = arith.addf %33, %35 : vector<528x30xf32>
    %cst_27 = arith.constant 0.000000e+00 : f32
    %37 = vector.broadcast %cst_27 : f32 to vector<528x30xf32>
    %38 = arith.maximumf %36, %37 : vector<528x30xf32>
    %39 = vector.extract_strided_slice %38 {offsets = [0, 0], sizes = [8, 30], strides = [1, 1]} : vector<528x30xf32> to vector<8x30xf32>
    %c0_28 = arith.constant 0 : index
    %c0_29 = arith.constant 0 : index
    %40 = vector.load %arg13[%c0_28, %c0_29] : memref<8x1980xf32, #tpu.memory_space<vmem>>, vector<8x30xf32>
    tpu.vector_store %arg13[%c0_28, %c0_29], %39 {strides = array<i32>} : memref<8x1980xf32, #tpu.memory_space<vmem>>, vector<8x30xf32>,
    %41 = vector.extract_strided_slice %38 {offsets = [8, 0], sizes = [8, 30], strides = [1, 1]} : vector<528x30xf32> to vector<8x30xf32>
    %c0_30 = arith.constant 0 : index
    %c30 = arith.constant 30 : index
    %42 = vector.load %arg13[%c0_30, %c30] : memref<8x1980xf32, #tpu.memory_space<vmem>>, vector<8x30xf32>
    tpu.vector_store %arg13[%c0_30, %c30], %41 {strides = array<i32>} : memref<8x1980xf32, #tpu.memory_space<vmem>>, vector<8x30xf32>,
    %43 = vector.extract_strided_slice %38 {offsets = [16, 0], sizes = [8, 30], strides = [1, 1]} : vector<528x30xf32> to vector<8x30xf32>
    %c0_31 = arith.constant 0 : index
    %c60 = arith.constant 60 : index
    %44 = vector.load %arg13[%c0_31, %c60] : memref<8x1980xf32, #tpu.memory_space<vmem>>, vector<8x30xf32>
    tpu.vector_store %arg13[%c0_31, %c60], %43 {strides = array<i32>} : memref<8x1980xf32, #tpu.memory_space<vmem>>, vector<8x30xf32>,
    %45 = vector.extract_strided_slice %38 {offsets = [24, 0], sizes = [8, 30], strides = [1, 1]} : vector<528x30xf32> to vector<8x30xf32>
    %c0_32 = arith.constant 0 : index
    %c90 = arith.constant 90 : index
    %46 = vector.load %arg13[%c0_32, %c90] : memref<8x1980xf32, #tpu.memory_space<vmem>>, vector<8x30xf32>
    tpu.vector_store %arg13[%c0_32, %c90], %45 {strides = array<i32>} : memref<8x1980xf32, #tpu.memory_space<vmem>>, vector<8x30xf32>,
    %47 = vector.extract_strided_slice %38 {offsets = [32, 0], sizes = [8, 30], strides = [1, 1]} : vector<528x30xf32> to vector<8x30xf32>
    %c0_33 = arith.constant 0 : index
    %c120 = arith.constant 120 : index
    %48 = vector.load %arg13[%c0_33, %c120] : memref<8x1980xf32, #tpu.memory_space<vmem>>, vector<8x30xf32>
    tpu.vector_store %arg13[%c0_33, %c120], %47 {strides = array<i32>} : memref<8x1980xf32, #tpu.memory_space<vmem>>, vector<8x30xf32>,
    %49 = vector.extract_strided_slice %38 {offsets = [40, 0], sizes = [8, 30], strides = [1, 1]} : vector<528x30xf32> to vector<8x30xf32>
    %c0_34 = arith.constant 0 : index
    %c150 = arith.constant 150 : index
    %50 = vector.load %arg13[%c0_34, %c150] : memref<8x1980xf32, #tpu.memory_space<vmem>>, vector<8x30xf32>
    tpu.vector_store %arg13[%c0_34, %c150], %49 {strides = array<i32>} : memref<8x1980xf32, #tpu.memory_space<vmem>>, vector<8x30xf32>,
    %51 = vector.extract_strided_slice %38 {offsets = [48, 0], sizes = [8, 30], strides = [1, 1]} : vector<528x30xf32> to vector<8x30xf32>
    %c0_35 = arith.constant 0 : index
    %c180 = arith.constant 180 : index
    %52 = vector.load %arg13[%c0_35, %c180] : memref<8x1980xf32, #tpu.memory_space<vmem>>, vector<8x30xf32>
    tpu.vector_store %arg13[%c0_35, %c180], %51 {strides = array<i32>} : memref<8x1980xf32, #tpu.memory_space<vmem>>, vector<8x30xf32>,
    %53 = vector.extract_strided_slice %38 {offsets = [56, 0], sizes = [8, 30], strides = [1, 1]} : vector<528x30xf32> to vector<8x30xf32>
    %c0_36 = arith.constant 0 : index
    %c210 = arith.constant 210 : index
    %54 = vector.load %arg13[%c0_36, %c210] : memref<8x1980xf32, #tpu.memory_space<vmem>>, vector<8x30xf32>
    tpu.vector_store %arg13[%c0_36, %c210], %53 {strides = array<i32>} : memref<8x1980xf32, #tpu.memory_space<vmem>>, vector<8x30xf32>,
    %55 = vector.extract_strided_slice %38 {offsets = [64, 0], sizes = [8, 30], strides = [1, 1]} : vector<528x30xf32> to vector<8x30xf32>
    %c0_37 = arith.constant 0 : index
    %c240 = arith.constant 240 : index
    %56 = vector.load %arg13[%c0_37, %c240] : memref<8x1980xf32, #tpu.memory_space<vmem>>, vector<8x30xf32>
    tpu.vector_store %arg13[%c0_37, %c240], %55 {strides = array<i32>} : memref<8x1980xf32, #tpu.memory_space<vmem>>, vector<8x30xf32>,
    %57 = vector.extract_strided_slice %38 {offsets = [72, 0], sizes = [8, 30], strides = [1, 1]} : vector<528x30xf32> to vector<8x30xf32>
    %c0_38 = arith.constant 0 : index
    %c270 = arith.constant 270 : index
    %58 = vector.load %arg13[%c0_38, %c270] : memref<8x1980xf32, #tpu.memory_space<vmem>>, vector<8x30xf32>
    tpu.vector_store %arg13[%c0_38, %c270], %57 {strides = array<i32>} : memref<8x1980xf32, #tpu.memory_space<vmem>>, vector<8x30xf32>,
    %59 = vector.extract_strided_slice %38 {offsets = [80, 0], sizes = [8, 30], strides = [1, 1]} : vector<528x30xf32> to vector<8x30xf32>
    %c0_39 = arith.constant 0 : index
    %c300 = arith.constant 300 : index
    %60 = vector.load %arg13[%c0_39, %c300] : memref<8x1980xf32, #tpu.memory_space<vmem>>, vector<8x30xf32>
    tpu.vector_store %arg13[%c0_39, %c300], %59 {strides = array<i32>} : memref<8x1980xf32, #tpu.memory_space<vmem>>, vector<8x30xf32>,
    %61 = vector.extract_strided_slice %38 {offsets = [88, 0], sizes = [8, 30], strides = [1, 1]} : vector<528x30xf32> to vector<8x30xf32>
    %c0_40 = arith.constant 0 : index
    %c330 = arith.constant 330 : index
    %62 = vector.load %arg13[%c0_40, %c330] : memref<8x1980xf32, #tpu.memory_space<vmem>>, vector<8x30xf32>
    tpu.vector_store %arg13[%c0_40, %c330], %61 {strides = array<i32>} : memref<8x1980xf32, #tpu.memory_space<vmem>>, vector<8x30xf32>,
    %63 = vector.extract_strided_slice %38 {offsets = [96, 0], sizes = [8, 30], strides = [1, 1]} : vector<528x30xf32> to vector<8x30xf32>
    %c0_41 = arith.constant 0 : index
    %c360 = arith.constant 360 : index
    %64 = vector.load %arg13[%c0_41, %c360] : memref<8x1980xf32, #tpu.memory_space<vmem>>, vector<8x30xf32>
    tpu.vector_store %arg13[%c0_41, %c360], %63 {strides = array<i32>} : memref<8x1980xf32, #tpu.memory_space<vmem>>, vector<8x30xf32>,
    %65 = vector.extract_strided_slice %38 {offsets = [104, 0], sizes = [8, 30], strides = [1, 1]} : vector<528x30xf32> to vector<8x30xf32>
    %c0_42 = arith.constant 0 : index
    %c390 = arith.constant 390 : index
    %66 = vector.load %arg13[%c0_42, %c390] : memref<8x1980xf32, #tpu.memory_space<vmem>>, vector<8x30xf32>
    tpu.vector_store %arg13[%c0_42, %c390], %65 {strides = array<i32>} : memref<8x1980xf32, #tpu.memory_space<vmem>>, vector<8x30xf32>,
    %67 = vector.extract_strided_slice %38 {offsets = [112, 0], sizes = [8, 30], strides = [1, 1]} : vector<528x30xf32> to vector<8x30xf32>
    %c0_43 = arith.constant 0 : index
    %c420 = arith.constant 420 : index
    %68 = vector.load %arg13[%c0_43, %c420] : memref<8x1980xf32, #tpu.memory_space<vmem>>, vector<8x30xf32>
    tpu.vector_store %arg13[%c0_43, %c420], %67 {strides = array<i32>} : memref<8x1980xf32, #tpu.memory_space<vmem>>, vector<8x30xf32>,
    %69 = vector.extract_strided_slice %38 {offsets = [120, 0], sizes = [8, 30], strides = [1, 1]} : vector<528x30xf32> to vector<8x30xf32>
    %c0_44 = arith.constant 0 : index
    %c450 = arith.constant 450 : index
    %70 = vector.load %arg13[%c0_44, %c450] : memref<8x1980xf32, #tpu.memory_space<vmem>>, vector<8x30xf32>
    tpu.vector_store %arg13[%c0_44, %c450], %69 {strides = array<i32>} : memref<8x1980xf32, #tpu.memory_space<vmem>>, vector<8x30xf32>,
    %71 = vector.extract_strided_slice %38 {offsets = [128, 0], sizes = [8, 30], strides = [1, 1]} : vector<528x30xf32> to vector<8x30xf32>
    %c0_45 = arith.constant 0 : index
    %c480 = arith.constant 480 : index
    %72 = vector.load %arg13[%c0_45, %c480] : memref<8x1980xf32, #tpu.memory_space<vmem>>, vector<8x30xf32>
    tpu.vector_store %arg13[%c0_45, %c480], %71 {strides = array<i32>} : memref<8x1980xf32, #tpu.memory_space<vmem>>, vector<8x30xf32>,
    %73 = vector.extract_strided_slice %38 {offsets = [136, 0], sizes = [8, 30], strides = [1, 1]} : vector<528x30xf32> to vector<8x30xf32>
    %c0_46 = arith.constant 0 : index
    %c510 = arith.constant 510 : index
    %74 = vector.load %arg13[%c0_46, %c510] : memref<8x1980xf32, #tpu.memory_space<vmem>>, vector<8x30xf32>
    tpu.vector_store %arg13[%c0_46, %c510], %73 {strides = array<i32>} : memref<8x1980xf32, #tpu.memory_space<vmem>>, vector<8x30xf32>,
    %75 = vector.extract_strided_slice %38 {offsets = [144, 0], sizes = [8, 30], strides = [1, 1]} : vector<528x30xf32> to vector<8x30xf32>
    %c0_47 = arith.constant 0 : index
    %c540 = arith.constant 540 : index
    %76 = vector.load %arg13[%c0_47, %c540] : memref<8x1980xf32, #tpu.memory_space<vmem>>, vector<8x30xf32>
    tpu.vector_store %arg13[%c0_47, %c540], %75 {strides = array<i32>} : memref<8x1980xf32, #tpu.memory_space<vmem>>, vector<8x30xf32>,
    %77 = vector.extract_strided_slice %38 {offsets = [152, 0], sizes = [8, 30], strides = [1, 1]} : vector<528x30xf32> to vector<8x30xf32>
    %c0_48 = arith.constant 0 : index
    %c570 = arith.constant 570 : index
    %78 = vector.load %arg13[%c0_48, %c570] : memref<8x1980xf32, #tpu.memory_space<vmem>>, vector<8x30xf32>
    tpu.vector_store %arg13[%c0_48, %c570], %77 {strides = array<i32>} : memref<8x1980xf32, #tpu.memory_space<vmem>>, vector<8x30xf32>,
    %79 = vector.extract_strided_slice %38 {offsets = [160, 0], sizes = [8, 30], strides = [1, 1]} : vector<528x30xf32> to vector<8x30xf32>
    %c0_49 = arith.constant 0 : index
    %c600 = arith.constant 600 : index
    %80 = vector.load %arg13[%c0_49, %c600] : memref<8x1980xf32, #tpu.memory_space<vmem>>, vector<8x30xf32>
    tpu.vector_store %arg13[%c0_49, %c600], %79 {strides = array<i32>} : memref<8x1980xf32, #tpu.memory_space<vmem>>, vector<8x30xf32>,
    %81 = vector.extract_strided_slice %38 {offsets = [168, 0], sizes = [8, 30], strides = [1, 1]} : vector<528x30xf32> to vector<8x30xf32>
    %c0_50 = arith.constant 0 : index
    %c630 = arith.constant 630 : index
    %82 = vector.load %arg13[%c0_50, %c630] : memref<8x1980xf32, #tpu.memory_space<vmem>>, vector<8x30xf32>
    tpu.vector_store %arg13[%c0_50, %c630], %81 {strides = array<i32>} : memref<8x1980xf32, #tpu.memory_space<vmem>>, vector<8x30xf32>,
    %83 = vector.extract_strided_slice %38 {offsets = [176, 0], sizes = [8, 30], strides = [1, 1]} : vector<528x30xf32> to vector<8x30xf32>
    %c0_51 = arith.constant 0 : index
    %c660 = arith.constant 660 : index
    %84 = vector.load %arg13[%c0_51, %c660] : memref<8x1980xf32, #tpu.memory_space<vmem>>, vector<8x30xf32>
    tpu.vector_store %arg13[%c0_51, %c660], %83 {strides = array<i32>} : memref<8x1980xf32, #tpu.memory_space<vmem>>, vector<8x30xf32>,
    %85 = vector.extract_strided_slice %38 {offsets = [184, 0], sizes = [8, 30], strides = [1, 1]} : vector<528x30xf32> to vector<8x30xf32>
    %c0_52 = arith.constant 0 : index
    %c690 = arith.constant 690 : index
    %86 = vector.load %arg13[%c0_52, %c690] : memref<8x1980xf32, #tpu.memory_space<vmem>>, vector<8x30xf32>
    tpu.vector_store %arg13[%c0_52, %c690], %85 {strides = array<i32>} : memref<8x1980xf32, #tpu.memory_space<vmem>>, vector<8x30xf32>,
    %87 = vector.extract_strided_slice %38 {offsets = [192, 0], sizes = [8, 30], strides = [1, 1]} : vector<528x30xf32> to vector<8x30xf32>
    %c0_53 = arith.constant 0 : index
    %c720 = arith.constant 720 : index
    %88 = vector.load %arg13[%c0_53, %c720] : memref<8x1980xf32, #tpu.memory_space<vmem>>, vector<8x30xf32>
    tpu.vector_store %arg13[%c0_53, %c720], %87 {strides = array<i32>} : memref<8x1980xf32, #tpu.memory_space<vmem>>, vector<8x30xf32>,
    %89 = vector.extract_strided_slice %38 {offsets = [200, 0], sizes = [8, 30], strides = [1, 1]} : vector<528x30xf32> to vector<8x30xf32>
    %c0_54 = arith.constant 0 : index
    %c750 = arith.constant 750 : index
    %90 = vector.load %arg13[%c0_54, %c750] : memref<8x1980xf32, #tpu.memory_space<vmem>>, vector<8x30xf32>
    tpu.vector_store %arg13[%c0_54, %c750], %89 {strides = array<i32>} : memref<8x1980xf32, #tpu.memory_space<vmem>>, vector<8x30xf32>,
    %91 = vector.extract_strided_slice %38 {offsets = [208, 0], sizes = [8, 30], strides = [1, 1]} : vector<528x30xf32> to vector<8x30xf32>
    %c0_55 = arith.constant 0 : index
    %c780 = arith.constant 780 : index
    %92 = vector.load %arg13[%c0_55, %c780] : memref<8x1980xf32, #tpu.memory_space<vmem>>, vector<8x30xf32>
    tpu.vector_store %arg13[%c0_55, %c780], %91 {strides = array<i32>} : memref<8x1980xf32, #tpu.memory_space<vmem>>, vector<8x30xf32>,
    %93 = vector.extract_strided_slice %38 {offsets = [216, 0], sizes = [8, 30], strides = [1, 1]} : vector<528x30xf32> to vector<8x30xf32>
    %c0_56 = arith.constant 0 : index
    %c810 = arith.constant 810 : index
    %94 = vector.load %arg13[%c0_56, %c810] : memref<8x1980xf32, #tpu.memory_space<vmem>>, vector<8x30xf32>
    tpu.vector_store %arg13[%c0_56, %c810], %93 {strides = array<i32>} : memref<8x1980xf32, #tpu.memory_space<vmem>>, vector<8x30xf32>,
    %95 = vector.extract_strided_slice %38 {offsets = [224, 0], sizes = [8, 30], strides = [1, 1]} : vector<528x30xf32> to vector<8x30xf32>
    %c0_57 = arith.constant 0 : index
    %c840 = arith.constant 840 : index
    %96 = vector.load %arg13[%c0_57, %c840] : memref<8x1980xf32, #tpu.memory_space<vmem>>, vector<8x30xf32>
    tpu.vector_store %arg13[%c0_57, %c840], %95 {strides = array<i32>} : memref<8x1980xf32, #tpu.memory_space<vmem>>, vector<8x30xf32>,
    %97 = vector.extract_strided_slice %38 {offsets = [232, 0], sizes = [8, 30], strides = [1, 1]} : vector<528x30xf32> to vector<8x30xf32>
    %c0_58 = arith.constant 0 : index
    %c870 = arith.constant 870 : index
    %98 = vector.load %arg13[%c0_58, %c870] : memref<8x1980xf32, #tpu.memory_space<vmem>>, vector<8x30xf32>
    tpu.vector_store %arg13[%c0_58, %c870], %97 {strides = array<i32>} : memref<8x1980xf32, #tpu.memory_space<vmem>>, vector<8x30xf32>,
    %99 = vector.extract_strided_slice %38 {offsets = [240, 0], sizes = [8, 30], strides = [1, 1]} : vector<528x30xf32> to vector<8x30xf32>
    %c0_59 = arith.constant 0 : index
    %c900 = arith.constant 900 : index
    %100 = vector.load %arg13[%c0_59, %c900] : memref<8x1980xf32, #tpu.memory_space<vmem>>, vector<8x30xf32>
    tpu.vector_store %arg13[%c0_59, %c900], %99 {strides = array<i32>} : memref<8x1980xf32, #tpu.memory_space<vmem>>, vector<8x30xf32>,
    %101 = vector.extract_strided_slice %38 {offsets = [248, 0], sizes = [8, 30], strides = [1, 1]} : vector<528x30xf32> to vector<8x30xf32>
    %c0_60 = arith.constant 0 : index
    %c930 = arith.constant 930 : index
    %102 = vector.load %arg13[%c0_60, %c930] : memref<8x1980xf32, #tpu.memory_space<vmem>>, vector<8x30xf32>
    tpu.vector_store %arg13[%c0_60, %c930], %101 {strides = array<i32>} : memref<8x1980xf32, #tpu.memory_space<vmem>>, vector<8x30xf32>,
    %103 = vector.extract_strided_slice %38 {offsets = [256, 0], sizes = [8, 30], strides = [1, 1]} : vector<528x30xf32> to vector<8x30xf32>
    %c0_61 = arith.constant 0 : index
    %c960 = arith.constant 960 : index
    %104 = vector.load %arg13[%c0_61, %c960] : memref<8x1980xf32, #tpu.memory_space<vmem>>, vector<8x30xf32>
    tpu.vector_store %arg13[%c0_61, %c960], %103 {strides = array<i32>} : memref<8x1980xf32, #tpu.memory_space<vmem>>, vector<8x30xf32>,
    %105 = vector.extract_strided_slice %38 {offsets = [264, 0], sizes = [8, 30], strides = [1, 1]} : vector<528x30xf32> to vector<8x30xf32>
    %c0_62 = arith.constant 0 : index
    %c990 = arith.constant 990 : index
    %106 = vector.load %arg13[%c0_62, %c990] : memref<8x1980xf32, #tpu.memory_space<vmem>>, vector<8x30xf32>
    tpu.vector_store %arg13[%c0_62, %c990], %105 {strides = array<i32>} : memref<8x1980xf32, #tpu.memory_space<vmem>>, vector<8x30xf32>,
    %107 = vector.extract_strided_slice %38 {offsets = [272, 0], sizes = [8, 30], strides = [1, 1]} : vector<528x30xf32> to vector<8x30xf32>
    %c0_63 = arith.constant 0 : index
    %c1020 = arith.constant 1020 : index
    %108 = vector.load %arg13[%c0_63, %c1020] : memref<8x1980xf32, #tpu.memory_space<vmem>>, vector<8x30xf32>
    tpu.vector_store %arg13[%c0_63, %c1020], %107 {strides = array<i32>} : memref<8x1980xf32, #tpu.memory_space<vmem>>, vector<8x30xf32>,
    %109 = vector.extract_strided_slice %38 {offsets = [280, 0], sizes = [8, 30], strides = [1, 1]} : vector<528x30xf32> to vector<8x30xf32>
    %c0_64 = arith.constant 0 : index
    %c1050 = arith.constant 1050 : index
    %110 = vector.load %arg13[%c0_64, %c1050] : memref<8x1980xf32, #tpu.memory_space<vmem>>, vector<8x30xf32>
    tpu.vector_store %arg13[%c0_64, %c1050], %109 {strides = array<i32>} : memref<8x1980xf32, #tpu.memory_space<vmem>>, vector<8x30xf32>,
    %111 = vector.extract_strided_slice %38 {offsets = [288, 0], sizes = [8, 30], strides = [1, 1]} : vector<528x30xf32> to vector<8x30xf32>
    %c0_65 = arith.constant 0 : index
    %c1080 = arith.constant 1080 : index
    %112 = vector.load %arg13[%c0_65, %c1080] : memref<8x1980xf32, #tpu.memory_space<vmem>>, vector<8x30xf32>
    tpu.vector_store %arg13[%c0_65, %c1080], %111 {strides = array<i32>} : memref<8x1980xf32, #tpu.memory_space<vmem>>, vector<8x30xf32>,
    %113 = vector.extract_strided_slice %38 {offsets = [296, 0], sizes = [8, 30], strides = [1, 1]} : vector<528x30xf32> to vector<8x30xf32>
    %c0_66 = arith.constant 0 : index
    %c1110 = arith.constant 1110 : index
    %114 = vector.load %arg13[%c0_66, %c1110] : memref<8x1980xf32, #tpu.memory_space<vmem>>, vector<8x30xf32>
    tpu.vector_store %arg13[%c0_66, %c1110], %113 {strides = array<i32>} : memref<8x1980xf32, #tpu.memory_space<vmem>>, vector<8x30xf32>,
    %115 = vector.extract_strided_slice %38 {offsets = [304, 0], sizes = [8, 30], strides = [1, 1]} : vector<528x30xf32> to vector<8x30xf32>
    %c0_67 = arith.constant 0 : index
    %c1140 = arith.constant 1140 : index
    %116 = vector.load %arg13[%c0_67, %c1140] : memref<8x1980xf32, #tpu.memory_space<vmem>>, vector<8x30xf32>
    tpu.vector_store %arg13[%c0_67, %c1140], %115 {strides = array<i32>} : memref<8x1980xf32, #tpu.memory_space<vmem>>, vector<8x30xf32>,
    %117 = vector.extract_strided_slice %38 {offsets = [312, 0], sizes = [8, 30], strides = [1, 1]} : vector<528x30xf32> to vector<8x30xf32>
    %c0_68 = arith.constant 0 : index
    %c1170 = arith.constant 1170 : index
    %118 = vector.load %arg13[%c0_68, %c1170] : memref<8x1980xf32, #tpu.memory_space<vmem>>, vector<8x30xf32>
    tpu.vector_store %arg13[%c0_68, %c1170], %117 {strides = array<i32>} : memref<8x1980xf32, #tpu.memory_space<vmem>>, vector<8x30xf32>,
    %119 = vector.extract_strided_slice %38 {offsets = [320, 0], sizes = [8, 30], strides = [1, 1]} : vector<528x30xf32> to vector<8x30xf32>
    %c0_69 = arith.constant 0 : index
    %c1200 = arith.constant 1200 : index
    %120 = vector.load %arg13[%c0_69, %c1200] : memref<8x1980xf32, #tpu.memory_space<vmem>>, vector<8x30xf32>
    tpu.vector_store %arg13[%c0_69, %c1200], %119 {strides = array<i32>} : memref<8x1980xf32, #tpu.memory_space<vmem>>, vector<8x30xf32>,
    %121 = vector.extract_strided_slice %38 {offsets = [328, 0], sizes = [8, 30], strides = [1, 1]} : vector<528x30xf32> to vector<8x30xf32>
    %c0_70 = arith.constant 0 : index
    %c1230 = arith.constant 1230 : index
    %122 = vector.load %arg13[%c0_70, %c1230] : memref<8x1980xf32, #tpu.memory_space<vmem>>, vector<8x30xf32>
    tpu.vector_store %arg13[%c0_70, %c1230], %121 {strides = array<i32>} : memref<8x1980xf32, #tpu.memory_space<vmem>>, vector<8x30xf32>,
    %123 = vector.extract_strided_slice %38 {offsets = [336, 0], sizes = [8, 30], strides = [1, 1]} : vector<528x30xf32> to vector<8x30xf32>
    %c0_71 = arith.constant 0 : index
    %c1260 = arith.constant 1260 : index
    %124 = vector.load %arg13[%c0_71, %c1260] : memref<8x1980xf32, #tpu.memory_space<vmem>>, vector<8x30xf32>
    tpu.vector_store %arg13[%c0_71, %c1260], %123 {strides = array<i32>} : memref<8x1980xf32, #tpu.memory_space<vmem>>, vector<8x30xf32>,
    %125 = vector.extract_strided_slice %38 {offsets = [344, 0], sizes = [8, 30], strides = [1, 1]} : vector<528x30xf32> to vector<8x30xf32>
    %c0_72 = arith.constant 0 : index
    %c1290 = arith.constant 1290 : index
    %126 = vector.load %arg13[%c0_72, %c1290] : memref<8x1980xf32, #tpu.memory_space<vmem>>, vector<8x30xf32>
    tpu.vector_store %arg13[%c0_72, %c1290], %125 {strides = array<i32>} : memref<8x1980xf32, #tpu.memory_space<vmem>>, vector<8x30xf32>,
    %127 = vector.extract_strided_slice %38 {offsets = [352, 0], sizes = [8, 30], strides = [1, 1]} : vector<528x30xf32> to vector<8x30xf32>
    %c0_73 = arith.constant 0 : index
    %c1320 = arith.constant 1320 : index
    %128 = vector.load %arg13[%c0_73, %c1320] : memref<8x1980xf32, #tpu.memory_space<vmem>>, vector<8x30xf32>
    tpu.vector_store %arg13[%c0_73, %c1320], %127 {strides = array<i32>} : memref<8x1980xf32, #tpu.memory_space<vmem>>, vector<8x30xf32>,
    %129 = vector.extract_strided_slice %38 {offsets = [360, 0], sizes = [8, 30], strides = [1, 1]} : vector<528x30xf32> to vector<8x30xf32>
    %c0_74 = arith.constant 0 : index
    %c1350 = arith.constant 1350 : index
    %130 = vector.load %arg13[%c0_74, %c1350] : memref<8x1980xf32, #tpu.memory_space<vmem>>, vector<8x30xf32>
    tpu.vector_store %arg13[%c0_74, %c1350], %129 {strides = array<i32>} : memref<8x1980xf32, #tpu.memory_space<vmem>>, vector<8x30xf32>,
    %131 = vector.extract_strided_slice %38 {offsets = [368, 0], sizes = [8, 30], strides = [1, 1]} : vector<528x30xf32> to vector<8x30xf32>
    %c0_75 = arith.constant 0 : index
    %c1380 = arith.constant 1380 : index
    %132 = vector.load %arg13[%c0_75, %c1380] : memref<8x1980xf32, #tpu.memory_space<vmem>>, vector<8x30xf32>
    tpu.vector_store %arg13[%c0_75, %c1380], %131 {strides = array<i32>} : memref<8x1980xf32, #tpu.memory_space<vmem>>, vector<8x30xf32>,
    %133 = vector.extract_strided_slice %38 {offsets = [376, 0], sizes = [8, 30], strides = [1, 1]} : vector<528x30xf32> to vector<8x30xf32>
    %c0_76 = arith.constant 0 : index
    %c1410 = arith.constant 1410 : index
    %134 = vector.load %arg13[%c0_76, %c1410] : memref<8x1980xf32, #tpu.memory_space<vmem>>, vector<8x30xf32>
    tpu.vector_store %arg13[%c0_76, %c1410], %133 {strides = array<i32>} : memref<8x1980xf32, #tpu.memory_space<vmem>>, vector<8x30xf32>,
    %135 = vector.extract_strided_slice %38 {offsets = [384, 0], sizes = [8, 30], strides = [1, 1]} : vector<528x30xf32> to vector<8x30xf32>
    %c0_77 = arith.constant 0 : index
    %c1440 = arith.constant 1440 : index
    %136 = vector.load %arg13[%c0_77, %c1440] : memref<8x1980xf32, #tpu.memory_space<vmem>>, vector<8x30xf32>
    tpu.vector_store %arg13[%c0_77, %c1440], %135 {strides = array<i32>} : memref<8x1980xf32, #tpu.memory_space<vmem>>, vector<8x30xf32>,
    %137 = vector.extract_strided_slice %38 {offsets = [392, 0], sizes = [8, 30], strides = [1, 1]} : vector<528x30xf32> to vector<8x30xf32>
    %c0_78 = arith.constant 0 : index
    %c1470 = arith.constant 1470 : index
    %138 = vector.load %arg13[%c0_78, %c1470] : memref<8x1980xf32, #tpu.memory_space<vmem>>, vector<8x30xf32>
    tpu.vector_store %arg13[%c0_78, %c1470], %137 {strides = array<i32>} : memref<8x1980xf32, #tpu.memory_space<vmem>>, vector<8x30xf32>,
    %139 = vector.extract_strided_slice %38 {offsets = [400, 0], sizes = [8, 30], strides = [1, 1]} : vector<528x30xf32> to vector<8x30xf32>
    %c0_79 = arith.constant 0 : index
    %c1500 = arith.constant 1500 : index
    %140 = vector.load %arg13[%c0_79, %c1500] : memref<8x1980xf32, #tpu.memory_space<vmem>>, vector<8x30xf32>
    tpu.vector_store %arg13[%c0_79, %c1500], %139 {strides = array<i32>} : memref<8x1980xf32, #tpu.memory_space<vmem>>, vector<8x30xf32>,
    %141 = vector.extract_strided_slice %38 {offsets = [408, 0], sizes = [8, 30], strides = [1, 1]} : vector<528x30xf32> to vector<8x30xf32>
    %c0_80 = arith.constant 0 : index
    %c1530 = arith.constant 1530 : index
    %142 = vector.load %arg13[%c0_80, %c1530] : memref<8x1980xf32, #tpu.memory_space<vmem>>, vector<8x30xf32>
    tpu.vector_store %arg13[%c0_80, %c1530], %141 {strides = array<i32>} : memref<8x1980xf32, #tpu.memory_space<vmem>>, vector<8x30xf32>,
    %143 = vector.extract_strided_slice %38 {offsets = [416, 0], sizes = [8, 30], strides = [1, 1]} : vector<528x30xf32> to vector<8x30xf32>
    %c0_81 = arith.constant 0 : index
    %c1560 = arith.constant 1560 : index
    %144 = vector.load %arg13[%c0_81, %c1560] : memref<8x1980xf32, #tpu.memory_space<vmem>>, vector<8x30xf32>
    tpu.vector_store %arg13[%c0_81, %c1560], %143 {strides = array<i32>} : memref<8x1980xf32, #tpu.memory_space<vmem>>, vector<8x30xf32>,
    %145 = vector.extract_strided_slice %38 {offsets = [424, 0], sizes = [8, 30], strides = [1, 1]} : vector<528x30xf32> to vector<8x30xf32>
    %c0_82 = arith.constant 0 : index
    %c1590 = arith.constant 1590 : index
    %146 = vector.load %arg13[%c0_82, %c1590] : memref<8x1980xf32, #tpu.memory_space<vmem>>, vector<8x30xf32>
    tpu.vector_store %arg13[%c0_82, %c1590], %145 {strides = array<i32>} : memref<8x1980xf32, #tpu.memory_space<vmem>>, vector<8x30xf32>,
    %147 = vector.extract_strided_slice %38 {offsets = [432, 0], sizes = [8, 30], strides = [1, 1]} : vector<528x30xf32> to vector<8x30xf32>
    %c0_83 = arith.constant 0 : index
    %c1620 = arith.constant 1620 : index
    %148 = vector.load %arg13[%c0_83, %c1620] : memref<8x1980xf32, #tpu.memory_space<vmem>>, vector<8x30xf32>
    tpu.vector_store %arg13[%c0_83, %c1620], %147 {strides = array<i32>} : memref<8x1980xf32, #tpu.memory_space<vmem>>, vector<8x30xf32>,
    %149 = vector.extract_strided_slice %38 {offsets = [440, 0], sizes = [8, 30], strides = [1, 1]} : vector<528x30xf32> to vector<8x30xf32>
    %c0_84 = arith.constant 0 : index
    %c1650 = arith.constant 1650 : index
    %150 = vector.load %arg13[%c0_84, %c1650] : memref<8x1980xf32, #tpu.memory_space<vmem>>, vector<8x30xf32>
    tpu.vector_store %arg13[%c0_84, %c1650], %149 {strides = array<i32>} : memref<8x1980xf32, #tpu.memory_space<vmem>>, vector<8x30xf32>,
    %151 = vector.extract_strided_slice %38 {offsets = [448, 0], sizes = [8, 30], strides = [1, 1]} : vector<528x30xf32> to vector<8x30xf32>
    %c0_85 = arith.constant 0 : index
    %c1680 = arith.constant 1680 : index
    %152 = vector.load %arg13[%c0_85, %c1680] : memref<8x1980xf32, #tpu.memory_space<vmem>>, vector<8x30xf32>
    tpu.vector_store %arg13[%c0_85, %c1680], %151 {strides = array<i32>} : memref<8x1980xf32, #tpu.memory_space<vmem>>, vector<8x30xf32>,
    %153 = vector.extract_strided_slice %38 {offsets = [456, 0], sizes = [8, 30], strides = [1, 1]} : vector<528x30xf32> to vector<8x30xf32>
    %c0_86 = arith.constant 0 : index
    %c1710 = arith.constant 1710 : index
    %154 = vector.load %arg13[%c0_86, %c1710] : memref<8x1980xf32, #tpu.memory_space<vmem>>, vector<8x30xf32>
    tpu.vector_store %arg13[%c0_86, %c1710], %153 {strides = array<i32>} : memref<8x1980xf32, #tpu.memory_space<vmem>>, vector<8x30xf32>,
    %155 = vector.extract_strided_slice %38 {offsets = [464, 0], sizes = [8, 30], strides = [1, 1]} : vector<528x30xf32> to vector<8x30xf32>
    %c0_87 = arith.constant 0 : index
    %c1740 = arith.constant 1740 : index
    %156 = vector.load %arg13[%c0_87, %c1740] : memref<8x1980xf32, #tpu.memory_space<vmem>>, vector<8x30xf32>
    tpu.vector_store %arg13[%c0_87, %c1740], %155 {strides = array<i32>} : memref<8x1980xf32, #tpu.memory_space<vmem>>, vector<8x30xf32>,
    %157 = vector.extract_strided_slice %38 {offsets = [472, 0], sizes = [8, 30], strides = [1, 1]} : vector<528x30xf32> to vector<8x30xf32>
    %c0_88 = arith.constant 0 : index
    %c1770 = arith.constant 1770 : index
    %158 = vector.load %arg13[%c0_88, %c1770] : memref<8x1980xf32, #tpu.memory_space<vmem>>, vector<8x30xf32>
    tpu.vector_store %arg13[%c0_88, %c1770], %157 {strides = array<i32>} : memref<8x1980xf32, #tpu.memory_space<vmem>>, vector<8x30xf32>,
    %159 = vector.extract_strided_slice %38 {offsets = [480, 0], sizes = [8, 30], strides = [1, 1]} : vector<528x30xf32> to vector<8x30xf32>
    %c0_89 = arith.constant 0 : index
    %c1800 = arith.constant 1800 : index
    %160 = vector.load %arg13[%c0_89, %c1800] : memref<8x1980xf32, #tpu.memory_space<vmem>>, vector<8x30xf32>
    tpu.vector_store %arg13[%c0_89, %c1800], %159 {strides = array<i32>} : memref<8x1980xf32, #tpu.memory_space<vmem>>, vector<8x30xf32>,
    %161 = vector.extract_strided_slice %38 {offsets = [488, 0], sizes = [8, 30], strides = [1, 1]} : vector<528x30xf32> to vector<8x30xf32>
    %c0_90 = arith.constant 0 : index
    %c1830 = arith.constant 1830 : index
    %162 = vector.load %arg13[%c0_90, %c1830] : memref<8x1980xf32, #tpu.memory_space<vmem>>, vector<8x30xf32>
    tpu.vector_store %arg13[%c0_90, %c1830], %161 {strides = array<i32>} : memref<8x1980xf32, #tpu.memory_space<vmem>>, vector<8x30xf32>,
    %163 = vector.extract_strided_slice %38 {offsets = [496, 0], sizes = [8, 30], strides = [1, 1]} : vector<528x30xf32> to vector<8x30xf32>
    %c0_91 = arith.constant 0 : index
    %c1860 = arith.constant 1860 : index
    %164 = vector.load %arg13[%c0_91, %c1860] : memref<8x1980xf32, #tpu.memory_space<vmem>>, vector<8x30xf32>
    tpu.vector_store %arg13[%c0_91, %c1860], %163 {strides = array<i32>} : memref<8x1980xf32, #tpu.memory_space<vmem>>, vector<8x30xf32>,
    %165 = vector.extract_strided_slice %38 {offsets = [504, 0], sizes = [8, 30], strides = [1, 1]} : vector<528x30xf32> to vector<8x30xf32>
    %c0_92 = arith.constant 0 : index
    %c1890 = arith.constant 1890 : index
    %166 = vector.load %arg13[%c0_92, %c1890] : memref<8x1980xf32, #tpu.memory_space<vmem>>, vector<8x30xf32>
    tpu.vector_store %arg13[%c0_92, %c1890], %165 {strides = array<i32>} : memref<8x1980xf32, #tpu.memory_space<vmem>>, vector<8x30xf32>,
    %167 = vector.extract_strided_slice %38 {offsets = [512, 0], sizes = [8, 30], strides = [1, 1]} : vector<528x30xf32> to vector<8x30xf32>
    %c0_93 = arith.constant 0 : index
    %c1920 = arith.constant 1920 : index
    %168 = vector.load %arg13[%c0_93, %c1920] : memref<8x1980xf32, #tpu.memory_space<vmem>>, vector<8x30xf32>
    tpu.vector_store %arg13[%c0_93, %c1920], %167 {strides = array<i32>} : memref<8x1980xf32, #tpu.memory_space<vmem>>, vector<8x30xf32>,
    %169 = vector.extract_strided_slice %38 {offsets = [520, 0], sizes = [8, 30], strides = [1, 1]} : vector<528x30xf32> to vector<8x30xf32>
    %c0_94 = arith.constant 0 : index
    %c1950 = arith.constant 1950 : index
    %170 = vector.load %arg13[%c0_94, %c1950] : memref<8x1980xf32, #tpu.memory_space<vmem>>, vector<8x30xf32>
    tpu.vector_store %arg13[%c0_94, %c1950], %169 {strides = array<i32>} : memref<8x1980xf32, #tpu.memory_space<vmem>>, vector<8x30xf32>,
    %c0_95 = arith.constant 0 : index
    %c0_96 = arith.constant 0 : index
    %171 = vector.load %arg13[%c0_95, %c0_96] : memref<8x1980xf32, #tpu.memory_space<vmem>>, vector<8x1980xf32>
    %c0_97 = arith.constant 0 : index
    %c0_98 = arith.constant 0 : index
    %172 = vector.load %arg8[%c0_97, %c0_98] : memref<1980x50xf32, #tpu.memory_space<vmem>>, vector<1980x50xf32>
    %cst_99 = arith.constant dense<0.000000e+00> : vector<8x50xf32>
    %173 = tpu.matmul %171, %172, %cst_99 {dimension_numbers = #tpu.dot_dimension_numbers<[1], [0], [0], [1], [0, 0, 1, 1], [], []>} : vector<8x1980xf32>, vector<1980x50xf32>, vector<8x50xf32> -> vector<8x50xf32>
    %c0_100 = arith.constant 0 : index
    %c0_101 = arith.constant 0 : index
    %174 = vector.load %arg9[%c0_100, %c0_101] : memref<1x50xf32, #tpu.memory_space<vmem>>, vector<1x50xf32>
    %175 = vector.broadcast %174 : vector<1x50xf32> to vector<8x50xf32>
    %176 = arith.addf %173, %175 : vector<8x50xf32>
    %cst_102 = arith.constant 0.000000e+00 : f32
    %177 = vector.broadcast %cst_102 : f32 to vector<8x50xf32>
    %178 = arith.maximumf %176, %177 : vector<8x50xf32>
    %c0_103 = arith.constant 0 : index
    %c0_104 = arith.constant 0 : index
    %179 = vector.load %arg10[%c0_103, %c0_104] : memref<50x2xf32, #tpu.memory_space<vmem>>, vector<50x2xf32>
    %cst_105 = arith.constant dense<0.000000e+00> : vector<8x2xf32>
    %180 = tpu.matmul %178, %179, %cst_105 {dimension_numbers = #tpu.dot_dimension_numbers<[1], [0], [0], [1], [0, 0, 1, 1], [], []>} : vector<8x50xf32>, vector<50x2xf32>, vector<8x2xf32> -> vector<8x2xf32>
    %c0_106 = arith.constant 0 : index
    %c0_107 = arith.constant 0 : index
    %181 = vector.load %arg11[%c0_106, %c0_107] : memref<1x2xf32, #tpu.memory_space<vmem>>, vector<1x2xf32>
    %182 = vector.broadcast %181 : vector<1x2xf32> to vector<8x2xf32>
    %183 = arith.addf %180, %182 : vector<8x2xf32>
    %c0_108 = arith.constant 0 : index
    %c0_109 = arith.constant 0 : index
    %184 = vector.load %arg12[%c0_108, %c0_109] : memref<8x2xf32, #tpu.memory_space<vmem>>, vector<8x2xf32>
    tpu.vector_store %arg12[%c0_108, %c0_109], %183 {strides = array<i32>} : memref<8x2xf32, #tpu.memory_space<vmem>>, vector<8x2xf32>,
    return
  }
  func.func @transform_0(%arg0: i32) -> (i32, i32) {
    %c0_i32 = arith.constant 0 : i32
    %c0_i32_0 = arith.constant 0 : i32
    return %arg0, %c0_i32 : i32, i32
  }
  func.func @transform_1(%arg0: i32) -> (i32, i32) {
    %c0_i32 = arith.constant 0 : i32
    %c0_i32_0 = arith.constant 0 : i32
    %c0_i32_1 = arith.constant 0 : i32
    return %c0_i32, %c0_i32_0 : i32, i32
  }
  func.func @transform_2(%arg0: i32) -> (i32, i32) {
    %c0_i32 = arith.constant 0 : i32
    %c0_i32_0 = arith.constant 0 : i32
    %c0_i32_1 = arith.constant 0 : i32
    return %c0_i32, %c0_i32_0 : i32, i32
  }
  func.func @transform_3(%arg0: i32) -> (i32, i32) {
    %c0_i32 = arith.constant 0 : i32
    %c0_i32_0 = arith.constant 0 : i32
    %c0_i32_1 = arith.constant 0 : i32
    return %c0_i32, %c0_i32_0 : i32, i32
  }
  func.func @transform_4(%arg0: i32) -> (i32, i32) {
    %c0_i32 = arith.constant 0 : i32
    %c0_i32_0 = arith.constant 0 : i32
    %c0_i32_1 = arith.constant 0 : i32
    return %c0_i32, %c0_i32_0 : i32, i32
  }
  func.func @transform_5(%arg0: i32) -> (i32, i32, i32) {
    %c0_i32 = arith.constant 0 : i32
    %c0_i32_0 = arith.constant 0 : i32
    %c0_i32_1 = arith.constant 0 : i32
    %c0_i32_2 = arith.constant 0 : i32
    return %c0_i32, %c0_i32_0, %c0_i32_1 : i32, i32, i32
  }
  func.func @transform_6(%arg0: i32) -> (i32, i32) {
    %c0_i32 = arith.constant 0 : i32
    %c0_i32_0 = arith.constant 0 : i32
    %c0_i32_1 = arith.constant 0 : i32
    return %c0_i32, %c0_i32_0 : i32, i32
  }
  func.func @transform_7(%arg0: i32) -> (i32, i32) {
    %c0_i32 = arith.constant 0 : i32
    %c0_i32_0 = arith.constant 0 : i32
    %c0_i32_1 = arith.constant 0 : i32
    return %c0_i32, %c0_i32_0 : i32, i32
  }
  func.func @transform_8(%arg0: i32) -> (i32, i32) {
    %c0_i32 = arith.constant 0 : i32
    %c0_i32_0 = arith.constant 0 : i32
    %c0_i32_1 = arith.constant 0 : i32
    return %c0_i32, %c0_i32_0 : i32, i32
  }
  func.func @transform_9(%arg0: i32) -> (i32, i32) {
    %c0_i32 = arith.constant 0 : i32
    %c0_i32_0 = arith.constant 0 : i32
    %c0_i32_1 = arith.constant 0 : i32
    return %c0_i32, %c0_i32_0 : i32, i32
  }
  func.func @transform_10(%arg0: i32) -> (i32, i32) {
    %c0_i32 = arith.constant 0 : i32
    %c0_i32_0 = arith.constant 0 : i32
    %c0_i32_1 = arith.constant 0 : i32
    return %c0_i32, %c0_i32_0 : i32, i32
  }
  func.func @transform_11(%arg0: i32) -> (i32, i32) {
    %c0_i32 = arith.constant 0 : i32
    %c0_i32_0 = arith.constant 0 : i32
    return %arg0, %c0_i32 : i32, i32
  }
}

</mosaic_0001>

<llo_original>
// kernel: cnn_forward.1
$region0: #{cnn_forward.1}
  #allocation0 [shape = 'u32[]', space=smem, size = 0x4, offset = 0x4, fixed_abs, tag = 'smem constant byte address 0x4 - core index']
  #allocation1 [shape = 'u32[144,128]{1,0:T(1,128)}', space=vmem, size = 0x12000, scoped, tag = 'internal scratch']
  #allocation2 [shape = 'f32[8,1980]{1,0:T(8,128)}', space=vmem, size = 0x10000, scoped, tag = 'scratch operand']
  %s0 = inlined_call_operand.vmem [shape: f32[2112,80], index: 0, kind: input, shape index: {}]
  %s1 = inlined_call_operand.vmem [shape: f32[80,120], index: 1, kind: input, shape index: {}]
  %s2 = inlined_call_operand.vmem [shape: f32[1,120], index: 2, kind: input, shape index: {}]
  %s3 = inlined_call_operand.vmem [shape: f32[120,30], index: 3, kind: input, shape index: {}]
  %s4 = inlined_call_operand.vmem [shape: f32[1,30], index: 4, kind: input, shape index: {}]
  %s5 = inlined_call_operand.vmem [shape: f32[4,30,30], index: 5, kind: input, shape index: {}]
  %s6 = inlined_call_operand.vmem [shape: f32[1,30], index: 6, kind: input, shape index: {}]
  %s7 = inlined_call_operand.vmem [shape: f32[1980,50], index: 7, kind: input, shape index: {}]
  %s8 = inlined_call_operand.vmem [shape: f32[1,50], index: 8, kind: input, shape index: {}]
  %s9 = inlined_call_operand.vmem [shape: f32[50,2], index: 9, kind: input, shape index: {}]
  %s10 = inlined_call_operand.vmem [shape: f32[1,2], index: 10, kind: input, shape index: {}]
  %s11 = inlined_call_operand.vmem [shape: f32[8,2], index: 11, kind: output, shape index: {}]
  %s12 = sld [smem:[#allocation0]]
  $region54: #{cnn_forward.1} parent=0
    _
  %s14 = ssub.s32 1, %s12
  %s15 = scalar_select 0, %s14, %s12
  // Predicated region
  $region2: #{cnn_forward.1} parent=0 // pred_check
    _
  $region3: #{cnn_forward.1} parent=0 // pred_check_branch
    %17 = sbr.rel (0) target = $region5
  $region4: #{cnn_forward.1} parent=0 // pred_region
    _
  $region5: #{cnn_forward.1} parent=0 // pred_fallthru
    _
  // Predicated region
  $region6: #{cnn_forward.1} parent=0 // pred_check
    _
  $region7: #{cnn_forward.1} parent=0 // pred_check_branch
    %19 = sbr.rel (0) target = $region9
  $region8: #{cnn_forward.1} parent=0 // pred_region
    _
  $region9: #{cnn_forward.1} parent=0 // pred_fallthru
    _
  // Predicated region
  $region10: #{cnn_forward.1} parent=0 // pred_check
    _
  $region11: #{cnn_forward.1} parent=0 // pred_check_branch
    %21 = sbr.rel (0) target = $region13
  $region12: #{cnn_forward.1} parent=0 // pred_region
    _
  $region13: #{cnn_forward.1} parent=0 // pred_fallthru
    _
  // Predicated region
  $region14: #{cnn_forward.1} parent=0 // pred_check
    _
  $region15: #{cnn_forward.1} parent=0 // pred_check_branch
    %23 = sbr.rel (0) target = $region17
  $region16: #{cnn_forward.1} parent=0 // pred_region
    _
  $region17: #{cnn_forward.1} parent=0 // pred_fallthru
    _
  // Predicated region
  $region18: #{cnn_forward.1} parent=0 // pred_check
    _
  $region19: #{cnn_forward.1} parent=0 // pred_check_branch
    %25 = sbr.rel (0) target = $region21
  $region20: #{cnn_forward.1} parent=0 // pred_region
    _
  $region21: #{cnn_forward.1} parent=0 // pred_fallthru
    _
  // Predicated region
  $region22: #{cnn_forward.1} parent=0 // pred_check
    _
  $region23: #{cnn_forward.1} parent=0 // pred_check_branch
    %27 = sbr.rel (0) target = $region25
  $region24: #{cnn_forward.1} parent=0 // pred_region
    _
  $region25: #{cnn_forward.1} parent=0 // pred_fallthru
    _
  // Predicated region
  $region26: #{cnn_forward.1} parent=0 // pred_check
    _
  $region27: #{cnn_forward.1} parent=0 // pred_check_branch
    %29 = sbr.rel (0) target = $region29
  $region28: #{cnn_forward.1} parent=0 // pred_region
    _
  $region29: #{cnn_forward.1} parent=0 // pred_fallthru
    _
  // Predicated region
  $region30: #{cnn_forward.1} parent=0 // pred_check
    _
  $region31: #{cnn_forward.1} parent=0 // pred_check_branch
    %31 = sbr.rel (0) target = $region33
  $region32: #{cnn_forward.1} parent=0 // pred_region
    _
  $region33: #{cnn_forward.1} parent=0 // pred_fallthru
    _
  // Predicated region
  $region34: #{cnn_forward.1} parent=0 // pred_check
    _
  $region35: #{cnn_forward.1} parent=0 // pred_check_branch
    %33 = sbr.rel (0) target = $region37
  $region36: #{cnn_forward.1} parent=0 // pred_region
    _
  $region37: #{cnn_forward.1} parent=0 // pred_fallthru
    _
  // Predicated region
  $region38: #{cnn_forward.1} parent=0 // pred_check
    _
  $region39: #{cnn_forward.1} parent=0 // pred_check_branch
    %35 = sbr.rel (0) target = $region41
  $region40: #{cnn_forward.1} parent=0 // pred_region
    _
  $region41: #{cnn_forward.1} parent=0 // pred_fallthru
    _
  // Predicated region
  $region42: #{cnn_forward.1} parent=0 // pred_check
    _
  $region43: #{cnn_forward.1} parent=0 // pred_check_branch
    %37 = sbr.rel (0) target = $region45
  $region44: #{cnn_forward.1} parent=0 // pred_region
    _
  $region45: #{cnn_forward.1} parent=0 // pred_fallthru
    _
  %v38 = vld [vmem:[%s0] sm:$0xff]
  %v39 = vld [vmem:[%s0 + $0x8] sm:$0xff]
  %v40 = vld [vmem:[%s0 + $0x10] sm:$0xff]
  %v41 = vld [vmem:[%s0 + $0x18] sm:$0xff]
  %v42 = vld [vmem:[%s0 + $0x20] sm:$0xff]
  %v43 = vld [vmem:[%s0 + $0x28] sm:$0xff]
  %v44 = vld [vmem:[%s0 + $0x30] sm:$0xff]
  %v45 = vld [vmem:[%s0 + $0x38] sm:$0xff]
  %v46 = vld [vmem:[%s0 + $0x40] sm:$0xff]
  %v47 = vld [vmem:[%s0 + $0x48] sm:$0xff]
  %v48 = vld [vmem:[%s0 + $0x50] sm:$0xff]
  %v49 = vld [vmem:[%s0 + $0x58] sm:$0xff]
  %v50 = vld [vmem:[%s0 + $0x60] sm:$0xff]
  %v51 = vld [vmem:[%s0 + $0x68] sm:$0xff]
  %v52 = vld [vmem:[%s0 + $0x70] sm:$0xff]
  %v53 = vld [vmem:[%s0 + $0x78] sm:$0xff]
  %v54 = vld [vmem:[%s0 + $0x80] sm:$0xff]
  %v55 = vld [vmem:[%s0 + $0x88] sm:$0xff]
  %v56 = vld [vmem:[%s0 + $0x90] sm:$0xff]
  %v57 = vld [vmem:[%s0 + $0x98] sm:$0xff]
  %v58 = vld [vmem:[%s0 + $0xa0] sm:$0xff]
  %v59 = vld [vmem:[%s0 + $0xa8] sm:$0xff]
  %v60 = vld [vmem:[%s0 + $0xb0] sm:$0xff]
  %v61 = vld [vmem:[%s0 + $0xb8] sm:$0xff]
  %v62 = vld [vmem:[%s0 + $0xc0] sm:$0xff]
  %v63 = vld [vmem:[%s0 + $0xc8] sm:$0xff]
  %v64 = vld [vmem:[%s0 + $0xd0] sm:$0xff]
  %v65 = vld [vmem:[%s0 + $0xd8] sm:$0xff]
  %v66 = vld [vmem:[%s0 + $0xe0] sm:$0xff]
  %v67 = vld [vmem:[%s0 + $0xe8] sm:$0xff]
  %v68 = vld [vmem:[%s0 + $0xf0] sm:$0xff]
  %v69 = vld [vmem:[%s0 + $0xf8] sm:$0xff]
  %v70 = vld [vmem:[%s0 + $0x100] sm:$0xff]
  %v71 = vld [vmem:[%s0 + $0x108] sm:$0xff]
  %v72 = vld [vmem:[%s0 + $0x110] sm:$0xff]
  %v73 = vld [vmem:[%s0 + $0x118] sm:$0xff]
  %v74 = vld [vmem:[%s0 + $0x120] sm:$0xff]
  %v75 = vld [vmem:[%s0 + $0x128] sm:$0xff]
  %v76 = vld [vmem:[%s0 + $0x130] sm:$0xff]
  %v77 = vld [vmem:[%s0 + $0x138] sm:$0xff]
  %v78 = vld [vmem:[%s0 + $0x140] sm:$0xff]
  %v79 = vld [vmem:[%s0 + $0x148] sm:$0xff]
  %v80 = vld [vmem:[%s0 + $0x150] sm:$0xff]
  %v81 = vld [vmem:[%s0 + $0x158] sm:$0xff]
  %v82 = vld [vmem:[%s0 + $0x160] sm:$0xff]
  %v83 = vld [vmem:[%s0 + $0x168] sm:$0xff]
  %v84 = vld [vmem:[%s0 + $0x170] sm:$0xff]
  %v85 = vld [vmem:[%s0 + $0x178] sm:$0xff]
  %v86 = vld [vmem:[%s0 + $0x180] sm:$0xff]
  %v87 = vld [vmem:[%s0 + $0x188] sm:$0xff]
  %v88 = vld [vmem:[%s0 + $0x190] sm:$0xff]
  %v89 = vld [vmem:[%s0 + $0x198] sm:$0xff]
  %v90 = vld [vmem:[%s0 + $0x1a0] sm:$0xff]
  %v91 = vld [vmem:[%s0 + $0x1a8] sm:$0xff]
  %v92 = vld [vmem:[%s0 + $0x1b0] sm:$0xff]
  %v93 = vld [vmem:[%s0 + $0x1b8] sm:$0xff]
  %v94 = vld [vmem:[%s0 + $0x1c0] sm:$0xff]
  %v95 = vld [vmem:[%s0 + $0x1c8] sm:$0xff]
  %v96 = vld [vmem:[%s0 + $0x1d0] sm:$0xff]
  %v97 = vld [vmem:[%s0 + $0x1d8] sm:$0xff]
  %v98 = vld [vmem:[%s0 + $0x1e0] sm:$0xff]
  %v99 = vld [vmem:[%s0 + $0x1e8] sm:$0xff]
  %v100 = vld [vmem:[%s0 + $0x1f0] sm:$0xff]
  %v101 = vld [vmem:[%s0 + $0x1f8] sm:$0xff]
  %v102 = vld [vmem:[%s0 + $0x200] sm:$0xff]
  %v103 = vld [vmem:[%s0 + $0x208] sm:$0xff]
  %v104 = vld [vmem:[%s0 + $0x210] sm:$0xff]
  %v105 = vld [vmem:[%s0 + $0x218] sm:$0xff]
  %v106 = vld [vmem:[%s0 + $0x220] sm:$0xff]
  %v107 = vld [vmem:[%s0 + $0x228] sm:$0xff]
  %v108 = vld [vmem:[%s0 + $0x230] sm:$0xff]
  %v109 = vld [vmem:[%s0 + $0x238] sm:$0xff]
  %v110 = vld [vmem:[%s0 + $0x240] sm:$0xff]
  %v111 = vld [vmem:[%s0 + $0x248] sm:$0xff]
  %v112 = vld [vmem:[%s0 + $0x250] sm:$0xff]
  %v113 = vld [vmem:[%s0 + $0x258] sm:$0xff]
  %v114 = vld [vmem:[%s0 + $0x260] sm:$0xff]
  %v115 = vld [vmem:[%s0 + $0x268] sm:$0xff]
  %v116 = vld [vmem:[%s0 + $0x270] sm:$0xff]
  %v117 = vld [vmem:[%s0 + $0x278] sm:$0xff]
  %v118 = vld [vmem:[%s0 + $0x280] sm:$0xff]
  %v119 = vld [vmem:[%s0 + $0x288] sm:$0xff]
  %v120 = vld [vmem:[%s0 + $0x290] sm:$0xff]
  %v121 = vld [vmem:[%s0 + $0x298] sm:$0xff]
  %v122 = vld [vmem:[%s0 + $0x2a0] sm:$0xff]
  %v123 = vld [vmem:[%s0 + $0x2a8] sm:$0xff]
  %v124 = vld [vmem:[%s0 + $0x2b0] sm:$0xff]
  %v125 = vld [vmem:[%s0 + $0x2b8] sm:$0xff]
  %v126 = vld [vmem:[%s0 + $0x2c0] sm:$0xff]
  %v127 = vld [vmem:[%s0 + $0x2c8] sm:$0xff]
  %v128 = vld [vmem:[%s0 + $0x2d0] sm:$0xff]
  %v129 = vld [vmem:[%s0 + $0x2d8] sm:$0xff]
  %v130 = vld [vmem:[%s0 + $0x2e0] sm:$0xff]
  %v131 = vld [vmem:[%s0 + $0x2e8] sm:$0xff]
  %v132 = vld [vmem:[%s0 + $0x2f0] sm:$0xff]
  %v133 = vld [vmem:[%s0 + $0x2f8] sm:$0xff]
  %v134 = vld [vmem:[%s0 + $0x300] sm:$0xff]
  %v135 = vld [vmem:[%s0 + $0x308] sm:$0xff]
  %v136 = vld [vmem:[%s0 + $0x310] sm:$0xff]
  %v137 = vld [vmem:[%s0 + $0x318] sm:$0xff]
  %v138 = vld [vmem:[%s0 + $0x320] sm:$0xff]
  %v139 = vld [vmem:[%s0 + $0x328] sm:$0xff]
  %v140 = vld [vmem:[%s0 + $0x330] sm:$0xff]
  %v141 = vld [vmem:[%s0 + $0x338] sm:$0xff]
  %v142 = vld [vmem:[%s0 + $0x340] sm:$0xff]
  %v143 = vld [vmem:[%s0 + $0x348] sm:$0xff]
  %v144 = vld [vmem:[%s0 + $0x350] sm:$0xff]
  %v145 = vld [vmem:[%s0 + $0x358] sm:$0xff]
  %v146 = vld [vmem:[%s0 + $0x360] sm:$0xff]
  %v147 = vld [vmem:[%s0 + $0x368] sm:$0xff]
  %v148 = vld [vmem:[%s0 + $0x370] sm:$0xff]
  %v149 = vld [vmem:[%s0 + $0x378] sm:$0xff]
  %v150 = vld [vmem:[%s0 + $0x380] sm:$0xff]
  %v151 = vld [vmem:[%s0 + $0x388] sm:$0xff]
  %v152 = vld [vmem:[%s0 + $0x390] sm:$0xff]
  %v153 = vld [vmem:[%s0 + $0x398] sm:$0xff]
  %v154 = vld [vmem:[%s0 + $0x3a0] sm:$0xff]
  %v155 = vld [vmem:[%s0 + $0x3a8] sm:$0xff]
  %v156 = vld [vmem:[%s0 + $0x3b0] sm:$0xff]
  %v157 = vld [vmem:[%s0 + $0x3b8] sm:$0xff]
  %v158 = vld [vmem:[%s0 + $0x3c0] sm:$0xff]
  %v159 = vld [vmem:[%s0 + $0x3c8] sm:$0xff]
  %v160 = vld [vmem:[%s0 + $0x3d0] sm:$0xff]
  %v161 = vld [vmem:[%s0 + $0x3d8] sm:$0xff]
  %v162 = vld [vmem:[%s0 + $0x3e0] sm:$0xff]
  %v163 = vld [vmem:[%s0 + $0x3e8] sm:$0xff]
  %v164 = vld [vmem:[%s0 + $0x3f0] sm:$0xff]
  %v165 = vld [vmem:[%s0 + $0x3f8] sm:$0xff]
  %v166 = vld [vmem:[%s0 + $0x400] sm:$0xff]
  %v167 = vld [vmem:[%s0 + $0x408] sm:$0xff]
  %v168 = vld [vmem:[%s0 + $0x410] sm:$0xff]
  %v169 = vld [vmem:[%s0 + $0x418] sm:$0xff]
  %v170 = vld [vmem:[%s0 + $0x420] sm:$0xff]
  %v171 = vld [vmem:[%s0 + $0x428] sm:$0xff]
  %v172 = vld [vmem:[%s0 + $0x430] sm:$0xff]
  %v173 = vld [vmem:[%s0 + $0x438] sm:$0xff]
  %v174 = vld [vmem:[%s0 + $0x440] sm:$0xff]
  %v175 = vld [vmem:[%s0 + $0x448] sm:$0xff]
  %v176 = vld [vmem:[%s0 + $0x450] sm:$0xff]
  %v177 = vld [vmem:[%s0 + $0x458] sm:$0xff]
  %v178 = vld [vmem:[%s0 + $0x460] sm:$0xff]
  %v179 = vld [vmem:[%s0 + $0x468] sm:$0xff]
  %v180 = vld [vmem:[%s0 + $0x470] sm:$0xff]
  %v181 = vld [vmem:[%s0 + $0x478] sm:$0xff]
  %v182 = vld [vmem:[%s0 + $0x480] sm:$0xff]
  %v183 = vld [vmem:[%s0 + $0x488] sm:$0xff]
  %v184 = vld [vmem:[%s0 + $0x490] sm:$0xff]
  %v185 = vld [vmem:[%s0 + $0x498] sm:$0xff]
  %v186 = vld [vmem:[%s0 + $0x4a0] sm:$0xff]
  %v187 = vld [vmem:[%s0 + $0x4a8] sm:$0xff]
  %v188 = vld [vmem:[%s0 + $0x4b0] sm:$0xff]
  %v189 = vld [vmem:[%s0 + $0x4b8] sm:$0xff]
  %v190 = vld [vmem:[%s0 + $0x4c0] sm:$0xff]
  %v191 = vld [vmem:[%s0 + $0x4c8] sm:$0xff]
  %v192 = vld [vmem:[%s0 + $0x4d0] sm:$0xff]
  %v193 = vld [vmem:[%s0 + $0x4d8] sm:$0xff]
  %v194 = vld [vmem:[%s0 + $0x4e0] sm:$0xff]
  %v195 = vld [vmem:[%s0 + $0x4e8] sm:$0xff]
  %v196 = vld [vmem:[%s0 + $0x4f0] sm:$0xff]
  %v197 = vld [vmem:[%s0 + $0x4f8] sm:$0xff]
  %v198 = vld [vmem:[%s0 + $0x500] sm:$0xff]
  %v199 = vld [vmem:[%s0 + $0x508] sm:$0xff]
  %v200 = vld [vmem:[%s0 + $0x510] sm:$0xff]
  %v201 = vld [vmem:[%s0 + $0x518] sm:$0xff]
  %v202 = vld [vmem:[%s0 + $0x520] sm:$0xff]
  %v203 = vld [vmem:[%s0 + $0x528] sm:$0xff]
  %v204 = vld [vmem:[%s0 + $0x530] sm:$0xff]
  %v205 = vld [vmem:[%s0 + $0x538] sm:$0xff]
  %v206 = vld [vmem:[%s0 + $0x540] sm:$0xff]
  %v207 = vld [vmem:[%s0 + $0x548] sm:$0xff]
  %v208 = vld [vmem:[%s0 + $0x550] sm:$0xff]
  %v209 = vld [vmem:[%s0 + $0x558] sm:$0xff]
  %v210 = vld [vmem:[%s0 + $0x560] sm:$0xff]
  %v211 = vld [vmem:[%s0 + $0x568] sm:$0xff]
  %v212 = vld [vmem:[%s0 + $0x570] sm:$0xff]
  %v213 = vld [vmem:[%s0 + $0x578] sm:$0xff]
  %v214 = vld [vmem:[%s0 + $0x580] sm:$0xff]
  %v215 = vld [vmem:[%s0 + $0x588] sm:$0xff]
  %v216 = vld [vmem:[%s0 + $0x590] sm:$0xff]
  %v217 = vld [vmem:[%s0 + $0x598] sm:$0xff]
  %v218 = vld [vmem:[%s0 + $0x5a0] sm:$0xff]
  %v219 = vld [vmem:[%s0 + $0x5a8] sm:$0xff]
  %v220 = vld [vmem:[%s0 + $0x5b0] sm:$0xff]
  %v221 = vld [vmem:[%s0 + $0x5b8] sm:$0xff]
  %v222 = vld [vmem:[%s0 + $0x5c0] sm:$0xff]
  %v223 = vld [vmem:[%s0 + $0x5c8] sm:$0xff]
  %v224 = vld [vmem:[%s0 + $0x5d0] sm:$0xff]
  %v225 = vld [vmem:[%s0 + $0x5d8] sm:$0xff]
  %v226 = vld [vmem:[%s0 + $0x5e0] sm:$0xff]
  %v227 = vld [vmem:[%s0 + $0x5e8] sm:$0xff]
  %v228 = vld [vmem:[%s0 + $0x5f0] sm:$0xff]
  %v229 = vld [vmem:[%s0 + $0x5f8] sm:$0xff]
  %v230 = vld [vmem:[%s0 + $0x600] sm:$0xff]
  %v231 = vld [vmem:[%s0 + $0x608] sm:$0xff]
  %v232 = vld [vmem:[%s0 + $0x610] sm:$0xff]
  %v233 = vld [vmem:[%s0 + $0x618] sm:$0xff]
  %v234 = vld [vmem:[%s0 + $0x620] sm:$0xff]
  %v235 = vld [vmem:[%s0 + $0x628] sm:$0xff]
  %v236 = vld [vmem:[%s0 + $0x630] sm:$0xff]
  %v237 = vld [vmem:[%s0 + $0x638] sm:$0xff]
  %v238 = vld [vmem:[%s0 + $0x640] sm:$0xff]
  %v239 = vld [vmem:[%s0 + $0x648] sm:$0xff]
  %v240 = vld [vmem:[%s0 + $0x650] sm:$0xff]
  %v241 = vld [vmem:[%s0 + $0x658] sm:$0xff]
  %v242 = vld [vmem:[%s0 + $0x660] sm:$0xff]
  %v243 = vld [vmem:[%s0 + $0x668] sm:$0xff]
  %v244 = vld [vmem:[%s0 + $0x670] sm:$0xff]
  %v245 = vld [vmem:[%s0 + $0x678] sm:$0xff]
  %v246 = vld [vmem:[%s0 + $0x680] sm:$0xff]
  %v247 = vld [vmem:[%s0 + $0x688] sm:$0xff]
  %v248 = vld [vmem:[%s0 + $0x690] sm:$0xff]
  %v249 = vld [vmem:[%s0 + $0x698] sm:$0xff]
  %v250 = vld [vmem:[%s0 + $0x6a0] sm:$0xff]
  %v251 = vld [vmem:[%s0 + $0x6a8] sm:$0xff]
  %v252 = vld [vmem:[%s0 + $0x6b0] sm:$0xff]
  %v253 = vld [vmem:[%s0 + $0x6b8] sm:$0xff]
  %v254 = vld [vmem:[%s0 + $0x6c0] sm:$0xff]
  %v255 = vld [vmem:[%s0 + $0x6c8] sm:$0xff]
  %v256 = vld [vmem:[%s0 + $0x6d0] sm:$0xff]
  %v257 = vld [vmem:[%s0 + $0x6d8] sm:$0xff]
  %v258 = vld [vmem:[%s0 + $0x6e0] sm:$0xff]
  %v259 = vld [vmem:[%s0 + $0x6e8] sm:$0xff]
  %v260 = vld [vmem:[%s0 + $0x6f0] sm:$0xff]
  %v261 = vld [vmem:[%s0 + $0x6f8] sm:$0xff]
  %v262 = vld [vmem:[%s0 + $0x700] sm:$0xff]
  %v263 = vld [vmem:[%s0 + $0x708] sm:$0xff]
  %v264 = vld [vmem:[%s0 + $0x710] sm:$0xff]
  %v265 = vld [vmem:[%s0 + $0x718] sm:$0xff]
  %v266 = vld [vmem:[%s0 + $0x720] sm:$0xff]
  %v267 = vld [vmem:[%s0 + $0x728] sm:$0xff]
  %v268 = vld [vmem:[%s0 + $0x730] sm:$0xff]
  %v269 = vld [vmem:[%s0 + $0x738] sm:$0xff]
  %v270 = vld [vmem:[%s0 + $0x740] sm:$0xff]
  %v271 = vld [vmem:[%s0 + $0x748] sm:$0xff]
  %v272 = vld [vmem:[%s0 + $0x750] sm:$0xff]
  %v273 = vld [vmem:[%s0 + $0x758] sm:$0xff]
  %v274 = vld [vmem:[%s0 + $0x760] sm:$0xff]
  %v275 = vld [vmem:[%s0 + $0x768] sm:$0xff]
  %v276 = vld [vmem:[%s0 + $0x770] sm:$0xff]
  %v277 = vld [vmem:[%s0 + $0x778] sm:$0xff]
  %v278 = vld [vmem:[%s0 + $0x780] sm:$0xff]
  %v279 = vld [vmem:[%s0 + $0x788] sm:$0xff]
  %v280 = vld [vmem:[%s0 + $0x790] sm:$0xff]
  %v281 = vld [vmem:[%s0 + $0x798] sm:$0xff]
  %v282 = vld [vmem:[%s0 + $0x7a0] sm:$0xff]
  %v283 = vld [vmem:[%s0 + $0x7a8] sm:$0xff]
  %v284 = vld [vmem:[%s0 + $0x7b0] sm:$0xff]
  %v285 = vld [vmem:[%s0 + $0x7b8] sm:$0xff]
  %v286 = vld [vmem:[%s0 + $0x7c0] sm:$0xff]
  %v287 = vld [vmem:[%s0 + $0x7c8] sm:$0xff]
  %v288 = vld [vmem:[%s0 + $0x7d0] sm:$0xff]
  %v289 = vld [vmem:[%s0 + $0x7d8] sm:$0xff]
  %v290 = vld [vmem:[%s0 + $0x7e0] sm:$0xff]
  %v291 = vld [vmem:[%s0 + $0x7e8] sm:$0xff]
  %v292 = vld [vmem:[%s0 + $0x7f0] sm:$0xff]
  %v293 = vld [vmem:[%s0 + $0x7f8] sm:$0xff]
  %v294 = vld [vmem:[%s0 + $0x800] sm:$0xff]
  %v295 = vld [vmem:[%s0 + $0x808] sm:$0xff]
  %v296 = vld [vmem:[%s0 + $0x810] sm:$0xff]
  %v297 = vld [vmem:[%s0 + $0x818] sm:$0xff]
  %v298 = vld [vmem:[%s0 + $0x820] sm:$0xff]
  %v299 = vld [vmem:[%s0 + $0x828] sm:$0xff]
  %v300 = vld [vmem:[%s0 + $0x830] sm:$0xff]
  %v301 = vld [vmem:[%s0 + $0x838] sm:$0xff]
  %v302 = vld [vmem:[%s1] sm:$0xff]
  %v303 = vld [vmem:[%s1 + $0x8] sm:$0xff]
  %v304 = vld [vmem:[%s1 + $0x10] sm:$0xff]
  %v305 = vld [vmem:[%s1 + $0x18] sm:$0xff]
  %v306 = vld [vmem:[%s1 + $0x20] sm:$0xff]
  %v307 = vld [vmem:[%s1 + $0x28] sm:$0xff]
  %v308 = vld [vmem:[%s1 + $0x30] sm:$0xff]
  %v309 = vld [vmem:[%s1 + $0x38] sm:$0xff]
  %v310 = vld [vmem:[%s1 + $0x40] sm:$0xff]
  %v311 = vld [vmem:[%s1 + $0x48] sm:$0xff]
  %v312 = vld [vmem:[%s2] sm:$0x1]
  %v314 = vlaneseq
  %v315 = vshrl.u32 %v314, 7
  %v316 = vsub.s32 0, %v315
  %v317 = vrot.slane %v312, %v316
  %vm319 = vcmask 654336
  %v321 = vsel %vm319, %v38, 0
  %v324 = vsel %vm319, %v39, 0
  %v327 = vsel %vm319, %v40, 0
  %v330 = vsel %vm319, %v41, 0
  %v333 = vsel %vm319, %v42, 0
  %v336 = vsel %vm319, %v43, 0
  %v339 = vsel %vm319, %v44, 0
  %v342 = vsel %vm319, %v45, 0
  %v345 = vsel %vm319, %v46, 0
  %v348 = vsel %vm319, %v47, 0
  %v351 = vsel %vm319, %v48, 0
  %v354 = vsel %vm319, %v49, 0
  %v357 = vsel %vm319, %v50, 0
  %v360 = vsel %vm319, %v51, 0
  %v363 = vsel %vm319, %v52, 0
  %v366 = vsel %vm319, %v53, 0
  %v369 = vsel %vm319, %v54, 0
  %v372 = vsel %vm319, %v55, 0
  %v375 = vsel %vm319, %v56, 0
  %v378 = vsel %vm319, %v57, 0
  %v381 = vsel %vm319, %v58, 0
  %v384 = vsel %vm319, %v59, 0
  %v387 = vsel %vm319, %v60, 0
  %v390 = vsel %vm319, %v61, 0
  %v393 = vsel %vm319, %v62, 0
  %v396 = vsel %vm319, %v63, 0
  %v399 = vsel %vm319, %v64, 0
  %v402 = vsel %vm319, %v65, 0
  %v405 = vsel %vm319, %v66, 0
  %v408 = vsel %vm319, %v67, 0
  %v411 = vsel %vm319, %v68, 0
  %v414 = vsel %vm319, %v69, 0
  %v417 = vsel %vm319, %v70, 0
  %v420 = vsel %vm319, %v71, 0
  %v423 = vsel %vm319, %v72, 0
  %v426 = vsel %vm319, %v73, 0
  %v429 = vsel %vm319, %v74, 0
  %v432 = vsel %vm319, %v75, 0
  %v435 = vsel %vm319, %v76, 0
  %v438 = vsel %vm319, %v77, 0
  %v441 = vsel %vm319, %v78, 0
  %v444 = vsel %vm319, %v79, 0
  %v447 = vsel %vm319, %v80, 0
  %v450 = vsel %vm319, %v81, 0
  %v453 = vsel %vm319, %v82, 0
  %v456 = vsel %vm319, %v83, 0
  %v459 = vsel %vm319, %v84, 0
  %v462 = vsel %vm319, %v85, 0
  %v465 = vsel %vm319, %v86, 0
  %v468 = vsel %vm319, %v87, 0
  %v471 = vsel %vm319, %v88, 0
  %v474 = vsel %vm319, %v89, 0
  %v477 = vsel %vm319, %v90, 0
  %v480 = vsel %vm319, %v91, 0
  %v483 = vsel %vm319, %v92, 0
  %v486 = vsel %vm319, %v93, 0
  %v489 = vsel %vm319, %v94, 0
  %v492 = vsel %vm319, %v95, 0
  %v495 = vsel %vm319, %v96, 0
  %v498 = vsel %vm319, %v97, 0
  %v501 = vsel %vm319, %v98, 0
  %v504 = vsel %vm319, %v99, 0
  %v507 = vsel %vm319, %v100, 0
  %v510 = vsel %vm319, %v101, 0
  %v513 = vsel %vm319, %v102, 0
  %v516 = vsel %vm319, %v103, 0
  %v519 = vsel %vm319, %v104, 0
  %v522 = vsel %vm319, %v105, 0
  %v525 = vsel %vm319, %v106, 0
  %v528 = vsel %vm319, %v107, 0
  %v531 = vsel %vm319, %v108, 0
  %v534 = vsel %vm319, %v109, 0
  %v537 = vsel %vm319, %v110, 0
  %v540 = vsel %vm319, %v111, 0
  %v543 = vsel %vm319, %v112, 0
  %v546 = vsel %vm319, %v113, 0
  %v549 = vsel %vm319, %v114, 0
  %v552 = vsel %vm319, %v115, 0
  %v555 = vsel %vm319, %v116, 0
  %v558 = vsel %vm319, %v117, 0
  %v561 = vsel %vm319, %v118, 0
  %v564 = vsel %vm319, %v119, 0
  %v567 = vsel %vm319, %v120, 0
  %v570 = vsel %vm319, %v121, 0
  %v573 = vsel %vm319, %v122, 0
  %v576 = vsel %vm319, %v123, 0
  %v579 = vsel %vm319, %v124, 0
  %v582 = vsel %vm319, %v125, 0
  %v585 = vsel %vm319, %v126, 0
  %v588 = vsel %vm319, %v127, 0
  %v591 = vsel %vm319, %v128, 0
  %v594 = vsel %vm319, %v129, 0
  %v597 = vsel %vm319, %v130, 0
  %v600 = vsel %vm319, %v131, 0
  %v603 = vsel %vm319, %v132, 0
  %v606 = vsel %vm319, %v133, 0
  %v609 = vsel %vm319, %v134, 0
  %v612 = vsel %vm319, %v135, 0
  %v615 = vsel %vm319, %v136, 0
  %v618 = vsel %vm319, %v137, 0
  %v621 = vsel %vm319, %v138, 0
  %v624 = vsel %vm319, %v139, 0
  %v627 = vsel %vm319, %v140, 0
  %v630 = vsel %vm319, %v141, 0
  %v633 = vsel %vm319, %v142, 0
  %v636 = vsel %vm319, %v143, 0
  %v639 = vsel %vm319, %v144, 0
  %v642 = vsel %vm319, %v145, 0
  %v645 = vsel %vm319, %v146, 0
  %v648 = vsel %vm319, %v147, 0
  %v651 = vsel %vm319, %v148, 0
  %v654 = vsel %vm319, %v149, 0
  %v657 = vsel %vm319, %v150, 0
  %v660 = vsel %vm319, %v151, 0
  %v663 = vsel %vm319, %v152, 0
  %v666 = vsel %vm319, %v153, 0
  %v669 = vsel %vm319, %v154, 0
  %v672 = vsel %vm319, %v155, 0
  %v675 = vsel %vm319, %v156, 0
  %v678 = vsel %vm319, %v157, 0
  %v681 = vsel %vm319, %v158, 0
  %v684 = vsel %vm319, %v159, 0
  %v687 = vsel %vm319, %v160, 0
  %v690 = vsel %vm319, %v161, 0
  %v693 = vsel %vm319, %v162, 0
  %v696 = vsel %vm319, %v163, 0
  %v699 = vsel %vm319, %v164, 0
  %v702 = vsel %vm319, %v165, 0
  %v705 = vsel %vm319, %v166, 0
  %v708 = vsel %vm319, %v167, 0
  %v711 = vsel %vm319, %v168, 0
  %v714 = vsel %vm319, %v169, 0
  %v717 = vsel %vm319, %v170, 0
  %v720 = vsel %vm319, %v171, 0
  %v723 = vsel %vm319, %v172, 0
  %v726 = vsel %vm319, %v173, 0
  %v729 = vsel %vm319, %v174, 0
  %v732 = vsel %vm319, %v175, 0
  %v735 = vsel %vm319, %v176, 0
  %v738 = vsel %vm319, %v177, 0
  %v741 = vsel %vm319, %v178, 0
  %v744 = vsel %vm319, %v179, 0
  %v747 = vsel %vm319, %v180, 0
  %v750 = vsel %vm319, %v181, 0
  %v753 = vsel %vm319, %v182, 0
  %v756 = vsel %vm319, %v183, 0
  %v759 = vsel %vm319, %v184, 0
  %v762 = vsel %vm319, %v185, 0
  %v765 = vsel %vm319, %v186, 0
  %v768 = vsel %vm319, %v187, 0
  %v771 = vsel %vm319, %v188, 0
  %v774 = vsel %vm319, %v189, 0
  %v777 = vsel %vm319, %v190, 0
  %v780 = vsel %vm319, %v191, 0
  %v783 = vsel %vm319, %v192, 0
  %v786 = vsel %vm319, %v193, 0
  %v789 = vsel %vm319, %v194, 0
  %v792 = vsel %vm319, %v195, 0
  %v795 = vsel %vm319, %v196, 0
  %v798 = vsel %vm319, %v197, 0
  %v801 = vsel %vm319, %v198, 0
  %v804 = vsel %vm319, %v199, 0
  %v807 = vsel %vm319, %v200, 0
  %v810 = vsel %vm319, %v201, 0
  %v813 = vsel %vm319, %v202, 0
  %v816 = vsel %vm319, %v203, 0
  %v819 = vsel %vm319, %v204, 0
  %v822 = vsel %vm319, %v205, 0
  %v825 = vsel %vm319, %v206, 0
  %v828 = vsel %vm319, %v207, 0
  %v831 = vsel %vm319, %v208, 0
  %v834 = vsel %vm319, %v209, 0
  %v837 = vsel %vm319, %v210, 0
  %v840 = vsel %vm319, %v211, 0
  %v843 = vsel %vm319, %v212, 0
  %v846 = vsel %vm319, %v213, 0
  %v849 = vsel %vm319, %v214, 0
  %v852 = vsel %vm319, %v215, 0
  %v855 = vsel %vm319, %v216, 0
  %v858 = vsel %vm319, %v217, 0
  %v861 = vsel %vm319, %v218, 0
  %v864 = vsel %vm319, %v219, 0
  %v867 = vsel %vm319, %v220, 0
  %v870 = vsel %vm319, %v221, 0
  %v873 = vsel %vm319, %v222, 0
  %v876 = vsel %vm319, %v223, 0
  %v879 = vsel %vm319, %v224, 0
  %v882 = vsel %vm319, %v225, 0
  %v885 = vsel %vm319, %v226, 0
  %v888 = vsel %vm319, %v227, 0
  %v891 = vsel %vm319, %v228, 0
  %v894 = vsel %vm319, %v229, 0
  %v897 = vsel %vm319, %v230, 0
  %v900 = vsel %vm319, %v231, 0
  %v903 = vsel %vm319, %v232, 0
  %v906 = vsel %vm319, %v233, 0
  %v909 = vsel %vm319, %v234, 0
  %v912 = vsel %vm319, %v235, 0
  %v915 = vsel %vm319, %v236, 0
  %v918 = vsel %vm319, %v237, 0
  %v921 = vsel %vm319, %v238, 0
  %v924 = vsel %vm319, %v239, 0
  %v927 = vsel %vm319, %v240, 0
  %v930 = vsel %vm319, %v241, 0
  %v933 = vsel %vm319, %v242, 0
  %v936 = vsel %vm319, %v243, 0
  %v939 = vsel %vm319, %v244, 0
  %v942 = vsel %vm319, %v245, 0
  %v945 = vsel %vm319, %v246, 0
  %v948 = vsel %vm319, %v247, 0
  %v951 = vsel %vm319, %v248, 0
  %v954 = vsel %vm319, %v249, 0
  %v957 = vsel %vm319, %v250, 0
  %v960 = vsel %vm319, %v251, 0
  %v963 = vsel %vm319, %v252, 0
  %v966 = vsel %vm319, %v253, 0
  %v969 = vsel %vm319, %v254, 0
  %v972 = vsel %vm319, %v255, 0
  %v975 = vsel %vm319, %v256, 0
  %v978 = vsel %vm319, %v257, 0
  %v981 = vsel %vm319, %v258, 0
  %v984 = vsel %vm319, %v259, 0
  %v987 = vsel %vm319, %v260, 0
  %v990 = vsel %vm319, %v261, 0
  %v993 = vsel %vm319, %v262, 0
  %v996 = vsel %vm319, %v263, 0
  %v999 = vsel %vm319, %v264, 0
  %v1002 = vsel %vm319, %v265, 0
  %v1005 = vsel %vm319, %v266, 0
  %v1008 = vsel %vm319, %v267, 0
  %v1011 = vsel %vm319, %v268, 0
  %v1014 = vsel %vm319, %v269, 0
  %v1017 = vsel %vm319, %v270, 0
  %v1020 = vsel %vm319, %v271, 0
  %v1023 = vsel %vm319, %v272, 0
  %v1026 = vsel %vm319, %v273, 0
  %v1029 = vsel %vm319, %v274, 0
  %v1032 = vsel %vm319, %v275, 0
  %v1035 = vsel %vm319, %v276, 0
  %v1038 = vsel %vm319, %v277, 0
  %v1041 = vsel %vm319, %v278, 0
  %v1044 = vsel %vm319, %v279, 0
  %v1047 = vsel %vm319, %v280, 0
  %v1050 = vsel %vm319, %v281, 0
  %v1053 = vsel %vm319, %v282, 0
  %v1056 = vsel %vm319, %v283, 0
  %v1059 = vsel %vm319, %v284, 0
  %v1062 = vsel %vm319, %v285, 0
  %v1065 = vsel %vm319, %v286, 0
  %v1068 = vsel %vm319, %v287, 0
  %v1071 = vsel %vm319, %v288, 0
  %v1074 = vsel %vm319, %v289, 0
  %v1077 = vsel %vm319, %v290, 0
  %v1080 = vsel %vm319, %v291, 0
  %v1083 = vsel %vm319, %v292, 0
  %v1086 = vsel %vm319, %v293, 0
  %v1089 = vsel %vm319, %v294, 0
  %v1092 = vsel %vm319, %v295, 0
  %v1095 = vsel %vm319, %v296, 0
  %v1098 = vsel %vm319, %v297, 0
  %v1101 = vsel %vm319, %v298, 0
  %v1104 = vsel %vm319, %v299, 0
  %v1107 = vsel %vm319, %v300, 0
  %v1110 = vsel %vm319, %v301, 0
  %1112 = vmatprep.subr.mxu0 0.0
  %1113 = vmatpush1.msra.mxu0 0.0
  %1114 = vmatprep.subr.mxu0 0.0
  %1115 = vmatpush1.msra.mxu0 0.0
  %1116 = vmatprep.subr.mxu0 0.0
  %1117 = vmatpush1.msra.mxu0 0.0
  %1118 = vmatprep.subr.mxu0 0.0
  %1119 = vmatpush1.msra.mxu0 0.0
  %1120 = vmatprep.subr.mxu0 0.0
  %1121 = vmatpush1.msra.mxu0 0.0
  %1122 = vmatprep.subr.mxu0 0.0
  %1123 = vmatpush1.msra.mxu0 0.0
  %1124 = vmatprep.subr.mxu0 0.0
  %1125 = vmatpush1.msra.mxu0 %v311
  %1126 = vmatprep.subr.mxu0 0.0
  %1127 = vmatpush1.msra.mxu0 %v310
  %1128 = vmatprep.subr.mxu0 0.0
  %1129 = vmatpush1.msra.mxu0 %v309
  %1130 = vmatprep.subr.mxu0 0.0
  %1131 = vmatpush1.msra.mxu0 %v308
  %1132 = vmatprep.subr.mxu0 0.0
  %1133 = vmatpush1.msra.mxu0 %v307
  %1134 = vmatprep.subr.mxu0 0.0
  %1135 = vmatpush1.msra.mxu0 %v306
  %1136 = vmatprep.subr.mxu0 0.0
  %1137 = vmatpush1.msra.mxu0 %v305
  %1138 = vmatprep.subr.mxu0 0.0
  %1139 = vmatpush1.msra.mxu0 %v304
  %1140 = vmatprep.subr.mxu0 0.0
  %1141 = vmatpush1.msra.mxu0 %v303
  %1142 = vmatprep.subr.mxu0 0.0
  %1143 = vmatpush1.msra.mxu0 %v302
  %1144 = vmatprep.subr.mxu0 0.0
  %1145 = vmatpush2.msra.mxu0 0.0
  %1146 = vmatprep.subr.mxu0 0.0
  %1147 = vmatpush2.msra.mxu0 0.0
  %1148 = vmatprep.subr.mxu0 0.0
  %1149 = vmatpush2.msra.mxu0 0.0
  %1150 = vmatprep.subr.mxu0 0.0
  %1151 = vmatpush2.msra.mxu0 0.0
  %1152 = vmatprep.subr.mxu0 0.0
  %1153 = vmatpush2.msra.mxu0 0.0
  %1154 = vmatprep.subr.mxu0 0.0
  %1155 = vmatpush2.msra.mxu0 0.0
  %1156 = vmatprep.subr.mxu0 0.0
  %1157 = vmatpush2.msra.mxu0 0.0
  %1158 = vmatprep.subr.mxu0 0.0
  %1159 = vmatpush2.msra.mxu0 0.0
  %1160 = vmatprep.subr.mxu0 0.0
  %1161 = vmatpush2.msra.mxu0 0.0
  %1162 = vmatprep.subr.mxu0 0.0
  %1163 = vmatpush2.msra.mxu0 0.0
  %1164 = vmatprep.subr.mxu0 0.0
  %1165 = vmatpush2.msra.mxu0 0.0
  %1166 = vmatprep.subr.mxu0 0.0
  %1167 = vmatpush2.msra.mxu0 0.0
  %1168 = vmatprep.subr.mxu0 0.0
  %1169 = vmatpush2.msra.mxu0 0.0
  %1170 = vmatprep.subr.mxu0 0.0
  %1171 = vmatpush2.msra.mxu0 0.0
  %1172 = vmatprep.subr.mxu0 0.0
  %1173 = vmatpush2.msra.mxu0 0.0
  %1174 = vmatprep.subr.mxu0 0.0
  %1175 = vmatpush2.msra.mxu0 0.0
  %1176 = vmatprep.mubr.f32.mxu0 0.0
  %1177 = vmatmul.mubr.f32.gmra.mxu0 %v321
  %v1178 = vpop.f32.mrf.mxu0
  %v1179 = vadd.f32 %v317, %v1178
  %v1180 = vpop.f32.mrf.mxu0
  %1181 = vmatprep.mubr.f32.mxu0 0.0
  %1182 = vmatmul.mubr.f32.gmra.mxu0 %v324
  %v1183 = vpop.f32.mrf.mxu0
  %v1184 = vadd.f32 %v317, %v1183
  %v1185 = vpop.f32.mrf.mxu0
  %1186 = vmatprep.mubr.f32.mxu0 0.0
  %1187 = vmatmul.mubr.f32.gmra.mxu0 %v327
  %v1188 = vpop.f32.mrf.mxu0
  %v1189 = vadd.f32 %v317, %v1188
  %v1190 = vpop.f32.mrf.mxu0
  %1191 = vmatprep.mubr.f32.mxu0 0.0
  %1192 = vmatmul.mubr.f32.gmra.mxu0 %v330
  %v1193 = vpop.f32.mrf.mxu0
  %v1194 = vadd.f32 %v317, %v1193
  %v1195 = vpop.f32.mrf.mxu0
  %1196 = vmatprep.mubr.f32.mxu0 0.0
  %1197 = vmatmul.mubr.f32.gmra.mxu0 %v333
  %v1198 = vpop.f32.mrf.mxu0
  %v1199 = vadd.f32 %v317, %v1198
  %v1200 = vpop.f32.mrf.mxu0
  %1201 = vmatprep.mubr.f32.mxu0 0.0
  %1202 = vmatmul.mubr.f32.gmra.mxu0 %v336
  %v1203 = vpop.f32.mrf.mxu0
  %v1204 = vadd.f32 %v317, %v1203
  %v1205 = vpop.f32.mrf.mxu0
  %1206 = vmatprep.mubr.f32.mxu0 0.0
  %1207 = vmatmul.mubr.f32.gmra.mxu0 %v339
  %v1208 = vpop.f32.mrf.mxu0
  %v1209 = vadd.f32 %v317, %v1208
  %v1210 = vpop.f32.mrf.mxu0
  %1211 = vmatprep.mubr.f32.mxu0 0.0
  %1212 = vmatmul.mubr.f32.gmra.mxu0 %v342
  %v1213 = vpop.f32.mrf.mxu0
  %v1214 = vadd.f32 %v317, %v1213
  %v1215 = vpop.f32.mrf.mxu0
  %1216 = vmatprep.mubr.f32.mxu0 0.0
  %1217 = vmatmul.mubr.f32.gmra.mxu0 %v345
  %v1218 = vpop.f32.mrf.mxu0
  %v1219 = vadd.f32 %v317, %v1218
  %v1220 = vpop.f32.mrf.mxu0
  %1221 = vmatprep.mubr.f32.mxu0 0.0
  %1222 = vmatmul.mubr.f32.gmra.mxu0 %v348
  %v1223 = vpop.f32.mrf.mxu0
  %v1224 = vadd.f32 %v317, %v1223
  %v1225 = vpop.f32.mrf.mxu0
  %1226 = vmatprep.mubr.f32.mxu0 0.0
  %1227 = vmatmul.mubr.f32.gmra.mxu0 %v351
  %v1228 = vpop.f32.mrf.mxu0
  %v1229 = vadd.f32 %v317, %v1228
  %v1230 = vpop.f32.mrf.mxu0
  %1231 = vmatprep.mubr.f32.mxu0 0.0
  %1232 = vmatmul.mubr.f32.gmra.mxu0 %v354
  %v1233 = vpop.f32.mrf.mxu0
  %v1234 = vadd.f32 %v317, %v1233
  %v1235 = vpop.f32.mrf.mxu0
  %1236 = vmatprep.mubr.f32.mxu0 0.0
  %1237 = vmatmul.mubr.f32.gmra.mxu0 %v357
  %v1238 = vpop.f32.mrf.mxu0
  %v1239 = vadd.f32 %v317, %v1238
  %v1240 = vpop.f32.mrf.mxu0
  %1241 = vmatprep.mubr.f32.mxu0 0.0
  %1242 = vmatmul.mubr.f32.gmra.mxu0 %v360
  %v1243 = vpop.f32.mrf.mxu0
  %v1244 = vadd.f32 %v317, %v1243
  %v1245 = vpop.f32.mrf.mxu0
  %1246 = vmatprep.mubr.f32.mxu0 0.0
  %1247 = vmatmul.mubr.f32.gmra.mxu0 %v363
  %v1248 = vpop.f32.mrf.mxu0
  %v1249 = vadd.f32 %v317, %v1248
  %v1250 = vpop.f32.mrf.mxu0
  %1251 = vmatprep.mubr.f32.mxu0 0.0
  %1252 = vmatmul.mubr.f32.gmra.mxu0 %v366
  %v1253 = vpop.f32.mrf.mxu0
  %v1254 = vadd.f32 %v317, %v1253
  %v1255 = vpop.f32.mrf.mxu0
  %1256 = vmatprep.mubr.f32.mxu0 0.0
  %1257 = vmatmul.mubr.f32.gmra.mxu0 %v369
  %v1258 = vpop.f32.mrf.mxu0
  %v1259 = vadd.f32 %v317, %v1258
  %v1260 = vpop.f32.mrf.mxu0
  %1261 = vmatprep.mubr.f32.mxu0 0.0
  %1262 = vmatmul.mubr.f32.gmra.mxu0 %v372
  %v1263 = vpop.f32.mrf.mxu0
  %v1264 = vadd.f32 %v317, %v1263
  %v1265 = vpop.f32.mrf.mxu0
  %1266 = vmatprep.mubr.f32.mxu0 0.0
  %1267 = vmatmul.mubr.f32.gmra.mxu0 %v375
  %v1268 = vpop.f32.mrf.mxu0
  %v1269 = vadd.f32 %v317, %v1268
  %v1270 = vpop.f32.mrf.mxu0
  %1271 = vmatprep.mubr.f32.mxu0 0.0
  %1272 = vmatmul.mubr.f32.gmra.mxu0 %v378
  %v1273 = vpop.f32.mrf.mxu0
  %v1274 = vadd.f32 %v317, %v1273
  %v1275 = vpop.f32.mrf.mxu0
  %1276 = vmatprep.mubr.f32.mxu0 0.0
  %1277 = vmatmul.mubr.f32.gmra.mxu0 %v381
  %v1278 = vpop.f32.mrf.mxu0
  %v1279 = vadd.f32 %v317, %v1278
  %v1280 = vpop.f32.mrf.mxu0
  %1281 = vmatprep.mubr.f32.mxu0 0.0
  %1282 = vmatmul.mubr.f32.gmra.mxu0 %v384
  %v1283 = vpop.f32.mrf.mxu0
  %v1284 = vadd.f32 %v317, %v1283
  %v1285 = vpop.f32.mrf.mxu0
  %1286 = vmatprep.mubr.f32.mxu0 0.0
  %1287 = vmatmul.mubr.f32.gmra.mxu0 %v387
  %v1288 = vpop.f32.mrf.mxu0
  %v1289 = vadd.f32 %v317, %v1288
  %v1290 = vpop.f32.mrf.mxu0
  %1291 = vmatprep.mubr.f32.mxu0 0.0
  %1292 = vmatmul.mubr.f32.gmra.mxu0 %v390
  %v1293 = vpop.f32.mrf.mxu0
  %v1294 = vadd.f32 %v317, %v1293
  %v1295 = vpop.f32.mrf.mxu0
  %1296 = vmatprep.mubr.f32.mxu0 0.0
  %1297 = vmatmul.mubr.f32.gmra.mxu0 %v393
  %v1298 = vpop.f32.mrf.mxu0
  %v1299 = vadd.f32 %v317, %v1298
  %v1300 = vpop.f32.mrf.mxu0
  %1301 = vmatprep.mubr.f32.mxu0 0.0
  %1302 = vmatmul.mubr.f32.gmra.mxu0 %v396
  %v1303 = vpop.f32.mrf.mxu0
  %v1304 = vadd.f32 %v317, %v1303
  %v1305 = vpop.f32.mrf.mxu0
  %1306 = vmatprep.mubr.f32.mxu0 0.0
  %1307 = vmatmul.mubr.f32.gmra.mxu0 %v399
  %v1308 = vpop.f32.mrf.mxu0
  %v1309 = vadd.f32 %v317, %v1308
  %v1310 = vpop.f32.mrf.mxu0
  %1311 = vmatprep.mubr.f32.mxu0 0.0
  %1312 = vmatmul.mubr.f32.gmra.mxu0 %v402
  %v1313 = vpop.f32.mrf.mxu0
  %v1314 = vadd.f32 %v317, %v1313
  %v1315 = vpop.f32.mrf.mxu0
  %1316 = vmatprep.mubr.f32.mxu0 0.0
  %1317 = vmatmul.mubr.f32.gmra.mxu0 %v405
  %v1318 = vpop.f32.mrf.mxu0
  %v1319 = vadd.f32 %v317, %v1318
  %v1320 = vpop.f32.mrf.mxu0
  %1321 = vmatprep.mubr.f32.mxu0 0.0
  %1322 = vmatmul.mubr.f32.gmra.mxu0 %v408
  %v1323 = vpop.f32.mrf.mxu0
  %v1324 = vadd.f32 %v317, %v1323
  %v1325 = vpop.f32.mrf.mxu0
  %1326 = vmatprep.mubr.f32.mxu0 0.0
  %1327 = vmatmul.mubr.f32.gmra.mxu0 %v411
  %v1328 = vpop.f32.mrf.mxu0
  %v1329 = vadd.f32 %v317, %v1328
  %v1330 = vpop.f32.mrf.mxu0
  %1331 = vmatprep.mubr.f32.mxu0 0.0
  %1332 = vmatmul.mubr.f32.gmra.mxu0 %v414
  %v1333 = vpop.f32.mrf.mxu0
  %v1334 = vadd.f32 %v317, %v1333
  %v1335 = vpop.f32.mrf.mxu0
  %1336 = vmatprep.mubr.f32.mxu0 0.0
  %1337 = vmatmul.mubr.f32.gmra.mxu0 %v417
  %v1338 = vpop.f32.mrf.mxu0
  %v1339 = vadd.f32 %v317, %v1338
  %v1340 = vpop.f32.mrf.mxu0
  %1341 = vmatprep.mubr.f32.mxu0 0.0
  %1342 = vmatmul.mubr.f32.gmra.mxu0 %v420
  %v1343 = vpop.f32.mrf.mxu0
  %v1344 = vadd.f32 %v317, %v1343
  %v1345 = vpop.f32.mrf.mxu0
  %1346 = vmatprep.mubr.f32.mxu0 0.0
  %1347 = vmatmul.mubr.f32.gmra.mxu0 %v423
  %v1348 = vpop.f32.mrf.mxu0
  %v1349 = vadd.f32 %v317, %v1348
  %v1350 = vpop.f32.mrf.mxu0
  %1351 = vmatprep.mubr.f32.mxu0 0.0
  %1352 = vmatmul.mubr.f32.gmra.mxu0 %v426
  %v1353 = vpop.f32.mrf.mxu0
  %v1354 = vadd.f32 %v317, %v1353
  %v1355 = vpop.f32.mrf.mxu0
  %1356 = vmatprep.mubr.f32.mxu0 0.0
  %1357 = vmatmul.mubr.f32.gmra.mxu0 %v429
  %v1358 = vpop.f32.mrf.mxu0
  %v1359 = vadd.f32 %v317, %v1358
  %v1360 = vpop.f32.mrf.mxu0
  %1361 = vmatprep.mubr.f32.mxu0 0.0
  %1362 = vmatmul.mubr.f32.gmra.mxu0 %v432
  %v1363 = vpop.f32.mrf.mxu0
  %v1364 = vadd.f32 %v317, %v1363
  %v1365 = vpop.f32.mrf.mxu0
  %1366 = vmatprep.mubr.f32.mxu0 0.0
  %1367 = vmatmul.mubr.f32.gmra.mxu0 %v435
  %v1368 = vpop.f32.mrf.mxu0
  %v1369 = vadd.f32 %v317, %v1368
  %v1370 = vpop.f32.mrf.mxu0
  %1371 = vmatprep.mubr.f32.mxu0 0.0
  %1372 = vmatmul.mubr.f32.gmra.mxu0 %v438
  %v1373 = vpop.f32.mrf.mxu0
  %v1374 = vadd.f32 %v317, %v1373
  %v1375 = vpop.f32.mrf.mxu0
  %1376 = vmatprep.mubr.f32.mxu0 0.0
  %1377 = vmatmul.mubr.f32.gmra.mxu0 %v441
  %v1378 = vpop.f32.mrf.mxu0
  %v1379 = vadd.f32 %v317, %v1378
  %v1380 = vpop.f32.mrf.mxu0
  %1381 = vmatprep.mubr.f32.mxu0 0.0
  %1382 = vmatmul.mubr.f32.gmra.mxu0 %v444
  %v1383 = vpop.f32.mrf.mxu0
  %v1384 = vadd.f32 %v317, %v1383
  %v1385 = vpop.f32.mrf.mxu0
  %1386 = vmatprep.mubr.f32.mxu0 0.0
  %1387 = vmatmul.mubr.f32.gmra.mxu0 %v447
  %v1388 = vpop.f32.mrf.mxu0
  %v1389 = vadd.f32 %v317, %v1388
  %v1390 = vpop.f32.mrf.mxu0
  %1391 = vmatprep.mubr.f32.mxu0 0.0
  %1392 = vmatmul.mubr.f32.gmra.mxu0 %v450
  %v1393 = vpop.f32.mrf.mxu0
  %v1394 = vadd.f32 %v317, %v1393
  %v1395 = vpop.f32.mrf.mxu0
  %1396 = vmatprep.mubr.f32.mxu0 0.0
  %1397 = vmatmul.mubr.f32.gmra.mxu0 %v453
  %v1398 = vpop.f32.mrf.mxu0
  %v1399 = vadd.f32 %v317, %v1398
  %v1400 = vpop.f32.mrf.mxu0
  %1401 = vmatprep.mubr.f32.mxu0 0.0
  %1402 = vmatmul.mubr.f32.gmra.mxu0 %v456
  %v1403 = vpop.f32.mrf.mxu0
  %v1404 = vadd.f32 %v317, %v1403
  %v1405 = vpop.f32.mrf.mxu0
  %1406 = vmatprep.mubr.f32.mxu0 0.0
  %1407 = vmatmul.mubr.f32.gmra.mxu0 %v459
  %v1408 = vpop.f32.mrf.mxu0
  %v1409 = vadd.f32 %v317, %v1408
  %v1410 = vpop.f32.mrf.mxu0
  %1411 = vmatprep.mubr.f32.mxu0 0.0
  %1412 = vmatmul.mubr.f32.gmra.mxu0 %v462
  %v1413 = vpop.f32.mrf.mxu0
  %v1414 = vadd.f32 %v317, %v1413
  %v1415 = vpop.f32.mrf.mxu0
  %1416 = vmatprep.mubr.f32.mxu0 0.0
  %1417 = vmatmul.mubr.f32.gmra.mxu0 %v465
  %v1418 = vpop.f32.mrf.mxu0
  %v1419 = vadd.f32 %v317, %v1418
  %v1420 = vpop.f32.mrf.mxu0
  %1421 = vmatprep.mubr.f32.mxu0 0.0
  %1422 = vmatmul.mubr.f32.gmra.mxu0 %v468
  %v1423 = vpop.f32.mrf.mxu0
  %v1424 = vadd.f32 %v317, %v1423
  %v1425 = vpop.f32.mrf.mxu0
  %1426 = vmatprep.mubr.f32.mxu0 0.0
  %1427 = vmatmul.mubr.f32.gmra.mxu0 %v471
  %v1428 = vpop.f32.mrf.mxu0
  %v1429 = vadd.f32 %v317, %v1428
  %v1430 = vpop.f32.mrf.mxu0
  %1431 = vmatprep.mubr.f32.mxu0 0.0
  %1432 = vmatmul.mubr.f32.gmra.mxu0 %v474
  %v1433 = vpop.f32.mrf.mxu0
  %v1434 = vadd.f32 %v317, %v1433
  %v1435 = vpop.f32.mrf.mxu0
  %1436 = vmatprep.mubr.f32.mxu0 0.0
  %1437 = vmatmul.mubr.f32.gmra.mxu0 %v477
  %v1438 = vpop.f32.mrf.mxu0
  %v1439 = vadd.f32 %v317, %v1438
  %v1440 = vpop.f32.mrf.mxu0
  %1441 = vmatprep.mubr.f32.mxu0 0.0
  %1442 = vmatmul.mubr.f32.gmra.mxu0 %v480
  %v1443 = vpop.f32.mrf.mxu0
  %v1444 = vadd.f32 %v317, %v1443
  %v1445 = vpop.f32.mrf.mxu0
  %1446 = vmatprep.mubr.f32.mxu0 0.0
  %1447 = vmatmul.mubr.f32.gmra.mxu0 %v483
  %v1448 = vpop.f32.mrf.mxu0
  %v1449 = vadd.f32 %v317, %v1448
  %v1450 = vpop.f32.mrf.mxu0
  %1451 = vmatprep.mubr.f32.mxu0 0.0
  %1452 = vmatmul.mubr.f32.gmra.mxu0 %v486
  %v1453 = vpop.f32.mrf.mxu0
  %v1454 = vadd.f32 %v317, %v1453
  %v1455 = vpop.f32.mrf.mxu0
  %1456 = vmatprep.mubr.f32.mxu0 0.0
  %1457 = vmatmul.mubr.f32.gmra.mxu0 %v489
  %v1458 = vpop.f32.mrf.mxu0
  %v1459 = vadd.f32 %v317, %v1458
  %v1460 = vpop.f32.mrf.mxu0
  %1461 = vmatprep.mubr.f32.mxu0 0.0
  %1462 = vmatmul.mubr.f32.gmra.mxu0 %v492
  %v1463 = vpop.f32.mrf.mxu0
  %v1464 = vadd.f32 %v317, %v1463
  %v1465 = vpop.f32.mrf.mxu0
  %1466 = vmatprep.mubr.f32.mxu0 0.0
  %1467 = vmatmul.mubr.f32.gmra.mxu0 %v495
  %v1468 = vpop.f32.mrf.mxu0
  %v1469 = vadd.f32 %v317, %v1468
  %v1470 = vpop.f32.mrf.mxu0
  %1471 = vmatprep.mubr.f32.mxu0 0.0
  %1472 = vmatmul.mubr.f32.gmra.mxu0 %v498
  %v1473 = vpop.f32.mrf.mxu0
  %v1474 = vadd.f32 %v317, %v1473
  %v1475 = vpop.f32.mrf.mxu0
  %1476 = vmatprep.mubr.f32.mxu0 0.0
  %1477 = vmatmul.mubr.f32.gmra.mxu0 %v501
  %v1478 = vpop.f32.mrf.mxu0
  %v1479 = vadd.f32 %v317, %v1478
  %v1480 = vpop.f32.mrf.mxu0
  %1481 = vmatprep.mubr.f32.mxu0 0.0
  %1482 = vmatmul.mubr.f32.gmra.mxu0 %v504
  %v1483 = vpop.f32.mrf.mxu0
  %v1484 = vadd.f32 %v317, %v1483
  %v1485 = vpop.f32.mrf.mxu0
  %1486 = vmatprep.mubr.f32.mxu0 0.0
  %1487 = vmatmul.mubr.f32.gmra.mxu0 %v507
  %v1488 = vpop.f32.mrf.mxu0
  %v1489 = vadd.f32 %v317, %v1488
  %v1490 = vpop.f32.mrf.mxu0
  %1491 = vmatprep.mubr.f32.mxu0 0.0
  %1492 = vmatmul.mubr.f32.gmra.mxu0 %v510
  %v1493 = vpop.f32.mrf.mxu0
  %v1494 = vadd.f32 %v317, %v1493
  %v1495 = vpop.f32.mrf.mxu0
  %1496 = vmatprep.mubr.f32.mxu0 0.0
  %1497 = vmatmul.mubr.f32.gmra.mxu0 %v513
  %v1498 = vpop.f32.mrf.mxu0
  %v1499 = vadd.f32 %v317, %v1498
  %v1500 = vpop.f32.mrf.mxu0
  %1501 = vmatprep.mubr.f32.mxu0 0.0
  %1502 = vmatmul.mubr.f32.gmra.mxu0 %v516
  %v1503 = vpop.f32.mrf.mxu0
  %v1504 = vadd.f32 %v317, %v1503
  %v1505 = vpop.f32.mrf.mxu0
  %1506 = vmatprep.mubr.f32.mxu0 0.0
  %1507 = vmatmul.mubr.f32.gmra.mxu0 %v519
  %v1508 = vpop.f32.mrf.mxu0
  %v1509 = vadd.f32 %v317, %v1508
  %v1510 = vpop.f32.mrf.mxu0
  %1511 = vmatprep.mubr.f32.mxu0 0.0
  %1512 = vmatmul.mubr.f32.gmra.mxu0 %v522
  %v1513 = vpop.f32.mrf.mxu0
  %v1514 = vadd.f32 %v317, %v1513
  %v1515 = vpop.f32.mrf.mxu0
  %1516 = vmatprep.mubr.f32.mxu0 0.0
  %1517 = vmatmul.mubr.f32.gmra.mxu0 %v525
  %v1518 = vpop.f32.mrf.mxu0
  %v1519 = vadd.f32 %v317, %v1518
  %v1520 = vpop.f32.mrf.mxu0
  %1521 = vmatprep.mubr.f32.mxu0 0.0
  %1522 = vmatmul.mubr.f32.gmra.mxu0 %v528
  %v1523 = vpop.f32.mrf.mxu0
  %v1524 = vadd.f32 %v317, %v1523
  %v1525 = vpop.f32.mrf.mxu0
  %1526 = vmatprep.mubr.f32.mxu0 0.0
  %1527 = vmatmul.mubr.f32.gmra.mxu0 %v531
  %v1528 = vpop.f32.mrf.mxu0
  %v1529 = vadd.f32 %v317, %v1528
  %v1530 = vpop.f32.mrf.mxu0
  %1531 = vmatprep.mubr.f32.mxu0 0.0
  %1532 = vmatmul.mubr.f32.gmra.mxu0 %v534
  %v1533 = vpop.f32.mrf.mxu0
  %v1534 = vadd.f32 %v317, %v1533
  %v1535 = vpop.f32.mrf.mxu0
  %1536 = vmatprep.mubr.f32.mxu0 0.0
  %1537 = vmatmul.mubr.f32.gmra.mxu0 %v537
  %v1538 = vpop.f32.mrf.mxu0
  %v1539 = vadd.f32 %v317, %v1538
  %v1540 = vpop.f32.mrf.mxu0
  %1541 = vmatprep.mubr.f32.mxu0 0.0
  %1542 = vmatmul.mubr.f32.gmra.mxu0 %v540
  %v1543 = vpop.f32.mrf.mxu0
  %v1544 = vadd.f32 %v317, %v1543
  %v1545 = vpop.f32.mrf.mxu0
  %1546 = vmatprep.mubr.f32.mxu0 0.0
  %1547 = vmatmul.mubr.f32.gmra.mxu0 %v543
  %v1548 = vpop.f32.mrf.mxu0
  %v1549 = vadd.f32 %v317, %v1548
  %v1550 = vpop.f32.mrf.mxu0
  %1551 = vmatprep.mubr.f32.mxu0 0.0
  %1552 = vmatmul.mubr.f32.gmra.mxu0 %v546
  %v1553 = vpop.f32.mrf.mxu0
  %v1554 = vadd.f32 %v317, %v1553
  %v1555 = vpop.f32.mrf.mxu0
  %1556 = vmatprep.mubr.f32.mxu0 0.0
  %1557 = vmatmul.mubr.f32.gmra.mxu0 %v549
  %v1558 = vpop.f32.mrf.mxu0
  %v1559 = vadd.f32 %v317, %v1558
  %v1560 = vpop.f32.mrf.mxu0
  %1561 = vmatprep.mubr.f32.mxu0 0.0
  %1562 = vmatmul.mubr.f32.gmra.mxu0 %v552
  %v1563 = vpop.f32.mrf.mxu0
  %v1564 = vadd.f32 %v317, %v1563
  %v1565 = vpop.f32.mrf.mxu0
  %1566 = vmatprep.mubr.f32.mxu0 0.0
  %1567 = vmatmul.mubr.f32.gmra.mxu0 %v555
  %v1568 = vpop.f32.mrf.mxu0
  %v1569 = vadd.f32 %v317, %v1568
  %v1570 = vpop.f32.mrf.mxu0
  %1571 = vmatprep.mubr.f32.mxu0 0.0
  %1572 = vmatmul.mubr.f32.gmra.mxu0 %v558
  %v1573 = vpop.f32.mrf.mxu0
  %v1574 = vadd.f32 %v317, %v1573
  %v1575 = vpop.f32.mrf.mxu0
  %1576 = vmatprep.mubr.f32.mxu0 0.0
  %1577 = vmatmul.mubr.f32.gmra.mxu0 %v561
  %v1578 = vpop.f32.mrf.mxu0
  %v1579 = vadd.f32 %v317, %v1578
  %v1580 = vpop.f32.mrf.mxu0
  %1581 = vmatprep.mubr.f32.mxu0 0.0
  %1582 = vmatmul.mubr.f32.gmra.mxu0 %v564
  %v1583 = vpop.f32.mrf.mxu0
  %v1584 = vadd.f32 %v317, %v1583
  %v1585 = vpop.f32.mrf.mxu0
  %1586 = vmatprep.mubr.f32.mxu0 0.0
  %1587 = vmatmul.mubr.f32.gmra.mxu0 %v567
  %v1588 = vpop.f32.mrf.mxu0
  %v1589 = vadd.f32 %v317, %v1588
  %v1590 = vpop.f32.mrf.mxu0
  %1591 = vmatprep.mubr.f32.mxu0 0.0
  %1592 = vmatmul.mubr.f32.gmra.mxu0 %v570
  %v1593 = vpop.f32.mrf.mxu0
  %v1594 = vadd.f32 %v317, %v1593
  %v1595 = vpop.f32.mrf.mxu0
  %1596 = vmatprep.mubr.f32.mxu0 0.0
  %1597 = vmatmul.mubr.f32.gmra.mxu0 %v573
  %v1598 = vpop.f32.mrf.mxu0
  %v1599 = vadd.f32 %v317, %v1598
  %v1600 = vpop.f32.mrf.mxu0
  %1601 = vmatprep.mubr.f32.mxu0 0.0
  %1602 = vmatmul.mubr.f32.gmra.mxu0 %v576
  %v1603 = vpop.f32.mrf.mxu0
  %v1604 = vadd.f32 %v317, %v1603
  %v1605 = vpop.f32.mrf.mxu0
  %1606 = vmatprep.mubr.f32.mxu0 0.0
  %1607 = vmatmul.mubr.f32.gmra.mxu0 %v579
  %v1608 = vpop.f32.mrf.mxu0
  %v1609 = vadd.f32 %v317, %v1608
  %v1610 = vpop.f32.mrf.mxu0
  %1611 = vmatprep.mubr.f32.mxu0 0.0
  %1612 = vmatmul.mubr.f32.gmra.mxu0 %v582
  %v1613 = vpop.f32.mrf.mxu0
  %v1614 = vadd.f32 %v317, %v1613
  %v1615 = vpop.f32.mrf.mxu0
  %1616 = vmatprep.mubr.f32.mxu0 0.0
  %1617 = vmatmul.mubr.f32.gmra.mxu0 %v585
  %v1618 = vpop.f32.mrf.mxu0
  %v1619 = vadd.f32 %v317, %v1618
  %v1620 = vpop.f32.mrf.mxu0
  %1621 = vmatprep.mubr.f32.mxu0 0.0
  %1622 = vmatmul.mubr.f32.gmra.mxu0 %v588
  %v1623 = vpop.f32.mrf.mxu0
  %v1624 = vadd.f32 %v317, %v1623
  %v1625 = vpop.f32.mrf.mxu0
  %1626 = vmatprep.mubr.f32.mxu0 0.0
  %1627 = vmatmul.mubr.f32.gmra.mxu0 %v591
  %v1628 = vpop.f32.mrf.mxu0
  %v1629 = vadd.f32 %v317, %v1628
  %v1630 = vpop.f32.mrf.mxu0
  %1631 = vmatprep.mubr.f32.mxu0 0.0
  %1632 = vmatmul.mubr.f32.gmra.mxu0 %v594
  %v1633 = vpop.f32.mrf.mxu0
  %v1634 = vadd.f32 %v317, %v1633
  %v1635 = vpop.f32.mrf.mxu0
  %1636 = vmatprep.mubr.f32.mxu0 0.0
  %1637 = vmatmul.mubr.f32.gmra.mxu0 %v597
  %v1638 = vpop.f32.mrf.mxu0
  %v1639 = vadd.f32 %v317, %v1638
  %v1640 = vpop.f32.mrf.mxu0
  %1641 = vmatprep.mubr.f32.mxu0 0.0
  %1642 = vmatmul.mubr.f32.gmra.mxu0 %v600
  %v1643 = vpop.f32.mrf.mxu0
  %v1644 = vadd.f32 %v317, %v1643
  %v1645 = vpop.f32.mrf.mxu0
  %1646 = vmatprep.mubr.f32.mxu0 0.0
  %1647 = vmatmul.mubr.f32.gmra.mxu0 %v603
  %v1648 = vpop.f32.mrf.mxu0
  %v1649 = vadd.f32 %v317, %v1648
  %v1650 = vpop.f32.mrf.mxu0
  %1651 = vmatprep.mubr.f32.mxu0 0.0
  %1652 = vmatmul.mubr.f32.gmra.mxu0 %v606
  %v1653 = vpop.f32.mrf.mxu0
  %v1654 = vadd.f32 %v317, %v1653
  %v1655 = vpop.f32.mrf.mxu0
  %1656 = vmatprep.mubr.f32.mxu0 0.0
  %1657 = vmatmul.mubr.f32.gmra.mxu0 %v609
  %v1658 = vpop.f32.mrf.mxu0
  %v1659 = vadd.f32 %v317, %v1658
  %v1660 = vpop.f32.mrf.mxu0
  %1661 = vmatprep.mubr.f32.mxu0 0.0
  %1662 = vmatmul.mubr.f32.gmra.mxu0 %v612
  %v1663 = vpop.f32.mrf.mxu0
  %v1664 = vadd.f32 %v317, %v1663
  %v1665 = vpop.f32.mrf.mxu0
  %1666 = vmatprep.mubr.f32.mxu0 0.0
  %1667 = vmatmul.mubr.f32.gmra.mxu0 %v615
  %v1668 = vpop.f32.mrf.mxu0
  %v1669 = vadd.f32 %v317, %v1668
  %v1670 = vpop.f32.mrf.mxu0
  %1671 = vmatprep.mubr.f32.mxu0 0.0
  %1672 = vmatmul.mubr.f32.gmra.mxu0 %v618
  %v1673 = vpop.f32.mrf.mxu0
  %v1674 = vadd.f32 %v317, %v1673
  %v1675 = vpop.f32.mrf.mxu0
  %1676 = vmatprep.mubr.f32.mxu0 0.0
  %1677 = vmatmul.mubr.f32.gmra.mxu0 %v621
  %v1678 = vpop.f32.mrf.mxu0
  %v1679 = vadd.f32 %v317, %v1678
  %v1680 = vpop.f32.mrf.mxu0
  %1681 = vmatprep.mubr.f32.mxu0 0.0
  %1682 = vmatmul.mubr.f32.gmra.mxu0 %v624
  %v1683 = vpop.f32.mrf.mxu0
  %v1684 = vadd.f32 %v317, %v1683
  %v1685 = vpop.f32.mrf.mxu0
  %1686 = vmatprep.mubr.f32.mxu0 0.0
  %1687 = vmatmul.mubr.f32.gmra.mxu0 %v627
  %v1688 = vpop.f32.mrf.mxu0
  %v1689 = vadd.f32 %v317, %v1688
  %v1690 = vpop.f32.mrf.mxu0
  %1691 = vmatprep.mubr.f32.mxu0 0.0
  %1692 = vmatmul.mubr.f32.gmra.mxu0 %v630
  %v1693 = vpop.f32.mrf.mxu0
  %v1694 = vadd.f32 %v317, %v1693
  %v1695 = vpop.f32.mrf.mxu0
  %1696 = vmatprep.mubr.f32.mxu0 0.0
  %1697 = vmatmul.mubr.f32.gmra.mxu0 %v633
  %v1698 = vpop.f32.mrf.mxu0
  %v1699 = vadd.f32 %v317, %v1698
  %v1700 = vpop.f32.mrf.mxu0
  %1701 = vmatprep.mubr.f32.mxu0 0.0
  %1702 = vmatmul.mubr.f32.gmra.mxu0 %v636
  %v1703 = vpop.f32.mrf.mxu0
  %v1704 = vadd.f32 %v317, %v1703
  %v1705 = vpop.f32.mrf.mxu0
  %1706 = vmatprep.mubr.f32.mxu0 0.0
  %1707 = vmatmul.mubr.f32.gmra.mxu0 %v639
  %v1708 = vpop.f32.mrf.mxu0
  %v1709 = vadd.f32 %v317, %v1708
  %v1710 = vpop.f32.mrf.mxu0
  %1711 = vmatprep.mubr.f32.mxu0 0.0
  %1712 = vmatmul.mubr.f32.gmra.mxu0 %v642
  %v1713 = vpop.f32.mrf.mxu0
  %v1714 = vadd.f32 %v317, %v1713
  %v1715 = vpop.f32.mrf.mxu0
  %1716 = vmatprep.mubr.f32.mxu0 0.0
  %1717 = vmatmul.mubr.f32.gmra.mxu0 %v645
  %v1718 = vpop.f32.mrf.mxu0
  %v1719 = vadd.f32 %v317, %v1718
  %v1720 = vpop.f32.mrf.mxu0
  %1721 = vmatprep.mubr.f32.mxu0 0.0
  %1722 = vmatmul.mubr.f32.gmra.mxu0 %v648
  %v1723 = vpop.f32.mrf.mxu0
  %v1724 = vadd.f32 %v317, %v1723
  %v1725 = vpop.f32.mrf.mxu0
  %1726 = vmatprep.mubr.f32.mxu0 0.0
  %1727 = vmatmul.mubr.f32.gmra.mxu0 %v651
  %v1728 = vpop.f32.mrf.mxu0
  %v1729 = vadd.f32 %v317, %v1728
  %v1730 = vpop.f32.mrf.mxu0
  %1731 = vmatprep.mubr.f32.mxu0 0.0
  %1732 = vmatmul.mubr.f32.gmra.mxu0 %v654
  %v1733 = vpop.f32.mrf.mxu0
  %v1734 = vadd.f32 %v317, %v1733
  %v1735 = vpop.f32.mrf.mxu0
  %1736 = vmatprep.mubr.f32.mxu0 0.0
  %1737 = vmatmul.mubr.f32.gmra.mxu0 %v657
  %v1738 = vpop.f32.mrf.mxu0
  %v1739 = vadd.f32 %v317, %v1738
  %v1740 = vpop.f32.mrf.mxu0
  %1741 = vmatprep.mubr.f32.mxu0 0.0
  %1742 = vmatmul.mubr.f32.gmra.mxu0 %v660
  %v1743 = vpop.f32.mrf.mxu0
  %v1744 = vadd.f32 %v317, %v1743
  %v1745 = vpop.f32.mrf.mxu0
  %1746 = vmatprep.mubr.f32.mxu0 0.0
  %1747 = vmatmul.mubr.f32.gmra.mxu0 %v663
  %v1748 = vpop.f32.mrf.mxu0
  %v1749 = vadd.f32 %v317, %v1748
  %v1750 = vpop.f32.mrf.mxu0
  %1751 = vmatprep.mubr.f32.mxu0 0.0
  %1752 = vmatmul.mubr.f32.gmra.mxu0 %v666
  %v1753 = vpop.f32.mrf.mxu0
  %v1754 = vadd.f32 %v317, %v1753
  %v1755 = vpop.f32.mrf.mxu0
  %1756 = vmatprep.mubr.f32.mxu0 0.0
  %1757 = vmatmul.mubr.f32.gmra.mxu0 %v669
  %v1758 = vpop.f32.mrf.mxu0
  %v1759 = vadd.f32 %v317, %v1758
  %v1760 = vpop.f32.mrf.mxu0
  %1761 = vmatprep.mubr.f32.mxu0 0.0
  %1762 = vmatmul.mubr.f32.gmra.mxu0 %v672
  %v1763 = vpop.f32.mrf.mxu0
  %v1764 = vadd.f32 %v317, %v1763
  %v1765 = vpop.f32.mrf.mxu0
  %1766 = vmatprep.mubr.f32.mxu0 0.0
  %1767 = vmatmul.mubr.f32.gmra.mxu0 %v675
  %v1768 = vpop.f32.mrf.mxu0
  %v1769 = vadd.f32 %v317, %v1768
  %v1770 = vpop.f32.mrf.mxu0
  %1771 = vmatprep.mubr.f32.mxu0 0.0
  %1772 = vmatmul.mubr.f32.gmra.mxu0 %v678
  %v1773 = vpop.f32.mrf.mxu0
  %v1774 = vadd.f32 %v317, %v1773
  %v1775 = vpop.f32.mrf.mxu0
  %1776 = vmatprep.mubr.f32.mxu0 0.0
  %1777 = vmatmul.mubr.f32.gmra.mxu0 %v681
  %v1778 = vpop.f32.mrf.mxu0
  %v1779 = vadd.f32 %v317, %v1778
  %v1780 = vpop.f32.mrf.mxu0
  %1781 = vmatprep.mubr.f32.mxu0 0.0
  %1782 = vmatmul.mubr.f32.gmra.mxu0 %v684
  %v1783 = vpop.f32.mrf.mxu0
  %v1784 = vadd.f32 %v317, %v1783
  %v1785 = vpop.f32.mrf.mxu0
  %1786 = vmatprep.mubr.f32.mxu0 0.0
  %1787 = vmatmul.mubr.f32.gmra.mxu0 %v687
  %v1788 = vpop.f32.mrf.mxu0
  %v1789 = vadd.f32 %v317, %v1788
  %v1790 = vpop.f32.mrf.mxu0
  %1791 = vmatprep.mubr.f32.mxu0 0.0
  %1792 = vmatmul.mubr.f32.gmra.mxu0 %v690
  %v1793 = vpop.f32.mrf.mxu0
  %v1794 = vadd.f32 %v317, %v1793
  %v1795 = vpop.f32.mrf.mxu0
  %1796 = vmatprep.mubr.f32.mxu0 0.0
  %1797 = vmatmul.mubr.f32.gmra.mxu0 %v693
  %v1798 = vpop.f32.mrf.mxu0
  %v1799 = vadd.f32 %v317, %v1798
  %v1800 = vpop.f32.mrf.mxu0
  %1801 = vmatprep.mubr.f32.mxu0 0.0
  %1802 = vmatmul.mubr.f32.gmra.mxu0 %v696
  %v1803 = vpop.f32.mrf.mxu0
  %v1804 = vadd.f32 %v317, %v1803
  %v1805 = vpop.f32.mrf.mxu0
  %1806 = vmatprep.mubr.f32.mxu0 0.0
  %1807 = vmatmul.mubr.f32.gmra.mxu0 %v699
  %v1808 = vpop.f32.mrf.mxu0
  %v1809 = vadd.f32 %v317, %v1808
  %v1810 = vpop.f32.mrf.mxu0
  %1811 = vmatprep.mubr.f32.mxu0 0.0
  %1812 = vmatmul.mubr.f32.gmra.mxu0 %v702
  %v1813 = vpop.f32.mrf.mxu0
  %v1814 = vadd.f32 %v317, %v1813
  %v1815 = vpop.f32.mrf.mxu0
  %1816 = vmatprep.mubr.f32.mxu0 0.0
  %1817 = vmatmul.mubr.f32.gmra.mxu0 %v705
  %v1818 = vpop.f32.mrf.mxu0
  %v1819 = vadd.f32 %v317, %v1818
  %v1820 = vpop.f32.mrf.mxu0
  %1821 = vmatprep.mubr.f32.mxu0 0.0
  %1822 = vmatmul.mubr.f32.gmra.mxu0 %v708
  %v1823 = vpop.f32.mrf.mxu0
  %v1824 = vadd.f32 %v317, %v1823
  %v1825 = vpop.f32.mrf.mxu0
  %1826 = vmatprep.mubr.f32.mxu0 0.0
  %1827 = vmatmul.mubr.f32.gmra.mxu0 %v711
  %v1828 = vpop.f32.mrf.mxu0
  %v1829 = vadd.f32 %v317, %v1828
  %v1830 = vpop.f32.mrf.mxu0
  %1831 = vmatprep.mubr.f32.mxu0 0.0
  %1832 = vmatmul.mubr.f32.gmra.mxu0 %v714
  %v1833 = vpop.f32.mrf.mxu0
  %v1834 = vadd.f32 %v317, %v1833
  %v1835 = vpop.f32.mrf.mxu0
  %1836 = vmatprep.mubr.f32.mxu0 0.0
  %1837 = vmatmul.mubr.f32.gmra.mxu0 %v717
  %v1838 = vpop.f32.mrf.mxu0
  %v1839 = vadd.f32 %v317, %v1838
  %v1840 = vpop.f32.mrf.mxu0
  %1841 = vmatprep.mubr.f32.mxu0 0.0
  %1842 = vmatmul.mubr.f32.gmra.mxu0 %v720
  %v1843 = vpop.f32.mrf.mxu0
  %v1844 = vadd.f32 %v317, %v1843
  %v1845 = vpop.f32.mrf.mxu0
  %1846 = vmatprep.mubr.f32.mxu0 0.0
  %1847 = vmatmul.mubr.f32.gmra.mxu0 %v723
  %v1848 = vpop.f32.mrf.mxu0
  %v1849 = vadd.f32 %v317, %v1848
  %v1850 = vpop.f32.mrf.mxu0
  %1851 = vmatprep.mubr.f32.mxu0 0.0
  %1852 = vmatmul.mubr.f32.gmra.mxu0 %v726
  %v1853 = vpop.f32.mrf.mxu0
  %v1854 = vadd.f32 %v317, %v1853
  %v1855 = vpop.f32.mrf.mxu0
  %1856 = vmatprep.mubr.f32.mxu0 0.0
  %1857 = vmatmul.mubr.f32.gmra.mxu0 %v729
  %v1858 = vpop.f32.mrf.mxu0
  %v1859 = vadd.f32 %v317, %v1858
  %v1860 = vpop.f32.mrf.mxu0
  %1861 = vmatprep.mubr.f32.mxu0 0.0
  %1862 = vmatmul.mubr.f32.gmra.mxu0 %v732
  %v1863 = vpop.f32.mrf.mxu0
  %v1864 = vadd.f32 %v317, %v1863
  %v1865 = vpop.f32.mrf.mxu0
  %1866 = vmatprep.mubr.f32.mxu0 0.0
  %1867 = vmatmul.mubr.f32.gmra.mxu0 %v735
  %v1868 = vpop.f32.mrf.mxu0
  %v1869 = vadd.f32 %v317, %v1868
  %v1870 = vpop.f32.mrf.mxu0
  %1871 = vmatprep.mubr.f32.mxu0 0.0
  %1872 = vmatmul.mubr.f32.gmra.mxu0 %v738
  %v1873 = vpop.f32.mrf.mxu0
  %v1874 = vadd.f32 %v317, %v1873
  %v1875 = vpop.f32.mrf.mxu0
  %1876 = vmatprep.mubr.f32.mxu0 0.0
  %1877 = vmatmul.mubr.f32.gmra.mxu0 %v741
  %v1878 = vpop.f32.mrf.mxu0
  %v1879 = vadd.f32 %v317, %v1878
  %v1880 = vpop.f32.mrf.mxu0
  %1881 = vmatprep.mubr.f32.mxu0 0.0
  %1882 = vmatmul.mubr.f32.gmra.mxu0 %v744
  %v1883 = vpop.f32.mrf.mxu0
  %v1884 = vadd.f32 %v317, %v1883
  %v1885 = vpop.f32.mrf.mxu0
  %1886 = vmatprep.mubr.f32.mxu0 0.0
  %1887 = vmatmul.mubr.f32.gmra.mxu0 %v747
  %v1888 = vpop.f32.mrf.mxu0
  %v1889 = vadd.f32 %v317, %v1888
  %v1890 = vpop.f32.mrf.mxu0
  %1891 = vmatprep.mubr.f32.mxu0 0.0
  %1892 = vmatmul.mubr.f32.gmra.mxu0 %v750
  %v1893 = vpop.f32.mrf.mxu0
  %v1894 = vadd.f32 %v317, %v1893
  %v1895 = vpop.f32.mrf.mxu0
  %1896 = vmatprep.mubr.f32.mxu0 0.0
  %1897 = vmatmul.mubr.f32.gmra.mxu0 %v753
  %v1898 = vpop.f32.mrf.mxu0
  %v1899 = vadd.f32 %v317, %v1898
  %v1900 = vpop.f32.mrf.mxu0
  %1901 = vmatprep.mubr.f32.mxu0 0.0
  %1902 = vmatmul.mubr.f32.gmra.mxu0 %v756
  %v1903 = vpop.f32.mrf.mxu0
  %v1904 = vadd.f32 %v317, %v1903
  %v1905 = vpop.f32.mrf.mxu0
  %1906 = vmatprep.mubr.f32.mxu0 0.0
  %1907 = vmatmul.mubr.f32.gmra.mxu0 %v759
  %v1908 = vpop.f32.mrf.mxu0
  %v1909 = vadd.f32 %v317, %v1908
  %v1910 = vpop.f32.mrf.mxu0
  %1911 = vmatprep.mubr.f32.mxu0 0.0
  %1912 = vmatmul.mubr.f32.gmra.mxu0 %v762
  %v1913 = vpop.f32.mrf.mxu0
  %v1914 = vadd.f32 %v317, %v1913
  %v1915 = vpop.f32.mrf.mxu0
  %1916 = vmatprep.mubr.f32.mxu0 0.0
  %1917 = vmatmul.mubr.f32.gmra.mxu0 %v765
  %v1918 = vpop.f32.mrf.mxu0
  %v1919 = vadd.f32 %v317, %v1918
  %v1920 = vpop.f32.mrf.mxu0
  %1921 = vmatprep.mubr.f32.mxu0 0.0
  %1922 = vmatmul.mubr.f32.gmra.mxu0 %v768
  %v1923 = vpop.f32.mrf.mxu0
  %v1924 = vadd.f32 %v317, %v1923
  %v1925 = vpop.f32.mrf.mxu0
  %1926 = vmatprep.mubr.f32.mxu0 0.0
  %1927 = vmatmul.mubr.f32.gmra.mxu0 %v771
  %v1928 = vpop.f32.mrf.mxu0
  %v1929 = vadd.f32 %v317, %v1928
  %v1930 = vpop.f32.mrf.mxu0
  %1931 = vmatprep.mubr.f32.mxu0 0.0
  %1932 = vmatmul.mubr.f32.gmra.mxu0 %v774
  %v1933 = vpop.f32.mrf.mxu0
  %v1934 = vadd.f32 %v317, %v1933
  %v1935 = vpop.f32.mrf.mxu0
  %1936 = vmatprep.mubr.f32.mxu0 0.0
  %1937 = vmatmul.mubr.f32.gmra.mxu0 %v777
  %v1938 = vpop.f32.mrf.mxu0
  %v1939 = vadd.f32 %v317, %v1938
  %v1940 = vpop.f32.mrf.mxu0
  %1941 = vmatprep.mubr.f32.mxu0 0.0
  %1942 = vmatmul.mubr.f32.gmra.mxu0 %v780
  %v1943 = vpop.f32.mrf.mxu0
  %v1944 = vadd.f32 %v317, %v1943
  %v1945 = vpop.f32.mrf.mxu0
  %1946 = vmatprep.mubr.f32.mxu0 0.0
  %1947 = vmatmul.mubr.f32.gmra.mxu0 %v783
  %v1948 = vpop.f32.mrf.mxu0
  %v1949 = vadd.f32 %v317, %v1948
  %v1950 = vpop.f32.mrf.mxu0
  %1951 = vmatprep.mubr.f32.mxu0 0.0
  %1952 = vmatmul.mubr.f32.gmra.mxu0 %v786
  %v1953 = vpop.f32.mrf.mxu0
  %v1954 = vadd.f32 %v317, %v1953
  %v1955 = vpop.f32.mrf.mxu0
  %1956 = vmatprep.mubr.f32.mxu0 0.0
  %1957 = vmatmul.mubr.f32.gmra.mxu0 %v789
  %v1958 = vpop.f32.mrf.mxu0
  %v1959 = vadd.f32 %v317, %v1958
  %v1960 = vpop.f32.mrf.mxu0
  %1961 = vmatprep.mubr.f32.mxu0 0.0
  %1962 = vmatmul.mubr.f32.gmra.mxu0 %v792
  %v1963 = vpop.f32.mrf.mxu0
  %v1964 = vadd.f32 %v317, %v1963
  %v1965 = vpop.f32.mrf.mxu0
  %1966 = vmatprep.mubr.f32.mxu0 0.0
  %1967 = vmatmul.mubr.f32.gmra.mxu0 %v795
  %v1968 = vpop.f32.mrf.mxu0
  %v1969 = vadd.f32 %v317, %v1968
  %v1970 = vpop.f32.mrf.mxu0
  %1971 = vmatprep.mubr.f32.mxu0 0.0
  %1972 = vmatmul.mubr.f32.gmra.mxu0 %v798
  %v1973 = vpop.f32.mrf.mxu0
  %v1974 = vadd.f32 %v317, %v1973
  %v1975 = vpop.f32.mrf.mxu0
  %1976 = vmatprep.mubr.f32.mxu0 0.0
  %1977 = vmatmul.mubr.f32.gmra.mxu0 %v801
  %v1978 = vpop.f32.mrf.mxu0
  %v1979 = vadd.f32 %v317, %v1978
  %v1980 = vpop.f32.mrf.mxu0
  %1981 = vmatprep.mubr.f32.mxu0 0.0
  %1982 = vmatmul.mubr.f32.gmra.mxu0 %v804
  %v1983 = vpop.f32.mrf.mxu0
  %v1984 = vadd.f32 %v317, %v1983
  %v1985 = vpop.f32.mrf.mxu0
  %1986 = vmatprep.mubr.f32.mxu0 0.0
  %1987 = vmatmul.mubr.f32.gmra.mxu0 %v807
  %v1988 = vpop.f32.mrf.mxu0
  %v1989 = vadd.f32 %v317, %v1988
  %v1990 = vpop.f32.mrf.mxu0
  %1991 = vmatprep.mubr.f32.mxu0 0.0
  %1992 = vmatmul.mubr.f32.gmra.mxu0 %v810
  %v1993 = vpop.f32.mrf.mxu0
  %v1994 = vadd.f32 %v317, %v1993
  %v1995 = vpop.f32.mrf.mxu0
  %1996 = vmatprep.mubr.f32.mxu0 0.0
  %1997 = vmatmul.mubr.f32.gmra.mxu0 %v813
  %v1998 = vpop.f32.mrf.mxu0
  %v1999 = vadd.f32 %v317, %v1998
  %v2000 = vpop.f32.mrf.mxu0
  %2001 = vmatprep.mubr.f32.mxu0 0.0
  %2002 = vmatmul.mubr.f32.gmra.mxu0 %v816
  %v2003 = vpop.f32.mrf.mxu0
  %v2004 = vadd.f32 %v317, %v2003
  %v2005 = vpop.f32.mrf.mxu0
  %2006 = vmatprep.mubr.f32.mxu0 0.0
  %2007 = vmatmul.mubr.f32.gmra.mxu0 %v819
  %v2008 = vpop.f32.mrf.mxu0
  %v2009 = vadd.f32 %v317, %v2008
  %v2010 = vpop.f32.mrf.mxu0
  %2011 = vmatprep.mubr.f32.mxu0 0.0
  %2012 = vmatmul.mubr.f32.gmra.mxu0 %v822
  %v2013 = vpop.f32.mrf.mxu0
  %v2014 = vadd.f32 %v317, %v2013
  %v2015 = vpop.f32.mrf.mxu0
  %2016 = vmatprep.mubr.f32.mxu0 0.0
  %2017 = vmatmul.mubr.f32.gmra.mxu0 %v825
  %v2018 = vpop.f32.mrf.mxu0
  %v2019 = vadd.f32 %v317, %v2018
  %v2020 = vpop.f32.mrf.mxu0
  %2021 = vmatprep.mubr.f32.mxu0 0.0
  %2022 = vmatmul.mubr.f32.gmra.mxu0 %v828
  %v2023 = vpop.f32.mrf.mxu0
  %v2024 = vadd.f32 %v317, %v2023
  %v2025 = vpop.f32.mrf.mxu0
  %2026 = vmatprep.mubr.f32.mxu0 0.0
  %2027 = vmatmul.mubr.f32.gmra.mxu0 %v831
  %v2028 = vpop.f32.mrf.mxu0
  %v2029 = vadd.f32 %v317, %v2028
  %v2030 = vpop.f32.mrf.mxu0
  %2031 = vmatprep.mubr.f32.mxu0 0.0
  %2032 = vmatmul.mubr.f32.gmra.mxu0 %v834
  %v2033 = vpop.f32.mrf.mxu0
  %v2034 = vadd.f32 %v317, %v2033
  %v2035 = vpop.f32.mrf.mxu0
  %2036 = vmatprep.mubr.f32.mxu0 0.0
  %2037 = vmatmul.mubr.f32.gmra.mxu0 %v837
  %v2038 = vpop.f32.mrf.mxu0
  %v2039 = vadd.f32 %v317, %v2038
  %v2040 = vpop.f32.mrf.mxu0
  %2041 = vmatprep.mubr.f32.mxu0 0.0
  %2042 = vmatmul.mubr.f32.gmra.mxu0 %v840
  %v2043 = vpop.f32.mrf.mxu0
  %v2044 = vadd.f32 %v317, %v2043
  %v2045 = vpop.f32.mrf.mxu0
  %2046 = vmatprep.mubr.f32.mxu0 0.0
  %2047 = vmatmul.mubr.f32.gmra.mxu0 %v843
  %v2048 = vpop.f32.mrf.mxu0
  %v2049 = vadd.f32 %v317, %v2048
  %v2050 = vpop.f32.mrf.mxu0
  %2051 = vmatprep.mubr.f32.mxu0 0.0
  %2052 = vmatmul.mubr.f32.gmra.mxu0 %v846
  %v2053 = vpop.f32.mrf.mxu0
  %v2054 = vadd.f32 %v317, %v2053
  %v2055 = vpop.f32.mrf.mxu0
  %2056 = vmatprep.mubr.f32.mxu0 0.0
  %2057 = vmatmul.mubr.f32.gmra.mxu0 %v849
  %v2058 = vpop.f32.mrf.mxu0
  %v2059 = vadd.f32 %v317, %v2058
  %v2060 = vpop.f32.mrf.mxu0
  %2061 = vmatprep.mubr.f32.mxu0 0.0
  %2062 = vmatmul.mubr.f32.gmra.mxu0 %v852
  %v2063 = vpop.f32.mrf.mxu0
  %v2064 = vadd.f32 %v317, %v2063
  %v2065 = vpop.f32.mrf.mxu0
  %2066 = vmatprep.mubr.f32.mxu0 0.0
  %2067 = vmatmul.mubr.f32.gmra.mxu0 %v855
  %v2068 = vpop.f32.mrf.mxu0
  %v2069 = vadd.f32 %v317, %v2068
  %v2070 = vpop.f32.mrf.mxu0
  %2071 = vmatprep.mubr.f32.mxu0 0.0
  %2072 = vmatmul.mubr.f32.gmra.mxu0 %v858
  %v2073 = vpop.f32.mrf.mxu0
  %v2074 = vadd.f32 %v317, %v2073
  %v2075 = vpop.f32.mrf.mxu0
  %2076 = vmatprep.mubr.f32.mxu0 0.0
  %2077 = vmatmul.mubr.f32.gmra.mxu0 %v861
  %v2078 = vpop.f32.mrf.mxu0
  %v2079 = vadd.f32 %v317, %v2078
  %v2080 = vpop.f32.mrf.mxu0
  %2081 = vmatprep.mubr.f32.mxu0 0.0
  %2082 = vmatmul.mubr.f32.gmra.mxu0 %v864
  %v2083 = vpop.f32.mrf.mxu0
  %v2084 = vadd.f32 %v317, %v2083
  %v2085 = vpop.f32.mrf.mxu0
  %2086 = vmatprep.mubr.f32.mxu0 0.0
  %2087 = vmatmul.mubr.f32.gmra.mxu0 %v867
  %v2088 = vpop.f32.mrf.mxu0
  %v2089 = vadd.f32 %v317, %v2088
  %v2090 = vpop.f32.mrf.mxu0
  %2091 = vmatprep.mubr.f32.mxu0 0.0
  %2092 = vmatmul.mubr.f32.gmra.mxu0 %v870
  %v2093 = vpop.f32.mrf.mxu0
  %v2094 = vadd.f32 %v317, %v2093
  %v2095 = vpop.f32.mrf.mxu0
  %2096 = vmatprep.mubr.f32.mxu0 0.0
  %2097 = vmatmul.mubr.f32.gmra.mxu0 %v873
  %v2098 = vpop.f32.mrf.mxu0
  %v2099 = vadd.f32 %v317, %v2098
  %v2100 = vpop.f32.mrf.mxu0
  %2101 = vmatprep.mubr.f32.mxu0 0.0
  %2102 = vmatmul.mubr.f32.gmra.mxu0 %v876
  %v2103 = vpop.f32.mrf.mxu0
  %v2104 = vadd.f32 %v317, %v2103
  %v2105 = vpop.f32.mrf.mxu0
  %2106 = vmatprep.mubr.f32.mxu0 0.0
  %2107 = vmatmul.mubr.f32.gmra.mxu0 %v879
  %v2108 = vpop.f32.mrf.mxu0
  %v2109 = vadd.f32 %v317, %v2108
  %v2110 = vpop.f32.mrf.mxu0
  %2111 = vmatprep.mubr.f32.mxu0 0.0
  %2112 = vmatmul.mubr.f32.gmra.mxu0 %v882
  %v2113 = vpop.f32.mrf.mxu0
  %v2114 = vadd.f32 %v317, %v2113
  %v2115 = vpop.f32.mrf.mxu0
  %2116 = vmatprep.mubr.f32.mxu0 0.0
  %2117 = vmatmul.mubr.f32.gmra.mxu0 %v885
  %v2118 = vpop.f32.mrf.mxu0
  %v2119 = vadd.f32 %v317, %v2118
  %v2120 = vpop.f32.mrf.mxu0
  %2121 = vmatprep.mubr.f32.mxu0 0.0
  %2122 = vmatmul.mubr.f32.gmra.mxu0 %v888
  %v2123 = vpop.f32.mrf.mxu0
  %v2124 = vadd.f32 %v317, %v2123
  %v2125 = vpop.f32.mrf.mxu0
  %2126 = vmatprep.mubr.f32.mxu0 0.0
  %2127 = vmatmul.mubr.f32.gmra.mxu0 %v891
  %v2128 = vpop.f32.mrf.mxu0
  %v2129 = vadd.f32 %v317, %v2128
  %v2130 = vpop.f32.mrf.mxu0
  %2131 = vmatprep.mubr.f32.mxu0 0.0
  %2132 = vmatmul.mubr.f32.gmra.mxu0 %v894
  %v2133 = vpop.f32.mrf.mxu0
  %v2134 = vadd.f32 %v317, %v2133
  %v2135 = vpop.f32.mrf.mxu0
  %2136 = vmatprep.mubr.f32.mxu0 0.0
  %2137 = vmatmul.mubr.f32.gmra.mxu0 %v897
  %v2138 = vpop.f32.mrf.mxu0
  %v2139 = vadd.f32 %v317, %v2138
  %v2140 = vpop.f32.mrf.mxu0
  %2141 = vmatprep.mubr.f32.mxu0 0.0
  %2142 = vmatmul.mubr.f32.gmra.mxu0 %v900
  %v2143 = vpop.f32.mrf.mxu0
  %v2144 = vadd.f32 %v317, %v2143
  %v2145 = vpop.f32.mrf.mxu0
  %2146 = vmatprep.mubr.f32.mxu0 0.0
  %2147 = vmatmul.mubr.f32.gmra.mxu0 %v903
  %v2148 = vpop.f32.mrf.mxu0
  %v2149 = vadd.f32 %v317, %v2148
  %v2150 = vpop.f32.mrf.mxu0
  %2151 = vmatprep.mubr.f32.mxu0 0.0
  %2152 = vmatmul.mubr.f32.gmra.mxu0 %v906
  %v2153 = vpop.f32.mrf.mxu0
  %v2154 = vadd.f32 %v317, %v2153
  %v2155 = vpop.f32.mrf.mxu0
  %2156 = vmatprep.mubr.f32.mxu0 0.0
  %2157 = vmatmul.mubr.f32.gmra.mxu0 %v909
  %v2158 = vpop.f32.mrf.mxu0
  %v2159 = vadd.f32 %v317, %v2158
  %v2160 = vpop.f32.mrf.mxu0
  %2161 = vmatprep.mubr.f32.mxu0 0.0
  %2162 = vmatmul.mubr.f32.gmra.mxu0 %v912
  %v2163 = vpop.f32.mrf.mxu0
  %v2164 = vadd.f32 %v317, %v2163
  %v2165 = vpop.f32.mrf.mxu0
  %2166 = vmatprep.mubr.f32.mxu0 0.0
  %2167 = vmatmul.mubr.f32.gmra.mxu0 %v915
  %v2168 = vpop.f32.mrf.mxu0
  %v2169 = vadd.f32 %v317, %v2168
  %v2170 = vpop.f32.mrf.mxu0
  %2171 = vmatprep.mubr.f32.mxu0 0.0
  %2172 = vmatmul.mubr.f32.gmra.mxu0 %v918
  %v2173 = vpop.f32.mrf.mxu0
  %v2174 = vadd.f32 %v317, %v2173
  %v2175 = vpop.f32.mrf.mxu0
  %2176 = vmatprep.mubr.f32.mxu0 0.0
  %2177 = vmatmul.mubr.f32.gmra.mxu0 %v921
  %v2178 = vpop.f32.mrf.mxu0
  %v2179 = vadd.f32 %v317, %v2178
  %v2180 = vpop.f32.mrf.mxu0
  %2181 = vmatprep.mubr.f32.mxu0 0.0
  %2182 = vmatmul.mubr.f32.gmra.mxu0 %v924
  %v2183 = vpop.f32.mrf.mxu0
  %v2184 = vadd.f32 %v317, %v2183
  %v2185 = vpop.f32.mrf.mxu0
  %2186 = vmatprep.mubr.f32.mxu0 0.0
  %2187 = vmatmul.mubr.f32.gmra.mxu0 %v927
  %v2188 = vpop.f32.mrf.mxu0
  %v2189 = vadd.f32 %v317, %v2188
  %v2190 = vpop.f32.mrf.mxu0
  %2191 = vmatprep.mubr.f32.mxu0 0.0
  %2192 = vmatmul.mubr.f32.gmra.mxu0 %v930
  %v2193 = vpop.f32.mrf.mxu0
  %v2194 = vadd.f32 %v317, %v2193
  %v2195 = vpop.f32.mrf.mxu0
  %2196 = vmatprep.mubr.f32.mxu0 0.0
  %2197 = vmatmul.mubr.f32.gmra.mxu0 %v933
  %v2198 = vpop.f32.mrf.mxu0
  %v2199 = vadd.f32 %v317, %v2198
  %v2200 = vpop.f32.mrf.mxu0
  %2201 = vmatprep.mubr.f32.mxu0 0.0
  %2202 = vmatmul.mubr.f32.gmra.mxu0 %v936
  %v2203 = vpop.f32.mrf.mxu0
  %v2204 = vadd.f32 %v317, %v2203
  %v2205 = vpop.f32.mrf.mxu0
  %2206 = vmatprep.mubr.f32.mxu0 0.0
  %2207 = vmatmul.mubr.f32.gmra.mxu0 %v939
  %v2208 = vpop.f32.mrf.mxu0
  %v2209 = vadd.f32 %v317, %v2208
  %v2210 = vpop.f32.mrf.mxu0
  %2211 = vmatprep.mubr.f32.mxu0 0.0
  %2212 = vmatmul.mubr.f32.gmra.mxu0 %v942
  %v2213 = vpop.f32.mrf.mxu0
  %v2214 = vadd.f32 %v317, %v2213
  %v2215 = vpop.f32.mrf.mxu0
  %2216 = vmatprep.mubr.f32.mxu0 0.0
  %2217 = vmatmul.mubr.f32.gmra.mxu0 %v945
  %v2218 = vpop.f32.mrf.mxu0
  %v2219 = vadd.f32 %v317, %v2218
  %v2220 = vpop.f32.mrf.mxu0
  %2221 = vmatprep.mubr.f32.mxu0 0.0
  %2222 = vmatmul.mubr.f32.gmra.mxu0 %v948
  %v2223 = vpop.f32.mrf.mxu0
  %v2224 = vadd.f32 %v317, %v2223
  %v2225 = vpop.f32.mrf.mxu0
  %2226 = vmatprep.mubr.f32.mxu0 0.0
  %2227 = vmatmul.mubr.f32.gmra.mxu0 %v951
  %v2228 = vpop.f32.mrf.mxu0
  %v2229 = vadd.f32 %v317, %v2228
  %v2230 = vpop.f32.mrf.mxu0
  %2231 = vmatprep.mubr.f32.mxu0 0.0
  %2232 = vmatmul.mubr.f32.gmra.mxu0 %v954
  %v2233 = vpop.f32.mrf.mxu0
  %v2234 = vadd.f32 %v317, %v2233
  %v2235 = vpop.f32.mrf.mxu0
  %2236 = vmatprep.mubr.f32.mxu0 0.0
  %2237 = vmatmul.mubr.f32.gmra.mxu0 %v957
  %v2238 = vpop.f32.mrf.mxu0
  %v2239 = vadd.f32 %v317, %v2238
  %v2240 = vpop.f32.mrf.mxu0
  %2241 = vmatprep.mubr.f32.mxu0 0.0
  %2242 = vmatmul.mubr.f32.gmra.mxu0 %v960
  %v2243 = vpop.f32.mrf.mxu0
  %v2244 = vadd.f32 %v317, %v2243
  %v2245 = vpop.f32.mrf.mxu0
  %2246 = vmatprep.mubr.f32.mxu0 0.0
  %2247 = vmatmul.mubr.f32.gmra.mxu0 %v963
  %v2248 = vpop.f32.mrf.mxu0
  %v2249 = vadd.f32 %v317, %v2248
  %v2250 = vpop.f32.mrf.mxu0
  %2251 = vmatprep.mubr.f32.mxu0 0.0
  %2252 = vmatmul.mubr.f32.gmra.mxu0 %v966
  %v2253 = vpop.f32.mrf.mxu0
  %v2254 = vadd.f32 %v317, %v2253
  %v2255 = vpop.f32.mrf.mxu0
  %2256 = vmatprep.mubr.f32.mxu0 0.0
  %2257 = vmatmul.mubr.f32.gmra.mxu0 %v969
  %v2258 = vpop.f32.mrf.mxu0
  %v2259 = vadd.f32 %v317, %v2258
  %v2260 = vpop.f32.mrf.mxu0
  %2261 = vmatprep.mubr.f32.mxu0 0.0
  %2262 = vmatmul.mubr.f32.gmra.mxu0 %v972
  %v2263 = vpop.f32.mrf.mxu0
  %v2264 = vadd.f32 %v317, %v2263
  %v2265 = vpop.f32.mrf.mxu0
  %2266 = vmatprep.mubr.f32.mxu0 0.0
  %2267 = vmatmul.mubr.f32.gmra.mxu0 %v975
  %v2268 = vpop.f32.mrf.mxu0
  %v2269 = vadd.f32 %v317, %v2268
  %v2270 = vpop.f32.mrf.mxu0
  %2271 = vmatprep.mubr.f32.mxu0 0.0
  %2272 = vmatmul.mubr.f32.gmra.mxu0 %v978
  %v2273 = vpop.f32.mrf.mxu0
  %v2274 = vadd.f32 %v317, %v2273
  %v2275 = vpop.f32.mrf.mxu0
  %2276 = vmatprep.mubr.f32.mxu0 0.0
  %2277 = vmatmul.mubr.f32.gmra.mxu0 %v981
  %v2278 = vpop.f32.mrf.mxu0
  %v2279 = vadd.f32 %v317, %v2278
  %v2280 = vpop.f32.mrf.mxu0
  %2281 = vmatprep.mubr.f32.mxu0 0.0
  %2282 = vmatmul.mubr.f32.gmra.mxu0 %v984
  %v2283 = vpop.f32.mrf.mxu0
  %v2284 = vadd.f32 %v317, %v2283
  %v2285 = vpop.f32.mrf.mxu0
  %2286 = vmatprep.mubr.f32.mxu0 0.0
  %2287 = vmatmul.mubr.f32.gmra.mxu0 %v987
  %v2288 = vpop.f32.mrf.mxu0
  %v2289 = vadd.f32 %v317, %v2288
  %v2290 = vpop.f32.mrf.mxu0
  %2291 = vmatprep.mubr.f32.mxu0 0.0
  %2292 = vmatmul.mubr.f32.gmra.mxu0 %v990
  %v2293 = vpop.f32.mrf.mxu0
  %v2294 = vadd.f32 %v317, %v2293
  %v2295 = vpop.f32.mrf.mxu0
  %2296 = vmatprep.mubr.f32.mxu0 0.0
  %2297 = vmatmul.mubr.f32.gmra.mxu0 %v993
  %v2298 = vpop.f32.mrf.mxu0
  %v2299 = vadd.f32 %v317, %v2298
  %v2300 = vpop.f32.mrf.mxu0
  %2301 = vmatprep.mubr.f32.mxu0 0.0
  %2302 = vmatmul.mubr.f32.gmra.mxu0 %v996
  %v2303 = vpop.f32.mrf.mxu0
  %v2304 = vadd.f32 %v317, %v2303
  %v2305 = vpop.f32.mrf.mxu0
  %2306 = vmatprep.mubr.f32.mxu0 0.0
  %2307 = vmatmul.mubr.f32.gmra.mxu0 %v999
  %v2308 = vpop.f32.mrf.mxu0
  %v2309 = vadd.f32 %v317, %v2308
  %v2310 = vpop.f32.mrf.mxu0
  %2311 = vmatprep.mubr.f32.mxu0 0.0
  %2312 = vmatmul.mubr.f32.gmra.mxu0 %v1002
  %v2313 = vpop.f32.mrf.mxu0
  %v2314 = vadd.f32 %v317, %v2313
  %v2315 = vpop.f32.mrf.mxu0
  %2316 = vmatprep.mubr.f32.mxu0 0.0
  %2317 = vmatmul.mubr.f32.gmra.mxu0 %v1005
  %v2318 = vpop.f32.mrf.mxu0
  %v2319 = vadd.f32 %v317, %v2318
  %v2320 = vpop.f32.mrf.mxu0
  %2321 = vmatprep.mubr.f32.mxu0 0.0
  %2322 = vmatmul.mubr.f32.gmra.mxu0 %v1008
  %v2323 = vpop.f32.mrf.mxu0
  %v2324 = vadd.f32 %v317, %v2323
  %v2325 = vpop.f32.mrf.mxu0
  %2326 = vmatprep.mubr.f32.mxu0 0.0
  %2327 = vmatmul.mubr.f32.gmra.mxu0 %v1011
  %v2328 = vpop.f32.mrf.mxu0
  %v2329 = vadd.f32 %v317, %v2328
  %v2330 = vpop.f32.mrf.mxu0
  %2331 = vmatprep.mubr.f32.mxu0 0.0
  %2332 = vmatmul.mubr.f32.gmra.mxu0 %v1014
  %v2333 = vpop.f32.mrf.mxu0
  %v2334 = vadd.f32 %v317, %v2333
  %v2335 = vpop.f32.mrf.mxu0
  %2336 = vmatprep.mubr.f32.mxu0 0.0
  %2337 = vmatmul.mubr.f32.gmra.mxu0 %v1017
  %v2338 = vpop.f32.mrf.mxu0
  %v2339 = vadd.f32 %v317, %v2338
  %v2340 = vpop.f32.mrf.mxu0
  %2341 = vmatprep.mubr.f32.mxu0 0.0
  %2342 = vmatmul.mubr.f32.gmra.mxu0 %v1020
  %v2343 = vpop.f32.mrf.mxu0
  %v2344 = vadd.f32 %v317, %v2343
  %v2345 = vpop.f32.mrf.mxu0
  %2346 = vmatprep.mubr.f32.mxu0 0.0
  %2347 = vmatmul.mubr.f32.gmra.mxu0 %v1023
  %v2348 = vpop.f32.mrf.mxu0
  %v2349 = vadd.f32 %v317, %v2348
  %v2350 = vpop.f32.mrf.mxu0
  %2351 = vmatprep.mubr.f32.mxu0 0.0
  %2352 = vmatmul.mubr.f32.gmra.mxu0 %v1026
  %v2353 = vpop.f32.mrf.mxu0
  %v2354 = vadd.f32 %v317, %v2353
  %v2355 = vpop.f32.mrf.mxu0
  %2356 = vmatprep.mubr.f32.mxu0 0.0
  %2357 = vmatmul.mubr.f32.gmra.mxu0 %v1029
  %v2358 = vpop.f32.mrf.mxu0
  %v2359 = vadd.f32 %v317, %v2358
  %v2360 = vpop.f32.mrf.mxu0
  %2361 = vmatprep.mubr.f32.mxu0 0.0
  %2362 = vmatmul.mubr.f32.gmra.mxu0 %v1032
  %v2363 = vpop.f32.mrf.mxu0
  %v2364 = vadd.f32 %v317, %v2363
  %v2365 = vpop.f32.mrf.mxu0
  %2366 = vmatprep.mubr.f32.mxu0 0.0
  %2367 = vmatmul.mubr.f32.gmra.mxu0 %v1035
  %v2368 = vpop.f32.mrf.mxu0
  %v2369 = vadd.f32 %v317, %v2368
  %v2370 = vpop.f32.mrf.mxu0
  %2371 = vmatprep.mubr.f32.mxu0 0.0
  %2372 = vmatmul.mubr.f32.gmra.mxu0 %v1038
  %v2373 = vpop.f32.mrf.mxu0
  %v2374 = vadd.f32 %v317, %v2373
  %v2375 = vpop.f32.mrf.mxu0
  %2376 = vmatprep.mubr.f32.mxu0 0.0
  %2377 = vmatmul.mubr.f32.gmra.mxu0 %v1041
  %v2378 = vpop.f32.mrf.mxu0
  %v2379 = vadd.f32 %v317, %v2378
  %v2380 = vpop.f32.mrf.mxu0
  %2381 = vmatprep.mubr.f32.mxu0 0.0
  %2382 = vmatmul.mubr.f32.gmra.mxu0 %v1044
  %v2383 = vpop.f32.mrf.mxu0
  %v2384 = vadd.f32 %v317, %v2383
  %v2385 = vpop.f32.mrf.mxu0
  %2386 = vmatprep.mubr.f32.mxu0 0.0
  %2387 = vmatmul.mubr.f32.gmra.mxu0 %v1047
  %v2388 = vpop.f32.mrf.mxu0
  %v2389 = vadd.f32 %v317, %v2388
  %v2390 = vpop.f32.mrf.mxu0
  %2391 = vmatprep.mubr.f32.mxu0 0.0
  %2392 = vmatmul.mubr.f32.gmra.mxu0 %v1050
  %v2393 = vpop.f32.mrf.mxu0
  %v2394 = vadd.f32 %v317, %v2393
  %v2395 = vpop.f32.mrf.mxu0
  %2396 = vmatprep.mubr.f32.mxu0 0.0
  %2397 = vmatmul.mubr.f32.gmra.mxu0 %v1053
  %v2398 = vpop.f32.mrf.mxu0
  %v2399 = vadd.f32 %v317, %v2398
  %v2400 = vpop.f32.mrf.mxu0
  %2401 = vmatprep.mubr.f32.mxu0 0.0
  %2402 = vmatmul.mubr.f32.gmra.mxu0 %v1056
  %v2403 = vpop.f32.mrf.mxu0
  %v2404 = vadd.f32 %v317, %v2403
  %v2405 = vpop.f32.mrf.mxu0
  %2406 = vmatprep.mubr.f32.mxu0 0.0
  %2407 = vmatmul.mubr.f32.gmra.mxu0 %v1059
  %v2408 = vpop.f32.mrf.mxu0
  %v2409 = vadd.f32 %v317, %v2408
  %v2410 = vpop.f32.mrf.mxu0
  %2411 = vmatprep.mubr.f32.mxu0 0.0
  %2412 = vmatmul.mubr.f32.gmra.mxu0 %v1062
  %v2413 = vpop.f32.mrf.mxu0
  %v2414 = vadd.f32 %v317, %v2413
  %v2415 = vpop.f32.mrf.mxu0
  %2416 = vmatprep.mubr.f32.mxu0 0.0
  %2417 = vmatmul.mubr.f32.gmra.mxu0 %v1065
  %v2418 = vpop.f32.mrf.mxu0
  %v2419 = vadd.f32 %v317, %v2418
  %v2420 = vpop.f32.mrf.mxu0
  %2421 = vmatprep.mubr.f32.mxu0 0.0
  %2422 = vmatmul.mubr.f32.gmra.mxu0 %v1068
  %v2423 = vpop.f32.mrf.mxu0
  %v2424 = vadd.f32 %v317, %v2423
  %v2425 = vpop.f32.mrf.mxu0
  %2426 = vmatprep.mubr.f32.mxu0 0.0
  %2427 = vmatmul.mubr.f32.gmra.mxu0 %v1071
  %v2428 = vpop.f32.mrf.mxu0
  %v2429 = vadd.f32 %v317, %v2428
  %v2430 = vpop.f32.mrf.mxu0
  %2431 = vmatprep.mubr.f32.mxu0 0.0
  %2432 = vmatmul.mubr.f32.gmra.mxu0 %v1074
  %v2433 = vpop.f32.mrf.mxu0
  %v2434 = vadd.f32 %v317, %v2433
  %v2435 = vpop.f32.mrf.mxu0
  %2436 = vmatprep.mubr.f32.mxu0 0.0
  %2437 = vmatmul.mubr.f32.gmra.mxu0 %v1077
  %v2438 = vpop.f32.mrf.mxu0
  %v2439 = vadd.f32 %v317, %v2438
  %v2440 = vpop.f32.mrf.mxu0
  %2441 = vmatprep.mubr.f32.mxu0 0.0
  %2442 = vmatmul.mubr.f32.gmra.mxu0 %v1080
  %v2443 = vpop.f32.mrf.mxu0
  %v2444 = vadd.f32 %v317, %v2443
  %v2445 = vpop.f32.mrf.mxu0
  %2446 = vmatprep.mubr.f32.mxu0 0.0
  %2447 = vmatmul.mubr.f32.gmra.mxu0 %v1083
  %v2448 = vpop.f32.mrf.mxu0
  %v2449 = vadd.f32 %v317, %v2448
  %v2450 = vpop.f32.mrf.mxu0
  %2451 = vmatprep.mubr.f32.mxu0 0.0
  %2452 = vmatmul.mubr.f32.gmra.mxu0 %v1086
  %v2453 = vpop.f32.mrf.mxu0
  %v2454 = vadd.f32 %v317, %v2453
  %v2455 = vpop.f32.mrf.mxu0
  %2456 = vmatprep.mubr.f32.mxu0 0.0
  %2457 = vmatmul.mubr.f32.gmra.mxu0 %v1089
  %v2458 = vpop.f32.mrf.mxu0
  %v2459 = vadd.f32 %v317, %v2458
  %v2460 = vpop.f32.mrf.mxu0
  %2461 = vmatprep.mubr.f32.mxu0 0.0
  %2462 = vmatmul.mubr.f32.gmra.mxu0 %v1092
  %v2463 = vpop.f32.mrf.mxu0
  %v2464 = vadd.f32 %v317, %v2463
  %v2465 = vpop.f32.mrf.mxu0
  %2466 = vmatprep.mubr.f32.mxu0 0.0
  %2467 = vmatmul.mubr.f32.gmra.mxu0 %v1095
  %v2468 = vpop.f32.mrf.mxu0
  %v2469 = vadd.f32 %v317, %v2468
  %v2470 = vpop.f32.mrf.mxu0
  %2471 = vmatprep.mubr.f32.mxu0 0.0
  %2472 = vmatmul.mubr.f32.gmra.mxu0 %v1098
  %v2473 = vpop.f32.mrf.mxu0
  %v2474 = vadd.f32 %v317, %v2473
  %v2475 = vpop.f32.mrf.mxu0
  %2476 = vmatprep.mubr.f32.mxu0 0.0
  %2477 = vmatmul.mubr.f32.gmra.mxu0 %v1101
  %v2478 = vpop.f32.mrf.mxu0
  %v2479 = vadd.f32 %v317, %v2478
  %v2480 = vpop.f32.mrf.mxu0
  %2481 = vmatprep.mubr.f32.mxu0 0.0
  %2482 = vmatmul.mubr.f32.gmra.mxu0 %v1104
  %v2483 = vpop.f32.mrf.mxu0
  %v2484 = vadd.f32 %v317, %v2483
  %v2485 = vpop.f32.mrf.mxu0
  %2486 = vmatprep.mubr.f32.mxu0 0.0
  %2487 = vmatmul.mubr.f32.gmra.mxu0 %v1107
  %v2488 = vpop.f32.mrf.mxu0
  %v2489 = vadd.f32 %v317, %v2488
  %v2490 = vpop.f32.mrf.mxu0
  %2491 = vmatprep.mubr.f32.mxu0 0.0
  %2492 = vmatmul.mubr.f32.gmra.mxu0 %v1110
  %v2493 = vpop.f32.mrf.mxu0
  %v2494 = vadd.f32 %v317, %v2493
  %v2495 = vpop.f32.mrf.mxu0
  %2496 = vdwg.mxu0
  %v2497 = vmax.f32 %v1179, 0.0
  %v2498 = vmax.f32 %v1184, 0.0
  %v2499 = vmax.f32 %v1189, 0.0
  %v2500 = vmax.f32 %v1194, 0.0
  %v2501 = vmax.f32 %v1199, 0.0
  %v2502 = vmax.f32 %v1204, 0.0
  %v2503 = vmax.f32 %v1209, 0.0
  %v2504 = vmax.f32 %v1214, 0.0
  %v2505 = vmax.f32 %v1219, 0.0
  %v2506 = vmax.f32 %v1224, 0.0
  %v2507 = vmax.f32 %v1229, 0.0
  %v2508 = vmax.f32 %v1234, 0.0
  %v2509 = vmax.f32 %v1239, 0.0
  %v2510 = vmax.f32 %v1244, 0.0
  %v2511 = vmax.f32 %v1249, 0.0
  %v2512 = vmax.f32 %v1254, 0.0
  %v2513 = vmax.f32 %v1259, 0.0
  %v2514 = vmax.f32 %v1264, 0.0
  %v2515 = vmax.f32 %v1269, 0.0
  %v2516 = vmax.f32 %v1274, 0.0
  %v2517 = vmax.f32 %v1279, 0.0
  %v2518 = vmax.f32 %v1284, 0.0
  %v2519 = vmax.f32 %v1289, 0.0
  %v2520 = vmax.f32 %v1294, 0.0
  %v2521 = vmax.f32 %v1299, 0.0
  %v2522 = vmax.f32 %v1304, 0.0
  %v2523 = vmax.f32 %v1309, 0.0
  %v2524 = vmax.f32 %v1314, 0.0
  %v2525 = vmax.f32 %v1319, 0.0
  %v2526 = vmax.f32 %v1324, 0.0
  %v2527 = vmax.f32 %v1329, 0.0
  %v2528 = vmax.f32 %v1334, 0.0
  %v2529 = vmax.f32 %v1339, 0.0
  %v2530 = vmax.f32 %v1344, 0.0
  %v2531 = vmax.f32 %v1349, 0.0
  %v2532 = vmax.f32 %v1354, 0.0
  %v2533 = vmax.f32 %v1359, 0.0
  %v2534 = vmax.f32 %v1364, 0.0
  %v2535 = vmax.f32 %v1369, 0.0
  %v2536 = vmax.f32 %v1374, 0.0
  %v2537 = vmax.f32 %v1379, 0.0
  %v2538 = vmax.f32 %v1384, 0.0
  %v2539 = vmax.f32 %v1389, 0.0
  %v2540 = vmax.f32 %v1394, 0.0
  %v2541 = vmax.f32 %v1399, 0.0
  %v2542 = vmax.f32 %v1404, 0.0
  %v2543 = vmax.f32 %v1409, 0.0
  %v2544 = vmax.f32 %v1414, 0.0
  %v2545 = vmax.f32 %v1419, 0.0
  %v2546 = vmax.f32 %v1424, 0.0
  %v2547 = vmax.f32 %v1429, 0.0
  %v2548 = vmax.f32 %v1434, 0.0
  %v2549 = vmax.f32 %v1439, 0.0
  %v2550 = vmax.f32 %v1444, 0.0
  %v2551 = vmax.f32 %v1449, 0.0
  %v2552 = vmax.f32 %v1454, 0.0
  %v2553 = vmax.f32 %v1459, 0.0
  %v2554 = vmax.f32 %v1464, 0.0
  %v2555 = vmax.f32 %v1469, 0.0
  %v2556 = vmax.f32 %v1474, 0.0
  %v2557 = vmax.f32 %v1479, 0.0
  %v2558 = vmax.f32 %v1484, 0.0
  %v2559 = vmax.f32 %v1489, 0.0
  %v2560 = vmax.f32 %v1494, 0.0
  %v2561 = vmax.f32 %v1499, 0.0
  %v2562 = vmax.f32 %v1504, 0.0
  %v2563 = vmax.f32 %v1509, 0.0
  %v2564 = vmax.f32 %v1514, 0.0
  %v2565 = vmax.f32 %v1519, 0.0
  %v2566 = vmax.f32 %v1524, 0.0
  %v2567 = vmax.f32 %v1529, 0.0
  %v2568 = vmax.f32 %v1534, 0.0
  %v2569 = vmax.f32 %v1539, 0.0
  %v2570 = vmax.f32 %v1544, 0.0
  %v2571 = vmax.f32 %v1549, 0.0
  %v2572 = vmax.f32 %v1554, 0.0
  %v2573 = vmax.f32 %v1559, 0.0
  %v2574 = vmax.f32 %v1564, 0.0
  %v2575 = vmax.f32 %v1569, 0.0
  %v2576 = vmax.f32 %v1574, 0.0
  %v2577 = vmax.f32 %v1579, 0.0
  %v2578 = vmax.f32 %v1584, 0.0
  %v2579 = vmax.f32 %v1589, 0.0
  %v2580 = vmax.f32 %v1594, 0.0
  %v2581 = vmax.f32 %v1599, 0.0
  %v2582 = vmax.f32 %v1604, 0.0
  %v2583 = vmax.f32 %v1609, 0.0
  %v2584 = vmax.f32 %v1614, 0.0
  %v2585 = vmax.f32 %v1619, 0.0
  %v2586 = vmax.f32 %v1624, 0.0
  %v2587 = vmax.f32 %v1629, 0.0
  %v2588 = vmax.f32 %v1634, 0.0
  %v2589 = vmax.f32 %v1639, 0.0
  %v2590 = vmax.f32 %v1644, 0.0
  %v2591 = vmax.f32 %v1649, 0.0
  %v2592 = vmax.f32 %v1654, 0.0
  %v2593 = vmax.f32 %v1659, 0.0
  %v2594 = vmax.f32 %v1664, 0.0
  %v2595 = vmax.f32 %v1669, 0.0
  %v2596 = vmax.f32 %v1674, 0.0
  %v2597 = vmax.f32 %v1679, 0.0
  %v2598 = vmax.f32 %v1684, 0.0
  %v2599 = vmax.f32 %v1689, 0.0
  %v2600 = vmax.f32 %v1694, 0.0
  %v2601 = vmax.f32 %v1699, 0.0
  %v2602 = vmax.f32 %v1704, 0.0
  %v2603 = vmax.f32 %v1709, 0.0
  %v2604 = vmax.f32 %v1714, 0.0
  %v2605 = vmax.f32 %v1719, 0.0
  %v2606 = vmax.f32 %v1724, 0.0
  %v2607 = vmax.f32 %v1729, 0.0
  %v2608 = vmax.f32 %v1734, 0.0
  %v2609 = vmax.f32 %v1739, 0.0
  %v2610 = vmax.f32 %v1744, 0.0
  %v2611 = vmax.f32 %v1749, 0.0
  %v2612 = vmax.f32 %v1754, 0.0
  %v2613 = vmax.f32 %v1759, 0.0
  %v2614 = vmax.f32 %v1764, 0.0
  %v2615 = vmax.f32 %v1769, 0.0
  %v2616 = vmax.f32 %v1774, 0.0
  %v2617 = vmax.f32 %v1779, 0.0
  %v2618 = vmax.f32 %v1784, 0.0
  %v2619 = vmax.f32 %v1789, 0.0
  %v2620 = vmax.f32 %v1794, 0.0
  %v2621 = vmax.f32 %v1799, 0.0
  %v2622 = vmax.f32 %v1804, 0.0
  %v2623 = vmax.f32 %v1809, 0.0
  %v2624 = vmax.f32 %v1814, 0.0
  %v2625 = vmax.f32 %v1819, 0.0
  %v2626 = vmax.f32 %v1824, 0.0
  %v2627 = vmax.f32 %v1829, 0.0
  %v2628 = vmax.f32 %v1834, 0.0
  %v2629 = vmax.f32 %v1839, 0.0
  %v2630 = vmax.f32 %v1844, 0.0
  %v2631 = vmax.f32 %v1849, 0.0
  %v2632 = vmax.f32 %v1854, 0.0
  %v2633 = vmax.f32 %v1859, 0.0
  %v2634 = vmax.f32 %v1864, 0.0
  %v2635 = vmax.f32 %v1869, 0.0
  %v2636 = vmax.f32 %v1874, 0.0
  %v2637 = vmax.f32 %v1879, 0.0
  %v2638 = vmax.f32 %v1884, 0.0
  %v2639 = vmax.f32 %v1889, 0.0
  %v2640 = vmax.f32 %v1894, 0.0
  %v2641 = vmax.f32 %v1899, 0.0
  %v2642 = vmax.f32 %v1904, 0.0
  %v2643 = vmax.f32 %v1909, 0.0
  %v2644 = vmax.f32 %v1914, 0.0
  %v2645 = vmax.f32 %v1919, 0.0
  %v2646 = vmax.f32 %v1924, 0.0
  %v2647 = vmax.f32 %v1929, 0.0
  %v2648 = vmax.f32 %v1934, 0.0
  %v2649 = vmax.f32 %v1939, 0.0
  %v2650 = vmax.f32 %v1944, 0.0
  %v2651 = vmax.f32 %v1949, 0.0
  %v2652 = vmax.f32 %v1954, 0.0
  %v2653 = vmax.f32 %v1959, 0.0
  %v2654 = vmax.f32 %v1964, 0.0
  %v2655 = vmax.f32 %v1969, 0.0
  %v2656 = vmax.f32 %v1974, 0.0
  %v2657 = vmax.f32 %v1979, 0.0
  %v2658 = vmax.f32 %v1984, 0.0
  %v2659 = vmax.f32 %v1989, 0.0
  %v2660 = vmax.f32 %v1994, 0.0
  %v2661 = vmax.f32 %v1999, 0.0
  %v2662 = vmax.f32 %v2004, 0.0
  %v2663 = vmax.f32 %v2009, 0.0
  %v2664 = vmax.f32 %v2014, 0.0
  %v2665 = vmax.f32 %v2019, 0.0
  %v2666 = vmax.f32 %v2024, 0.0
  %v2667 = vmax.f32 %v2029, 0.0
  %v2668 = vmax.f32 %v2034, 0.0
  %v2669 = vmax.f32 %v2039, 0.0
  %v2670 = vmax.f32 %v2044, 0.0
  %v2671 = vmax.f32 %v2049, 0.0
  %v2672 = vmax.f32 %v2054, 0.0
  %v2673 = vmax.f32 %v2059, 0.0
  %v2674 = vmax.f32 %v2064, 0.0
  %v2675 = vmax.f32 %v2069, 0.0
  %v2676 = vmax.f32 %v2074, 0.0
  %v2677 = vmax.f32 %v2079, 0.0
  %v2678 = vmax.f32 %v2084, 0.0
  %v2679 = vmax.f32 %v2089, 0.0
  %v2680 = vmax.f32 %v2094, 0.0
  %v2681 = vmax.f32 %v2099, 0.0
  %v2682 = vmax.f32 %v2104, 0.0
  %v2683 = vmax.f32 %v2109, 0.0
  %v2684 = vmax.f32 %v2114, 0.0
  %v2685 = vmax.f32 %v2119, 0.0
  %v2686 = vmax.f32 %v2124, 0.0
  %v2687 = vmax.f32 %v2129, 0.0
  %v2688 = vmax.f32 %v2134, 0.0
  %v2689 = vmax.f32 %v2139, 0.0
  %v2690 = vmax.f32 %v2144, 0.0
  %v2691 = vmax.f32 %v2149, 0.0
  %v2692 = vmax.f32 %v2154, 0.0
  %v2693 = vmax.f32 %v2159, 0.0
  %v2694 = vmax.f32 %v2164, 0.0
  %v2695 = vmax.f32 %v2169, 0.0
  %v2696 = vmax.f32 %v2174, 0.0
  %v2697 = vmax.f32 %v2179, 0.0
  %v2698 = vmax.f32 %v2184, 0.0
  %v2699 = vmax.f32 %v2189, 0.0
  %v2700 = vmax.f32 %v2194, 0.0
  %v2701 = vmax.f32 %v2199, 0.0
  %v2702 = vmax.f32 %v2204, 0.0
  %v2703 = vmax.f32 %v2209, 0.0
  %v2704 = vmax.f32 %v2214, 0.0
  %v2705 = vmax.f32 %v2219, 0.0
  %v2706 = vmax.f32 %v2224, 0.0
  %v2707 = vmax.f32 %v2229, 0.0
  %v2708 = vmax.f32 %v2234, 0.0
  %v2709 = vmax.f32 %v2239, 0.0
  %v2710 = vmax.f32 %v2244, 0.0
  %v2711 = vmax.f32 %v2249, 0.0
  %v2712 = vmax.f32 %v2254, 0.0
  %v2713 = vmax.f32 %v2259, 0.0
  %v2714 = vmax.f32 %v2264, 0.0
  %v2715 = vmax.f32 %v2269, 0.0
  %v2716 = vmax.f32 %v2274, 0.0
  %v2717 = vmax.f32 %v2279, 0.0
  %v2718 = vmax.f32 %v2284, 0.0
  %v2719 = vmax.f32 %v2289, 0.0
  %v2720 = vmax.f32 %v2294, 0.0
  %v2721 = vmax.f32 %v2299, 0.0
  %v2722 = vmax.f32 %v2304, 0.0
  %v2723 = vmax.f32 %v2309, 0.0
  %v2724 = vmax.f32 %v2314, 0.0
  %v2725 = vmax.f32 %v2319, 0.0
  %v2726 = vmax.f32 %v2324, 0.0
  %v2727 = vmax.f32 %v2329, 0.0
  %v2728 = vmax.f32 %v2334, 0.0
  %v2729 = vmax.f32 %v2339, 0.0
  %v2730 = vmax.f32 %v2344, 0.0
  %v2731 = vmax.f32 %v2349, 0.0
  %v2732 = vmax.f32 %v2354, 0.0
  %v2733 = vmax.f32 %v2359, 0.0
  %v2734 = vmax.f32 %v2364, 0.0
  %v2735 = vmax.f32 %v2369, 0.0
  %v2736 = vmax.f32 %v2374, 0.0
  %v2737 = vmax.f32 %v2379, 0.0
  %v2738 = vmax.f32 %v2384, 0.0
  %v2739 = vmax.f32 %v2389, 0.0
  %v2740 = vmax.f32 %v2394, 0.0
  %v2741 = vmax.f32 %v2399, 0.0
  %v2742 = vmax.f32 %v2404, 0.0
  %v2743 = vmax.f32 %v2409, 0.0
  %v2744 = vmax.f32 %v2414, 0.0
  %v2745 = vmax.f32 %v2419, 0.0
  %v2746 = vmax.f32 %v2424, 0.0
  %v2747 = vmax.f32 %v2429, 0.0
  %v2748 = vmax.f32 %v2434, 0.0
  %v2749 = vmax.f32 %v2439, 0.0
  %v2750 = vmax.f32 %v2444, 0.0
  %v2751 = vmax.f32 %v2449, 0.0
  %v2752 = vmax.f32 %v2454, 0.0
  %v2753 = vmax.f32 %v2459, 0.0
  %v2754 = vmax.f32 %v2464, 0.0
  %v2755 = vmax.f32 %v2469, 0.0
  %v2756 = vmax.f32 %v2474, 0.0
  %v2757 = vmax.f32 %v2479, 0.0
  %v2758 = vmax.f32 %v2484, 0.0
  %v2759 = vmax.f32 %v2489, 0.0
  %v2760 = vmax.f32 %v2494, 0.0
  %v2761 = vld [vmem:[%s3] sm:$0xff]
  %v2762 = vld [vmem:[%s3 + $0x8] sm:$0xff]
  %v2763 = vld [vmem:[%s3 + $0x10] sm:$0xff]
  %v2764 = vld [vmem:[%s3 + $0x18] sm:$0xff]
  %v2765 = vld [vmem:[%s3 + $0x20] sm:$0xff]
  %v2766 = vld [vmem:[%s3 + $0x28] sm:$0xff]
  %v2767 = vld [vmem:[%s3 + $0x30] sm:$0xff]
  %v2768 = vld [vmem:[%s3 + $0x38] sm:$0xff]
  %v2769 = vld [vmem:[%s3 + $0x40] sm:$0xff]
  %v2770 = vld [vmem:[%s3 + $0x48] sm:$0xff]
  %v2771 = vld [vmem:[%s3 + $0x50] sm:$0xff]
  %v2772 = vld [vmem:[%s3 + $0x58] sm:$0xff]
  %v2773 = vld [vmem:[%s3 + $0x60] sm:$0xff]
  %v2774 = vld [vmem:[%s3 + $0x68] sm:$0xff]
  %v2775 = vld [vmem:[%s3 + $0x70] sm:$0xff]
  %v2776 = vld [vmem:[%s4] sm:$0x1]
  %v2778 = vlaneseq
  %v2779 = vshrl.u32 %v2778, 7
  %v2780 = vsub.s32 0, %v2779
  %v2781 = vrot.slane %v2776, %v2780
  %vm2783 = vcmask 982016
  %v2785 = vsel %vm2783, %v2497, 0
  %v2788 = vsel %vm2783, %v2498, 0
  %v2791 = vsel %vm2783, %v2499, 0
  %v2794 = vsel %vm2783, %v2500, 0
  %v2797 = vsel %vm2783, %v2501, 0
  %v2800 = vsel %vm2783, %v2502, 0
  %v2803 = vsel %vm2783, %v2503, 0
  %v2806 = vsel %vm2783, %v2504, 0
  %v2809 = vsel %vm2783, %v2505, 0
  %v2812 = vsel %vm2783, %v2506, 0
  %v2815 = vsel %vm2783, %v2507, 0
  %v2818 = vsel %vm2783, %v2508, 0
  %v2821 = vsel %vm2783, %v2509, 0
  %v2824 = vsel %vm2783, %v2510, 0
  %v2827 = vsel %vm2783, %v2511, 0
  %v2830 = vsel %vm2783, %v2512, 0
  %v2833 = vsel %vm2783, %v2513, 0
  %v2836 = vsel %vm2783, %v2514, 0
  %v2839 = vsel %vm2783, %v2515, 0
  %v2842 = vsel %vm2783, %v2516, 0
  %v2845 = vsel %vm2783, %v2517, 0
  %v2848 = vsel %vm2783, %v2518, 0
  %v2851 = vsel %vm2783, %v2519, 0
  %v2854 = vsel %vm2783, %v2520, 0
  %v2857 = vsel %vm2783, %v2521, 0
  %v2860 = vsel %vm2783, %v2522, 0
  %v2863 = vsel %vm2783, %v2523, 0
  %v2866 = vsel %vm2783, %v2524, 0
  %v2869 = vsel %vm2783, %v2525, 0
  %v2872 = vsel %vm2783, %v2526, 0
  %v2875 = vsel %vm2783, %v2527, 0
  %v2878 = vsel %vm2783, %v2528, 0
  %v2881 = vsel %vm2783, %v2529, 0
  %v2884 = vsel %vm2783, %v2530, 0
  %v2887 = vsel %vm2783, %v2531, 0
  %v2890 = vsel %vm2783, %v2532, 0
  %v2893 = vsel %vm2783, %v2533, 0
  %v2896 = vsel %vm2783, %v2534, 0
  %v2899 = vsel %vm2783, %v2535, 0
  %v2902 = vsel %vm2783, %v2536, 0
  %v2905 = vsel %vm2783, %v2537, 0
  %v2908 = vsel %vm2783, %v2538, 0
  %v2911 = vsel %vm2783, %v2539, 0
  %v2914 = vsel %vm2783, %v2540, 0
  %v2917 = vsel %vm2783, %v2541, 0
  %v2920 = vsel %vm2783, %v2542, 0
  %v2923 = vsel %vm2783, %v2543, 0
  %v2926 = vsel %vm2783, %v2544, 0
  %v2929 = vsel %vm2783, %v2545, 0
  %v2932 = vsel %vm2783, %v2546, 0
  %v2935 = vsel %vm2783, %v2547, 0
  %v2938 = vsel %vm2783, %v2548, 0
  %v2941 = vsel %vm2783, %v2549, 0
  %v2944 = vsel %vm2783, %v2550, 0
  %v2947 = vsel %vm2783, %v2551, 0
  %v2950 = vsel %vm2783, %v2552, 0
  %v2953 = vsel %vm2783, %v2553, 0
  %v2956 = vsel %vm2783, %v2554, 0
  %v2959 = vsel %vm2783, %v2555, 0
  %v2962 = vsel %vm2783, %v2556, 0
  %v2965 = vsel %vm2783, %v2557, 0
  %v2968 = vsel %vm2783, %v2558, 0
  %v2971 = vsel %vm2783, %v2559, 0
  %v2974 = vsel %vm2783, %v2560, 0
  %v2977 = vsel %vm2783, %v2561, 0
  %v2980 = vsel %vm2783, %v2562, 0
  %v2983 = vsel %vm2783, %v2563, 0
  %v2986 = vsel %vm2783, %v2564, 0
  %v2989 = vsel %vm2783, %v2565, 0
  %v2992 = vsel %vm2783, %v2566, 0
  %v2995 = vsel %vm2783, %v2567, 0
  %v2998 = vsel %vm2783, %v2568, 0
  %v3001 = vsel %vm2783, %v2569, 0
  %v3004 = vsel %vm2783, %v2570, 0
  %v3007 = vsel %vm2783, %v2571, 0
  %v3010 = vsel %vm2783, %v2572, 0
  %v3013 = vsel %vm2783, %v2573, 0
  %v3016 = vsel %vm2783, %v2574, 0
  %v3019 = vsel %vm2783, %v2575, 0
  %v3022 = vsel %vm2783, %v2576, 0
  %v3025 = vsel %vm2783, %v2577, 0
  %v3028 = vsel %vm2783, %v2578, 0
  %v3031 = vsel %vm2783, %v2579, 0
  %v3034 = vsel %vm2783, %v2580, 0
  %v3037 = vsel %vm2783, %v2581, 0
  %v3040 = vsel %vm2783, %v2582, 0
  %v3043 = vsel %vm2783, %v2583, 0
  %v3046 = vsel %vm2783, %v2584, 0
  %v3049 = vsel %vm2783, %v2585, 0
  %v3052 = vsel %vm2783, %v2586, 0
  %v3055 = vsel %vm2783, %v2587, 0
  %v3058 = vsel %vm2783, %v2588, 0
  %v3061 = vsel %vm2783, %v2589, 0
  %v3064 = vsel %vm2783, %v2590, 0
  %v3067 = vsel %vm2783, %v2591, 0
  %v3070 = vsel %vm2783, %v2592, 0
  %v3073 = vsel %vm2783, %v2593, 0
  %v3076 = vsel %vm2783, %v2594, 0
  %v3079 = vsel %vm2783, %v2595, 0
  %v3082 = vsel %vm2783, %v2596, 0
  %v3085 = vsel %vm2783, %v2597, 0
  %v3088 = vsel %vm2783, %v2598, 0
  %v3091 = vsel %vm2783, %v2599, 0
  %v3094 = vsel %vm2783, %v2600, 0
  %v3097 = vsel %vm2783, %v2601, 0
  %v3100 = vsel %vm2783, %v2602, 0
  %v3103 = vsel %vm2783, %v2603, 0
  %v3106 = vsel %vm2783, %v2604, 0
  %v3109 = vsel %vm2783, %v2605, 0
  %v3112 = vsel %vm2783, %v2606, 0
  %v3115 = vsel %vm2783, %v2607, 0
  %v3118 = vsel %vm2783, %v2608, 0
  %v3121 = vsel %vm2783, %v2609, 0
  %v3124 = vsel %vm2783, %v2610, 0
  %v3127 = vsel %vm2783, %v2611, 0
  %v3130 = vsel %vm2783, %v2612, 0
  %v3133 = vsel %vm2783, %v2613, 0
  %v3136 = vsel %vm2783, %v2614, 0
  %v3139 = vsel %vm2783, %v2615, 0
  %v3142 = vsel %vm2783, %v2616, 0
  %v3145 = vsel %vm2783, %v2617, 0
  %v3148 = vsel %vm2783, %v2618, 0
  %v3151 = vsel %vm2783, %v2619, 0
  %v3154 = vsel %vm2783, %v2620, 0
  %v3157 = vsel %vm2783, %v2621, 0
  %v3160 = vsel %vm2783, %v2622, 0
  %v3163 = vsel %vm2783, %v2623, 0
  %v3166 = vsel %vm2783, %v2624, 0
  %v3169 = vsel %vm2783, %v2625, 0
  %v3172 = vsel %vm2783, %v2626, 0
  %v3175 = vsel %vm2783, %v2627, 0
  %v3178 = vsel %vm2783, %v2628, 0
  %v3181 = vsel %vm2783, %v2629, 0
  %v3184 = vsel %vm2783, %v2630, 0
  %v3187 = vsel %vm2783, %v2631, 0
  %v3190 = vsel %vm2783, %v2632, 0
  %v3193 = vsel %vm2783, %v2633, 0
  %v3196 = vsel %vm2783, %v2634, 0
  %v3199 = vsel %vm2783, %v2635, 0
  %v3202 = vsel %vm2783, %v2636, 0
  %v3205 = vsel %vm2783, %v2637, 0
  %v3208 = vsel %vm2783, %v2638, 0
  %v3211 = vsel %vm2783, %v2639, 0
  %v3214 = vsel %vm2783, %v2640, 0
  %v3217 = vsel %vm2783, %v2641, 0
  %v3220 = vsel %vm2783, %v2642, 0
  %v3223 = vsel %vm2783, %v2643, 0
  %v3226 = vsel %vm2783, %v2644, 0
  %v3229 = vsel %vm2783, %v2645, 0
  %v3232 = vsel %vm2783, %v2646, 0
  %v3235 = vsel %vm2783, %v2647, 0
  %v3238 = vsel %vm2783, %v2648, 0
  %v3241 = vsel %vm2783, %v2649, 0
  %v3244 = vsel %vm2783, %v2650, 0
  %v3247 = vsel %vm2783, %v2651, 0
  %v3250 = vsel %vm2783, %v2652, 0
  %v3253 = vsel %vm2783, %v2653, 0
  %v3256 = vsel %vm2783, %v2654, 0
  %v3259 = vsel %vm2783, %v2655, 0
  %v3262 = vsel %vm2783, %v2656, 0
  %v3265 = vsel %vm2783, %v2657, 0
  %v3268 = vsel %vm2783, %v2658, 0
  %v3271 = vsel %vm2783, %v2659, 0
  %v3274 = vsel %vm2783, %v2660, 0
  %v3277 = vsel %vm2783, %v2661, 0
  %v3280 = vsel %vm2783, %v2662, 0
  %v3283 = vsel %vm2783, %v2663, 0
  %v3286 = vsel %vm2783, %v2664, 0
  %v3289 = vsel %vm2783, %v2665, 0
  %v3292 = vsel %vm2783, %v2666, 0
  %v3295 = vsel %vm2783, %v2667, 0
  %v3298 = vsel %vm2783, %v2668, 0
  %v3301 = vsel %vm2783, %v2669, 0
  %v3304 = vsel %vm2783, %v2670, 0
  %v3307 = vsel %vm2783, %v2671, 0
  %v3310 = vsel %vm2783, %v2672, 0
  %v3313 = vsel %vm2783, %v2673, 0
  %v3316 = vsel %vm2783, %v2674, 0
  %v3319 = vsel %vm2783, %v2675, 0
  %v3322 = vsel %vm2783, %v2676, 0
  %v3325 = vsel %vm2783, %v2677, 0
  %v3328 = vsel %vm2783, %v2678, 0
  %v3331 = vsel %vm2783, %v2679, 0
  %v3334 = vsel %vm2783, %v2680, 0
  %v3337 = vsel %vm2783, %v2681, 0
  %v3340 = vsel %vm2783, %v2682, 0
  %v3343 = vsel %vm2783, %v2683, 0
  %v3346 = vsel %vm2783, %v2684, 0
  %v3349 = vsel %vm2783, %v2685, 0
  %v3352 = vsel %vm2783, %v2686, 0
  %v3355 = vsel %vm2783, %v2687, 0
  %v3358 = vsel %vm2783, %v2688, 0
  %v3361 = vsel %vm2783, %v2689, 0
  %v3364 = vsel %vm2783, %v2690, 0
  %v3367 = vsel %vm2783, %v2691, 0
  %v3370 = vsel %vm2783, %v2692, 0
  %v3373 = vsel %vm2783, %v2693, 0
  %v3376 = vsel %vm2783, %v2694, 0
  %v3379 = vsel %vm2783, %v2695, 0
  %v3382 = vsel %vm2783, %v2696, 0
  %v3385 = vsel %vm2783, %v2697, 0
  %v3388 = vsel %vm2783, %v2698, 0
  %v3391 = vsel %vm2783, %v2699, 0
  %v3394 = vsel %vm2783, %v2700, 0
  %v3397 = vsel %vm2783, %v2701, 0
  %v3400 = vsel %vm2783, %v2702, 0
  %v3403 = vsel %vm2783, %v2703, 0
  %v3406 = vsel %vm2783, %v2704, 0
  %v3409 = vsel %vm2783, %v2705, 0
  %v3412 = vsel %vm2783, %v2706, 0
  %v3415 = vsel %vm2783, %v2707, 0
  %v3418 = vsel %vm2783, %v2708, 0
  %v3421 = vsel %vm2783, %v2709, 0
  %v3424 = vsel %vm2783, %v2710, 0
  %v3427 = vsel %vm2783, %v2711, 0
  %v3430 = vsel %vm2783, %v2712, 0
  %v3433 = vsel %vm2783, %v2713, 0
  %v3436 = vsel %vm2783, %v2714, 0
  %v3439 = vsel %vm2783, %v2715, 0
  %v3442 = vsel %vm2783, %v2716, 0
  %v3445 = vsel %vm2783, %v2717, 0
  %v3448 = vsel %vm2783, %v2718, 0
  %v3451 = vsel %vm2783, %v2719, 0
  %v3454 = vsel %vm2783, %v2720, 0
  %v3457 = vsel %vm2783, %v2721, 0
  %v3460 = vsel %vm2783, %v2722, 0
  %v3463 = vsel %vm2783, %v2723, 0
  %v3466 = vsel %vm2783, %v2724, 0
  %v3469 = vsel %vm2783, %v2725, 0
  %v3472 = vsel %vm2783, %v2726, 0
  %v3475 = vsel %vm2783, %v2727, 0
  %v3478 = vsel %vm2783, %v2728, 0
  %v3481 = vsel %vm2783, %v2729, 0
  %v3484 = vsel %vm2783, %v2730, 0
  %v3487 = vsel %vm2783, %v2731, 0
  %v3490 = vsel %vm2783, %v2732, 0
  %v3493 = vsel %vm2783, %v2733, 0
  %v3496 = vsel %vm2783, %v2734, 0
  %v3499 = vsel %vm2783, %v2735, 0
  %v3502 = vsel %vm2783, %v2736, 0
  %v3505 = vsel %vm2783, %v2737, 0
  %v3508 = vsel %vm2783, %v2738, 0
  %v3511 = vsel %vm2783, %v2739, 0
  %v3514 = vsel %vm2783, %v2740, 0
  %v3517 = vsel %vm2783, %v2741, 0
  %v3520 = vsel %vm2783, %v2742, 0
  %v3523 = vsel %vm2783, %v2743, 0
  %v3526 = vsel %vm2783, %v2744, 0
  %v3529 = vsel %vm2783, %v2745, 0
  %v3532 = vsel %vm2783, %v2746, 0
  %v3535 = vsel %vm2783, %v2747, 0
  %v3538 = vsel %vm2783, %v2748, 0
  %v3541 = vsel %vm2783, %v2749, 0
  %v3544 = vsel %vm2783, %v2750, 0
  %v3547 = vsel %vm2783, %v2751, 0
  %v3550 = vsel %vm2783, %v2752, 0
  %v3553 = vsel %vm2783, %v2753, 0
  %v3556 = vsel %vm2783, %v2754, 0
  %v3559 = vsel %vm2783, %v2755, 0
  %v3562 = vsel %vm2783, %v2756, 0
  %v3565 = vsel %vm2783, %v2757, 0
  %v3568 = vsel %vm2783, %v2758, 0
  %v3571 = vsel %vm2783, %v2759, 0
  %v3574 = vsel %vm2783, %v2760, 0
  %3576 = vmatprep.subr.mxu0 0.0
  %3577 = vmatpush1.msra.mxu0 0.0
  %3578 = vmatprep.subr.mxu0 0.0
  %3579 = vmatpush1.msra.mxu0 %v2775
  %3580 = vmatprep.subr.mxu0 0.0
  %3581 = vmatpush1.msra.mxu0 %v2774
  %3582 = vmatprep.subr.mxu0 0.0
  %3583 = vmatpush1.msra.mxu0 %v2773
  %3584 = vmatprep.subr.mxu0 0.0
  %3585 = vmatpush1.msra.mxu0 %v2772
  %3586 = vmatprep.subr.mxu0 0.0
  %3587 = vmatpush1.msra.mxu0 %v2771
  %3588 = vmatprep.subr.mxu0 0.0
  %3589 = vmatpush1.msra.mxu0 %v2770
  %3590 = vmatprep.subr.mxu0 0.0
  %3591 = vmatpush1.msra.mxu0 %v2769
  %3592 = vmatprep.subr.mxu0 0.0
  %3593 = vmatpush1.msra.mxu0 %v2768
  %3594 = vmatprep.subr.mxu0 0.0
  %3595 = vmatpush1.msra.mxu0 %v2767
  %3596 = vmatprep.subr.mxu0 0.0
  %3597 = vmatpush1.msra.mxu0 %v2766
  %3598 = vmatprep.subr.mxu0 0.0
  %3599 = vmatpush1.msra.mxu0 %v2765
  %3600 = vmatprep.subr.mxu0 0.0
  %3601 = vmatpush1.msra.mxu0 %v2764
  %3602 = vmatprep.subr.mxu0 0.0
  %3603 = vmatpush1.msra.mxu0 %v2763
  %3604 = vmatprep.subr.mxu0 0.0
  %3605 = vmatpush1.msra.mxu0 %v2762
  %3606 = vmatprep.subr.mxu0 0.0
  %3607 = vmatpush1.msra.mxu0 %v2761
  %3608 = vmatprep.subr.mxu0 0.0
  %3609 = vmatpush2.msra.mxu0 0.0
  %3610 = vmatprep.subr.mxu0 0.0
  %3611 = vmatpush2.msra.mxu0 0.0
  %3612 = vmatprep.subr.mxu0 0.0
  %3613 = vmatpush2.msra.mxu0 0.0
  %3614 = vmatprep.subr.mxu0 0.0
  %3615 = vmatpush2.msra.mxu0 0.0
  %3616 = vmatprep.subr.mxu0 0.0
  %3617 = vmatpush2.msra.mxu0 0.0
  %3618 = vmatprep.subr.mxu0 0.0
  %3619 = vmatpush2.msra.mxu0 0.0
  %3620 = vmatprep.subr.mxu0 0.0
  %3621 = vmatpush2.msra.mxu0 0.0
  %3622 = vmatprep.subr.mxu0 0.0
  %3623 = vmatpush2.msra.mxu0 0.0
  %3624 = vmatprep.subr.mxu0 0.0
  %3625 = vmatpush2.msra.mxu0 0.0
  %3626 = vmatprep.subr.mxu0 0.0
  %3627 = vmatpush2.msra.mxu0 0.0
  %3628 = vmatprep.subr.mxu0 0.0
  %3629 = vmatpush2.msra.mxu0 0.0
  %3630 = vmatprep.subr.mxu0 0.0
  %3631 = vmatpush2.msra.mxu0 0.0
  %3632 = vmatprep.subr.mxu0 0.0
  %3633 = vmatpush2.msra.mxu0 0.0
  %3634 = vmatprep.subr.mxu0 0.0
  %3635 = vmatpush2.msra.mxu0 0.0
  %3636 = vmatprep.subr.mxu0 0.0
  %3637 = vmatpush2.msra.mxu0 0.0
  %3638 = vmatprep.subr.mxu0 0.0
  %3639 = vmatpush2.msra.mxu0 0.0
  %3640 = vmatprep.mubr.f32.mxu0 0.0
  %3641 = vmatmul.mubr.f32.gmra.mxu0 %v2785
  %v3642 = vpop.f32.mrf.mxu0
  %v3643 = vadd.f32 %v2781, %v3642
  %v3644 = vpop.f32.mrf.mxu0
  %3645 = vmatprep.mubr.f32.mxu0 0.0
  %3646 = vmatmul.mubr.f32.gmra.mxu0 %v2788
  %v3647 = vpop.f32.mrf.mxu0
  %v3648 = vadd.f32 %v2781, %v3647
  %v3649 = vpop.f32.mrf.mxu0
  %3650 = vmatprep.mubr.f32.mxu0 0.0
  %3651 = vmatmul.mubr.f32.gmra.mxu0 %v2791
  %v3652 = vpop.f32.mrf.mxu0
  %v3653 = vadd.f32 %v2781, %v3652
  %v3654 = vpop.f32.mrf.mxu0
  %3655 = vmatprep.mubr.f32.mxu0 0.0
  %3656 = vmatmul.mubr.f32.gmra.mxu0 %v2794
  %v3657 = vpop.f32.mrf.mxu0
  %v3658 = vadd.f32 %v2781, %v3657
  %v3659 = vpop.f32.mrf.mxu0
  %3660 = vmatprep.mubr.f32.mxu0 0.0
  %3661 = vmatmul.mubr.f32.gmra.mxu0 %v2797
  %v3662 = vpop.f32.mrf.mxu0
  %v3663 = vadd.f32 %v2781, %v3662
  %v3664 = vpop.f32.mrf.mxu0
  %3665 = vmatprep.mubr.f32.mxu0 0.0
  %3666 = vmatmul.mubr.f32.gmra.mxu0 %v2800
  %v3667 = vpop.f32.mrf.mxu0
  %v3668 = vadd.f32 %v2781, %v3667
  %v3669 = vpop.f32.mrf.mxu0
  %3670 = vmatprep.mubr.f32.mxu0 0.0
  %3671 = vmatmul.mubr.f32.gmra.mxu0 %v2803
  %v3672 = vpop.f32.mrf.mxu0
  %v3673 = vadd.f32 %v2781, %v3672
  %v3674 = vpop.f32.mrf.mxu0
  %3675 = vmatprep.mubr.f32.mxu0 0.0
  %3676 = vmatmul.mubr.f32.gmra.mxu0 %v2806
  %v3677 = vpop.f32.mrf.mxu0
  %v3678 = vadd.f32 %v2781, %v3677
  %v3679 = vpop.f32.mrf.mxu0
  %3680 = vmatprep.mubr.f32.mxu0 0.0
  %3681 = vmatmul.mubr.f32.gmra.mxu0 %v2809
  %v3682 = vpop.f32.mrf.mxu0
  %v3683 = vadd.f32 %v2781, %v3682
  %v3684 = vpop.f32.mrf.mxu0
  %3685 = vmatprep.mubr.f32.mxu0 0.0
  %3686 = vmatmul.mubr.f32.gmra.mxu0 %v2812
  %v3687 = vpop.f32.mrf.mxu0
  %v3688 = vadd.f32 %v2781, %v3687
  %v3689 = vpop.f32.mrf.mxu0
  %3690 = vmatprep.mubr.f32.mxu0 0.0
  %3691 = vmatmul.mubr.f32.gmra.mxu0 %v2815
  %v3692 = vpop.f32.mrf.mxu0
  %v3693 = vadd.f32 %v2781, %v3692
  %v3694 = vpop.f32.mrf.mxu0
  %3695 = vmatprep.mubr.f32.mxu0 0.0
  %3696 = vmatmul.mubr.f32.gmra.mxu0 %v2818
  %v3697 = vpop.f32.mrf.mxu0
  %v3698 = vadd.f32 %v2781, %v3697
  %v3699 = vpop.f32.mrf.mxu0
  %3700 = vmatprep.mubr.f32.mxu0 0.0
  %3701 = vmatmul.mubr.f32.gmra.mxu0 %v2821
  %v3702 = vpop.f32.mrf.mxu0
  %v3703 = vadd.f32 %v2781, %v3702
  %v3704 = vpop.f32.mrf.mxu0
  %3705 = vmatprep.mubr.f32.mxu0 0.0
  %3706 = vmatmul.mubr.f32.gmra.mxu0 %v2824
  %v3707 = vpop.f32.mrf.mxu0
  %v3708 = vadd.f32 %v2781, %v3707
  %v3709 = vpop.f32.mrf.mxu0
  %3710 = vmatprep.mubr.f32.mxu0 0.0
  %3711 = vmatmul.mubr.f32.gmra.mxu0 %v2827
  %v3712 = vpop.f32.mrf.mxu0
  %v3713 = vadd.f32 %v2781, %v3712
  %v3714 = vpop.f32.mrf.mxu0
  %3715 = vmatprep.mubr.f32.mxu0 0.0
  %3716 = vmatmul.mubr.f32.gmra.mxu0 %v2830
  %v3717 = vpop.f32.mrf.mxu0
  %v3718 = vadd.f32 %v2781, %v3717
  %v3719 = vpop.f32.mrf.mxu0
  %3720 = vmatprep.mubr.f32.mxu0 0.0
  %3721 = vmatmul.mubr.f32.gmra.mxu0 %v2833
  %v3722 = vpop.f32.mrf.mxu0
  %v3723 = vadd.f32 %v2781, %v3722
  %v3724 = vpop.f32.mrf.mxu0
  %3725 = vmatprep.mubr.f32.mxu0 0.0
  %3726 = vmatmul.mubr.f32.gmra.mxu0 %v2836
  %v3727 = vpop.f32.mrf.mxu0
  %v3728 = vadd.f32 %v2781, %v3727
  %v3729 = vpop.f32.mrf.mxu0
  %3730 = vmatprep.mubr.f32.mxu0 0.0
  %3731 = vmatmul.mubr.f32.gmra.mxu0 %v2839
  %v3732 = vpop.f32.mrf.mxu0
  %v3733 = vadd.f32 %v2781, %v3732
  %v3734 = vpop.f32.mrf.mxu0
  %3735 = vmatprep.mubr.f32.mxu0 0.0
  %3736 = vmatmul.mubr.f32.gmra.mxu0 %v2842
  %v3737 = vpop.f32.mrf.mxu0
  %v3738 = vadd.f32 %v2781, %v3737
  %v3739 = vpop.f32.mrf.mxu0
  %3740 = vmatprep.mubr.f32.mxu0 0.0
  %3741 = vmatmul.mubr.f32.gmra.mxu0 %v2845
  %v3742 = vpop.f32.mrf.mxu0
  %v3743 = vadd.f32 %v2781, %v3742
  %v3744 = vpop.f32.mrf.mxu0
  %3745 = vmatprep.mubr.f32.mxu0 0.0
  %3746 = vmatmul.mubr.f32.gmra.mxu0 %v2848
  %v3747 = vpop.f32.mrf.mxu0
  %v3748 = vadd.f32 %v2781, %v3747
  %v3749 = vpop.f32.mrf.mxu0
  %3750 = vmatprep.mubr.f32.mxu0 0.0
  %3751 = vmatmul.mubr.f32.gmra.mxu0 %v2851
  %v3752 = vpop.f32.mrf.mxu0
  %v3753 = vadd.f32 %v2781, %v3752
  %v3754 = vpop.f32.mrf.mxu0
  %3755 = vmatprep.mubr.f32.mxu0 0.0
  %3756 = vmatmul.mubr.f32.gmra.mxu0 %v2854
  %v3757 = vpop.f32.mrf.mxu0
  %v3758 = vadd.f32 %v2781, %v3757
  %v3759 = vpop.f32.mrf.mxu0
  %3760 = vmatprep.mubr.f32.mxu0 0.0
  %3761 = vmatmul.mubr.f32.gmra.mxu0 %v2857
  %v3762 = vpop.f32.mrf.mxu0
  %v3763 = vadd.f32 %v2781, %v3762
  %v3764 = vpop.f32.mrf.mxu0
  %3765 = vmatprep.mubr.f32.mxu0 0.0
  %3766 = vmatmul.mubr.f32.gmra.mxu0 %v2860
  %v3767 = vpop.f32.mrf.mxu0
  %v3768 = vadd.f32 %v2781, %v3767
  %v3769 = vpop.f32.mrf.mxu0
  %3770 = vmatprep.mubr.f32.mxu0 0.0
  %3771 = vmatmul.mubr.f32.gmra.mxu0 %v2863
  %v3772 = vpop.f32.mrf.mxu0
  %v3773 = vadd.f32 %v2781, %v3772
  %v3774 = vpop.f32.mrf.mxu0
  %3775 = vmatprep.mubr.f32.mxu0 0.0
  %3776 = vmatmul.mubr.f32.gmra.mxu0 %v2866
  %v3777 = vpop.f32.mrf.mxu0
  %v3778 = vadd.f32 %v2781, %v3777
  %v3779 = vpop.f32.mrf.mxu0
  %3780 = vmatprep.mubr.f32.mxu0 0.0
  %3781 = vmatmul.mubr.f32.gmra.mxu0 %v2869
  %v3782 = vpop.f32.mrf.mxu0
  %v3783 = vadd.f32 %v2781, %v3782
  %v3784 = vpop.f32.mrf.mxu0
  %3785 = vmatprep.mubr.f32.mxu0 0.0
  %3786 = vmatmul.mubr.f32.gmra.mxu0 %v2872
  %v3787 = vpop.f32.mrf.mxu0
  %v3788 = vadd.f32 %v2781, %v3787
  %v3789 = vpop.f32.mrf.mxu0
  %3790 = vmatprep.mubr.f32.mxu0 0.0
  %3791 = vmatmul.mubr.f32.gmra.mxu0 %v2875
  %v3792 = vpop.f32.mrf.mxu0
  %v3793 = vadd.f32 %v2781, %v3792
  %v3794 = vpop.f32.mrf.mxu0
  %3795 = vmatprep.mubr.f32.mxu0 0.0
  %3796 = vmatmul.mubr.f32.gmra.mxu0 %v2878
  %v3797 = vpop.f32.mrf.mxu0
  %v3798 = vadd.f32 %v2781, %v3797
  %v3799 = vpop.f32.mrf.mxu0
  %3800 = vmatprep.mubr.f32.mxu0 0.0
  %3801 = vmatmul.mubr.f32.gmra.mxu0 %v2881
  %v3802 = vpop.f32.mrf.mxu0
  %v3803 = vadd.f32 %v2781, %v3802
  %v3804 = vpop.f32.mrf.mxu0
  %3805 = vmatprep.mubr.f32.mxu0 0.0
  %3806 = vmatmul.mubr.f32.gmra.mxu0 %v2884
  %v3807 = vpop.f32.mrf.mxu0
  %v3808 = vadd.f32 %v2781, %v3807
  %v3809 = vpop.f32.mrf.mxu0
  %3810 = vmatprep.mubr.f32.mxu0 0.0
  %3811 = vmatmul.mubr.f32.gmra.mxu0 %v2887
  %v3812 = vpop.f32.mrf.mxu0
  %v3813 = vadd.f32 %v2781, %v3812
  %v3814 = vpop.f32.mrf.mxu0
  %3815 = vmatprep.mubr.f32.mxu0 0.0
  %3816 = vmatmul.mubr.f32.gmra.mxu0 %v2890
  %v3817 = vpop.f32.mrf.mxu0
  %v3818 = vadd.f32 %v2781, %v3817
  %v3819 = vpop.f32.mrf.mxu0
  %3820 = vmatprep.mubr.f32.mxu0 0.0
  %3821 = vmatmul.mubr.f32.gmra.mxu0 %v2893
  %v3822 = vpop.f32.mrf.mxu0
  %v3823 = vadd.f32 %v2781, %v3822
  %v3824 = vpop.f32.mrf.mxu0
  %3825 = vmatprep.mubr.f32.mxu0 0.0
  %3826 = vmatmul.mubr.f32.gmra.mxu0 %v2896
  %v3827 = vpop.f32.mrf.mxu0
  %v3828 = vadd.f32 %v2781, %v3827
  %v3829 = vpop.f32.mrf.mxu0
  %3830 = vmatprep.mubr.f32.mxu0 0.0
  %3831 = vmatmul.mubr.f32.gmra.mxu0 %v2899
  %v3832 = vpop.f32.mrf.mxu0
  %v3833 = vadd.f32 %v2781, %v3832
  %v3834 = vpop.f32.mrf.mxu0
  %3835 = vmatprep.mubr.f32.mxu0 0.0
  %3836 = vmatmul.mubr.f32.gmra.mxu0 %v2902
  %v3837 = vpop.f32.mrf.mxu0
  %v3838 = vadd.f32 %v2781, %v3837
  %v3839 = vpop.f32.mrf.mxu0
  %3840 = vmatprep.mubr.f32.mxu0 0.0
  %3841 = vmatmul.mubr.f32.gmra.mxu0 %v2905
  %v3842 = vpop.f32.mrf.mxu0
  %v3843 = vadd.f32 %v2781, %v3842
  %v3844 = vpop.f32.mrf.mxu0
  %3845 = vmatprep.mubr.f32.mxu0 0.0
  %3846 = vmatmul.mubr.f32.gmra.mxu0 %v2908
  %v3847 = vpop.f32.mrf.mxu0
  %v3848 = vadd.f32 %v2781, %v3847
  %v3849 = vpop.f32.mrf.mxu0
  %3850 = vmatprep.mubr.f32.mxu0 0.0
  %3851 = vmatmul.mubr.f32.gmra.mxu0 %v2911
  %v3852 = vpop.f32.mrf.mxu0
  %v3853 = vadd.f32 %v2781, %v3852
  %v3854 = vpop.f32.mrf.mxu0
  %3855 = vmatprep.mubr.f32.mxu0 0.0
  %3856 = vmatmul.mubr.f32.gmra.mxu0 %v2914
  %v3857 = vpop.f32.mrf.mxu0
  %v3858 = vadd.f32 %v2781, %v3857
  %v3859 = vpop.f32.mrf.mxu0
  %3860 = vmatprep.mubr.f32.mxu0 0.0
  %3861 = vmatmul.mubr.f32.gmra.mxu0 %v2917
  %v3862 = vpop.f32.mrf.mxu0
  %v3863 = vadd.f32 %v2781, %v3862
  %v3864 = vpop.f32.mrf.mxu0
  %3865 = vmatprep.mubr.f32.mxu0 0.0
  %3866 = vmatmul.mubr.f32.gmra.mxu0 %v2920
  %v3867 = vpop.f32.mrf.mxu0
  %v3868 = vadd.f32 %v2781, %v3867
  %v3869 = vpop.f32.mrf.mxu0
  %3870 = vmatprep.mubr.f32.mxu0 0.0
  %3871 = vmatmul.mubr.f32.gmra.mxu0 %v2923
  %v3872 = vpop.f32.mrf.mxu0
  %v3873 = vadd.f32 %v2781, %v3872
  %v3874 = vpop.f32.mrf.mxu0
  %3875 = vmatprep.mubr.f32.mxu0 0.0
  %3876 = vmatmul.mubr.f32.gmra.mxu0 %v2926
  %v3877 = vpop.f32.mrf.mxu0
  %v3878 = vadd.f32 %v2781, %v3877
  %v3879 = vpop.f32.mrf.mxu0
  %3880 = vmatprep.mubr.f32.mxu0 0.0
  %3881 = vmatmul.mubr.f32.gmra.mxu0 %v2929
  %v3882 = vpop.f32.mrf.mxu0
  %v3883 = vadd.f32 %v2781, %v3882
  %v3884 = vpop.f32.mrf.mxu0
  %3885 = vmatprep.mubr.f32.mxu0 0.0
  %3886 = vmatmul.mubr.f32.gmra.mxu0 %v2932
  %v3887 = vpop.f32.mrf.mxu0
  %v3888 = vadd.f32 %v2781, %v3887
  %v3889 = vpop.f32.mrf.mxu0
  %3890 = vmatprep.mubr.f32.mxu0 0.0
  %3891 = vmatmul.mubr.f32.gmra.mxu0 %v2935
  %v3892 = vpop.f32.mrf.mxu0
  %v3893 = vadd.f32 %v2781, %v3892
  %v3894 = vpop.f32.mrf.mxu0
  %3895 = vmatprep.mubr.f32.mxu0 0.0
  %3896 = vmatmul.mubr.f32.gmra.mxu0 %v2938
  %v3897 = vpop.f32.mrf.mxu0
  %v3898 = vadd.f32 %v2781, %v3897
  %v3899 = vpop.f32.mrf.mxu0
  %3900 = vmatprep.mubr.f32.mxu0 0.0
  %3901 = vmatmul.mubr.f32.gmra.mxu0 %v2941
  %v3902 = vpop.f32.mrf.mxu0
  %v3903 = vadd.f32 %v2781, %v3902
  %v3904 = vpop.f32.mrf.mxu0
  %3905 = vmatprep.mubr.f32.mxu0 0.0
  %3906 = vmatmul.mubr.f32.gmra.mxu0 %v2944
  %v3907 = vpop.f32.mrf.mxu0
  %v3908 = vadd.f32 %v2781, %v3907
  %v3909 = vpop.f32.mrf.mxu0
  %3910 = vmatprep.mubr.f32.mxu0 0.0
  %3911 = vmatmul.mubr.f32.gmra.mxu0 %v2947
  %v3912 = vpop.f32.mrf.mxu0
  %v3913 = vadd.f32 %v2781, %v3912
  %v3914 = vpop.f32.mrf.mxu0
  %3915 = vmatprep.mubr.f32.mxu0 0.0
  %3916 = vmatmul.mubr.f32.gmra.mxu0 %v2950
  %v3917 = vpop.f32.mrf.mxu0
  %v3918 = vadd.f32 %v2781, %v3917
  %v3919 = vpop.f32.mrf.mxu0
  %3920 = vmatprep.mubr.f32.mxu0 0.0
  %3921 = vmatmul.mubr.f32.gmra.mxu0 %v2953
  %v3922 = vpop.f32.mrf.mxu0
  %v3923 = vadd.f32 %v2781, %v3922
  %v3924 = vpop.f32.mrf.mxu0
  %3925 = vmatprep.mubr.f32.mxu0 0.0
  %3926 = vmatmul.mubr.f32.gmra.mxu0 %v2956
  %v3927 = vpop.f32.mrf.mxu0
  %v3928 = vadd.f32 %v2781, %v3927
  %v3929 = vpop.f32.mrf.mxu0
  %3930 = vmatprep.mubr.f32.mxu0 0.0
  %3931 = vmatmul.mubr.f32.gmra.mxu0 %v2959
  %v3932 = vpop.f32.mrf.mxu0
  %v3933 = vadd.f32 %v2781, %v3932
  %v3934 = vpop.f32.mrf.mxu0
  %3935 = vmatprep.mubr.f32.mxu0 0.0
  %3936 = vmatmul.mubr.f32.gmra.mxu0 %v2962
  %v3937 = vpop.f32.mrf.mxu0
  %v3938 = vadd.f32 %v2781, %v3937
  %v3939 = vpop.f32.mrf.mxu0
  %3940 = vmatprep.mubr.f32.mxu0 0.0
  %3941 = vmatmul.mubr.f32.gmra.mxu0 %v2965
  %v3942 = vpop.f32.mrf.mxu0
  %v3943 = vadd.f32 %v2781, %v3942
  %v3944 = vpop.f32.mrf.mxu0
  %3945 = vmatprep.mubr.f32.mxu0 0.0
  %3946 = vmatmul.mubr.f32.gmra.mxu0 %v2968
  %v3947 = vpop.f32.mrf.mxu0
  %v3948 = vadd.f32 %v2781, %v3947
  %v3949 = vpop.f32.mrf.mxu0
  %3950 = vmatprep.mubr.f32.mxu0 0.0
  %3951 = vmatmul.mubr.f32.gmra.mxu0 %v2971
  %v3952 = vpop.f32.mrf.mxu0
  %v3953 = vadd.f32 %v2781, %v3952
  %v3954 = vpop.f32.mrf.mxu0
  %3955 = vmatprep.mubr.f32.mxu0 0.0
  %3956 = vmatmul.mubr.f32.gmra.mxu0 %v2974
  %v3957 = vpop.f32.mrf.mxu0
  %v3958 = vadd.f32 %v2781, %v3957
  %v3959 = vpop.f32.mrf.mxu0
  %3960 = vmatprep.mubr.f32.mxu0 0.0
  %3961 = vmatmul.mubr.f32.gmra.mxu0 %v2977
  %v3962 = vpop.f32.mrf.mxu0
  %v3963 = vadd.f32 %v2781, %v3962
  %v3964 = vpop.f32.mrf.mxu0
  %3965 = vmatprep.mubr.f32.mxu0 0.0
  %3966 = vmatmul.mubr.f32.gmra.mxu0 %v2980
  %v3967 = vpop.f32.mrf.mxu0
  %v3968 = vadd.f32 %v2781, %v3967
  %v3969 = vpop.f32.mrf.mxu0
  %3970 = vmatprep.mubr.f32.mxu0 0.0
  %3971 = vmatmul.mubr.f32.gmra.mxu0 %v2983
  %v3972 = vpop.f32.mrf.mxu0
  %v3973 = vadd.f32 %v2781, %v3972
  %v3974 = vpop.f32.mrf.mxu0
  %3975 = vmatprep.mubr.f32.mxu0 0.0
  %3976 = vmatmul.mubr.f32.gmra.mxu0 %v2986
  %v3977 = vpop.f32.mrf.mxu0
  %v3978 = vadd.f32 %v2781, %v3977
  %v3979 = vpop.f32.mrf.mxu0
  %3980 = vmatprep.mubr.f32.mxu0 0.0
  %3981 = vmatmul.mubr.f32.gmra.mxu0 %v2989
  %v3982 = vpop.f32.mrf.mxu0
  %v3983 = vadd.f32 %v2781, %v3982
  %v3984 = vpop.f32.mrf.mxu0
  %3985 = vmatprep.mubr.f32.mxu0 0.0
  %3986 = vmatmul.mubr.f32.gmra.mxu0 %v2992
  %v3987 = vpop.f32.mrf.mxu0
  %v3988 = vadd.f32 %v2781, %v3987
  %v3989 = vpop.f32.mrf.mxu0
  %3990 = vmatprep.mubr.f32.mxu0 0.0
  %3991 = vmatmul.mubr.f32.gmra.mxu0 %v2995
  %v3992 = vpop.f32.mrf.mxu0
  %v3993 = vadd.f32 %v2781, %v3992
  %v3994 = vpop.f32.mrf.mxu0
  %3995 = vmatprep.mubr.f32.mxu0 0.0
  %3996 = vmatmul.mubr.f32.gmra.mxu0 %v2998
  %v3997 = vpop.f32.mrf.mxu0
  %v3998 = vadd.f32 %v2781, %v3997
  %v3999 = vpop.f32.mrf.mxu0
  %4000 = vmatprep.mubr.f32.mxu0 0.0
  %4001 = vmatmul.mubr.f32.gmra.mxu0 %v3001
  %v4002 = vpop.f32.mrf.mxu0
  %v4003 = vadd.f32 %v2781, %v4002
  %v4004 = vpop.f32.mrf.mxu0
  %4005 = vmatprep.mubr.f32.mxu0 0.0
  %4006 = vmatmul.mubr.f32.gmra.mxu0 %v3004
  %v4007 = vpop.f32.mrf.mxu0
  %v4008 = vadd.f32 %v2781, %v4007
  %v4009 = vpop.f32.mrf.mxu0
  %4010 = vmatprep.mubr.f32.mxu0 0.0
  %4011 = vmatmul.mubr.f32.gmra.mxu0 %v3007
  %v4012 = vpop.f32.mrf.mxu0
  %v4013 = vadd.f32 %v2781, %v4012
  %v4014 = vpop.f32.mrf.mxu0
  %4015 = vmatprep.mubr.f32.mxu0 0.0
  %4016 = vmatmul.mubr.f32.gmra.mxu0 %v3010
  %v4017 = vpop.f32.mrf.mxu0
  %v4018 = vadd.f32 %v2781, %v4017
  %v4019 = vpop.f32.mrf.mxu0
  %4020 = vmatprep.mubr.f32.mxu0 0.0
  %4021 = vmatmul.mubr.f32.gmra.mxu0 %v3013
  %v4022 = vpop.f32.mrf.mxu0
  %v4023 = vadd.f32 %v2781, %v4022
  %v4024 = vpop.f32.mrf.mxu0
  %4025 = vmatprep.mubr.f32.mxu0 0.0
  %4026 = vmatmul.mubr.f32.gmra.mxu0 %v3016
  %v4027 = vpop.f32.mrf.mxu0
  %v4028 = vadd.f32 %v2781, %v4027
  %v4029 = vpop.f32.mrf.mxu0
  %4030 = vmatprep.mubr.f32.mxu0 0.0
  %4031 = vmatmul.mubr.f32.gmra.mxu0 %v3019
  %v4032 = vpop.f32.mrf.mxu0
  %v4033 = vadd.f32 %v2781, %v4032
  %v4034 = vpop.f32.mrf.mxu0
  %4035 = vmatprep.mubr.f32.mxu0 0.0
  %4036 = vmatmul.mubr.f32.gmra.mxu0 %v3022
  %v4037 = vpop.f32.mrf.mxu0
  %v4038 = vadd.f32 %v2781, %v4037
  %v4039 = vpop.f32.mrf.mxu0
  %4040 = vmatprep.mubr.f32.mxu0 0.0
  %4041 = vmatmul.mubr.f32.gmra.mxu0 %v3025
  %v4042 = vpop.f32.mrf.mxu0
  %v4043 = vadd.f32 %v2781, %v4042
  %v4044 = vpop.f32.mrf.mxu0
  %4045 = vmatprep.mubr.f32.mxu0 0.0
  %4046 = vmatmul.mubr.f32.gmra.mxu0 %v3028
  %v4047 = vpop.f32.mrf.mxu0
  %v4048 = vadd.f32 %v2781, %v4047
  %v4049 = vpop.f32.mrf.mxu0
  %4050 = vmatprep.mubr.f32.mxu0 0.0
  %4051 = vmatmul.mubr.f32.gmra.mxu0 %v3031
  %v4052 = vpop.f32.mrf.mxu0
  %v4053 = vadd.f32 %v2781, %v4052
  %v4054 = vpop.f32.mrf.mxu0
  %4055 = vmatprep.mubr.f32.mxu0 0.0
  %4056 = vmatmul.mubr.f32.gmra.mxu0 %v3034
  %v4057 = vpop.f32.mrf.mxu0
  %v4058 = vadd.f32 %v2781, %v4057
  %v4059 = vpop.f32.mrf.mxu0
  %4060 = vmatprep.mubr.f32.mxu0 0.0
  %4061 = vmatmul.mubr.f32.gmra.mxu0 %v3037
  %v4062 = vpop.f32.mrf.mxu0
  %v4063 = vadd.f32 %v2781, %v4062
  %v4064 = vpop.f32.mrf.mxu0
  %4065 = vmatprep.mubr.f32.mxu0 0.0
  %4066 = vmatmul.mubr.f32.gmra.mxu0 %v3040
  %v4067 = vpop.f32.mrf.mxu0
  %v4068 = vadd.f32 %v2781, %v4067
  %v4069 = vpop.f32.mrf.mxu0
  %4070 = vmatprep.mubr.f32.mxu0 0.0
  %4071 = vmatmul.mubr.f32.gmra.mxu0 %v3043
  %v4072 = vpop.f32.mrf.mxu0
  %v4073 = vadd.f32 %v2781, %v4072
  %v4074 = vpop.f32.mrf.mxu0
  %4075 = vmatprep.mubr.f32.mxu0 0.0
  %4076 = vmatmul.mubr.f32.gmra.mxu0 %v3046
  %v4077 = vpop.f32.mrf.mxu0
  %v4078 = vadd.f32 %v2781, %v4077
  %v4079 = vpop.f32.mrf.mxu0
  %4080 = vmatprep.mubr.f32.mxu0 0.0
  %4081 = vmatmul.mubr.f32.gmra.mxu0 %v3049
  %v4082 = vpop.f32.mrf.mxu0
  %v4083 = vadd.f32 %v2781, %v4082
  %v4084 = vpop.f32.mrf.mxu0
  %4085 = vmatprep.mubr.f32.mxu0 0.0
  %4086 = vmatmul.mubr.f32.gmra.mxu0 %v3052
  %v4087 = vpop.f32.mrf.mxu0
  %v4088 = vadd.f32 %v2781, %v4087
  %v4089 = vpop.f32.mrf.mxu0
  %4090 = vmatprep.mubr.f32.mxu0 0.0
  %4091 = vmatmul.mubr.f32.gmra.mxu0 %v3055
  %v4092 = vpop.f32.mrf.mxu0
  %v4093 = vadd.f32 %v2781, %v4092
  %v4094 = vpop.f32.mrf.mxu0
  %4095 = vmatprep.mubr.f32.mxu0 0.0
  %4096 = vmatmul.mubr.f32.gmra.mxu0 %v3058
  %v4097 = vpop.f32.mrf.mxu0
  %v4098 = vadd.f32 %v2781, %v4097
  %v4099 = vpop.f32.mrf.mxu0
  %4100 = vmatprep.mubr.f32.mxu0 0.0
  %4101 = vmatmul.mubr.f32.gmra.mxu0 %v3061
  %v4102 = vpop.f32.mrf.mxu0
  %v4103 = vadd.f32 %v2781, %v4102
  %v4104 = vpop.f32.mrf.mxu0
  %4105 = vmatprep.mubr.f32.mxu0 0.0
  %4106 = vmatmul.mubr.f32.gmra.mxu0 %v3064
  %v4107 = vpop.f32.mrf.mxu0
  %v4108 = vadd.f32 %v2781, %v4107
  %v4109 = vpop.f32.mrf.mxu0
  %4110 = vmatprep.mubr.f32.mxu0 0.0
  %4111 = vmatmul.mubr.f32.gmra.mxu0 %v3067
  %v4112 = vpop.f32.mrf.mxu0
  %v4113 = vadd.f32 %v2781, %v4112
  %v4114 = vpop.f32.mrf.mxu0
  %4115 = vmatprep.mubr.f32.mxu0 0.0
  %4116 = vmatmul.mubr.f32.gmra.mxu0 %v3070
  %v4117 = vpop.f32.mrf.mxu0
  %v4118 = vadd.f32 %v2781, %v4117
  %v4119 = vpop.f32.mrf.mxu0
  %4120 = vmatprep.mubr.f32.mxu0 0.0
  %4121 = vmatmul.mubr.f32.gmra.mxu0 %v3073
  %v4122 = vpop.f32.mrf.mxu0
  %v4123 = vadd.f32 %v2781, %v4122
  %v4124 = vpop.f32.mrf.mxu0
  %4125 = vmatprep.mubr.f32.mxu0 0.0
  %4126 = vmatmul.mubr.f32.gmra.mxu0 %v3076
  %v4127 = vpop.f32.mrf.mxu0
  %v4128 = vadd.f32 %v2781, %v4127
  %v4129 = vpop.f32.mrf.mxu0
  %4130 = vmatprep.mubr.f32.mxu0 0.0
  %4131 = vmatmul.mubr.f32.gmra.mxu0 %v3079
  %v4132 = vpop.f32.mrf.mxu0
  %v4133 = vadd.f32 %v2781, %v4132
  %v4134 = vpop.f32.mrf.mxu0
  %4135 = vmatprep.mubr.f32.mxu0 0.0
  %4136 = vmatmul.mubr.f32.gmra.mxu0 %v3082
  %v4137 = vpop.f32.mrf.mxu0
  %v4138 = vadd.f32 %v2781, %v4137
  %v4139 = vpop.f32.mrf.mxu0
  %4140 = vmatprep.mubr.f32.mxu0 0.0
  %4141 = vmatmul.mubr.f32.gmra.mxu0 %v3085
  %v4142 = vpop.f32.mrf.mxu0
  %v4143 = vadd.f32 %v2781, %v4142
  %v4144 = vpop.f32.mrf.mxu0
  %4145 = vmatprep.mubr.f32.mxu0 0.0
  %4146 = vmatmul.mubr.f32.gmra.mxu0 %v3088
  %v4147 = vpop.f32.mrf.mxu0
  %v4148 = vadd.f32 %v2781, %v4147
  %v4149 = vpop.f32.mrf.mxu0
  %4150 = vmatprep.mubr.f32.mxu0 0.0
  %4151 = vmatmul.mubr.f32.gmra.mxu0 %v3091
  %v4152 = vpop.f32.mrf.mxu0
  %v4153 = vadd.f32 %v2781, %v4152
  %v4154 = vpop.f32.mrf.mxu0
  %4155 = vmatprep.mubr.f32.mxu0 0.0
  %4156 = vmatmul.mubr.f32.gmra.mxu0 %v3094
  %v4157 = vpop.f32.mrf.mxu0
  %v4158 = vadd.f32 %v2781, %v4157
  %v4159 = vpop.f32.mrf.mxu0
  %4160 = vmatprep.mubr.f32.mxu0 0.0
  %4161 = vmatmul.mubr.f32.gmra.mxu0 %v3097
  %v4162 = vpop.f32.mrf.mxu0
  %v4163 = vadd.f32 %v2781, %v4162
  %v4164 = vpop.f32.mrf.mxu0
  %4165 = vmatprep.mubr.f32.mxu0 0.0
  %4166 = vmatmul.mubr.f32.gmra.mxu0 %v3100
  %v4167 = vpop.f32.mrf.mxu0
  %v4168 = vadd.f32 %v2781, %v4167
  %v4169 = vpop.f32.mrf.mxu0
  %4170 = vmatprep.mubr.f32.mxu0 0.0
  %4171 = vmatmul.mubr.f32.gmra.mxu0 %v3103
  %v4172 = vpop.f32.mrf.mxu0
  %v4173 = vadd.f32 %v2781, %v4172
  %v4174 = vpop.f32.mrf.mxu0
  %4175 = vmatprep.mubr.f32.mxu0 0.0
  %4176 = vmatmul.mubr.f32.gmra.mxu0 %v3106
  %v4177 = vpop.f32.mrf.mxu0
  %v4178 = vadd.f32 %v2781, %v4177
  %v4179 = vpop.f32.mrf.mxu0
  %4180 = vmatprep.mubr.f32.mxu0 0.0
  %4181 = vmatmul.mubr.f32.gmra.mxu0 %v3109
  %v4182 = vpop.f32.mrf.mxu0
  %v4183 = vadd.f32 %v2781, %v4182
  %v4184 = vpop.f32.mrf.mxu0
  %4185 = vmatprep.mubr.f32.mxu0 0.0
  %4186 = vmatmul.mubr.f32.gmra.mxu0 %v3112
  %v4187 = vpop.f32.mrf.mxu0
  %v4188 = vadd.f32 %v2781, %v4187
  %v4189 = vpop.f32.mrf.mxu0
  %4190 = vmatprep.mubr.f32.mxu0 0.0
  %4191 = vmatmul.mubr.f32.gmra.mxu0 %v3115
  %v4192 = vpop.f32.mrf.mxu0
  %v4193 = vadd.f32 %v2781, %v4192
  %v4194 = vpop.f32.mrf.mxu0
  %4195 = vmatprep.mubr.f32.mxu0 0.0
  %4196 = vmatmul.mubr.f32.gmra.mxu0 %v3118
  %v4197 = vpop.f32.mrf.mxu0
  %v4198 = vadd.f32 %v2781, %v4197
  %v4199 = vpop.f32.mrf.mxu0
  %4200 = vmatprep.mubr.f32.mxu0 0.0
  %4201 = vmatmul.mubr.f32.gmra.mxu0 %v3121
  %v4202 = vpop.f32.mrf.mxu0
  %v4203 = vadd.f32 %v2781, %v4202
  %v4204 = vpop.f32.mrf.mxu0
  %4205 = vmatprep.mubr.f32.mxu0 0.0
  %4206 = vmatmul.mubr.f32.gmra.mxu0 %v3124
  %v4207 = vpop.f32.mrf.mxu0
  %v4208 = vadd.f32 %v2781, %v4207
  %v4209 = vpop.f32.mrf.mxu0
  %4210 = vmatprep.mubr.f32.mxu0 0.0
  %4211 = vmatmul.mubr.f32.gmra.mxu0 %v3127
  %v4212 = vpop.f32.mrf.mxu0
  %v4213 = vadd.f32 %v2781, %v4212
  %v4214 = vpop.f32.mrf.mxu0
  %4215 = vmatprep.mubr.f32.mxu0 0.0
  %4216 = vmatmul.mubr.f32.gmra.mxu0 %v3130
  %v4217 = vpop.f32.mrf.mxu0
  %v4218 = vadd.f32 %v2781, %v4217
  %v4219 = vpop.f32.mrf.mxu0
  %4220 = vmatprep.mubr.f32.mxu0 0.0
  %4221 = vmatmul.mubr.f32.gmra.mxu0 %v3133
  %v4222 = vpop.f32.mrf.mxu0
  %v4223 = vadd.f32 %v2781, %v4222
  %v4224 = vpop.f32.mrf.mxu0
  %4225 = vmatprep.mubr.f32.mxu0 0.0
  %4226 = vmatmul.mubr.f32.gmra.mxu0 %v3136
  %v4227 = vpop.f32.mrf.mxu0
  %v4228 = vadd.f32 %v2781, %v4227
  %v4229 = vpop.f32.mrf.mxu0
  %4230 = vmatprep.mubr.f32.mxu0 0.0
  %4231 = vmatmul.mubr.f32.gmra.mxu0 %v3139
  %v4232 = vpop.f32.mrf.mxu0
  %v4233 = vadd.f32 %v2781, %v4232
  %v4234 = vpop.f32.mrf.mxu0
  %4235 = vmatprep.mubr.f32.mxu0 0.0
  %4236 = vmatmul.mubr.f32.gmra.mxu0 %v3142
  %v4237 = vpop.f32.mrf.mxu0
  %v4238 = vadd.f32 %v2781, %v4237
  %v4239 = vpop.f32.mrf.mxu0
  %4240 = vmatprep.mubr.f32.mxu0 0.0
  %4241 = vmatmul.mubr.f32.gmra.mxu0 %v3145
  %v4242 = vpop.f32.mrf.mxu0
  %v4243 = vadd.f32 %v2781, %v4242
  %v4244 = vpop.f32.mrf.mxu0
  %4245 = vmatprep.mubr.f32.mxu0 0.0
  %4246 = vmatmul.mubr.f32.gmra.mxu0 %v3148
  %v4247 = vpop.f32.mrf.mxu0
  %v4248 = vadd.f32 %v2781, %v4247
  %v4249 = vpop.f32.mrf.mxu0
  %4250 = vmatprep.mubr.f32.mxu0 0.0
  %4251 = vmatmul.mubr.f32.gmra.mxu0 %v3151
  %v4252 = vpop.f32.mrf.mxu0
  %v4253 = vadd.f32 %v2781, %v4252
  %v4254 = vpop.f32.mrf.mxu0
  %4255 = vmatprep.mubr.f32.mxu0 0.0
  %4256 = vmatmul.mubr.f32.gmra.mxu0 %v3154
  %v4257 = vpop.f32.mrf.mxu0
  %v4258 = vadd.f32 %v2781, %v4257
  %v4259 = vpop.f32.mrf.mxu0
  %4260 = vmatprep.mubr.f32.mxu0 0.0
  %4261 = vmatmul.mubr.f32.gmra.mxu0 %v3157
  %v4262 = vpop.f32.mrf.mxu0
  %v4263 = vadd.f32 %v2781, %v4262
  %v4264 = vpop.f32.mrf.mxu0
  %4265 = vmatprep.mubr.f32.mxu0 0.0
  %4266 = vmatmul.mubr.f32.gmra.mxu0 %v3160
  %v4267 = vpop.f32.mrf.mxu0
  %v4268 = vadd.f32 %v2781, %v4267
  %v4269 = vpop.f32.mrf.mxu0
  %4270 = vmatprep.mubr.f32.mxu0 0.0
  %4271 = vmatmul.mubr.f32.gmra.mxu0 %v3163
  %v4272 = vpop.f32.mrf.mxu0
  %v4273 = vadd.f32 %v2781, %v4272
  %v4274 = vpop.f32.mrf.mxu0
  %4275 = vmatprep.mubr.f32.mxu0 0.0
  %4276 = vmatmul.mubr.f32.gmra.mxu0 %v3166
  %v4277 = vpop.f32.mrf.mxu0
  %v4278 = vadd.f32 %v2781, %v4277
  %v4279 = vpop.f32.mrf.mxu0
  %4280 = vmatprep.mubr.f32.mxu0 0.0
  %4281 = vmatmul.mubr.f32.gmra.mxu0 %v3169
  %v4282 = vpop.f32.mrf.mxu0
  %v4283 = vadd.f32 %v2781, %v4282
  %v4284 = vpop.f32.mrf.mxu0
  %4285 = vmatprep.mubr.f32.mxu0 0.0
  %4286 = vmatmul.mubr.f32.gmra.mxu0 %v3172
  %v4287 = vpop.f32.mrf.mxu0
  %v4288 = vadd.f32 %v2781, %v4287
  %v4289 = vpop.f32.mrf.mxu0
  %4290 = vmatprep.mubr.f32.mxu0 0.0
  %4291 = vmatmul.mubr.f32.gmra.mxu0 %v3175
  %v4292 = vpop.f32.mrf.mxu0
  %v4293 = vadd.f32 %v2781, %v4292
  %v4294 = vpop.f32.mrf.mxu0
  %4295 = vmatprep.mubr.f32.mxu0 0.0
  %4296 = vmatmul.mubr.f32.gmra.mxu0 %v3178
  %v4297 = vpop.f32.mrf.mxu0
  %v4298 = vadd.f32 %v2781, %v4297
  %v4299 = vpop.f32.mrf.mxu0
  %4300 = vmatprep.mubr.f32.mxu0 0.0
  %4301 = vmatmul.mubr.f32.gmra.mxu0 %v3181
  %v4302 = vpop.f32.mrf.mxu0
  %v4303 = vadd.f32 %v2781, %v4302
  %v4304 = vpop.f32.mrf.mxu0
  %4305 = vmatprep.mubr.f32.mxu0 0.0
  %4306 = vmatmul.mubr.f32.gmra.mxu0 %v3184
  %v4307 = vpop.f32.mrf.mxu0
  %v4308 = vadd.f32 %v2781, %v4307
  %v4309 = vpop.f32.mrf.mxu0
  %4310 = vmatprep.mubr.f32.mxu0 0.0
  %4311 = vmatmul.mubr.f32.gmra.mxu0 %v3187
  %v4312 = vpop.f32.mrf.mxu0
  %v4313 = vadd.f32 %v2781, %v4312
  %v4314 = vpop.f32.mrf.mxu0
  %4315 = vmatprep.mubr.f32.mxu0 0.0
  %4316 = vmatmul.mubr.f32.gmra.mxu0 %v3190
  %v4317 = vpop.f32.mrf.mxu0
  %v4318 = vadd.f32 %v2781, %v4317
  %v4319 = vpop.f32.mrf.mxu0
  %4320 = vmatprep.mubr.f32.mxu0 0.0
  %4321 = vmatmul.mubr.f32.gmra.mxu0 %v3193
  %v4322 = vpop.f32.mrf.mxu0
  %v4323 = vadd.f32 %v2781, %v4322
  %v4324 = vpop.f32.mrf.mxu0
  %4325 = vmatprep.mubr.f32.mxu0 0.0
  %4326 = vmatmul.mubr.f32.gmra.mxu0 %v3196
  %v4327 = vpop.f32.mrf.mxu0
  %v4328 = vadd.f32 %v2781, %v4327
  %v4329 = vpop.f32.mrf.mxu0
  %4330 = vmatprep.mubr.f32.mxu0 0.0
  %4331 = vmatmul.mubr.f32.gmra.mxu0 %v3199
  %v4332 = vpop.f32.mrf.mxu0
  %v4333 = vadd.f32 %v2781, %v4332
  %v4334 = vpop.f32.mrf.mxu0
  %4335 = vmatprep.mubr.f32.mxu0 0.0
  %4336 = vmatmul.mubr.f32.gmra.mxu0 %v3202
  %v4337 = vpop.f32.mrf.mxu0
  %v4338 = vadd.f32 %v2781, %v4337
  %v4339 = vpop.f32.mrf.mxu0
  %4340 = vmatprep.mubr.f32.mxu0 0.0
  %4341 = vmatmul.mubr.f32.gmra.mxu0 %v3205
  %v4342 = vpop.f32.mrf.mxu0
  %v4343 = vadd.f32 %v2781, %v4342
  %v4344 = vpop.f32.mrf.mxu0
  %4345 = vmatprep.mubr.f32.mxu0 0.0
  %4346 = vmatmul.mubr.f32.gmra.mxu0 %v3208
  %v4347 = vpop.f32.mrf.mxu0
  %v4348 = vadd.f32 %v2781, %v4347
  %v4349 = vpop.f32.mrf.mxu0
  %4350 = vmatprep.mubr.f32.mxu0 0.0
  %4351 = vmatmul.mubr.f32.gmra.mxu0 %v3211
  %v4352 = vpop.f32.mrf.mxu0
  %v4353 = vadd.f32 %v2781, %v4352
  %v4354 = vpop.f32.mrf.mxu0
  %4355 = vmatprep.mubr.f32.mxu0 0.0
  %4356 = vmatmul.mubr.f32.gmra.mxu0 %v3214
  %v4357 = vpop.f32.mrf.mxu0
  %v4358 = vadd.f32 %v2781, %v4357
  %v4359 = vpop.f32.mrf.mxu0
  %4360 = vmatprep.mubr.f32.mxu0 0.0
  %4361 = vmatmul.mubr.f32.gmra.mxu0 %v3217
  %v4362 = vpop.f32.mrf.mxu0
  %v4363 = vadd.f32 %v2781, %v4362
  %v4364 = vpop.f32.mrf.mxu0
  %4365 = vmatprep.mubr.f32.mxu0 0.0
  %4366 = vmatmul.mubr.f32.gmra.mxu0 %v3220
  %v4367 = vpop.f32.mrf.mxu0
  %v4368 = vadd.f32 %v2781, %v4367
  %v4369 = vpop.f32.mrf.mxu0
  %4370 = vmatprep.mubr.f32.mxu0 0.0
  %4371 = vmatmul.mubr.f32.gmra.mxu0 %v3223
  %v4372 = vpop.f32.mrf.mxu0
  %v4373 = vadd.f32 %v2781, %v4372
  %v4374 = vpop.f32.mrf.mxu0
  %4375 = vmatprep.mubr.f32.mxu0 0.0
  %4376 = vmatmul.mubr.f32.gmra.mxu0 %v3226
  %v4377 = vpop.f32.mrf.mxu0
  %v4378 = vadd.f32 %v2781, %v4377
  %v4379 = vpop.f32.mrf.mxu0
  %4380 = vmatprep.mubr.f32.mxu0 0.0
  %4381 = vmatmul.mubr.f32.gmra.mxu0 %v3229
  %v4382 = vpop.f32.mrf.mxu0
  %v4383 = vadd.f32 %v2781, %v4382
  %v4384 = vpop.f32.mrf.mxu0
  %4385 = vmatprep.mubr.f32.mxu0 0.0
  %4386 = vmatmul.mubr.f32.gmra.mxu0 %v3232
  %v4387 = vpop.f32.mrf.mxu0
  %v4388 = vadd.f32 %v2781, %v4387
  %v4389 = vpop.f32.mrf.mxu0
  %4390 = vmatprep.mubr.f32.mxu0 0.0
  %4391 = vmatmul.mubr.f32.gmra.mxu0 %v3235
  %v4392 = vpop.f32.mrf.mxu0
  %v4393 = vadd.f32 %v2781, %v4392
  %v4394 = vpop.f32.mrf.mxu0
  %4395 = vmatprep.mubr.f32.mxu0 0.0
  %4396 = vmatmul.mubr.f32.gmra.mxu0 %v3238
  %v4397 = vpop.f32.mrf.mxu0
  %v4398 = vadd.f32 %v2781, %v4397
  %v4399 = vpop.f32.mrf.mxu0
  %4400 = vmatprep.mubr.f32.mxu0 0.0
  %4401 = vmatmul.mubr.f32.gmra.mxu0 %v3241
  %v4402 = vpop.f32.mrf.mxu0
  %v4403 = vadd.f32 %v2781, %v4402
  %v4404 = vpop.f32.mrf.mxu0
  %4405 = vmatprep.mubr.f32.mxu0 0.0
  %4406 = vmatmul.mubr.f32.gmra.mxu0 %v3244
  %v4407 = vpop.f32.mrf.mxu0
  %v4408 = vadd.f32 %v2781, %v4407
  %v4409 = vpop.f32.mrf.mxu0
  %4410 = vmatprep.mubr.f32.mxu0 0.0
  %4411 = vmatmul.mubr.f32.gmra.mxu0 %v3247
  %v4412 = vpop.f32.mrf.mxu0
  %v4413 = vadd.f32 %v2781, %v4412
  %v4414 = vpop.f32.mrf.mxu0
  %4415 = vmatprep.mubr.f32.mxu0 0.0
  %4416 = vmatmul.mubr.f32.gmra.mxu0 %v3250
  %v4417 = vpop.f32.mrf.mxu0
  %v4418 = vadd.f32 %v2781, %v4417
  %v4419 = vpop.f32.mrf.mxu0
  %4420 = vmatprep.mubr.f32.mxu0 0.0
  %4421 = vmatmul.mubr.f32.gmra.mxu0 %v3253
  %v4422 = vpop.f32.mrf.mxu0
  %v4423 = vadd.f32 %v2781, %v4422
  %v4424 = vpop.f32.mrf.mxu0
  %4425 = vmatprep.mubr.f32.mxu0 0.0
  %4426 = vmatmul.mubr.f32.gmra.mxu0 %v3256
  %v4427 = vpop.f32.mrf.mxu0
  %v4428 = vadd.f32 %v2781, %v4427
  %v4429 = vpop.f32.mrf.mxu0
  %4430 = vmatprep.mubr.f32.mxu0 0.0
  %4431 = vmatmul.mubr.f32.gmra.mxu0 %v3259
  %v4432 = vpop.f32.mrf.mxu0
  %v4433 = vadd.f32 %v2781, %v4432
  %v4434 = vpop.f32.mrf.mxu0
  %4435 = vmatprep.mubr.f32.mxu0 0.0
  %4436 = vmatmul.mubr.f32.gmra.mxu0 %v3262
  %v4437 = vpop.f32.mrf.mxu0
  %v4438 = vadd.f32 %v2781, %v4437
  %v4439 = vpop.f32.mrf.mxu0
  %4440 = vmatprep.mubr.f32.mxu0 0.0
  %4441 = vmatmul.mubr.f32.gmra.mxu0 %v3265
  %v4442 = vpop.f32.mrf.mxu0
  %v4443 = vadd.f32 %v2781, %v4442
  %v4444 = vpop.f32.mrf.mxu0
  %4445 = vmatprep.mubr.f32.mxu0 0.0
  %4446 = vmatmul.mubr.f32.gmra.mxu0 %v3268
  %v4447 = vpop.f32.mrf.mxu0
  %v4448 = vadd.f32 %v2781, %v4447
  %v4449 = vpop.f32.mrf.mxu0
  %4450 = vmatprep.mubr.f32.mxu0 0.0
  %4451 = vmatmul.mubr.f32.gmra.mxu0 %v3271
  %v4452 = vpop.f32.mrf.mxu0
  %v4453 = vadd.f32 %v2781, %v4452
  %v4454 = vpop.f32.mrf.mxu0
  %4455 = vmatprep.mubr.f32.mxu0 0.0
  %4456 = vmatmul.mubr.f32.gmra.mxu0 %v3274
  %v4457 = vpop.f32.mrf.mxu0
  %v4458 = vadd.f32 %v2781, %v4457
  %v4459 = vpop.f32.mrf.mxu0
  %4460 = vmatprep.mubr.f32.mxu0 0.0
  %4461 = vmatmul.mubr.f32.gmra.mxu0 %v3277
  %v4462 = vpop.f32.mrf.mxu0
  %v4463 = vadd.f32 %v2781, %v4462
  %v4464 = vpop.f32.mrf.mxu0
  %4465 = vmatprep.mubr.f32.mxu0 0.0
  %4466 = vmatmul.mubr.f32.gmra.mxu0 %v3280
  %v4467 = vpop.f32.mrf.mxu0
  %v4468 = vadd.f32 %v2781, %v4467
  %v4469 = vpop.f32.mrf.mxu0
  %4470 = vmatprep.mubr.f32.mxu0 0.0
  %4471 = vmatmul.mubr.f32.gmra.mxu0 %v3283
  %v4472 = vpop.f32.mrf.mxu0
  %v4473 = vadd.f32 %v2781, %v4472
  %v4474 = vpop.f32.mrf.mxu0
  %4475 = vmatprep.mubr.f32.mxu0 0.0
  %4476 = vmatmul.mubr.f32.gmra.mxu0 %v3286
  %v4477 = vpop.f32.mrf.mxu0
  %v4478 = vadd.f32 %v2781, %v4477
  %v4479 = vpop.f32.mrf.mxu0
  %4480 = vmatprep.mubr.f32.mxu0 0.0
  %4481 = vmatmul.mubr.f32.gmra.mxu0 %v3289
  %v4482 = vpop.f32.mrf.mxu0
  %v4483 = vadd.f32 %v2781, %v4482
  %v4484 = vpop.f32.mrf.mxu0
  %4485 = vmatprep.mubr.f32.mxu0 0.0
  %4486 = vmatmul.mubr.f32.gmra.mxu0 %v3292
  %v4487 = vpop.f32.mrf.mxu0
  %v4488 = vadd.f32 %v2781, %v4487
  %v4489 = vpop.f32.mrf.mxu0
  %4490 = vmatprep.mubr.f32.mxu0 0.0
  %4491 = vmatmul.mubr.f32.gmra.mxu0 %v3295
  %v4492 = vpop.f32.mrf.mxu0
  %v4493 = vadd.f32 %v2781, %v4492
  %v4494 = vpop.f32.mrf.mxu0
  %4495 = vmatprep.mubr.f32.mxu0 0.0
  %4496 = vmatmul.mubr.f32.gmra.mxu0 %v3298
  %v4497 = vpop.f32.mrf.mxu0
  %v4498 = vadd.f32 %v2781, %v4497
  %v4499 = vpop.f32.mrf.mxu0
  %4500 = vmatprep.mubr.f32.mxu0 0.0
  %4501 = vmatmul.mubr.f32.gmra.mxu0 %v3301
  %v4502 = vpop.f32.mrf.mxu0
  %v4503 = vadd.f32 %v2781, %v4502
  %v4504 = vpop.f32.mrf.mxu0
  %4505 = vmatprep.mubr.f32.mxu0 0.0
  %4506 = vmatmul.mubr.f32.gmra.mxu0 %v3304
  %v4507 = vpop.f32.mrf.mxu0
  %v4508 = vadd.f32 %v2781, %v4507
  %v4509 = vpop.f32.mrf.mxu0
  %4510 = vmatprep.mubr.f32.mxu0 0.0
  %4511 = vmatmul.mubr.f32.gmra.mxu0 %v3307
  %v4512 = vpop.f32.mrf.mxu0
  %v4513 = vadd.f32 %v2781, %v4512
  %v4514 = vpop.f32.mrf.mxu0
  %4515 = vmatprep.mubr.f32.mxu0 0.0
  %4516 = vmatmul.mubr.f32.gmra.mxu0 %v3310
  %v4517 = vpop.f32.mrf.mxu0
  %v4518 = vadd.f32 %v2781, %v4517
  %v4519 = vpop.f32.mrf.mxu0
  %4520 = vmatprep.mubr.f32.mxu0 0.0
  %4521 = vmatmul.mubr.f32.gmra.mxu0 %v3313
  %v4522 = vpop.f32.mrf.mxu0
  %v4523 = vadd.f32 %v2781, %v4522
  %v4524 = vpop.f32.mrf.mxu0
  %4525 = vmatprep.mubr.f32.mxu0 0.0
  %4526 = vmatmul.mubr.f32.gmra.mxu0 %v3316
  %v4527 = vpop.f32.mrf.mxu0
  %v4528 = vadd.f32 %v2781, %v4527
  %v4529 = vpop.f32.mrf.mxu0
  %4530 = vmatprep.mubr.f32.mxu0 0.0
  %4531 = vmatmul.mubr.f32.gmra.mxu0 %v3319
  %v4532 = vpop.f32.mrf.mxu0
  %v4533 = vadd.f32 %v2781, %v4532
  %v4534 = vpop.f32.mrf.mxu0
  %4535 = vmatprep.mubr.f32.mxu0 0.0
  %4536 = vmatmul.mubr.f32.gmra.mxu0 %v3322
  %v4537 = vpop.f32.mrf.mxu0
  %v4538 = vadd.f32 %v2781, %v4537
  %v4539 = vpop.f32.mrf.mxu0
  %4540 = vmatprep.mubr.f32.mxu0 0.0
  %4541 = vmatmul.mubr.f32.gmra.mxu0 %v3325
  %v4542 = vpop.f32.mrf.mxu0
  %v4543 = vadd.f32 %v2781, %v4542
  %v4544 = vpop.f32.mrf.mxu0
  %4545 = vmatprep.mubr.f32.mxu0 0.0
  %4546 = vmatmul.mubr.f32.gmra.mxu0 %v3328
  %v4547 = vpop.f32.mrf.mxu0
  %v4548 = vadd.f32 %v2781, %v4547
  %v4549 = vpop.f32.mrf.mxu0
  %4550 = vmatprep.mubr.f32.mxu0 0.0
  %4551 = vmatmul.mubr.f32.gmra.mxu0 %v3331
  %v4552 = vpop.f32.mrf.mxu0
  %v4553 = vadd.f32 %v2781, %v4552
  %v4554 = vpop.f32.mrf.mxu0
  %4555 = vmatprep.mubr.f32.mxu0 0.0
  %4556 = vmatmul.mubr.f32.gmra.mxu0 %v3334
  %v4557 = vpop.f32.mrf.mxu0
  %v4558 = vadd.f32 %v2781, %v4557
  %v4559 = vpop.f32.mrf.mxu0
  %4560 = vmatprep.mubr.f32.mxu0 0.0
  %4561 = vmatmul.mubr.f32.gmra.mxu0 %v3337
  %v4562 = vpop.f32.mrf.mxu0
  %v4563 = vadd.f32 %v2781, %v4562
  %v4564 = vpop.f32.mrf.mxu0
  %4565 = vmatprep.mubr.f32.mxu0 0.0
  %4566 = vmatmul.mubr.f32.gmra.mxu0 %v3340
  %v4567 = vpop.f32.mrf.mxu0
  %v4568 = vadd.f32 %v2781, %v4567
  %v4569 = vpop.f32.mrf.mxu0
  %4570 = vmatprep.mubr.f32.mxu0 0.0
  %4571 = vmatmul.mubr.f32.gmra.mxu0 %v3343
  %v4572 = vpop.f32.mrf.mxu0
  %v4573 = vadd.f32 %v2781, %v4572
  %v4574 = vpop.f32.mrf.mxu0
  %4575 = vmatprep.mubr.f32.mxu0 0.0
  %4576 = vmatmul.mubr.f32.gmra.mxu0 %v3346
  %v4577 = vpop.f32.mrf.mxu0
  %v4578 = vadd.f32 %v2781, %v4577
  %v4579 = vpop.f32.mrf.mxu0
  %4580 = vmatprep.mubr.f32.mxu0 0.0
  %4581 = vmatmul.mubr.f32.gmra.mxu0 %v3349
  %v4582 = vpop.f32.mrf.mxu0
  %v4583 = vadd.f32 %v2781, %v4582
  %v4584 = vpop.f32.mrf.mxu0
  %4585 = vmatprep.mubr.f32.mxu0 0.0
  %4586 = vmatmul.mubr.f32.gmra.mxu0 %v3352
  %v4587 = vpop.f32.mrf.mxu0
  %v4588 = vadd.f32 %v2781, %v4587
  %v4589 = vpop.f32.mrf.mxu0
  %4590 = vmatprep.mubr.f32.mxu0 0.0
  %4591 = vmatmul.mubr.f32.gmra.mxu0 %v3355
  %v4592 = vpop.f32.mrf.mxu0
  %v4593 = vadd.f32 %v2781, %v4592
  %v4594 = vpop.f32.mrf.mxu0
  %4595 = vmatprep.mubr.f32.mxu0 0.0
  %4596 = vmatmul.mubr.f32.gmra.mxu0 %v3358
  %v4597 = vpop.f32.mrf.mxu0
  %v4598 = vadd.f32 %v2781, %v4597
  %v4599 = vpop.f32.mrf.mxu0
  %4600 = vmatprep.mubr.f32.mxu0 0.0
  %4601 = vmatmul.mubr.f32.gmra.mxu0 %v3361
  %v4602 = vpop.f32.mrf.mxu0
  %v4603 = vadd.f32 %v2781, %v4602
  %v4604 = vpop.f32.mrf.mxu0
  %4605 = vmatprep.mubr.f32.mxu0 0.0
  %4606 = vmatmul.mubr.f32.gmra.mxu0 %v3364
  %v4607 = vpop.f32.mrf.mxu0
  %v4608 = vadd.f32 %v2781, %v4607
  %v4609 = vpop.f32.mrf.mxu0
  %4610 = vmatprep.mubr.f32.mxu0 0.0
  %4611 = vmatmul.mubr.f32.gmra.mxu0 %v3367
  %v4612 = vpop.f32.mrf.mxu0
  %v4613 = vadd.f32 %v2781, %v4612
  %v4614 = vpop.f32.mrf.mxu0
  %4615 = vmatprep.mubr.f32.mxu0 0.0
  %4616 = vmatmul.mubr.f32.gmra.mxu0 %v3370
  %v4617 = vpop.f32.mrf.mxu0
  %v4618 = vadd.f32 %v2781, %v4617
  %v4619 = vpop.f32.mrf.mxu0
  %4620 = vmatprep.mubr.f32.mxu0 0.0
  %4621 = vmatmul.mubr.f32.gmra.mxu0 %v3373
  %v4622 = vpop.f32.mrf.mxu0
  %v4623 = vadd.f32 %v2781, %v4622
  %v4624 = vpop.f32.mrf.mxu0
  %4625 = vmatprep.mubr.f32.mxu0 0.0
  %4626 = vmatmul.mubr.f32.gmra.mxu0 %v3376
  %v4627 = vpop.f32.mrf.mxu0
  %v4628 = vadd.f32 %v2781, %v4627
  %v4629 = vpop.f32.mrf.mxu0
  %4630 = vmatprep.mubr.f32.mxu0 0.0
  %4631 = vmatmul.mubr.f32.gmra.mxu0 %v3379
  %v4632 = vpop.f32.mrf.mxu0
  %v4633 = vadd.f32 %v2781, %v4632
  %v4634 = vpop.f32.mrf.mxu0
  %4635 = vmatprep.mubr.f32.mxu0 0.0
  %4636 = vmatmul.mubr.f32.gmra.mxu0 %v3382
  %v4637 = vpop.f32.mrf.mxu0
  %v4638 = vadd.f32 %v2781, %v4637
  %v4639 = vpop.f32.mrf.mxu0
  %4640 = vmatprep.mubr.f32.mxu0 0.0
  %4641 = vmatmul.mubr.f32.gmra.mxu0 %v3385
  %v4642 = vpop.f32.mrf.mxu0
  %v4643 = vadd.f32 %v2781, %v4642
  %v4644 = vpop.f32.mrf.mxu0
  %4645 = vmatprep.mubr.f32.mxu0 0.0
  %4646 = vmatmul.mubr.f32.gmra.mxu0 %v3388
  %v4647 = vpop.f32.mrf.mxu0
  %v4648 = vadd.f32 %v2781, %v4647
  %v4649 = vpop.f32.mrf.mxu0
  %4650 = vmatprep.mubr.f32.mxu0 0.0
  %4651 = vmatmul.mubr.f32.gmra.mxu0 %v3391
  %v4652 = vpop.f32.mrf.mxu0
  %v4653 = vadd.f32 %v2781, %v4652
  %v4654 = vpop.f32.mrf.mxu0
  %4655 = vmatprep.mubr.f32.mxu0 0.0
  %4656 = vmatmul.mubr.f32.gmra.mxu0 %v3394
  %v4657 = vpop.f32.mrf.mxu0
  %v4658 = vadd.f32 %v2781, %v4657
  %v4659 = vpop.f32.mrf.mxu0
  %4660 = vmatprep.mubr.f32.mxu0 0.0
  %4661 = vmatmul.mubr.f32.gmra.mxu0 %v3397
  %v4662 = vpop.f32.mrf.mxu0
  %v4663 = vadd.f32 %v2781, %v4662
  %v4664 = vpop.f32.mrf.mxu0
  %4665 = vmatprep.mubr.f32.mxu0 0.0
  %4666 = vmatmul.mubr.f32.gmra.mxu0 %v3400
  %v4667 = vpop.f32.mrf.mxu0
  %v4668 = vadd.f32 %v2781, %v4667
  %v4669 = vpop.f32.mrf.mxu0
  %4670 = vmatprep.mubr.f32.mxu0 0.0
  %4671 = vmatmul.mubr.f32.gmra.mxu0 %v3403
  %v4672 = vpop.f32.mrf.mxu0
  %v4673 = vadd.f32 %v2781, %v4672
  %v4674 = vpop.f32.mrf.mxu0
  %4675 = vmatprep.mubr.f32.mxu0 0.0
  %4676 = vmatmul.mubr.f32.gmra.mxu0 %v3406
  %v4677 = vpop.f32.mrf.mxu0
  %v4678 = vadd.f32 %v2781, %v4677
  %v4679 = vpop.f32.mrf.mxu0
  %4680 = vmatprep.mubr.f32.mxu0 0.0
  %4681 = vmatmul.mubr.f32.gmra.mxu0 %v3409
  %v4682 = vpop.f32.mrf.mxu0
  %v4683 = vadd.f32 %v2781, %v4682
  %v4684 = vpop.f32.mrf.mxu0
  %4685 = vmatprep.mubr.f32.mxu0 0.0
  %4686 = vmatmul.mubr.f32.gmra.mxu0 %v3412
  %v4687 = vpop.f32.mrf.mxu0
  %v4688 = vadd.f32 %v2781, %v4687
  %v4689 = vpop.f32.mrf.mxu0
  %4690 = vmatprep.mubr.f32.mxu0 0.0
  %4691 = vmatmul.mubr.f32.gmra.mxu0 %v3415
  %v4692 = vpop.f32.mrf.mxu0
  %v4693 = vadd.f32 %v2781, %v4692
  %v4694 = vpop.f32.mrf.mxu0
  %4695 = vmatprep.mubr.f32.mxu0 0.0
  %4696 = vmatmul.mubr.f32.gmra.mxu0 %v3418
  %v4697 = vpop.f32.mrf.mxu0
  %v4698 = vadd.f32 %v2781, %v4697
  %v4699 = vpop.f32.mrf.mxu0
  %4700 = vmatprep.mubr.f32.mxu0 0.0
  %4701 = vmatmul.mubr.f32.gmra.mxu0 %v3421
  %v4702 = vpop.f32.mrf.mxu0
  %v4703 = vadd.f32 %v2781, %v4702
  %v4704 = vpop.f32.mrf.mxu0
  %4705 = vmatprep.mubr.f32.mxu0 0.0
  %4706 = vmatmul.mubr.f32.gmra.mxu0 %v3424
  %v4707 = vpop.f32.mrf.mxu0
  %v4708 = vadd.f32 %v2781, %v4707
  %v4709 = vpop.f32.mrf.mxu0
  %4710 = vmatprep.mubr.f32.mxu0 0.0
  %4711 = vmatmul.mubr.f32.gmra.mxu0 %v3427
  %v4712 = vpop.f32.mrf.mxu0
  %v4713 = vadd.f32 %v2781, %v4712
  %v4714 = vpop.f32.mrf.mxu0
  %4715 = vmatprep.mubr.f32.mxu0 0.0
  %4716 = vmatmul.mubr.f32.gmra.mxu0 %v3430
  %v4717 = vpop.f32.mrf.mxu0
  %v4718 = vadd.f32 %v2781, %v4717
  %v4719 = vpop.f32.mrf.mxu0
  %4720 = vmatprep.mubr.f32.mxu0 0.0
  %4721 = vmatmul.mubr.f32.gmra.mxu0 %v3433
  %v4722 = vpop.f32.mrf.mxu0
  %v4723 = vadd.f32 %v2781, %v4722
  %v4724 = vpop.f32.mrf.mxu0
  %4725 = vmatprep.mubr.f32.mxu0 0.0
  %4726 = vmatmul.mubr.f32.gmra.mxu0 %v3436
  %v4727 = vpop.f32.mrf.mxu0
  %v4728 = vadd.f32 %v2781, %v4727
  %v4729 = vpop.f32.mrf.mxu0
  %4730 = vmatprep.mubr.f32.mxu0 0.0
  %4731 = vmatmul.mubr.f32.gmra.mxu0 %v3439
  %v4732 = vpop.f32.mrf.mxu0
  %v4733 = vadd.f32 %v2781, %v4732
  %v4734 = vpop.f32.mrf.mxu0
  %4735 = vmatprep.mubr.f32.mxu0 0.0
  %4736 = vmatmul.mubr.f32.gmra.mxu0 %v3442
  %v4737 = vpop.f32.mrf.mxu0
  %v4738 = vadd.f32 %v2781, %v4737
  %v4739 = vpop.f32.mrf.mxu0
  %4740 = vmatprep.mubr.f32.mxu0 0.0
  %4741 = vmatmul.mubr.f32.gmra.mxu0 %v3445
  %v4742 = vpop.f32.mrf.mxu0
  %v4743 = vadd.f32 %v2781, %v4742
  %v4744 = vpop.f32.mrf.mxu0
  %4745 = vmatprep.mubr.f32.mxu0 0.0
  %4746 = vmatmul.mubr.f32.gmra.mxu0 %v3448
  %v4747 = vpop.f32.mrf.mxu0
  %v4748 = vadd.f32 %v2781, %v4747
  %v4749 = vpop.f32.mrf.mxu0
  %4750 = vmatprep.mubr.f32.mxu0 0.0
  %4751 = vmatmul.mubr.f32.gmra.mxu0 %v3451
  %v4752 = vpop.f32.mrf.mxu0
  %v4753 = vadd.f32 %v2781, %v4752
  %v4754 = vpop.f32.mrf.mxu0
  %4755 = vmatprep.mubr.f32.mxu0 0.0
  %4756 = vmatmul.mubr.f32.gmra.mxu0 %v3454
  %v4757 = vpop.f32.mrf.mxu0
  %v4758 = vadd.f32 %v2781, %v4757
  %v4759 = vpop.f32.mrf.mxu0
  %4760 = vmatprep.mubr.f32.mxu0 0.0
  %4761 = vmatmul.mubr.f32.gmra.mxu0 %v3457
  %v4762 = vpop.f32.mrf.mxu0
  %v4763 = vadd.f32 %v2781, %v4762
  %v4764 = vpop.f32.mrf.mxu0
  %4765 = vmatprep.mubr.f32.mxu0 0.0
  %4766 = vmatmul.mubr.f32.gmra.mxu0 %v3460
  %v4767 = vpop.f32.mrf.mxu0
  %v4768 = vadd.f32 %v2781, %v4767
  %v4769 = vpop.f32.mrf.mxu0
  %4770 = vmatprep.mubr.f32.mxu0 0.0
  %4771 = vmatmul.mubr.f32.gmra.mxu0 %v3463
  %v4772 = vpop.f32.mrf.mxu0
  %v4773 = vadd.f32 %v2781, %v4772
  %v4774 = vpop.f32.mrf.mxu0
  %4775 = vmatprep.mubr.f32.mxu0 0.0
  %4776 = vmatmul.mubr.f32.gmra.mxu0 %v3466
  %v4777 = vpop.f32.mrf.mxu0
  %v4778 = vadd.f32 %v2781, %v4777
  %v4779 = vpop.f32.mrf.mxu0
  %4780 = vmatprep.mubr.f32.mxu0 0.0
  %4781 = vmatmul.mubr.f32.gmra.mxu0 %v3469
  %v4782 = vpop.f32.mrf.mxu0
  %v4783 = vadd.f32 %v2781, %v4782
  %v4784 = vpop.f32.mrf.mxu0
  %4785 = vmatprep.mubr.f32.mxu0 0.0
  %4786 = vmatmul.mubr.f32.gmra.mxu0 %v3472
  %v4787 = vpop.f32.mrf.mxu0
  %v4788 = vadd.f32 %v2781, %v4787
  %v4789 = vpop.f32.mrf.mxu0
  %4790 = vmatprep.mubr.f32.mxu0 0.0
  %4791 = vmatmul.mubr.f32.gmra.mxu0 %v3475
  %v4792 = vpop.f32.mrf.mxu0
  %v4793 = vadd.f32 %v2781, %v4792
  %v4794 = vpop.f32.mrf.mxu0
  %4795 = vmatprep.mubr.f32.mxu0 0.0
  %4796 = vmatmul.mubr.f32.gmra.mxu0 %v3478
  %v4797 = vpop.f32.mrf.mxu0
  %v4798 = vadd.f32 %v2781, %v4797
  %v4799 = vpop.f32.mrf.mxu0
  %4800 = vmatprep.mubr.f32.mxu0 0.0
  %4801 = vmatmul.mubr.f32.gmra.mxu0 %v3481
  %v4802 = vpop.f32.mrf.mxu0
  %v4803 = vadd.f32 %v2781, %v4802
  %v4804 = vpop.f32.mrf.mxu0
  %4805 = vmatprep.mubr.f32.mxu0 0.0
  %4806 = vmatmul.mubr.f32.gmra.mxu0 %v3484
  %v4807 = vpop.f32.mrf.mxu0
  %v4808 = vadd.f32 %v2781, %v4807
  %v4809 = vpop.f32.mrf.mxu0
  %4810 = vmatprep.mubr.f32.mxu0 0.0
  %4811 = vmatmul.mubr.f32.gmra.mxu0 %v3487
  %v4812 = vpop.f32.mrf.mxu0
  %v4813 = vadd.f32 %v2781, %v4812
  %v4814 = vpop.f32.mrf.mxu0
  %4815 = vmatprep.mubr.f32.mxu0 0.0
  %4816 = vmatmul.mubr.f32.gmra.mxu0 %v3490
  %v4817 = vpop.f32.mrf.mxu0
  %v4818 = vadd.f32 %v2781, %v4817
  %v4819 = vpop.f32.mrf.mxu0
  %4820 = vmatprep.mubr.f32.mxu0 0.0
  %4821 = vmatmul.mubr.f32.gmra.mxu0 %v3493
  %v4822 = vpop.f32.mrf.mxu0
  %v4823 = vadd.f32 %v2781, %v4822
  %v4824 = vpop.f32.mrf.mxu0
  %4825 = vmatprep.mubr.f32.mxu0 0.0
  %4826 = vmatmul.mubr.f32.gmra.mxu0 %v3496
  %v4827 = vpop.f32.mrf.mxu0
  %v4828 = vadd.f32 %v2781, %v4827
  %v4829 = vpop.f32.mrf.mxu0
  %4830 = vmatprep.mubr.f32.mxu0 0.0
  %4831 = vmatmul.mubr.f32.gmra.mxu0 %v3499
  %v4832 = vpop.f32.mrf.mxu0
  %v4833 = vadd.f32 %v2781, %v4832
  %v4834 = vpop.f32.mrf.mxu0
  %4835 = vmatprep.mubr.f32.mxu0 0.0
  %4836 = vmatmul.mubr.f32.gmra.mxu0 %v3502
  %v4837 = vpop.f32.mrf.mxu0
  %v4838 = vadd.f32 %v2781, %v4837
  %v4839 = vpop.f32.mrf.mxu0
  %4840 = vmatprep.mubr.f32.mxu0 0.0
  %4841 = vmatmul.mubr.f32.gmra.mxu0 %v3505
  %v4842 = vpop.f32.mrf.mxu0
  %v4843 = vadd.f32 %v2781, %v4842
  %v4844 = vpop.f32.mrf.mxu0
  %4845 = vmatprep.mubr.f32.mxu0 0.0
  %4846 = vmatmul.mubr.f32.gmra.mxu0 %v3508
  %v4847 = vpop.f32.mrf.mxu0
  %v4848 = vadd.f32 %v2781, %v4847
  %v4849 = vpop.f32.mrf.mxu0
  %4850 = vmatprep.mubr.f32.mxu0 0.0
  %4851 = vmatmul.mubr.f32.gmra.mxu0 %v3511
  %v4852 = vpop.f32.mrf.mxu0
  %v4853 = vadd.f32 %v2781, %v4852
  %v4854 = vpop.f32.mrf.mxu0
  %4855 = vmatprep.mubr.f32.mxu0 0.0
  %4856 = vmatmul.mubr.f32.gmra.mxu0 %v3514
  %v4857 = vpop.f32.mrf.mxu0
  %v4858 = vadd.f32 %v2781, %v4857
  %v4859 = vpop.f32.mrf.mxu0
  %4860 = vmatprep.mubr.f32.mxu0 0.0
  %4861 = vmatmul.mubr.f32.gmra.mxu0 %v3517
  %v4862 = vpop.f32.mrf.mxu0
  %v4863 = vadd.f32 %v2781, %v4862
  %v4864 = vpop.f32.mrf.mxu0
  %4865 = vmatprep.mubr.f32.mxu0 0.0
  %4866 = vmatmul.mubr.f32.gmra.mxu0 %v3520
  %v4867 = vpop.f32.mrf.mxu0
  %v4868 = vadd.f32 %v2781, %v4867
  %v4869 = vpop.f32.mrf.mxu0
  %4870 = vmatprep.mubr.f32.mxu0 0.0
  %4871 = vmatmul.mubr.f32.gmra.mxu0 %v3523
  %v4872 = vpop.f32.mrf.mxu0
  %v4873 = vadd.f32 %v2781, %v4872
  %v4874 = vpop.f32.mrf.mxu0
  %4875 = vmatprep.mubr.f32.mxu0 0.0
  %4876 = vmatmul.mubr.f32.gmra.mxu0 %v3526
  %v4877 = vpop.f32.mrf.mxu0
  %v4878 = vadd.f32 %v2781, %v4877
  %v4879 = vpop.f32.mrf.mxu0
  %4880 = vmatprep.mubr.f32.mxu0 0.0
  %4881 = vmatmul.mubr.f32.gmra.mxu0 %v3529
  %v4882 = vpop.f32.mrf.mxu0
  %v4883 = vadd.f32 %v2781, %v4882
  %v4884 = vpop.f32.mrf.mxu0
  %4885 = vmatprep.mubr.f32.mxu0 0.0
  %4886 = vmatmul.mubr.f32.gmra.mxu0 %v3532
  %v4887 = vpop.f32.mrf.mxu0
  %v4888 = vadd.f32 %v2781, %v4887
  %v4889 = vpop.f32.mrf.mxu0
  %4890 = vmatprep.mubr.f32.mxu0 0.0
  %4891 = vmatmul.mubr.f32.gmra.mxu0 %v3535
  %v4892 = vpop.f32.mrf.mxu0
  %v4893 = vadd.f32 %v2781, %v4892
  %v4894 = vpop.f32.mrf.mxu0
  %4895 = vmatprep.mubr.f32.mxu0 0.0
  %4896 = vmatmul.mubr.f32.gmra.mxu0 %v3538
  %v4897 = vpop.f32.mrf.mxu0
  %v4898 = vadd.f32 %v2781, %v4897
  %v4899 = vpop.f32.mrf.mxu0
  %4900 = vmatprep.mubr.f32.mxu0 0.0
  %4901 = vmatmul.mubr.f32.gmra.mxu0 %v3541
  %v4902 = vpop.f32.mrf.mxu0
  %v4903 = vadd.f32 %v2781, %v4902
  %v4904 = vpop.f32.mrf.mxu0
  %4905 = vmatprep.mubr.f32.mxu0 0.0
  %4906 = vmatmul.mubr.f32.gmra.mxu0 %v3544
  %v4907 = vpop.f32.mrf.mxu0
  %v4908 = vadd.f32 %v2781, %v4907
  %v4909 = vpop.f32.mrf.mxu0
  %4910 = vmatprep.mubr.f32.mxu0 0.0
  %4911 = vmatmul.mubr.f32.gmra.mxu0 %v3547
  %v4912 = vpop.f32.mrf.mxu0
  %v4913 = vadd.f32 %v2781, %v4912
  %v4914 = vpop.f32.mrf.mxu0
  %4915 = vmatprep.mubr.f32.mxu0 0.0
  %4916 = vmatmul.mubr.f32.gmra.mxu0 %v3550
  %v4917 = vpop.f32.mrf.mxu0
  %v4918 = vadd.f32 %v2781, %v4917
  %v4919 = vpop.f32.mrf.mxu0
  %4920 = vmatprep.mubr.f32.mxu0 0.0
  %4921 = vmatmul.mubr.f32.gmra.mxu0 %v3553
  %v4922 = vpop.f32.mrf.mxu0
  %v4923 = vadd.f32 %v2781, %v4922
  %v4924 = vpop.f32.mrf.mxu0
  %4925 = vmatprep.mubr.f32.mxu0 0.0
  %4926 = vmatmul.mubr.f32.gmra.mxu0 %v3556
  %v4927 = vpop.f32.mrf.mxu0
  %v4928 = vadd.f32 %v2781, %v4927
  %v4929 = vpop.f32.mrf.mxu0
  %4930 = vmatprep.mubr.f32.mxu0 0.0
  %4931 = vmatmul.mubr.f32.gmra.mxu0 %v3559
  %v4932 = vpop.f32.mrf.mxu0
  %v4933 = vadd.f32 %v2781, %v4932
  %v4934 = vpop.f32.mrf.mxu0
  %4935 = vmatprep.mubr.f32.mxu0 0.0
  %4936 = vmatmul.mubr.f32.gmra.mxu0 %v3562
  %v4937 = vpop.f32.mrf.mxu0
  %v4938 = vadd.f32 %v2781, %v4937
  %v4939 = vpop.f32.mrf.mxu0
  %4940 = vmatprep.mubr.f32.mxu0 0.0
  %4941 = vmatmul.mubr.f32.gmra.mxu0 %v3565
  %v4942 = vpop.f32.mrf.mxu0
  %v4943 = vadd.f32 %v2781, %v4942
  %v4944 = vpop.f32.mrf.mxu0
  %4945 = vmatprep.mubr.f32.mxu0 0.0
  %4946 = vmatmul.mubr.f32.gmra.mxu0 %v3568
  %v4947 = vpop.f32.mrf.mxu0
  %v4948 = vadd.f32 %v2781, %v4947
  %v4949 = vpop.f32.mrf.mxu0
  %4950 = vmatprep.mubr.f32.mxu0 0.0
  %4951 = vmatmul.mubr.f32.gmra.mxu0 %v3571
  %v4952 = vpop.f32.mrf.mxu0
  %v4953 = vadd.f32 %v2781, %v4952
  %v4954 = vpop.f32.mrf.mxu0
  %4955 = vmatprep.mubr.f32.mxu0 0.0
  %4956 = vmatmul.mubr.f32.gmra.mxu0 %v3574
  %v4957 = vpop.f32.mrf.mxu0
  %v4958 = vadd.f32 %v2781, %v4957
  %v4959 = vpop.f32.mrf.mxu0
  %4960 = vdwg.mxu0
  %v4961 = vmax.f32 %v3643, 0.0
  %v4962 = vmax.f32 %v3648, 0.0
  %v4963 = vmax.f32 %v3653, 0.0
  %v4964 = vmax.f32 %v3658, 0.0
  %v4965 = vmax.f32 %v3663, 0.0
  %v4966 = vmax.f32 %v3668, 0.0
  %v4967 = vmax.f32 %v3673, 0.0
  %v4968 = vmax.f32 %v3678, 0.0
  %v4969 = vmax.f32 %v3683, 0.0
  %v4970 = vmax.f32 %v3688, 0.0
  %v4971 = vmax.f32 %v3693, 0.0
  %v4972 = vmax.f32 %v3698, 0.0
  %v4973 = vmax.f32 %v3703, 0.0
  %v4974 = vmax.f32 %v3708, 0.0
  %v4975 = vmax.f32 %v3713, 0.0
  %v4976 = vmax.f32 %v3718, 0.0
  %v4977 = vmax.f32 %v3723, 0.0
  %v4978 = vmax.f32 %v3728, 0.0
  %v4979 = vmax.f32 %v3733, 0.0
  %v4980 = vmax.f32 %v3738, 0.0
  %v4981 = vmax.f32 %v3743, 0.0
  %v4982 = vmax.f32 %v3748, 0.0
  %v4983 = vmax.f32 %v3753, 0.0
  %v4984 = vmax.f32 %v3758, 0.0
  %v4985 = vmax.f32 %v3763, 0.0
  %v4986 = vmax.f32 %v3768, 0.0
  %v4987 = vmax.f32 %v3773, 0.0
  %v4988 = vmax.f32 %v3778, 0.0
  %v4989 = vmax.f32 %v3783, 0.0
  %v4990 = vmax.f32 %v3788, 0.0
  %v4991 = vmax.f32 %v3793, 0.0
  %v4992 = vmax.f32 %v3798, 0.0
  %v4993 = vmax.f32 %v3803, 0.0
  %v4994 = vmax.f32 %v3808, 0.0
  %v4995 = vmax.f32 %v3813, 0.0
  %v4996 = vmax.f32 %v3818, 0.0
  %v4997 = vmax.f32 %v3823, 0.0
  %v4998 = vmax.f32 %v3828, 0.0
  %v4999 = vmax.f32 %v3833, 0.0
  %v5000 = vmax.f32 %v3838, 0.0
  %v5001 = vmax.f32 %v3843, 0.0
  %v5002 = vmax.f32 %v3848, 0.0
  %v5003 = vmax.f32 %v3853, 0.0
  %v5004 = vmax.f32 %v3858, 0.0
  %v5005 = vmax.f32 %v3863, 0.0
  %v5006 = vmax.f32 %v3868, 0.0
  %v5007 = vmax.f32 %v3873, 0.0
  %v5008 = vmax.f32 %v3878, 0.0
  %v5009 = vmax.f32 %v3883, 0.0
  %v5010 = vmax.f32 %v3888, 0.0
  %v5011 = vmax.f32 %v3893, 0.0
  %v5012 = vmax.f32 %v3898, 0.0
  %v5013 = vmax.f32 %v3903, 0.0
  %v5014 = vmax.f32 %v3908, 0.0
  %v5015 = vmax.f32 %v3913, 0.0
  %v5016 = vmax.f32 %v3918, 0.0
  %v5017 = vmax.f32 %v3923, 0.0
  %v5018 = vmax.f32 %v3928, 0.0
  %v5019 = vmax.f32 %v3933, 0.0
  %v5020 = vmax.f32 %v3938, 0.0
  %v5021 = vmax.f32 %v3943, 0.0
  %v5022 = vmax.f32 %v3948, 0.0
  %v5023 = vmax.f32 %v3953, 0.0
  %v5024 = vmax.f32 %v3958, 0.0
  %v5025 = vmax.f32 %v3963, 0.0
  %v5026 = vmax.f32 %v3968, 0.0
  %v5027 = vmax.f32 %v3973, 0.0
  %v5028 = vmax.f32 %v3978, 0.0
  %v5029 = vmax.f32 %v3983, 0.0
  %v5030 = vmax.f32 %v3988, 0.0
  %v5031 = vmax.f32 %v3993, 0.0
  %v5032 = vmax.f32 %v3998, 0.0
  %v5033 = vmax.f32 %v4003, 0.0
  %v5034 = vmax.f32 %v4008, 0.0
  %v5035 = vmax.f32 %v4013, 0.0
  %v5036 = vmax.f32 %v4018, 0.0
  %v5037 = vmax.f32 %v4023, 0.0
  %v5038 = vmax.f32 %v4028, 0.0
  %v5039 = vmax.f32 %v4033, 0.0
  %v5040 = vmax.f32 %v4038, 0.0
  %v5041 = vmax.f32 %v4043, 0.0
  %v5042 = vmax.f32 %v4048, 0.0
  %v5043 = vmax.f32 %v4053, 0.0
  %v5044 = vmax.f32 %v4058, 0.0
  %v5045 = vmax.f32 %v4063, 0.0
  %v5046 = vmax.f32 %v4068, 0.0
  %v5047 = vmax.f32 %v4073, 0.0
  %v5048 = vmax.f32 %v4078, 0.0
  %v5049 = vmax.f32 %v4083, 0.0
  %v5050 = vmax.f32 %v4088, 0.0
  %v5051 = vmax.f32 %v4093, 0.0
  %v5052 = vmax.f32 %v4098, 0.0
  %v5053 = vmax.f32 %v4103, 0.0
  %v5054 = vmax.f32 %v4108, 0.0
  %v5055 = vmax.f32 %v4113, 0.0
  %v5056 = vmax.f32 %v4118, 0.0
  %v5057 = vmax.f32 %v4123, 0.0
  %v5058 = vmax.f32 %v4128, 0.0
  %v5059 = vmax.f32 %v4133, 0.0
  %v5060 = vmax.f32 %v4138, 0.0
  %v5061 = vmax.f32 %v4143, 0.0
  %v5062 = vmax.f32 %v4148, 0.0
  %v5063 = vmax.f32 %v4153, 0.0
  %v5064 = vmax.f32 %v4158, 0.0
  %v5065 = vmax.f32 %v4163, 0.0
  %v5066 = vmax.f32 %v4168, 0.0
  %v5067 = vmax.f32 %v4173, 0.0
  %v5068 = vmax.f32 %v4178, 0.0
  %v5069 = vmax.f32 %v4183, 0.0
  %v5070 = vmax.f32 %v4188, 0.0
  %v5071 = vmax.f32 %v4193, 0.0
  %v5072 = vmax.f32 %v4198, 0.0
  %v5073 = vmax.f32 %v4203, 0.0
  %v5074 = vmax.f32 %v4208, 0.0
  %v5075 = vmax.f32 %v4213, 0.0
  %v5076 = vmax.f32 %v4218, 0.0
  %v5077 = vmax.f32 %v4223, 0.0
  %v5078 = vmax.f32 %v4228, 0.0
  %v5079 = vmax.f32 %v4233, 0.0
  %v5080 = vmax.f32 %v4238, 0.0
  %v5081 = vmax.f32 %v4243, 0.0
  %v5082 = vmax.f32 %v4248, 0.0
  %v5083 = vmax.f32 %v4253, 0.0
  %v5084 = vmax.f32 %v4258, 0.0
  %v5085 = vmax.f32 %v4263, 0.0
  %v5086 = vmax.f32 %v4268, 0.0
  %v5087 = vmax.f32 %v4273, 0.0
  %v5088 = vmax.f32 %v4278, 0.0
  %v5089 = vmax.f32 %v4283, 0.0
  %v5090 = vmax.f32 %v4288, 0.0
  %v5091 = vmax.f32 %v4293, 0.0
  %v5092 = vmax.f32 %v4298, 0.0
  %v5093 = vmax.f32 %v4303, 0.0
  %v5094 = vmax.f32 %v4308, 0.0
  %v5095 = vmax.f32 %v4313, 0.0
  %v5096 = vmax.f32 %v4318, 0.0
  %v5097 = vmax.f32 %v4323, 0.0
  %v5098 = vmax.f32 %v4328, 0.0
  %v5099 = vmax.f32 %v4333, 0.0
  %v5100 = vmax.f32 %v4338, 0.0
  %v5101 = vmax.f32 %v4343, 0.0
  %v5102 = vmax.f32 %v4348, 0.0
  %v5103 = vmax.f32 %v4353, 0.0
  %v5104 = vmax.f32 %v4358, 0.0
  %v5105 = vmax.f32 %v4363, 0.0
  %v5106 = vmax.f32 %v4368, 0.0
  %v5107 = vmax.f32 %v4373, 0.0
  %v5108 = vmax.f32 %v4378, 0.0
  %v5109 = vmax.f32 %v4383, 0.0
  %v5110 = vmax.f32 %v4388, 0.0
  %v5111 = vmax.f32 %v4393, 0.0
  %v5112 = vmax.f32 %v4398, 0.0
  %v5113 = vmax.f32 %v4403, 0.0
  %v5114 = vmax.f32 %v4408, 0.0
  %v5115 = vmax.f32 %v4413, 0.0
  %v5116 = vmax.f32 %v4418, 0.0
  %v5117 = vmax.f32 %v4423, 0.0
  %v5118 = vmax.f32 %v4428, 0.0
  %v5119 = vmax.f32 %v4433, 0.0
  %v5120 = vmax.f32 %v4438, 0.0
  %v5121 = vmax.f32 %v4443, 0.0
  %v5122 = vmax.f32 %v4448, 0.0
  %v5123 = vmax.f32 %v4453, 0.0
  %v5124 = vmax.f32 %v4458, 0.0
  %v5125 = vmax.f32 %v4463, 0.0
  %v5126 = vmax.f32 %v4468, 0.0
  %v5127 = vmax.f32 %v4473, 0.0
  %v5128 = vmax.f32 %v4478, 0.0
  %v5129 = vmax.f32 %v4483, 0.0
  %v5130 = vmax.f32 %v4488, 0.0
  %v5131 = vmax.f32 %v4493, 0.0
  %v5132 = vmax.f32 %v4498, 0.0
  %v5133 = vmax.f32 %v4503, 0.0
  %v5134 = vmax.f32 %v4508, 0.0
  %v5135 = vmax.f32 %v4513, 0.0
  %v5136 = vmax.f32 %v4518, 0.0
  %v5137 = vmax.f32 %v4523, 0.0
  %v5138 = vmax.f32 %v4528, 0.0
  %v5139 = vmax.f32 %v4533, 0.0
  %v5140 = vmax.f32 %v4538, 0.0
  %v5141 = vmax.f32 %v4543, 0.0
  %v5142 = vmax.f32 %v4548, 0.0
  %v5143 = vmax.f32 %v4553, 0.0
  %v5144 = vmax.f32 %v4558, 0.0
  %v5145 = vmax.f32 %v4563, 0.0
  %v5146 = vmax.f32 %v4568, 0.0
  %v5147 = vmax.f32 %v4573, 0.0
  %v5148 = vmax.f32 %v4578, 0.0
  %v5149 = vmax.f32 %v4583, 0.0
  %v5150 = vmax.f32 %v4588, 0.0
  %v5151 = vmax.f32 %v4593, 0.0
  %v5152 = vmax.f32 %v4598, 0.0
  %v5153 = vmax.f32 %v4603, 0.0
  %v5154 = vmax.f32 %v4608, 0.0
  %v5155 = vmax.f32 %v4613, 0.0
  %v5156 = vmax.f32 %v4618, 0.0
  %v5157 = vmax.f32 %v4623, 0.0
  %v5158 = vmax.f32 %v4628, 0.0
  %v5159 = vmax.f32 %v4633, 0.0
  %v5160 = vmax.f32 %v4638, 0.0
  %v5161 = vmax.f32 %v4643, 0.0
  %v5162 = vmax.f32 %v4648, 0.0
  %v5163 = vmax.f32 %v4653, 0.0
  %v5164 = vmax.f32 %v4658, 0.0
  %v5165 = vmax.f32 %v4663, 0.0
  %v5166 = vmax.f32 %v4668, 0.0
  %v5167 = vmax.f32 %v4673, 0.0
  %v5168 = vmax.f32 %v4678, 0.0
  %v5169 = vmax.f32 %v4683, 0.0
  %v5170 = vmax.f32 %v4688, 0.0
  %v5171 = vmax.f32 %v4693, 0.0
  %v5172 = vmax.f32 %v4698, 0.0
  %v5173 = vmax.f32 %v4703, 0.0
  %v5174 = vmax.f32 %v4708, 0.0
  %v5175 = vmax.f32 %v4713, 0.0
  %v5176 = vmax.f32 %v4718, 0.0
  %v5177 = vmax.f32 %v4723, 0.0
  %v5178 = vmax.f32 %v4728, 0.0
  %v5179 = vmax.f32 %v4733, 0.0
  %v5180 = vmax.f32 %v4738, 0.0
  %v5181 = vmax.f32 %v4743, 0.0
  %v5182 = vmax.f32 %v4748, 0.0
  %v5183 = vmax.f32 %v4753, 0.0
  %v5184 = vmax.f32 %v4758, 0.0
  %v5185 = vmax.f32 %v4763, 0.0
  %v5186 = vmax.f32 %v4768, 0.0
  %v5187 = vmax.f32 %v4773, 0.0
  %v5188 = vmax.f32 %v4778, 0.0
  %v5189 = vmax.f32 %v4783, 0.0
  %v5190 = vmax.f32 %v4788, 0.0
  %v5191 = vmax.f32 %v4793, 0.0
  %v5192 = vmax.f32 %v4798, 0.0
  %v5193 = vmax.f32 %v4803, 0.0
  %v5194 = vmax.f32 %v4808, 0.0
  %v5195 = vmax.f32 %v4813, 0.0
  %v5196 = vmax.f32 %v4818, 0.0
  %v5197 = vmax.f32 %v4823, 0.0
  %v5198 = vmax.f32 %v4828, 0.0
  %v5199 = vmax.f32 %v4833, 0.0
  %v5200 = vmax.f32 %v4838, 0.0
  %v5201 = vmax.f32 %v4843, 0.0
  %v5202 = vmax.f32 %v4848, 0.0
  %v5203 = vmax.f32 %v4853, 0.0
  %v5204 = vmax.f32 %v4858, 0.0
  %v5205 = vmax.f32 %v4863, 0.0
  %v5206 = vmax.f32 %v4868, 0.0
  %v5207 = vmax.f32 %v4873, 0.0
  %v5208 = vmax.f32 %v4878, 0.0
  %v5209 = vmax.f32 %v4883, 0.0
  %v5210 = vmax.f32 %v4888, 0.0
  %v5211 = vmax.f32 %v4893, 0.0
  %v5212 = vmax.f32 %v4898, 0.0
  %v5213 = vmax.f32 %v4903, 0.0
  %v5214 = vmax.f32 %v4908, 0.0
  %v5215 = vmax.f32 %v4913, 0.0
  %v5216 = vmax.f32 %v4918, 0.0
  %v5217 = vmax.f32 %v4923, 0.0
  %v5218 = vmax.f32 %v4928, 0.0
  %v5219 = vmax.f32 %v4933, 0.0
  %v5220 = vmax.f32 %v4938, 0.0
  %v5221 = vmax.f32 %v4943, 0.0
  %v5222 = vmax.f32 %v4948, 0.0
  %v5223 = vmax.f32 %v4953, 0.0
  %v5224 = vmax.f32 %v4958, 0.0
  %v5225 = vld [vmem:[%s5] sm:$0xff]
  %v5226 = vld [vmem:[%s5 + $0x8] sm:$0xff]
  %v5227 = vld [vmem:[%s5 + $0x10] sm:$0xff]
  %v5228 = vld [vmem:[%s5 + $0x18] sm:$0x3f]
  %s5229 = scalar_lea.vmem %s5, 32
  %v5230 = vld [vmem:[%s5229] sm:$0xff]
  %v5231 = vld [vmem:[%s5229 + $0x8] sm:$0xff]
  %v5232 = vld [vmem:[%s5229 + $0x10] sm:$0xff]
  %v5233 = vld [vmem:[%s5229 + $0x18] sm:$0x3f]
  %vm5234 = vcmask 244736
  %v5236 = vsel %vm5234, %v5027, 0
  %v5239 = vsel %vm5234, %v5028, 0
  %v5242 = vsel %vm5234, %v5029, 0
  %v5245 = vsel %vm5234, %v5030, 0
  %v5248 = vsel %vm5234, %v5031, 0
  %v5251 = vsel %vm5234, %v5032, 0
  %v5254 = vsel %vm5234, %v5033, 0
  %v5257 = vsel %vm5234, %v5034, 0
  %v5260 = vsel %vm5234, %v5035, 0
  %v5263 = vsel %vm5234, %v5036, 0
  %v5266 = vsel %vm5234, %v5037, 0
  %v5269 = vsel %vm5234, %v5038, 0
  %v5272 = vsel %vm5234, %v5039, 0
  %v5275 = vsel %vm5234, %v5040, 0
  %v5278 = vsel %vm5234, %v5041, 0
  %v5281 = vsel %vm5234, %v5042, 0
  %v5284 = vsel %vm5234, %v5043, 0
  %v5287 = vsel %vm5234, %v5044, 0
  %v5290 = vsel %vm5234, %v5045, 0
  %v5293 = vsel %vm5234, %v5046, 0
  %v5296 = vsel %vm5234, %v5047, 0
  %v5299 = vsel %vm5234, %v5048, 0
  %v5302 = vsel %vm5234, %v5049, 0
  %v5305 = vsel %vm5234, %v5050, 0
  %v5308 = vsel %vm5234, %v5051, 0
  %v5311 = vsel %vm5234, %v5052, 0
  %v5314 = vsel %vm5234, %v5053, 0
  %v5317 = vsel %vm5234, %v5054, 0
  %v5320 = vsel %vm5234, %v5055, 0
  %v5323 = vsel %vm5234, %v5056, 0
  %v5326 = vsel %vm5234, %v5057, 0
  %v5329 = vsel %vm5234, %v5058, 0
  %v5332 = vsel %vm5234, %v5059, 0
  %v5335 = vsel %vm5234, %v5060, 0
  %v5338 = vsel %vm5234, %v5061, 0
  %v5341 = vsel %vm5234, %v5062, 0
  %v5344 = vsel %vm5234, %v5063, 0
  %v5347 = vsel %vm5234, %v5064, 0
  %v5350 = vsel %vm5234, %v5065, 0
  %v5353 = vsel %vm5234, %v5066, 0
  %v5356 = vsel %vm5234, %v5067, 0
  %v5359 = vsel %vm5234, %v5068, 0
  %v5362 = vsel %vm5234, %v5069, 0
  %v5365 = vsel %vm5234, %v5070, 0
  %v5368 = vsel %vm5234, %v5071, 0
  %v5371 = vsel %vm5234, %v5072, 0
  %v5374 = vsel %vm5234, %v5073, 0
  %v5377 = vsel %vm5234, %v5074, 0
  %v5380 = vsel %vm5234, %v5075, 0
  %v5383 = vsel %vm5234, %v5076, 0
  %v5386 = vsel %vm5234, %v5077, 0
  %v5389 = vsel %vm5234, %v5078, 0
  %v5392 = vsel %vm5234, %v5079, 0
  %v5395 = vsel %vm5234, %v5080, 0
  %v5398 = vsel %vm5234, %v5081, 0
  %v5401 = vsel %vm5234, %v5082, 0
  %v5404 = vsel %vm5234, %v5083, 0
  %v5407 = vsel %vm5234, %v5084, 0
  %v5410 = vsel %vm5234, %v5085, 0
  %v5413 = vsel %vm5234, %v5086, 0
  %v5416 = vsel %vm5234, %v5087, 0
  %v5419 = vsel %vm5234, %v5088, 0
  %v5422 = vsel %vm5234, %v5089, 0
  %v5425 = vsel %vm5234, %v5090, 0
  %v5428 = vsel %vm5234, %v5091, 0
  %v5431 = vsel %vm5234, %v5092, 0
  %vm5433 = vcmask 1045504
  %v5435 = vsel %vm5433, %v5233, 0
  %5437 = vmatprep.subr.mxu0 0.0
  %5438 = vmatpush1.msra.mxu0 0.0
  %5439 = vmatprep.subr.mxu0 0.0
  %5440 = vmatpush1.msra.mxu0 0.0
  %5441 = vmatprep.subr.mxu0 0.0
  %5442 = vmatpush1.msra.mxu0 0.0
  %5443 = vmatprep.subr.mxu0 0.0
  %5444 = vmatpush1.msra.mxu0 0.0
  %5445 = vmatprep.subr.mxu0 0.0
  %5446 = vmatpush1.msra.mxu0 0.0
  %5447 = vmatprep.subr.mxu0 0.0
  %5448 = vmatpush1.msra.mxu0 0.0
  %5449 = vmatprep.subr.mxu0 0.0
  %5450 = vmatpush1.msra.mxu0 0.0
  %5451 = vmatprep.subr.mxu0 0.0
  %5452 = vmatpush1.msra.mxu0 0.0
  %5453 = vmatprep.subr.mxu0 0.0
  %5454 = vmatpush1.msra.mxu0 0.0
  %5455 = vmatprep.subr.mxu0 0.0
  %5456 = vmatpush1.msra.mxu0 0.0
  %5457 = vmatprep.subr.mxu0 0.0
  %5458 = vmatpush1.msra.mxu0 0.0
  %5459 = vmatprep.subr.mxu0 0.0
  %5460 = vmatpush1.msra.mxu0 0.0
  %5461 = vmatprep.subr.mxu0 0.0
  %5462 = vmatpush1.msra.mxu0 %v5435
  %5463 = vmatprep.subr.mxu0 0.0
  %5464 = vmatpush1.msra.mxu0 %v5232
  %5465 = vmatprep.subr.mxu0 0.0
  %5466 = vmatpush1.msra.mxu0 %v5231
  %5467 = vmatprep.subr.mxu0 0.0
  %5468 = vmatpush1.msra.mxu0 %v5230
  %5469 = vmatprep.subr.mxu0 0.0
  %5470 = vmatpush2.msra.mxu0 0.0
  %5471 = vmatprep.subr.mxu0 0.0
  %5472 = vmatpush2.msra.mxu0 0.0
  %5473 = vmatprep.subr.mxu0 0.0
  %5474 = vmatpush2.msra.mxu0 0.0
  %5475 = vmatprep.subr.mxu0 0.0
  %5476 = vmatpush2.msra.mxu0 0.0
  %5477 = vmatprep.subr.mxu0 0.0
  %5478 = vmatpush2.msra.mxu0 0.0
  %5479 = vmatprep.subr.mxu0 0.0
  %5480 = vmatpush2.msra.mxu0 0.0
  %5481 = vmatprep.subr.mxu0 0.0
  %5482 = vmatpush2.msra.mxu0 0.0
  %5483 = vmatprep.subr.mxu0 0.0
  %5484 = vmatpush2.msra.mxu0 0.0
  %5485 = vmatprep.subr.mxu0 0.0
  %5486 = vmatpush2.msra.mxu0 0.0
  %5487 = vmatprep.subr.mxu0 0.0
  %5488 = vmatpush2.msra.mxu0 0.0
  %5489 = vmatprep.subr.mxu0 0.0
  %5490 = vmatpush2.msra.mxu0 0.0
  %5491 = vmatprep.subr.mxu0 0.0
  %5492 = vmatpush2.msra.mxu0 0.0
  %5493 = vmatprep.subr.mxu0 0.0
  %5494 = vmatpush2.msra.mxu0 0.0
  %5495 = vmatprep.subr.mxu0 0.0
  %5496 = vmatpush2.msra.mxu0 0.0
  %5497 = vmatprep.subr.mxu0 0.0
  %5498 = vmatpush2.msra.mxu0 0.0
  %5499 = vmatprep.subr.mxu0 0.0
  %5500 = vmatpush2.msra.mxu0 0.0
  %5501 = vmatprep.mubr.f32.mxu0 0.0
  %5502 = vmatmul.mubr.f32.gmra.mxu0 %v5236
  %v5503 = vpop.f32.mrf.mxu0
  %v5504 = vadd.f32 0.0, %v5503
  %v5505 = vpop.f32.mrf.mxu0
  %5506 = vmatprep.mubr.f32.mxu0 0.0
  %5507 = vmatmul.mubr.f32.gmra.mxu0 %v5239
  %v5508 = vpop.f32.mrf.mxu0
  %v5509 = vadd.f32 0.0, %v5508
  %v5510 = vpop.f32.mrf.mxu0
  %5511 = vmatprep.mubr.f32.mxu0 0.0
  %5512 = vmatmul.mubr.f32.gmra.mxu0 %v5242
  %v5513 = vpop.f32.mrf.mxu0
  %v5514 = vadd.f32 0.0, %v5513
  %v5515 = vpop.f32.mrf.mxu0
  %5516 = vmatprep.mubr.f32.mxu0 0.0
  %5517 = vmatmul.mubr.f32.gmra.mxu0 %v5245
  %v5518 = vpop.f32.mrf.mxu0
  %v5519 = vadd.f32 0.0, %v5518
  %v5520 = vpop.f32.mrf.mxu0
  %5521 = vmatprep.mubr.f32.mxu0 0.0
  %5522 = vmatmul.mubr.f32.gmra.mxu0 %v5248
  %v5523 = vpop.f32.mrf.mxu0
  %v5524 = vadd.f32 0.0, %v5523
  %v5525 = vpop.f32.mrf.mxu0
  %5526 = vmatprep.mubr.f32.mxu0 0.0
  %5527 = vmatmul.mubr.f32.gmra.mxu0 %v5251
  %v5528 = vpop.f32.mrf.mxu0
  %v5529 = vadd.f32 0.0, %v5528
  %v5530 = vpop.f32.mrf.mxu0
  %5531 = vmatprep.mubr.f32.mxu0 0.0
  %5532 = vmatmul.mubr.f32.gmra.mxu0 %v5254
  %v5533 = vpop.f32.mrf.mxu0
  %v5534 = vadd.f32 0.0, %v5533
  %v5535 = vpop.f32.mrf.mxu0
  %5536 = vmatprep.mubr.f32.mxu0 0.0
  %5537 = vmatmul.mubr.f32.gmra.mxu0 %v5257
  %v5538 = vpop.f32.mrf.mxu0
  %v5539 = vadd.f32 0.0, %v5538
  %v5540 = vpop.f32.mrf.mxu0
  %5541 = vmatprep.mubr.f32.mxu0 0.0
  %5542 = vmatmul.mubr.f32.gmra.mxu0 %v5260
  %v5543 = vpop.f32.mrf.mxu0
  %v5544 = vadd.f32 0.0, %v5543
  %v5545 = vpop.f32.mrf.mxu0
  %5546 = vmatprep.mubr.f32.mxu0 0.0
  %5547 = vmatmul.mubr.f32.gmra.mxu0 %v5263
  %v5548 = vpop.f32.mrf.mxu0
  %v5549 = vadd.f32 0.0, %v5548
  %v5550 = vpop.f32.mrf.mxu0
  %5551 = vmatprep.mubr.f32.mxu0 0.0
  %5552 = vmatmul.mubr.f32.gmra.mxu0 %v5266
  %v5553 = vpop.f32.mrf.mxu0
  %v5554 = vadd.f32 0.0, %v5553
  %v5555 = vpop.f32.mrf.mxu0
  %5556 = vmatprep.mubr.f32.mxu0 0.0
  %5557 = vmatmul.mubr.f32.gmra.mxu0 %v5269
  %v5558 = vpop.f32.mrf.mxu0
  %v5559 = vadd.f32 0.0, %v5558
  %v5560 = vpop.f32.mrf.mxu0
  %5561 = vmatprep.mubr.f32.mxu0 0.0
  %5562 = vmatmul.mubr.f32.gmra.mxu0 %v5272
  %v5563 = vpop.f32.mrf.mxu0
  %v5564 = vadd.f32 0.0, %v5563
  %v5565 = vpop.f32.mrf.mxu0
  %5566 = vmatprep.mubr.f32.mxu0 0.0
  %5567 = vmatmul.mubr.f32.gmra.mxu0 %v5275
  %v5568 = vpop.f32.mrf.mxu0
  %v5569 = vadd.f32 0.0, %v5568
  %v5570 = vpop.f32.mrf.mxu0
  %5571 = vmatprep.mubr.f32.mxu0 0.0
  %5572 = vmatmul.mubr.f32.gmra.mxu0 %v5278
  %v5573 = vpop.f32.mrf.mxu0
  %v5574 = vadd.f32 0.0, %v5573
  %v5575 = vpop.f32.mrf.mxu0
  %5576 = vmatprep.mubr.f32.mxu0 0.0
  %5577 = vmatmul.mubr.f32.gmra.mxu0 %v5281
  %v5578 = vpop.f32.mrf.mxu0
  %v5579 = vadd.f32 0.0, %v5578
  %v5580 = vpop.f32.mrf.mxu0
  %5581 = vmatprep.mubr.f32.mxu0 0.0
  %5582 = vmatmul.mubr.f32.gmra.mxu0 %v5284
  %v5583 = vpop.f32.mrf.mxu0
  %v5584 = vadd.f32 0.0, %v5583
  %v5585 = vpop.f32.mrf.mxu0
  %5586 = vmatprep.mubr.f32.mxu0 0.0
  %5587 = vmatmul.mubr.f32.gmra.mxu0 %v5287
  %v5588 = vpop.f32.mrf.mxu0
  %v5589 = vadd.f32 0.0, %v5588
  %v5590 = vpop.f32.mrf.mxu0
  %5591 = vmatprep.mubr.f32.mxu0 0.0
  %5592 = vmatmul.mubr.f32.gmra.mxu0 %v5290
  %v5593 = vpop.f32.mrf.mxu0
  %v5594 = vadd.f32 0.0, %v5593
  %v5595 = vpop.f32.mrf.mxu0
  %5596 = vmatprep.mubr.f32.mxu0 0.0
  %5597 = vmatmul.mubr.f32.gmra.mxu0 %v5293
  %v5598 = vpop.f32.mrf.mxu0
  %v5599 = vadd.f32 0.0, %v5598
  %v5600 = vpop.f32.mrf.mxu0
  %5601 = vmatprep.mubr.f32.mxu0 0.0
  %5602 = vmatmul.mubr.f32.gmra.mxu0 %v5296
  %v5603 = vpop.f32.mrf.mxu0
  %v5604 = vadd.f32 0.0, %v5603
  %v5605 = vpop.f32.mrf.mxu0
  %5606 = vmatprep.mubr.f32.mxu0 0.0
  %5607 = vmatmul.mubr.f32.gmra.mxu0 %v5299
  %v5608 = vpop.f32.mrf.mxu0
  %v5609 = vadd.f32 0.0, %v5608
  %v5610 = vpop.f32.mrf.mxu0
  %5611 = vmatprep.mubr.f32.mxu0 0.0
  %5612 = vmatmul.mubr.f32.gmra.mxu0 %v5302
  %v5613 = vpop.f32.mrf.mxu0
  %v5614 = vadd.f32 0.0, %v5613
  %v5615 = vpop.f32.mrf.mxu0
  %5616 = vmatprep.mubr.f32.mxu0 0.0
  %5617 = vmatmul.mubr.f32.gmra.mxu0 %v5305
  %v5618 = vpop.f32.mrf.mxu0
  %v5619 = vadd.f32 0.0, %v5618
  %v5620 = vpop.f32.mrf.mxu0
  %5621 = vmatprep.mubr.f32.mxu0 0.0
  %5622 = vmatmul.mubr.f32.gmra.mxu0 %v5308
  %v5623 = vpop.f32.mrf.mxu0
  %v5624 = vadd.f32 0.0, %v5623
  %v5625 = vpop.f32.mrf.mxu0
  %5626 = vmatprep.mubr.f32.mxu0 0.0
  %5627 = vmatmul.mubr.f32.gmra.mxu0 %v5311
  %v5628 = vpop.f32.mrf.mxu0
  %v5629 = vadd.f32 0.0, %v5628
  %v5630 = vpop.f32.mrf.mxu0
  %5631 = vmatprep.mubr.f32.mxu0 0.0
  %5632 = vmatmul.mubr.f32.gmra.mxu0 %v5314
  %v5633 = vpop.f32.mrf.mxu0
  %v5634 = vadd.f32 0.0, %v5633
  %v5635 = vpop.f32.mrf.mxu0
  %5636 = vmatprep.mubr.f32.mxu0 0.0
  %5637 = vmatmul.mubr.f32.gmra.mxu0 %v5317
  %v5638 = vpop.f32.mrf.mxu0
  %v5639 = vadd.f32 0.0, %v5638
  %v5640 = vpop.f32.mrf.mxu0
  %5641 = vmatprep.mubr.f32.mxu0 0.0
  %5642 = vmatmul.mubr.f32.gmra.mxu0 %v5320
  %v5643 = vpop.f32.mrf.mxu0
  %v5644 = vadd.f32 0.0, %v5643
  %v5645 = vpop.f32.mrf.mxu0
  %5646 = vmatprep.mubr.f32.mxu0 0.0
  %5647 = vmatmul.mubr.f32.gmra.mxu0 %v5323
  %v5648 = vpop.f32.mrf.mxu0
  %v5649 = vadd.f32 0.0, %v5648
  %v5650 = vpop.f32.mrf.mxu0
  %5651 = vmatprep.mubr.f32.mxu0 0.0
  %5652 = vmatmul.mubr.f32.gmra.mxu0 %v5326
  %v5653 = vpop.f32.mrf.mxu0
  %v5654 = vadd.f32 0.0, %v5653
  %v5655 = vpop.f32.mrf.mxu0
  %5656 = vmatprep.mubr.f32.mxu0 0.0
  %5657 = vmatmul.mubr.f32.gmra.mxu0 %v5329
  %v5658 = vpop.f32.mrf.mxu0
  %v5659 = vadd.f32 0.0, %v5658
  %v5660 = vpop.f32.mrf.mxu0
  %5661 = vmatprep.mubr.f32.mxu0 0.0
  %5662 = vmatmul.mubr.f32.gmra.mxu0 %v5332
  %v5663 = vpop.f32.mrf.mxu0
  %v5664 = vadd.f32 0.0, %v5663
  %v5665 = vpop.f32.mrf.mxu0
  %5666 = vmatprep.mubr.f32.mxu0 0.0
  %5667 = vmatmul.mubr.f32.gmra.mxu0 %v5335
  %v5668 = vpop.f32.mrf.mxu0
  %v5669 = vadd.f32 0.0, %v5668
  %v5670 = vpop.f32.mrf.mxu0
  %5671 = vmatprep.mubr.f32.mxu0 0.0
  %5672 = vmatmul.mubr.f32.gmra.mxu0 %v5338
  %v5673 = vpop.f32.mrf.mxu0
  %v5674 = vadd.f32 0.0, %v5673
  %v5675 = vpop.f32.mrf.mxu0
  %5676 = vmatprep.mubr.f32.mxu0 0.0
  %5677 = vmatmul.mubr.f32.gmra.mxu0 %v5341
  %v5678 = vpop.f32.mrf.mxu0
  %v5679 = vadd.f32 0.0, %v5678
  %v5680 = vpop.f32.mrf.mxu0
  %5681 = vmatprep.mubr.f32.mxu0 0.0
  %5682 = vmatmul.mubr.f32.gmra.mxu0 %v5344
  %v5683 = vpop.f32.mrf.mxu0
  %v5684 = vadd.f32 0.0, %v5683
  %v5685 = vpop.f32.mrf.mxu0
  %5686 = vmatprep.mubr.f32.mxu0 0.0
  %5687 = vmatmul.mubr.f32.gmra.mxu0 %v5347
  %v5688 = vpop.f32.mrf.mxu0
  %v5689 = vadd.f32 0.0, %v5688
  %v5690 = vpop.f32.mrf.mxu0
  %5691 = vmatprep.mubr.f32.mxu0 0.0
  %5692 = vmatmul.mubr.f32.gmra.mxu0 %v5350
  %v5693 = vpop.f32.mrf.mxu0
  %v5694 = vadd.f32 0.0, %v5693
  %v5695 = vpop.f32.mrf.mxu0
  %5696 = vmatprep.mubr.f32.mxu0 0.0
  %5697 = vmatmul.mubr.f32.gmra.mxu0 %v5353
  %v5698 = vpop.f32.mrf.mxu0
  %v5699 = vadd.f32 0.0, %v5698
  %v5700 = vpop.f32.mrf.mxu0
  %5701 = vmatprep.mubr.f32.mxu0 0.0
  %5702 = vmatmul.mubr.f32.gmra.mxu0 %v5356
  %v5703 = vpop.f32.mrf.mxu0
  %v5704 = vadd.f32 0.0, %v5703
  %v5705 = vpop.f32.mrf.mxu0
  %5706 = vmatprep.mubr.f32.mxu0 0.0
  %5707 = vmatmul.mubr.f32.gmra.mxu0 %v5359
  %v5708 = vpop.f32.mrf.mxu0
  %v5709 = vadd.f32 0.0, %v5708
  %v5710 = vpop.f32.mrf.mxu0
  %5711 = vmatprep.mubr.f32.mxu0 0.0
  %5712 = vmatmul.mubr.f32.gmra.mxu0 %v5362
  %v5713 = vpop.f32.mrf.mxu0
  %v5714 = vadd.f32 0.0, %v5713
  %v5715 = vpop.f32.mrf.mxu0
  %5716 = vmatprep.mubr.f32.mxu0 0.0
  %5717 = vmatmul.mubr.f32.gmra.mxu0 %v5365
  %v5718 = vpop.f32.mrf.mxu0
  %v5719 = vadd.f32 0.0, %v5718
  %v5720 = vpop.f32.mrf.mxu0
  %5721 = vmatprep.mubr.f32.mxu0 0.0
  %5722 = vmatmul.mubr.f32.gmra.mxu0 %v5368
  %v5723 = vpop.f32.mrf.mxu0
  %v5724 = vadd.f32 0.0, %v5723
  %v5725 = vpop.f32.mrf.mxu0
  %5726 = vmatprep.mubr.f32.mxu0 0.0
  %5727 = vmatmul.mubr.f32.gmra.mxu0 %v5371
  %v5728 = vpop.f32.mrf.mxu0
  %v5729 = vadd.f32 0.0, %v5728
  %v5730 = vpop.f32.mrf.mxu0
  %5731 = vmatprep.mubr.f32.mxu0 0.0
  %5732 = vmatmul.mubr.f32.gmra.mxu0 %v5374
  %v5733 = vpop.f32.mrf.mxu0
  %v5734 = vadd.f32 0.0, %v5733
  %v5735 = vpop.f32.mrf.mxu0
  %5736 = vmatprep.mubr.f32.mxu0 0.0
  %5737 = vmatmul.mubr.f32.gmra.mxu0 %v5377
  %v5738 = vpop.f32.mrf.mxu0
  %v5739 = vadd.f32 0.0, %v5738
  %v5740 = vpop.f32.mrf.mxu0
  %5741 = vmatprep.mubr.f32.mxu0 0.0
  %5742 = vmatmul.mubr.f32.gmra.mxu0 %v5380
  %v5743 = vpop.f32.mrf.mxu0
  %v5744 = vadd.f32 0.0, %v5743
  %v5745 = vpop.f32.mrf.mxu0
  %5746 = vmatprep.mubr.f32.mxu0 0.0
  %5747 = vmatmul.mubr.f32.gmra.mxu0 %v5383
  %v5748 = vpop.f32.mrf.mxu0
  %v5749 = vadd.f32 0.0, %v5748
  %v5750 = vpop.f32.mrf.mxu0
  %5751 = vmatprep.mubr.f32.mxu0 0.0
  %5752 = vmatmul.mubr.f32.gmra.mxu0 %v5386
  %v5753 = vpop.f32.mrf.mxu0
  %v5754 = vadd.f32 0.0, %v5753
  %v5755 = vpop.f32.mrf.mxu0
  %5756 = vmatprep.mubr.f32.mxu0 0.0
  %5757 = vmatmul.mubr.f32.gmra.mxu0 %v5389
  %v5758 = vpop.f32.mrf.mxu0
  %v5759 = vadd.f32 0.0, %v5758
  %v5760 = vpop.f32.mrf.mxu0
  %5761 = vmatprep.mubr.f32.mxu0 0.0
  %5762 = vmatmul.mubr.f32.gmra.mxu0 %v5392
  %v5763 = vpop.f32.mrf.mxu0
  %v5764 = vadd.f32 0.0, %v5763
  %v5765 = vpop.f32.mrf.mxu0
  %5766 = vmatprep.mubr.f32.mxu0 0.0
  %5767 = vmatmul.mubr.f32.gmra.mxu0 %v5395
  %v5768 = vpop.f32.mrf.mxu0
  %v5769 = vadd.f32 0.0, %v5768
  %v5770 = vpop.f32.mrf.mxu0
  %5771 = vmatprep.mubr.f32.mxu0 0.0
  %5772 = vmatmul.mubr.f32.gmra.mxu0 %v5398
  %v5773 = vpop.f32.mrf.mxu0
  %v5774 = vadd.f32 0.0, %v5773
  %v5775 = vpop.f32.mrf.mxu0
  %5776 = vmatprep.mubr.f32.mxu0 0.0
  %5777 = vmatmul.mubr.f32.gmra.mxu0 %v5401
  %v5778 = vpop.f32.mrf.mxu0
  %v5779 = vadd.f32 0.0, %v5778
  %v5780 = vpop.f32.mrf.mxu0
  %5781 = vmatprep.mubr.f32.mxu0 0.0
  %5782 = vmatmul.mubr.f32.gmra.mxu0 %v5404
  %v5783 = vpop.f32.mrf.mxu0
  %v5784 = vadd.f32 0.0, %v5783
  %v5785 = vpop.f32.mrf.mxu0
  %5786 = vmatprep.mubr.f32.mxu0 0.0
  %5787 = vmatmul.mubr.f32.gmra.mxu0 %v5407
  %v5788 = vpop.f32.mrf.mxu0
  %v5789 = vadd.f32 0.0, %v5788
  %v5790 = vpop.f32.mrf.mxu0
  %5791 = vmatprep.mubr.f32.mxu0 0.0
  %5792 = vmatmul.mubr.f32.gmra.mxu0 %v5410
  %v5793 = vpop.f32.mrf.mxu0
  %v5794 = vadd.f32 0.0, %v5793
  %v5795 = vpop.f32.mrf.mxu0
  %5796 = vmatprep.mubr.f32.mxu0 0.0
  %5797 = vmatmul.mubr.f32.gmra.mxu0 %v5413
  %v5798 = vpop.f32.mrf.mxu0
  %v5799 = vadd.f32 0.0, %v5798
  %v5800 = vpop.f32.mrf.mxu0
  %5801 = vmatprep.mubr.f32.mxu0 0.0
  %5802 = vmatmul.mubr.f32.gmra.mxu0 %v5416
  %v5803 = vpop.f32.mrf.mxu0
  %v5804 = vadd.f32 0.0, %v5803
  %v5805 = vpop.f32.mrf.mxu0
  %5806 = vmatprep.mubr.f32.mxu0 0.0
  %5807 = vmatmul.mubr.f32.gmra.mxu0 %v5419
  %v5808 = vpop.f32.mrf.mxu0
  %v5809 = vadd.f32 0.0, %v5808
  %v5810 = vpop.f32.mrf.mxu0
  %5811 = vmatprep.mubr.f32.mxu0 0.0
  %5812 = vmatmul.mubr.f32.gmra.mxu0 %v5422
  %v5813 = vpop.f32.mrf.mxu0
  %v5814 = vadd.f32 0.0, %v5813
  %v5815 = vpop.f32.mrf.mxu0
  %5816 = vmatprep.mubr.f32.mxu0 0.0
  %5817 = vmatmul.mubr.f32.gmra.mxu0 %v5425
  %v5818 = vpop.f32.mrf.mxu0
  %v5819 = vadd.f32 0.0, %v5818
  %v5820 = vpop.f32.mrf.mxu0
  %5821 = vmatprep.mubr.f32.mxu0 0.0
  %5822 = vmatmul.mubr.f32.gmra.mxu0 %v5428
  %v5823 = vpop.f32.mrf.mxu0
  %v5824 = vadd.f32 0.0, %v5823
  %v5825 = vpop.f32.mrf.mxu0
  %5826 = vmatprep.mubr.f32.mxu0 0.0
  %5827 = vmatmul.mubr.f32.gmra.mxu0 %v5431
  %v5828 = vpop.f32.mrf.mxu0
  %v5829 = vadd.f32 0.0, %v5828
  %v5830 = vpop.f32.mrf.mxu0
  %5831 = vdwg.mxu0
  %v5833 = vsel %vm5234, %v4961, 0
  %v5836 = vsel %vm5234, %v4962, 0
  %v5839 = vsel %vm5234, %v4963, 0
  %v5842 = vsel %vm5234, %v4964, 0
  %v5845 = vsel %vm5234, %v4965, 0
  %v5848 = vsel %vm5234, %v4966, 0
  %v5851 = vsel %vm5234, %v4967, 0
  %v5854 = vsel %vm5234, %v4968, 0
  %v5857 = vsel %vm5234, %v4969, 0
  %v5860 = vsel %vm5234, %v4970, 0
  %v5863 = vsel %vm5234, %v4971, 0
  %v5866 = vsel %vm5234, %v4972, 0
  %v5869 = vsel %vm5234, %v4973, 0
  %v5872 = vsel %vm5234, %v4974, 0
  %v5875 = vsel %vm5234, %v4975, 0
  %v5878 = vsel %vm5234, %v4976, 0
  %v5881 = vsel %vm5234, %v4977, 0
  %v5884 = vsel %vm5234, %v4978, 0
  %v5887 = vsel %vm5234, %v4979, 0
  %v5890 = vsel %vm5234, %v4980, 0
  %v5893 = vsel %vm5234, %v4981, 0
  %v5896 = vsel %vm5234, %v4982, 0
  %v5899 = vsel %vm5234, %v4983, 0
  %v5902 = vsel %vm5234, %v4984, 0
  %v5905 = vsel %vm5234, %v4985, 0
  %v5908 = vsel %vm5234, %v4986, 0
  %v5911 = vsel %vm5234, %v4987, 0
  %v5914 = vsel %vm5234, %v4988, 0
  %v5917 = vsel %vm5234, %v4989, 0
  %v5920 = vsel %vm5234, %v4990, 0
  %v5923 = vsel %vm5234, %v4991, 0
  %v5926 = vsel %vm5234, %v4992, 0
  %v5929 = vsel %vm5234, %v4993, 0
  %v5932 = vsel %vm5234, %v4994, 0
  %v5935 = vsel %vm5234, %v4995, 0
  %v5938 = vsel %vm5234, %v4996, 0
  %v5941 = vsel %vm5234, %v4997, 0
  %v5944 = vsel %vm5234, %v4998, 0
  %v5947 = vsel %vm5234, %v4999, 0
  %v5950 = vsel %vm5234, %v5000, 0
  %v5953 = vsel %vm5234, %v5001, 0
  %v5956 = vsel %vm5234, %v5002, 0
  %v5959 = vsel %vm5234, %v5003, 0
  %v5962 = vsel %vm5234, %v5004, 0
  %v5965 = vsel %vm5234, %v5005, 0
  %v5968 = vsel %vm5234, %v5006, 0
  %v5971 = vsel %vm5234, %v5007, 0
  %v5974 = vsel %vm5234, %v5008, 0
  %v5977 = vsel %vm5234, %v5009, 0
  %v5980 = vsel %vm5234, %v5010, 0
  %v5983 = vsel %vm5234, %v5011, 0
  %v5986 = vsel %vm5234, %v5012, 0
  %v5989 = vsel %vm5234, %v5013, 0
  %v5992 = vsel %vm5234, %v5014, 0
  %v5995 = vsel %vm5234, %v5015, 0
  %v5998 = vsel %vm5234, %v5016, 0
  %v6001 = vsel %vm5234, %v5017, 0
  %v6004 = vsel %vm5234, %v5018, 0
  %v6007 = vsel %vm5234, %v5019, 0
  %v6010 = vsel %vm5234, %v5020, 0
  %v6013 = vsel %vm5234, %v5021, 0
  %v6016 = vsel %vm5234, %v5022, 0
  %v6019 = vsel %vm5234, %v5023, 0
  %v6022 = vsel %vm5234, %v5024, 0
  %v6025 = vsel %vm5234, %v5025, 0
  %v6028 = vsel %vm5234, %v5026, 0
  %v6031 = vsel %vm5433, %v5228, 0
  %6033 = vmatprep.subr.mxu0 0.0
  %6034 = vmatpush1.msra.mxu0 0.0
  %6035 = vmatprep.subr.mxu0 0.0
  %6036 = vmatpush1.msra.mxu0 0.0
  %6037 = vmatprep.subr.mxu0 0.0
  %6038 = vmatpush1.msra.mxu0 0.0
  %6039 = vmatprep.subr.mxu0 0.0
  %6040 = vmatpush1.msra.mxu0 0.0
  %6041 = vmatprep.subr.mxu0 0.0
  %6042 = vmatpush1.msra.mxu0 0.0
  %6043 = vmatprep.subr.mxu0 0.0
  %6044 = vmatpush1.msra.mxu0 0.0
  %6045 = vmatprep.subr.mxu0 0.0
  %6046 = vmatpush1.msra.mxu0 0.0
  %6047 = vmatprep.subr.mxu0 0.0
  %6048 = vmatpush1.msra.mxu0 0.0
  %6049 = vmatprep.subr.mxu0 0.0
  %6050 = vmatpush1.msra.mxu0 0.0
  %6051 = vmatprep.subr.mxu0 0.0
  %6052 = vmatpush1.msra.mxu0 0.0
  %6053 = vmatprep.subr.mxu0 0.0
  %6054 = vmatpush1.msra.mxu0 0.0
  %6055 = vmatprep.subr.mxu0 0.0
  %6056 = vmatpush1.msra.mxu0 0.0
  %6057 = vmatprep.subr.mxu0 0.0
  %6058 = vmatpush1.msra.mxu0 %v6031
  %6059 = vmatprep.subr.mxu0 0.0
  %6060 = vmatpush1.msra.mxu0 %v5227
  %6061 = vmatprep.subr.mxu0 0.0
  %6062 = vmatpush1.msra.mxu0 %v5226
  %6063 = vmatprep.subr.mxu0 0.0
  %6064 = vmatpush1.msra.mxu0 %v5225
  %6065 = vmatprep.subr.mxu0 0.0
  %6066 = vmatpush2.msra.mxu0 0.0
  %6067 = vmatprep.subr.mxu0 0.0
  %6068 = vmatpush2.msra.mxu0 0.0
  %6069 = vmatprep.subr.mxu0 0.0
  %6070 = vmatpush2.msra.mxu0 0.0
  %6071 = vmatprep.subr.mxu0 0.0
  %6072 = vmatpush2.msra.mxu0 0.0
  %6073 = vmatprep.subr.mxu0 0.0
  %6074 = vmatpush2.msra.mxu0 0.0
  %6075 = vmatprep.subr.mxu0 0.0
  %6076 = vmatpush2.msra.mxu0 0.0
  %6077 = vmatprep.subr.mxu0 0.0
  %6078 = vmatpush2.msra.mxu0 0.0
  %6079 = vmatprep.subr.mxu0 0.0
  %6080 = vmatpush2.msra.mxu0 0.0
  %6081 = vmatprep.subr.mxu0 0.0
  %6082 = vmatpush2.msra.mxu0 0.0
  %6083 = vmatprep.subr.mxu0 0.0
  %6084 = vmatpush2.msra.mxu0 0.0
  %6085 = vmatprep.subr.mxu0 0.0
  %6086 = vmatpush2.msra.mxu0 0.0
  %6087 = vmatprep.subr.mxu0 0.0
  %6088 = vmatpush2.msra.mxu0 0.0
  %6089 = vmatprep.subr.mxu0 0.0
  %6090 = vmatpush2.msra.mxu0 0.0
  %6091 = vmatprep.subr.mxu0 0.0
  %6092 = vmatpush2.msra.mxu0 0.0
  %6093 = vmatprep.subr.mxu0 0.0
  %6094 = vmatpush2.msra.mxu0 0.0
  %6095 = vmatprep.subr.mxu0 0.0
  %6096 = vmatpush2.msra.mxu0 0.0
  %6097 = vmatprep.mubr.f32.mxu0 0.0
  %6098 = vmatmul.mubr.f32.gmra.mxu0 %v5833
  %v6099 = vpop.f32.mrf.mxu0
  %v6100 = vadd.f32 %v5504, %v6099
  %v6101 = vpop.f32.mrf.mxu0
  %6102 = vmatprep.mubr.f32.mxu0 0.0
  %6103 = vmatmul.mubr.f32.gmra.mxu0 %v5836
  %v6104 = vpop.f32.mrf.mxu0
  %v6105 = vadd.f32 %v5509, %v6104
  %v6106 = vpop.f32.mrf.mxu0
  %6107 = vmatprep.mubr.f32.mxu0 0.0
  %6108 = vmatmul.mubr.f32.gmra.mxu0 %v5839
  %v6109 = vpop.f32.mrf.mxu0
  %v6110 = vadd.f32 %v5514, %v6109
  %v6111 = vpop.f32.mrf.mxu0
  %6112 = vmatprep.mubr.f32.mxu0 0.0
  %6113 = vmatmul.mubr.f32.gmra.mxu0 %v5842
  %v6114 = vpop.f32.mrf.mxu0
  %v6115 = vadd.f32 %v5519, %v6114
  %v6116 = vpop.f32.mrf.mxu0
  %6117 = vmatprep.mubr.f32.mxu0 0.0
  %6118 = vmatmul.mubr.f32.gmra.mxu0 %v5845
  %v6119 = vpop.f32.mrf.mxu0
  %v6120 = vadd.f32 %v5524, %v6119
  %v6121 = vpop.f32.mrf.mxu0
  %6122 = vmatprep.mubr.f32.mxu0 0.0
  %6123 = vmatmul.mubr.f32.gmra.mxu0 %v5848
  %v6124 = vpop.f32.mrf.mxu0
  %v6125 = vadd.f32 %v5529, %v6124
  %v6126 = vpop.f32.mrf.mxu0
  %6127 = vmatprep.mubr.f32.mxu0 0.0
  %6128 = vmatmul.mubr.f32.gmra.mxu0 %v5851
  %v6129 = vpop.f32.mrf.mxu0
  %v6130 = vadd.f32 %v5534, %v6129
  %v6131 = vpop.f32.mrf.mxu0
  %6132 = vmatprep.mubr.f32.mxu0 0.0
  %6133 = vmatmul.mubr.f32.gmra.mxu0 %v5854
  %v6134 = vpop.f32.mrf.mxu0
  %v6135 = vadd.f32 %v5539, %v6134
  %v6136 = vpop.f32.mrf.mxu0
  %6137 = vmatprep.mubr.f32.mxu0 0.0
  %6138 = vmatmul.mubr.f32.gmra.mxu0 %v5857
  %v6139 = vpop.f32.mrf.mxu0
  %v6140 = vadd.f32 %v5544, %v6139
  %v6141 = vpop.f32.mrf.mxu0
  %6142 = vmatprep.mubr.f32.mxu0 0.0
  %6143 = vmatmul.mubr.f32.gmra.mxu0 %v5860
  %v6144 = vpop.f32.mrf.mxu0
  %v6145 = vadd.f32 %v5549, %v6144
  %v6146 = vpop.f32.mrf.mxu0
  %6147 = vmatprep.mubr.f32.mxu0 0.0
  %6148 = vmatmul.mubr.f32.gmra.mxu0 %v5863
  %v6149 = vpop.f32.mrf.mxu0
  %v6150 = vadd.f32 %v5554, %v6149
  %v6151 = vpop.f32.mrf.mxu0
  %6152 = vmatprep.mubr.f32.mxu0 0.0
  %6153 = vmatmul.mubr.f32.gmra.mxu0 %v5866
  %v6154 = vpop.f32.mrf.mxu0
  %v6155 = vadd.f32 %v5559, %v6154
  %v6156 = vpop.f32.mrf.mxu0
  %6157 = vmatprep.mubr.f32.mxu0 0.0
  %6158 = vmatmul.mubr.f32.gmra.mxu0 %v5869
  %v6159 = vpop.f32.mrf.mxu0
  %v6160 = vadd.f32 %v5564, %v6159
  %v6161 = vpop.f32.mrf.mxu0
  %6162 = vmatprep.mubr.f32.mxu0 0.0
  %6163 = vmatmul.mubr.f32.gmra.mxu0 %v5872
  %v6164 = vpop.f32.mrf.mxu0
  %v6165 = vadd.f32 %v5569, %v6164
  %v6166 = vpop.f32.mrf.mxu0
  %6167 = vmatprep.mubr.f32.mxu0 0.0
  %6168 = vmatmul.mubr.f32.gmra.mxu0 %v5875
  %v6169 = vpop.f32.mrf.mxu0
  %v6170 = vadd.f32 %v5574, %v6169
  %v6171 = vpop.f32.mrf.mxu0
  %6172 = vmatprep.mubr.f32.mxu0 0.0
  %6173 = vmatmul.mubr.f32.gmra.mxu0 %v5878
  %v6174 = vpop.f32.mrf.mxu0
  %v6175 = vadd.f32 %v5579, %v6174
  %v6176 = vpop.f32.mrf.mxu0
  %6177 = vmatprep.mubr.f32.mxu0 0.0
  %6178 = vmatmul.mubr.f32.gmra.mxu0 %v5881
  %v6179 = vpop.f32.mrf.mxu0
  %v6180 = vadd.f32 %v5584, %v6179
  %v6181 = vpop.f32.mrf.mxu0
  %6182 = vmatprep.mubr.f32.mxu0 0.0
  %6183 = vmatmul.mubr.f32.gmra.mxu0 %v5884
  %v6184 = vpop.f32.mrf.mxu0
  %v6185 = vadd.f32 %v5589, %v6184
  %v6186 = vpop.f32.mrf.mxu0
  %6187 = vmatprep.mubr.f32.mxu0 0.0
  %6188 = vmatmul.mubr.f32.gmra.mxu0 %v5887
  %v6189 = vpop.f32.mrf.mxu0
  %v6190 = vadd.f32 %v5594, %v6189
  %v6191 = vpop.f32.mrf.mxu0
  %6192 = vmatprep.mubr.f32.mxu0 0.0
  %6193 = vmatmul.mubr.f32.gmra.mxu0 %v5890
  %v6194 = vpop.f32.mrf.mxu0
  %v6195 = vadd.f32 %v5599, %v6194
  %v6196 = vpop.f32.mrf.mxu0
  %6197 = vmatprep.mubr.f32.mxu0 0.0
  %6198 = vmatmul.mubr.f32.gmra.mxu0 %v5893
  %v6199 = vpop.f32.mrf.mxu0
  %v6200 = vadd.f32 %v5604, %v6199
  %v6201 = vpop.f32.mrf.mxu0
  %6202 = vmatprep.mubr.f32.mxu0 0.0
  %6203 = vmatmul.mubr.f32.gmra.mxu0 %v5896
  %v6204 = vpop.f32.mrf.mxu0
  %v6205 = vadd.f32 %v5609, %v6204
  %v6206 = vpop.f32.mrf.mxu0
  %6207 = vmatprep.mubr.f32.mxu0 0.0
  %6208 = vmatmul.mubr.f32.gmra.mxu0 %v5899
  %v6209 = vpop.f32.mrf.mxu0
  %v6210 = vadd.f32 %v5614, %v6209
  %v6211 = vpop.f32.mrf.mxu0
  %6212 = vmatprep.mubr.f32.mxu0 0.0
  %6213 = vmatmul.mubr.f32.gmra.mxu0 %v5902
  %v6214 = vpop.f32.mrf.mxu0
  %v6215 = vadd.f32 %v5619, %v6214
  %v6216 = vpop.f32.mrf.mxu0
  %6217 = vmatprep.mubr.f32.mxu0 0.0
  %6218 = vmatmul.mubr.f32.gmra.mxu0 %v5905
  %v6219 = vpop.f32.mrf.mxu0
  %v6220 = vadd.f32 %v5624, %v6219
  %v6221 = vpop.f32.mrf.mxu0
  %6222 = vmatprep.mubr.f32.mxu0 0.0
  %6223 = vmatmul.mubr.f32.gmra.mxu0 %v5908
  %v6224 = vpop.f32.mrf.mxu0
  %v6225 = vadd.f32 %v5629, %v6224
  %v6226 = vpop.f32.mrf.mxu0
  %6227 = vmatprep.mubr.f32.mxu0 0.0
  %6228 = vmatmul.mubr.f32.gmra.mxu0 %v5911
  %v6229 = vpop.f32.mrf.mxu0
  %v6230 = vadd.f32 %v5634, %v6229
  %v6231 = vpop.f32.mrf.mxu0
  %6232 = vmatprep.mubr.f32.mxu0 0.0
  %6233 = vmatmul.mubr.f32.gmra.mxu0 %v5914
  %v6234 = vpop.f32.mrf.mxu0
  %v6235 = vadd.f32 %v5639, %v6234
  %v6236 = vpop.f32.mrf.mxu0
  %6237 = vmatprep.mubr.f32.mxu0 0.0
  %6238 = vmatmul.mubr.f32.gmra.mxu0 %v5917
  %v6239 = vpop.f32.mrf.mxu0
  %v6240 = vadd.f32 %v5644, %v6239
  %v6241 = vpop.f32.mrf.mxu0
  %6242 = vmatprep.mubr.f32.mxu0 0.0
  %6243 = vmatmul.mubr.f32.gmra.mxu0 %v5920
  %v6244 = vpop.f32.mrf.mxu0
  %v6245 = vadd.f32 %v5649, %v6244
  %v6246 = vpop.f32.mrf.mxu0
  %6247 = vmatprep.mubr.f32.mxu0 0.0
  %6248 = vmatmul.mubr.f32.gmra.mxu0 %v5923
  %v6249 = vpop.f32.mrf.mxu0
  %v6250 = vadd.f32 %v5654, %v6249
  %v6251 = vpop.f32.mrf.mxu0
  %6252 = vmatprep.mubr.f32.mxu0 0.0
  %6253 = vmatmul.mubr.f32.gmra.mxu0 %v5926
  %v6254 = vpop.f32.mrf.mxu0
  %v6255 = vadd.f32 %v5659, %v6254
  %v6256 = vpop.f32.mrf.mxu0
  %6257 = vmatprep.mubr.f32.mxu0 0.0
  %6258 = vmatmul.mubr.f32.gmra.mxu0 %v5929
  %v6259 = vpop.f32.mrf.mxu0
  %v6260 = vadd.f32 %v5664, %v6259
  %v6261 = vpop.f32.mrf.mxu0
  %6262 = vmatprep.mubr.f32.mxu0 0.0
  %6263 = vmatmul.mubr.f32.gmra.mxu0 %v5932
  %v6264 = vpop.f32.mrf.mxu0
  %v6265 = vadd.f32 %v5669, %v6264
  %v6266 = vpop.f32.mrf.mxu0
  %6267 = vmatprep.mubr.f32.mxu0 0.0
  %6268 = vmatmul.mubr.f32.gmra.mxu0 %v5935
  %v6269 = vpop.f32.mrf.mxu0
  %v6270 = vadd.f32 %v5674, %v6269
  %v6271 = vpop.f32.mrf.mxu0
  %6272 = vmatprep.mubr.f32.mxu0 0.0
  %6273 = vmatmul.mubr.f32.gmra.mxu0 %v5938
  %v6274 = vpop.f32.mrf.mxu0
  %v6275 = vadd.f32 %v5679, %v6274
  %v6276 = vpop.f32.mrf.mxu0
  %6277 = vmatprep.mubr.f32.mxu0 0.0
  %6278 = vmatmul.mubr.f32.gmra.mxu0 %v5941
  %v6279 = vpop.f32.mrf.mxu0
  %v6280 = vadd.f32 %v5684, %v6279
  %v6281 = vpop.f32.mrf.mxu0
  %6282 = vmatprep.mubr.f32.mxu0 0.0
  %6283 = vmatmul.mubr.f32.gmra.mxu0 %v5944
  %v6284 = vpop.f32.mrf.mxu0
  %v6285 = vadd.f32 %v5689, %v6284
  %v6286 = vpop.f32.mrf.mxu0
  %6287 = vmatprep.mubr.f32.mxu0 0.0
  %6288 = vmatmul.mubr.f32.gmra.mxu0 %v5947
  %v6289 = vpop.f32.mrf.mxu0
  %v6290 = vadd.f32 %v5694, %v6289
  %v6291 = vpop.f32.mrf.mxu0
  %6292 = vmatprep.mubr.f32.mxu0 0.0
  %6293 = vmatmul.mubr.f32.gmra.mxu0 %v5950
  %v6294 = vpop.f32.mrf.mxu0
  %v6295 = vadd.f32 %v5699, %v6294
  %v6296 = vpop.f32.mrf.mxu0
  %6297 = vmatprep.mubr.f32.mxu0 0.0
  %6298 = vmatmul.mubr.f32.gmra.mxu0 %v5953
  %v6299 = vpop.f32.mrf.mxu0
  %v6300 = vadd.f32 %v5704, %v6299
  %v6301 = vpop.f32.mrf.mxu0
  %6302 = vmatprep.mubr.f32.mxu0 0.0
  %6303 = vmatmul.mubr.f32.gmra.mxu0 %v5956
  %v6304 = vpop.f32.mrf.mxu0
  %v6305 = vadd.f32 %v5709, %v6304
  %v6306 = vpop.f32.mrf.mxu0
  %6307 = vmatprep.mubr.f32.mxu0 0.0
  %6308 = vmatmul.mubr.f32.gmra.mxu0 %v5959
  %v6309 = vpop.f32.mrf.mxu0
  %v6310 = vadd.f32 %v5714, %v6309
  %v6311 = vpop.f32.mrf.mxu0
  %6312 = vmatprep.mubr.f32.mxu0 0.0
  %6313 = vmatmul.mubr.f32.gmra.mxu0 %v5962
  %v6314 = vpop.f32.mrf.mxu0
  %v6315 = vadd.f32 %v5719, %v6314
  %v6316 = vpop.f32.mrf.mxu0
  %6317 = vmatprep.mubr.f32.mxu0 0.0
  %6318 = vmatmul.mubr.f32.gmra.mxu0 %v5965
  %v6319 = vpop.f32.mrf.mxu0
  %v6320 = vadd.f32 %v5724, %v6319
  %v6321 = vpop.f32.mrf.mxu0
  %6322 = vmatprep.mubr.f32.mxu0 0.0
  %6323 = vmatmul.mubr.f32.gmra.mxu0 %v5968
  %v6324 = vpop.f32.mrf.mxu0
  %v6325 = vadd.f32 %v5729, %v6324
  %v6326 = vpop.f32.mrf.mxu0
  %6327 = vmatprep.mubr.f32.mxu0 0.0
  %6328 = vmatmul.mubr.f32.gmra.mxu0 %v5971
  %v6329 = vpop.f32.mrf.mxu0
  %v6330 = vadd.f32 %v5734, %v6329
  %v6331 = vpop.f32.mrf.mxu0
  %6332 = vmatprep.mubr.f32.mxu0 0.0
  %6333 = vmatmul.mubr.f32.gmra.mxu0 %v5974
  %v6334 = vpop.f32.mrf.mxu0
  %v6335 = vadd.f32 %v5739, %v6334
  %v6336 = vpop.f32.mrf.mxu0
  %6337 = vmatprep.mubr.f32.mxu0 0.0
  %6338 = vmatmul.mubr.f32.gmra.mxu0 %v5977
  %v6339 = vpop.f32.mrf.mxu0
  %v6340 = vadd.f32 %v5744, %v6339
  %v6341 = vpop.f32.mrf.mxu0
  %6342 = vmatprep.mubr.f32.mxu0 0.0
  %6343 = vmatmul.mubr.f32.gmra.mxu0 %v5980
  %v6344 = vpop.f32.mrf.mxu0
  %v6345 = vadd.f32 %v5749, %v6344
  %v6346 = vpop.f32.mrf.mxu0
  %6347 = vmatprep.mubr.f32.mxu0 0.0
  %6348 = vmatmul.mubr.f32.gmra.mxu0 %v5983
  %v6349 = vpop.f32.mrf.mxu0
  %v6350 = vadd.f32 %v5754, %v6349
  %v6351 = vpop.f32.mrf.mxu0
  %6352 = vmatprep.mubr.f32.mxu0 0.0
  %6353 = vmatmul.mubr.f32.gmra.mxu0 %v5986
  %v6354 = vpop.f32.mrf.mxu0
  %v6355 = vadd.f32 %v5759, %v6354
  %v6356 = vpop.f32.mrf.mxu0
  %6357 = vmatprep.mubr.f32.mxu0 0.0
  %6358 = vmatmul.mubr.f32.gmra.mxu0 %v5989
  %v6359 = vpop.f32.mrf.mxu0
  %v6360 = vadd.f32 %v5764, %v6359
  %v6361 = vpop.f32.mrf.mxu0
  %6362 = vmatprep.mubr.f32.mxu0 0.0
  %6363 = vmatmul.mubr.f32.gmra.mxu0 %v5992
  %v6364 = vpop.f32.mrf.mxu0
  %v6365 = vadd.f32 %v5769, %v6364
  %v6366 = vpop.f32.mrf.mxu0
  %6367 = vmatprep.mubr.f32.mxu0 0.0
  %6368 = vmatmul.mubr.f32.gmra.mxu0 %v5995
  %v6369 = vpop.f32.mrf.mxu0
  %v6370 = vadd.f32 %v5774, %v6369
  %v6371 = vpop.f32.mrf.mxu0
  %6372 = vmatprep.mubr.f32.mxu0 0.0
  %6373 = vmatmul.mubr.f32.gmra.mxu0 %v5998
  %v6374 = vpop.f32.mrf.mxu0
  %v6375 = vadd.f32 %v5779, %v6374
  %v6376 = vpop.f32.mrf.mxu0
  %6377 = vmatprep.mubr.f32.mxu0 0.0
  %6378 = vmatmul.mubr.f32.gmra.mxu0 %v6001
  %v6379 = vpop.f32.mrf.mxu0
  %v6380 = vadd.f32 %v5784, %v6379
  %v6381 = vpop.f32.mrf.mxu0
  %6382 = vmatprep.mubr.f32.mxu0 0.0
  %6383 = vmatmul.mubr.f32.gmra.mxu0 %v6004
  %v6384 = vpop.f32.mrf.mxu0
  %v6385 = vadd.f32 %v5789, %v6384
  %v6386 = vpop.f32.mrf.mxu0
  %6387 = vmatprep.mubr.f32.mxu0 0.0
  %6388 = vmatmul.mubr.f32.gmra.mxu0 %v6007
  %v6389 = vpop.f32.mrf.mxu0
  %v6390 = vadd.f32 %v5794, %v6389
  %v6391 = vpop.f32.mrf.mxu0
  %6392 = vmatprep.mubr.f32.mxu0 0.0
  %6393 = vmatmul.mubr.f32.gmra.mxu0 %v6010
  %v6394 = vpop.f32.mrf.mxu0
  %v6395 = vadd.f32 %v5799, %v6394
  %v6396 = vpop.f32.mrf.mxu0
  %6397 = vmatprep.mubr.f32.mxu0 0.0
  %6398 = vmatmul.mubr.f32.gmra.mxu0 %v6013
  %v6399 = vpop.f32.mrf.mxu0
  %v6400 = vadd.f32 %v5804, %v6399
  %v6401 = vpop.f32.mrf.mxu0
  %6402 = vmatprep.mubr.f32.mxu0 0.0
  %6403 = vmatmul.mubr.f32.gmra.mxu0 %v6016
  %v6404 = vpop.f32.mrf.mxu0
  %v6405 = vadd.f32 %v5809, %v6404
  %v6406 = vpop.f32.mrf.mxu0
  %6407 = vmatprep.mubr.f32.mxu0 0.0
  %6408 = vmatmul.mubr.f32.gmra.mxu0 %v6019
  %v6409 = vpop.f32.mrf.mxu0
  %v6410 = vadd.f32 %v5814, %v6409
  %v6411 = vpop.f32.mrf.mxu0
  %6412 = vmatprep.mubr.f32.mxu0 0.0
  %6413 = vmatmul.mubr.f32.gmra.mxu0 %v6022
  %v6414 = vpop.f32.mrf.mxu0
  %v6415 = vadd.f32 %v5819, %v6414
  %v6416 = vpop.f32.mrf.mxu0
  %6417 = vmatprep.mubr.f32.mxu0 0.0
  %6418 = vmatmul.mubr.f32.gmra.mxu0 %v6025
  %v6419 = vpop.f32.mrf.mxu0
  %v6420 = vadd.f32 %v5824, %v6419
  %v6421 = vpop.f32.mrf.mxu0
  %6422 = vmatprep.mubr.f32.mxu0 0.0
  %6423 = vmatmul.mubr.f32.gmra.mxu0 %v6028
  %v6424 = vpop.f32.mrf.mxu0
  %v6425 = vadd.f32 %v5829, %v6424
  %v6426 = vpop.f32.mrf.mxu0
  %6427 = vdwg.mxu0
  %s6428 = scalar_lea.vmem %s5, 64
  %v6429 = vld [vmem:[%s6428] sm:$0xff]
  %v6430 = vld [vmem:[%s6428 + $0x8] sm:$0xff]
  %v6431 = vld [vmem:[%s6428 + $0x10] sm:$0xff]
  %v6432 = vld [vmem:[%s6428 + $0x18] sm:$0x3f]
  %v6434 = vsel %vm5234, %v5093, 0
  %v6437 = vsel %vm5234, %v5094, 0
  %v6440 = vsel %vm5234, %v5095, 0
  %v6443 = vsel %vm5234, %v5096, 0
  %v6446 = vsel %vm5234, %v5097, 0
  %v6449 = vsel %vm5234, %v5098, 0
  %v6452 = vsel %vm5234, %v5099, 0
  %v6455 = vsel %vm5234, %v5100, 0
  %v6458 = vsel %vm5234, %v5101, 0
  %v6461 = vsel %vm5234, %v5102, 0
  %v6464 = vsel %vm5234, %v5103, 0
  %v6467 = vsel %vm5234, %v5104, 0
  %v6470 = vsel %vm5234, %v5105, 0
  %v6473 = vsel %vm5234, %v5106, 0
  %v6476 = vsel %vm5234, %v5107, 0
  %v6479 = vsel %vm5234, %v5108, 0
  %v6482 = vsel %vm5234, %v5109, 0
  %v6485 = vsel %vm5234, %v5110, 0
  %v6488 = vsel %vm5234, %v5111, 0
  %v6491 = vsel %vm5234, %v5112, 0
  %v6494 = vsel %vm5234, %v5113, 0
  %v6497 = vsel %vm5234, %v5114, 0
  %v6500 = vsel %vm5234, %v5115, 0
  %v6503 = vsel %vm5234, %v5116, 0
  %v6506 = vsel %vm5234, %v5117, 0
  %v6509 = vsel %vm5234, %v5118, 0
  %v6512 = vsel %vm5234, %v5119, 0
  %v6515 = vsel %vm5234, %v5120, 0
  %v6518 = vsel %vm5234, %v5121, 0
  %v6521 = vsel %vm5234, %v5122, 0
  %v6524 = vsel %vm5234, %v5123, 0
  %v6527 = vsel %vm5234, %v5124, 0
  %v6530 = vsel %vm5234, %v5125, 0
  %v6533 = vsel %vm5234, %v5126, 0
  %v6536 = vsel %vm5234, %v5127, 0
  %v6539 = vsel %vm5234, %v5128, 0
  %v6542 = vsel %vm5234, %v5129, 0
  %v6545 = vsel %vm5234, %v5130, 0
  %v6548 = vsel %vm5234, %v5131, 0
  %v6551 = vsel %vm5234, %v5132, 0
  %v6554 = vsel %vm5234, %v5133, 0
  %v6557 = vsel %vm5234, %v5134, 0
  %v6560 = vsel %vm5234, %v5135, 0
  %v6563 = vsel %vm5234, %v5136, 0
  %v6566 = vsel %vm5234, %v5137, 0
  %v6569 = vsel %vm5234, %v5138, 0
  %v6572 = vsel %vm5234, %v5139, 0
  %v6575 = vsel %vm5234, %v5140, 0
  %v6578 = vsel %vm5234, %v5141, 0
  %v6581 = vsel %vm5234, %v5142, 0
  %v6584 = vsel %vm5234, %v5143, 0
  %v6587 = vsel %vm5234, %v5144, 0
  %v6590 = vsel %vm5234, %v5145, 0
  %v6593 = vsel %vm5234, %v5146, 0
  %v6596 = vsel %vm5234, %v5147, 0
  %v6599 = vsel %vm5234, %v5148, 0
  %v6602 = vsel %vm5234, %v5149, 0
  %v6605 = vsel %vm5234, %v5150, 0
  %v6608 = vsel %vm5234, %v5151, 0
  %v6611 = vsel %vm5234, %v5152, 0
  %v6614 = vsel %vm5234, %v5153, 0
  %v6617 = vsel %vm5234, %v5154, 0
  %v6620 = vsel %vm5234, %v5155, 0
  %v6623 = vsel %vm5234, %v5156, 0
  %v6626 = vsel %vm5234, %v5157, 0
  %v6629 = vsel %vm5234, %v5158, 0
  %v6632 = vsel %vm5433, %v6432, 0
  %6634 = vmatprep.subr.mxu0 0.0
  %6635 = vmatpush1.msra.mxu0 0.0
  %6636 = vmatprep.subr.mxu0 0.0
  %6637 = vmatpush1.msra.mxu0 0.0
  %6638 = vmatprep.subr.mxu0 0.0
  %6639 = vmatpush1.msra.mxu0 0.0
  %6640 = vmatprep.subr.mxu0 0.0
  %6641 = vmatpush1.msra.mxu0 0.0
  %6642 = vmatprep.subr.mxu0 0.0
  %6643 = vmatpush1.msra.mxu0 0.0
  %6644 = vmatprep.subr.mxu0 0.0
  %6645 = vmatpush1.msra.mxu0 0.0
  %6646 = vmatprep.subr.mxu0 0.0
  %6647 = vmatpush1.msra.mxu0 0.0
  %6648 = vmatprep.subr.mxu0 0.0
  %6649 = vmatpush1.msra.mxu0 0.0
  %6650 = vmatprep.subr.mxu0 0.0
  %6651 = vmatpush1.msra.mxu0 0.0
  %6652 = vmatprep.subr.mxu0 0.0
  %6653 = vmatpush1.msra.mxu0 0.0
  %6654 = vmatprep.subr.mxu0 0.0
  %6655 = vmatpush1.msra.mxu0 0.0
  %6656 = vmatprep.subr.mxu0 0.0
  %6657 = vmatpush1.msra.mxu0 0.0
  %6658 = vmatprep.subr.mxu0 0.0
  %6659 = vmatpush1.msra.mxu0 %v6632
  %6660 = vmatprep.subr.mxu0 0.0
  %6661 = vmatpush1.msra.mxu0 %v6431
  %6662 = vmatprep.subr.mxu0 0.0
  %6663 = vmatpush1.msra.mxu0 %v6430
  %6664 = vmatprep.subr.mxu0 0.0
  %6665 = vmatpush1.msra.mxu0 %v6429
  %6666 = vmatprep.subr.mxu0 0.0
  %6667 = vmatpush2.msra.mxu0 0.0
  %6668 = vmatprep.subr.mxu0 0.0
  %6669 = vmatpush2.msra.mxu0 0.0
  %6670 = vmatprep.subr.mxu0 0.0
  %6671 = vmatpush2.msra.mxu0 0.0
  %6672 = vmatprep.subr.mxu0 0.0
  %6673 = vmatpush2.msra.mxu0 0.0
  %6674 = vmatprep.subr.mxu0 0.0
  %6675 = vmatpush2.msra.mxu0 0.0
  %6676 = vmatprep.subr.mxu0 0.0
  %6677 = vmatpush2.msra.mxu0 0.0
  %6678 = vmatprep.subr.mxu0 0.0
  %6679 = vmatpush2.msra.mxu0 0.0
  %6680 = vmatprep.subr.mxu0 0.0
  %6681 = vmatpush2.msra.mxu0 0.0
  %6682 = vmatprep.subr.mxu0 0.0
  %6683 = vmatpush2.msra.mxu0 0.0
  %6684 = vmatprep.subr.mxu0 0.0
  %6685 = vmatpush2.msra.mxu0 0.0
  %6686 = vmatprep.subr.mxu0 0.0
  %6687 = vmatpush2.msra.mxu0 0.0
  %6688 = vmatprep.subr.mxu0 0.0
  %6689 = vmatpush2.msra.mxu0 0.0
  %6690 = vmatprep.subr.mxu0 0.0
  %6691 = vmatpush2.msra.mxu0 0.0
  %6692 = vmatprep.subr.mxu0 0.0
  %6693 = vmatpush2.msra.mxu0 0.0
  %6694 = vmatprep.subr.mxu0 0.0
  %6695 = vmatpush2.msra.mxu0 0.0
  %6696 = vmatprep.subr.mxu0 0.0
  %6697 = vmatpush2.msra.mxu0 0.0
  %6698 = vmatprep.mubr.f32.mxu0 0.0
  %6699 = vmatmul.mubr.f32.gmra.mxu0 %v6434
  %v6700 = vpop.f32.mrf.mxu0
  %v6701 = vadd.f32 0.0, %v6700
  %v6702 = vpop.f32.mrf.mxu0
  %6703 = vmatprep.mubr.f32.mxu0 0.0
  %6704 = vmatmul.mubr.f32.gmra.mxu0 %v6437
  %v6705 = vpop.f32.mrf.mxu0
  %v6706 = vadd.f32 0.0, %v6705
  %v6707 = vpop.f32.mrf.mxu0
  %6708 = vmatprep.mubr.f32.mxu0 0.0
  %6709 = vmatmul.mubr.f32.gmra.mxu0 %v6440
  %v6710 = vpop.f32.mrf.mxu0
  %v6711 = vadd.f32 0.0, %v6710
  %v6712 = vpop.f32.mrf.mxu0
  %6713 = vmatprep.mubr.f32.mxu0 0.0
  %6714 = vmatmul.mubr.f32.gmra.mxu0 %v6443
  %v6715 = vpop.f32.mrf.mxu0
  %v6716 = vadd.f32 0.0, %v6715
  %v6717 = vpop.f32.mrf.mxu0
  %6718 = vmatprep.mubr.f32.mxu0 0.0
  %6719 = vmatmul.mubr.f32.gmra.mxu0 %v6446
  %v6720 = vpop.f32.mrf.mxu0
  %v6721 = vadd.f32 0.0, %v6720
  %v6722 = vpop.f32.mrf.mxu0
  %6723 = vmatprep.mubr.f32.mxu0 0.0
  %6724 = vmatmul.mubr.f32.gmra.mxu0 %v6449
  %v6725 = vpop.f32.mrf.mxu0
  %v6726 = vadd.f32 0.0, %v6725
  %v6727 = vpop.f32.mrf.mxu0
  %6728 = vmatprep.mubr.f32.mxu0 0.0
  %6729 = vmatmul.mubr.f32.gmra.mxu0 %v6452
  %v6730 = vpop.f32.mrf.mxu0
  %v6731 = vadd.f32 0.0, %v6730
  %v6732 = vpop.f32.mrf.mxu0
  %6733 = vmatprep.mubr.f32.mxu0 0.0
  %6734 = vmatmul.mubr.f32.gmra.mxu0 %v6455
  %v6735 = vpop.f32.mrf.mxu0
  %v6736 = vadd.f32 0.0, %v6735
  %v6737 = vpop.f32.mrf.mxu0
  %6738 = vmatprep.mubr.f32.mxu0 0.0
  %6739 = vmatmul.mubr.f32.gmra.mxu0 %v6458
  %v6740 = vpop.f32.mrf.mxu0
  %v6741 = vadd.f32 0.0, %v6740
  %v6742 = vpop.f32.mrf.mxu0
  %6743 = vmatprep.mubr.f32.mxu0 0.0
  %6744 = vmatmul.mubr.f32.gmra.mxu0 %v6461
  %v6745 = vpop.f32.mrf.mxu0
  %v6746 = vadd.f32 0.0, %v6745
  %v6747 = vpop.f32.mrf.mxu0
  %6748 = vmatprep.mubr.f32.mxu0 0.0
  %6749 = vmatmul.mubr.f32.gmra.mxu0 %v6464
  %v6750 = vpop.f32.mrf.mxu0
  %v6751 = vadd.f32 0.0, %v6750
  %v6752 = vpop.f32.mrf.mxu0
  %6753 = vmatprep.mubr.f32.mxu0 0.0
  %6754 = vmatmul.mubr.f32.gmra.mxu0 %v6467
  %v6755 = vpop.f32.mrf.mxu0
  %v6756 = vadd.f32 0.0, %v6755
  %v6757 = vpop.f32.mrf.mxu0
  %6758 = vmatprep.mubr.f32.mxu0 0.0
  %6759 = vmatmul.mubr.f32.gmra.mxu0 %v6470
  %v6760 = vpop.f32.mrf.mxu0
  %v6761 = vadd.f32 0.0, %v6760
  %v6762 = vpop.f32.mrf.mxu0
  %6763 = vmatprep.mubr.f32.mxu0 0.0
  %6764 = vmatmul.mubr.f32.gmra.mxu0 %v6473
  %v6765 = vpop.f32.mrf.mxu0
  %v6766 = vadd.f32 0.0, %v6765
  %v6767 = vpop.f32.mrf.mxu0
  %6768 = vmatprep.mubr.f32.mxu0 0.0
  %6769 = vmatmul.mubr.f32.gmra.mxu0 %v6476
  %v6770 = vpop.f32.mrf.mxu0
  %v6771 = vadd.f32 0.0, %v6770
  %v6772 = vpop.f32.mrf.mxu0
  %6773 = vmatprep.mubr.f32.mxu0 0.0
  %6774 = vmatmul.mubr.f32.gmra.mxu0 %v6479
  %v6775 = vpop.f32.mrf.mxu0
  %v6776 = vadd.f32 0.0, %v6775
  %v6777 = vpop.f32.mrf.mxu0
  %6778 = vmatprep.mubr.f32.mxu0 0.0
  %6779 = vmatmul.mubr.f32.gmra.mxu0 %v6482
  %v6780 = vpop.f32.mrf.mxu0
  %v6781 = vadd.f32 0.0, %v6780
  %v6782 = vpop.f32.mrf.mxu0
  %6783 = vmatprep.mubr.f32.mxu0 0.0
  %6784 = vmatmul.mubr.f32.gmra.mxu0 %v6485
  %v6785 = vpop.f32.mrf.mxu0
  %v6786 = vadd.f32 0.0, %v6785
  %v6787 = vpop.f32.mrf.mxu0
  %6788 = vmatprep.mubr.f32.mxu0 0.0
  %6789 = vmatmul.mubr.f32.gmra.mxu0 %v6488
  %v6790 = vpop.f32.mrf.mxu0
  %v6791 = vadd.f32 0.0, %v6790
  %v6792 = vpop.f32.mrf.mxu0
  %6793 = vmatprep.mubr.f32.mxu0 0.0
  %6794 = vmatmul.mubr.f32.gmra.mxu0 %v6491
  %v6795 = vpop.f32.mrf.mxu0
  %v6796 = vadd.f32 0.0, %v6795
  %v6797 = vpop.f32.mrf.mxu0
  %6798 = vmatprep.mubr.f32.mxu0 0.0
  %6799 = vmatmul.mubr.f32.gmra.mxu0 %v6494
  %v6800 = vpop.f32.mrf.mxu0
  %v6801 = vadd.f32 0.0, %v6800
  %v6802 = vpop.f32.mrf.mxu0
  %6803 = vmatprep.mubr.f32.mxu0 0.0
  %6804 = vmatmul.mubr.f32.gmra.mxu0 %v6497
  %v6805 = vpop.f32.mrf.mxu0
  %v6806 = vadd.f32 0.0, %v6805
  %v6807 = vpop.f32.mrf.mxu0
  %6808 = vmatprep.mubr.f32.mxu0 0.0
  %6809 = vmatmul.mubr.f32.gmra.mxu0 %v6500
  %v6810 = vpop.f32.mrf.mxu0
  %v6811 = vadd.f32 0.0, %v6810
  %v6812 = vpop.f32.mrf.mxu0
  %6813 = vmatprep.mubr.f32.mxu0 0.0
  %6814 = vmatmul.mubr.f32.gmra.mxu0 %v6503
  %v6815 = vpop.f32.mrf.mxu0
  %v6816 = vadd.f32 0.0, %v6815
  %v6817 = vpop.f32.mrf.mxu0
  %6818 = vmatprep.mubr.f32.mxu0 0.0
  %6819 = vmatmul.mubr.f32.gmra.mxu0 %v6506
  %v6820 = vpop.f32.mrf.mxu0
  %v6821 = vadd.f32 0.0, %v6820
  %v6822 = vpop.f32.mrf.mxu0
  %6823 = vmatprep.mubr.f32.mxu0 0.0
  %6824 = vmatmul.mubr.f32.gmra.mxu0 %v6509
  %v6825 = vpop.f32.mrf.mxu0
  %v6826 = vadd.f32 0.0, %v6825
  %v6827 = vpop.f32.mrf.mxu0
  %6828 = vmatprep.mubr.f32.mxu0 0.0
  %6829 = vmatmul.mubr.f32.gmra.mxu0 %v6512
  %v6830 = vpop.f32.mrf.mxu0
  %v6831 = vadd.f32 0.0, %v6830
  %v6832 = vpop.f32.mrf.mxu0
  %6833 = vmatprep.mubr.f32.mxu0 0.0
  %6834 = vmatmul.mubr.f32.gmra.mxu0 %v6515
  %v6835 = vpop.f32.mrf.mxu0
  %v6836 = vadd.f32 0.0, %v6835
  %v6837 = vpop.f32.mrf.mxu0
  %6838 = vmatprep.mubr.f32.mxu0 0.0
  %6839 = vmatmul.mubr.f32.gmra.mxu0 %v6518
  %v6840 = vpop.f32.mrf.mxu0
  %v6841 = vadd.f32 0.0, %v6840
  %v6842 = vpop.f32.mrf.mxu0
  %6843 = vmatprep.mubr.f32.mxu0 0.0
  %6844 = vmatmul.mubr.f32.gmra.mxu0 %v6521
  %v6845 = vpop.f32.mrf.mxu0
  %v6846 = vadd.f32 0.0, %v6845
  %v6847 = vpop.f32.mrf.mxu0
  %6848 = vmatprep.mubr.f32.mxu0 0.0
  %6849 = vmatmul.mubr.f32.gmra.mxu0 %v6524
  %v6850 = vpop.f32.mrf.mxu0
  %v6851 = vadd.f32 0.0, %v6850
  %v6852 = vpop.f32.mrf.mxu0
  %6853 = vmatprep.mubr.f32.mxu0 0.0
  %6854 = vmatmul.mubr.f32.gmra.mxu0 %v6527
  %v6855 = vpop.f32.mrf.mxu0
  %v6856 = vadd.f32 0.0, %v6855
  %v6857 = vpop.f32.mrf.mxu0
  %6858 = vmatprep.mubr.f32.mxu0 0.0
  %6859 = vmatmul.mubr.f32.gmra.mxu0 %v6530
  %v6860 = vpop.f32.mrf.mxu0
  %v6861 = vadd.f32 0.0, %v6860
  %v6862 = vpop.f32.mrf.mxu0
  %6863 = vmatprep.mubr.f32.mxu0 0.0
  %6864 = vmatmul.mubr.f32.gmra.mxu0 %v6533
  %v6865 = vpop.f32.mrf.mxu0
  %v6866 = vadd.f32 0.0, %v6865
  %v6867 = vpop.f32.mrf.mxu0
  %6868 = vmatprep.mubr.f32.mxu0 0.0
  %6869 = vmatmul.mubr.f32.gmra.mxu0 %v6536
  %v6870 = vpop.f32.mrf.mxu0
  %v6871 = vadd.f32 0.0, %v6870
  %v6872 = vpop.f32.mrf.mxu0
  %6873 = vmatprep.mubr.f32.mxu0 0.0
  %6874 = vmatmul.mubr.f32.gmra.mxu0 %v6539
  %v6875 = vpop.f32.mrf.mxu0
  %v6876 = vadd.f32 0.0, %v6875
  %v6877 = vpop.f32.mrf.mxu0
  %6878 = vmatprep.mubr.f32.mxu0 0.0
  %6879 = vmatmul.mubr.f32.gmra.mxu0 %v6542
  %v6880 = vpop.f32.mrf.mxu0
  %v6881 = vadd.f32 0.0, %v6880
  %v6882 = vpop.f32.mrf.mxu0
  %6883 = vmatprep.mubr.f32.mxu0 0.0
  %6884 = vmatmul.mubr.f32.gmra.mxu0 %v6545
  %v6885 = vpop.f32.mrf.mxu0
  %v6886 = vadd.f32 0.0, %v6885
  %v6887 = vpop.f32.mrf.mxu0
  %6888 = vmatprep.mubr.f32.mxu0 0.0
  %6889 = vmatmul.mubr.f32.gmra.mxu0 %v6548
  %v6890 = vpop.f32.mrf.mxu0
  %v6891 = vadd.f32 0.0, %v6890
  %v6892 = vpop.f32.mrf.mxu0
  %6893 = vmatprep.mubr.f32.mxu0 0.0
  %6894 = vmatmul.mubr.f32.gmra.mxu0 %v6551
  %v6895 = vpop.f32.mrf.mxu0
  %v6896 = vadd.f32 0.0, %v6895
  %v6897 = vpop.f32.mrf.mxu0
  %6898 = vmatprep.mubr.f32.mxu0 0.0
  %6899 = vmatmul.mubr.f32.gmra.mxu0 %v6554
  %v6900 = vpop.f32.mrf.mxu0
  %v6901 = vadd.f32 0.0, %v6900
  %v6902 = vpop.f32.mrf.mxu0
  %6903 = vmatprep.mubr.f32.mxu0 0.0
  %6904 = vmatmul.mubr.f32.gmra.mxu0 %v6557
  %v6905 = vpop.f32.mrf.mxu0
  %v6906 = vadd.f32 0.0, %v6905
  %v6907 = vpop.f32.mrf.mxu0
  %6908 = vmatprep.mubr.f32.mxu0 0.0
  %6909 = vmatmul.mubr.f32.gmra.mxu0 %v6560
  %v6910 = vpop.f32.mrf.mxu0
  %v6911 = vadd.f32 0.0, %v6910
  %v6912 = vpop.f32.mrf.mxu0
  %6913 = vmatprep.mubr.f32.mxu0 0.0
  %6914 = vmatmul.mubr.f32.gmra.mxu0 %v6563
  %v6915 = vpop.f32.mrf.mxu0
  %v6916 = vadd.f32 0.0, %v6915
  %v6917 = vpop.f32.mrf.mxu0
  %6918 = vmatprep.mubr.f32.mxu0 0.0
  %6919 = vmatmul.mubr.f32.gmra.mxu0 %v6566
  %v6920 = vpop.f32.mrf.mxu0
  %v6921 = vadd.f32 0.0, %v6920
  %v6922 = vpop.f32.mrf.mxu0
  %6923 = vmatprep.mubr.f32.mxu0 0.0
  %6924 = vmatmul.mubr.f32.gmra.mxu0 %v6569
  %v6925 = vpop.f32.mrf.mxu0
  %v6926 = vadd.f32 0.0, %v6925
  %v6927 = vpop.f32.mrf.mxu0
  %6928 = vmatprep.mubr.f32.mxu0 0.0
  %6929 = vmatmul.mubr.f32.gmra.mxu0 %v6572
  %v6930 = vpop.f32.mrf.mxu0
  %v6931 = vadd.f32 0.0, %v6930
  %v6932 = vpop.f32.mrf.mxu0
  %6933 = vmatprep.mubr.f32.mxu0 0.0
  %6934 = vmatmul.mubr.f32.gmra.mxu0 %v6575
  %v6935 = vpop.f32.mrf.mxu0
  %v6936 = vadd.f32 0.0, %v6935
  %v6937 = vpop.f32.mrf.mxu0
  %6938 = vmatprep.mubr.f32.mxu0 0.0
  %6939 = vmatmul.mubr.f32.gmra.mxu0 %v6578
  %v6940 = vpop.f32.mrf.mxu0
  %v6941 = vadd.f32 0.0, %v6940
  %v6942 = vpop.f32.mrf.mxu0
  %6943 = vmatprep.mubr.f32.mxu0 0.0
  %6944 = vmatmul.mubr.f32.gmra.mxu0 %v6581
  %v6945 = vpop.f32.mrf.mxu0
  %v6946 = vadd.f32 0.0, %v6945
  %v6947 = vpop.f32.mrf.mxu0
  %6948 = vmatprep.mubr.f32.mxu0 0.0
  %6949 = vmatmul.mubr.f32.gmra.mxu0 %v6584
  %v6950 = vpop.f32.mrf.mxu0
  %v6951 = vadd.f32 0.0, %v6950
  %v6952 = vpop.f32.mrf.mxu0
  %6953 = vmatprep.mubr.f32.mxu0 0.0
  %6954 = vmatmul.mubr.f32.gmra.mxu0 %v6587
  %v6955 = vpop.f32.mrf.mxu0
  %v6956 = vadd.f32 0.0, %v6955
  %v6957 = vpop.f32.mrf.mxu0
  %6958 = vmatprep.mubr.f32.mxu0 0.0
  %6959 = vmatmul.mubr.f32.gmra.mxu0 %v6590
  %v6960 = vpop.f32.mrf.mxu0
  %v6961 = vadd.f32 0.0, %v6960
  %v6962 = vpop.f32.mrf.mxu0
  %6963 = vmatprep.mubr.f32.mxu0 0.0
  %6964 = vmatmul.mubr.f32.gmra.mxu0 %v6593
  %v6965 = vpop.f32.mrf.mxu0
  %v6966 = vadd.f32 0.0, %v6965
  %v6967 = vpop.f32.mrf.mxu0
  %6968 = vmatprep.mubr.f32.mxu0 0.0
  %6969 = vmatmul.mubr.f32.gmra.mxu0 %v6596
  %v6970 = vpop.f32.mrf.mxu0
  %v6971 = vadd.f32 0.0, %v6970
  %v6972 = vpop.f32.mrf.mxu0
  %6973 = vmatprep.mubr.f32.mxu0 0.0
  %6974 = vmatmul.mubr.f32.gmra.mxu0 %v6599
  %v6975 = vpop.f32.mrf.mxu0
  %v6976 = vadd.f32 0.0, %v6975
  %v6977 = vpop.f32.mrf.mxu0
  %6978 = vmatprep.mubr.f32.mxu0 0.0
  %6979 = vmatmul.mubr.f32.gmra.mxu0 %v6602
  %v6980 = vpop.f32.mrf.mxu0
  %v6981 = vadd.f32 0.0, %v6980
  %v6982 = vpop.f32.mrf.mxu0
  %6983 = vmatprep.mubr.f32.mxu0 0.0
  %6984 = vmatmul.mubr.f32.gmra.mxu0 %v6605
  %v6985 = vpop.f32.mrf.mxu0
  %v6986 = vadd.f32 0.0, %v6985
  %v6987 = vpop.f32.mrf.mxu0
  %6988 = vmatprep.mubr.f32.mxu0 0.0
  %6989 = vmatmul.mubr.f32.gmra.mxu0 %v6608
  %v6990 = vpop.f32.mrf.mxu0
  %v6991 = vadd.f32 0.0, %v6990
  %v6992 = vpop.f32.mrf.mxu0
  %6993 = vmatprep.mubr.f32.mxu0 0.0
  %6994 = vmatmul.mubr.f32.gmra.mxu0 %v6611
  %v6995 = vpop.f32.mrf.mxu0
  %v6996 = vadd.f32 0.0, %v6995
  %v6997 = vpop.f32.mrf.mxu0
  %6998 = vmatprep.mubr.f32.mxu0 0.0
  %6999 = vmatmul.mubr.f32.gmra.mxu0 %v6614
  %v7000 = vpop.f32.mrf.mxu0
  %v7001 = vadd.f32 0.0, %v7000
  %v7002 = vpop.f32.mrf.mxu0
  %7003 = vmatprep.mubr.f32.mxu0 0.0
  %7004 = vmatmul.mubr.f32.gmra.mxu0 %v6617
  %v7005 = vpop.f32.mrf.mxu0
  %v7006 = vadd.f32 0.0, %v7005
  %v7007 = vpop.f32.mrf.mxu0
  %7008 = vmatprep.mubr.f32.mxu0 0.0
  %7009 = vmatmul.mubr.f32.gmra.mxu0 %v6620
  %v7010 = vpop.f32.mrf.mxu0
  %v7011 = vadd.f32 0.0, %v7010
  %v7012 = vpop.f32.mrf.mxu0
  %7013 = vmatprep.mubr.f32.mxu0 0.0
  %7014 = vmatmul.mubr.f32.gmra.mxu0 %v6623
  %v7015 = vpop.f32.mrf.mxu0
  %v7016 = vadd.f32 0.0, %v7015
  %v7017 = vpop.f32.mrf.mxu0
  %7018 = vmatprep.mubr.f32.mxu0 0.0
  %7019 = vmatmul.mubr.f32.gmra.mxu0 %v6626
  %v7020 = vpop.f32.mrf.mxu0
  %v7021 = vadd.f32 0.0, %v7020
  %v7022 = vpop.f32.mrf.mxu0
  %7023 = vmatprep.mubr.f32.mxu0 0.0
  %7024 = vmatmul.mubr.f32.gmra.mxu0 %v6629
  %v7025 = vpop.f32.mrf.mxu0
  %v7026 = vadd.f32 0.0, %v7025
  %v7027 = vpop.f32.mrf.mxu0
  %7028 = vdwg.mxu0
  %v7029 = vadd.f32 %v6100, %v6701
  %v7030 = vadd.f32 %v6105, %v6706
  %v7031 = vadd.f32 %v6110, %v6711
  %v7032 = vadd.f32 %v6115, %v6716
  %v7033 = vadd.f32 %v6120, %v6721
  %v7034 = vadd.f32 %v6125, %v6726
  %v7035 = vadd.f32 %v6130, %v6731
  %v7036 = vadd.f32 %v6135, %v6736
  %v7037 = vadd.f32 %v6140, %v6741
  %v7038 = vadd.f32 %v6145, %v6746
  %v7039 = vadd.f32 %v6150, %v6751
  %v7040 = vadd.f32 %v6155, %v6756
  %v7041 = vadd.f32 %v6160, %v6761
  %v7042 = vadd.f32 %v6165, %v6766
  %v7043 = vadd.f32 %v6170, %v6771
  %v7044 = vadd.f32 %v6175, %v6776
  %v7045 = vadd.f32 %v6180, %v6781
  %v7046 = vadd.f32 %v6185, %v6786
  %v7047 = vadd.f32 %v6190, %v6791
  %v7048 = vadd.f32 %v6195, %v6796
  %v7049 = vadd.f32 %v6200, %v6801
  %v7050 = vadd.f32 %v6205, %v6806
  %v7051 = vadd.f32 %v6210, %v6811
  %v7052 = vadd.f32 %v6215, %v6816
  %v7053 = vadd.f32 %v6220, %v6821
  %v7054 = vadd.f32 %v6225, %v6826
  %v7055 = vadd.f32 %v6230, %v6831
  %v7056 = vadd.f32 %v6235, %v6836
  %v7057 = vadd.f32 %v6240, %v6841
  %v7058 = vadd.f32 %v6245, %v6846
  %v7059 = vadd.f32 %v6250, %v6851
  %v7060 = vadd.f32 %v6255, %v6856
  %v7061 = vadd.f32 %v6260, %v6861
  %v7062 = vadd.f32 %v6265, %v6866
  %v7063 = vadd.f32 %v6270, %v6871
  %v7064 = vadd.f32 %v6275, %v6876
  %v7065 = vadd.f32 %v6280, %v6881
  %v7066 = vadd.f32 %v6285, %v6886
  %v7067 = vadd.f32 %v6290, %v6891
  %v7068 = vadd.f32 %v6295, %v6896
  %v7069 = vadd.f32 %v6300, %v6901
  %v7070 = vadd.f32 %v6305, %v6906
  %v7071 = vadd.f32 %v6310, %v6911
  %v7072 = vadd.f32 %v6315, %v6916
  %v7073 = vadd.f32 %v6320, %v6921
  %v7074 = vadd.f32 %v6325, %v6926
  %v7075 = vadd.f32 %v6330, %v6931
  %v7076 = vadd.f32 %v6335, %v6936
  %v7077 = vadd.f32 %v6340, %v6941
  %v7078 = vadd.f32 %v6345, %v6946
  %v7079 = vadd.f32 %v6350, %v6951
  %v7080 = vadd.f32 %v6355, %v6956
  %v7081 = vadd.f32 %v6360, %v6961
  %v7082 = vadd.f32 %v6365, %v6966
  %v7083 = vadd.f32 %v6370, %v6971
  %v7084 = vadd.f32 %v6375, %v6976
  %v7085 = vadd.f32 %v6380, %v6981
  %v7086 = vadd.f32 %v6385, %v6986
  %v7087 = vadd.f32 %v6390, %v6991
  %v7088 = vadd.f32 %v6395, %v6996
  %v7089 = vadd.f32 %v6400, %v7001
  %v7090 = vadd.f32 %v6405, %v7006
  %v7091 = vadd.f32 %v6410, %v7011
  %v7092 = vadd.f32 %v6415, %v7016
  %v7093 = vadd.f32 %v6420, %v7021
  %v7094 = vadd.f32 %v6425, %v7026
  %s7095 = scalar_lea.vmem %s5, 96
  %v7096 = vld [vmem:[%s7095] sm:$0xff]
  %v7097 = vld [vmem:[%s7095 + $0x8] sm:$0xff]
  %v7098 = vld [vmem:[%s7095 + $0x10] sm:$0xff]
  %v7099 = vld [vmem:[%s7095 + $0x18] sm:$0x3f]
  %v7101 = vsel %vm5234, %v5159, 0
  %v7104 = vsel %vm5234, %v5160, 0
  %v7107 = vsel %vm5234, %v5161, 0
  %v7110 = vsel %vm5234, %v5162, 0
  %v7113 = vsel %vm5234, %v5163, 0
  %v7116 = vsel %vm5234, %v5164, 0
  %v7119 = vsel %vm5234, %v5165, 0
  %v7122 = vsel %vm5234, %v5166, 0
  %v7125 = vsel %vm5234, %v5167, 0
  %v7128 = vsel %vm5234, %v5168, 0
  %v7131 = vsel %vm5234, %v5169, 0
  %v7134 = vsel %vm5234, %v5170, 0
  %v7137 = vsel %vm5234, %v5171, 0
  %v7140 = vsel %vm5234, %v5172, 0
  %v7143 = vsel %vm5234, %v5173, 0
  %v7146 = vsel %vm5234, %v5174, 0
  %v7149 = vsel %vm5234, %v5175, 0
  %v7152 = vsel %vm5234, %v5176, 0
  %v7155 = vsel %vm5234, %v5177, 0
  %v7158 = vsel %vm5234, %v5178, 0
  %v7161 = vsel %vm5234, %v5179, 0
  %v7164 = vsel %vm5234, %v5180, 0
  %v7167 = vsel %vm5234, %v5181, 0
  %v7170 = vsel %vm5234, %v5182, 0
  %v7173 = vsel %vm5234, %v5183, 0
  %v7176 = vsel %vm5234, %v5184, 0
  %v7179 = vsel %vm5234, %v5185, 0
  %v7182 = vsel %vm5234, %v5186, 0
  %v7185 = vsel %vm5234, %v5187, 0
  %v7188 = vsel %vm5234, %v5188, 0
  %v7191 = vsel %vm5234, %v5189, 0
  %v7194 = vsel %vm5234, %v5190, 0
  %v7197 = vsel %vm5234, %v5191, 0
  %v7200 = vsel %vm5234, %v5192, 0
  %v7203 = vsel %vm5234, %v5193, 0
  %v7206 = vsel %vm5234, %v5194, 0
  %v7209 = vsel %vm5234, %v5195, 0
  %v7212 = vsel %vm5234, %v5196, 0
  %v7215 = vsel %vm5234, %v5197, 0
  %v7218 = vsel %vm5234, %v5198, 0
  %v7221 = vsel %vm5234, %v5199, 0
  %v7224 = vsel %vm5234, %v5200, 0
  %v7227 = vsel %vm5234, %v5201, 0
  %v7230 = vsel %vm5234, %v5202, 0
  %v7233 = vsel %vm5234, %v5203, 0
  %v7236 = vsel %vm5234, %v5204, 0
  %v7239 = vsel %vm5234, %v5205, 0
  %v7242 = vsel %vm5234, %v5206, 0
  %v7245 = vsel %vm5234, %v5207, 0
  %v7248 = vsel %vm5234, %v5208, 0
  %v7251 = vsel %vm5234, %v5209, 0
  %v7254 = vsel %vm5234, %v5210, 0
  %v7257 = vsel %vm5234, %v5211, 0
  %v7260 = vsel %vm5234, %v5212, 0
  %v7263 = vsel %vm5234, %v5213, 0
  %v7266 = vsel %vm5234, %v5214, 0
  %v7269 = vsel %vm5234, %v5215, 0
  %v7272 = vsel %vm5234, %v5216, 0
  %v7275 = vsel %vm5234, %v5217, 0
  %v7278 = vsel %vm5234, %v5218, 0
  %v7281 = vsel %vm5234, %v5219, 0
  %v7284 = vsel %vm5234, %v5220, 0
  %v7287 = vsel %vm5234, %v5221, 0
  %v7290 = vsel %vm5234, %v5222, 0
  %v7293 = vsel %vm5234, %v5223, 0
  %v7296 = vsel %vm5234, %v5224, 0
  %v7299 = vsel %vm5433, %v7099, 0
  %7301 = vmatprep.subr.mxu0 0.0
  %7302 = vmatpush1.msra.mxu0 0.0
  %7303 = vmatprep.subr.mxu0 0.0
  %7304 = vmatpush1.msra.mxu0 0.0
  %7305 = vmatprep.subr.mxu0 0.0
  %7306 = vmatpush1.msra.mxu0 0.0
  %7307 = vmatprep.subr.mxu0 0.0
  %7308 = vmatpush1.msra.mxu0 0.0
  %7309 = vmatprep.subr.mxu0 0.0
  %7310 = vmatpush1.msra.mxu0 0.0
  %7311 = vmatprep.subr.mxu0 0.0
  %7312 = vmatpush1.msra.mxu0 0.0
  %7313 = vmatprep.subr.mxu0 0.0
  %7314 = vmatpush1.msra.mxu0 0.0
  %7315 = vmatprep.subr.mxu0 0.0
  %7316 = vmatpush1.msra.mxu0 0.0
  %7317 = vmatprep.subr.mxu0 0.0
  %7318 = vmatpush1.msra.mxu0 0.0
  %7319 = vmatprep.subr.mxu0 0.0
  %7320 = vmatpush1.msra.mxu0 0.0
  %7321 = vmatprep.subr.mxu0 0.0
  %7322 = vmatpush1.msra.mxu0 0.0
  %7323 = vmatprep.subr.mxu0 0.0
  %7324 = vmatpush1.msra.mxu0 0.0
  %7325 = vmatprep.subr.mxu0 0.0
  %7326 = vmatpush1.msra.mxu0 %v7299
  %7327 = vmatprep.subr.mxu0 0.0
  %7328 = vmatpush1.msra.mxu0 %v7098
  %7329 = vmatprep.subr.mxu0 0.0
  %7330 = vmatpush1.msra.mxu0 %v7097
  %7331 = vmatprep.subr.mxu0 0.0
  %7332 = vmatpush1.msra.mxu0 %v7096
  %7333 = vmatprep.subr.mxu0 0.0
  %7334 = vmatpush2.msra.mxu0 0.0
  %7335 = vmatprep.subr.mxu0 0.0
  %7336 = vmatpush2.msra.mxu0 0.0
  %7337 = vmatprep.subr.mxu0 0.0
  %7338 = vmatpush2.msra.mxu0 0.0
  %7339 = vmatprep.subr.mxu0 0.0
  %7340 = vmatpush2.msra.mxu0 0.0
  %7341 = vmatprep.subr.mxu0 0.0
  %7342 = vmatpush2.msra.mxu0 0.0
  %7343 = vmatprep.subr.mxu0 0.0
  %7344 = vmatpush2.msra.mxu0 0.0
  %7345 = vmatprep.subr.mxu0 0.0
  %7346 = vmatpush2.msra.mxu0 0.0
  %7347 = vmatprep.subr.mxu0 0.0
  %7348 = vmatpush2.msra.mxu0 0.0
  %7349 = vmatprep.subr.mxu0 0.0
  %7350 = vmatpush2.msra.mxu0 0.0
  %7351 = vmatprep.subr.mxu0 0.0
  %7352 = vmatpush2.msra.mxu0 0.0
  %7353 = vmatprep.subr.mxu0 0.0
  %7354 = vmatpush2.msra.mxu0 0.0
  %7355 = vmatprep.subr.mxu0 0.0
  %7356 = vmatpush2.msra.mxu0 0.0
  %7357 = vmatprep.subr.mxu0 0.0
  %7358 = vmatpush2.msra.mxu0 0.0
  %7359 = vmatprep.subr.mxu0 0.0
  %7360 = vmatpush2.msra.mxu0 0.0
  %7361 = vmatprep.subr.mxu0 0.0
  %7362 = vmatpush2.msra.mxu0 0.0
  %7363 = vmatprep.subr.mxu0 0.0
  %7364 = vmatpush2.msra.mxu0 0.0
  %7365 = vmatprep.mubr.f32.mxu0 0.0
  %7366 = vmatmul.mubr.f32.gmra.mxu0 %v7101
  %v7367 = vpop.f32.mrf.mxu0
  %v7368 = vadd.f32 0.0, %v7367
  %v7369 = vpop.f32.mrf.mxu0
  %7370 = vmatprep.mubr.f32.mxu0 0.0
  %7371 = vmatmul.mubr.f32.gmra.mxu0 %v7104
  %v7372 = vpop.f32.mrf.mxu0
  %v7373 = vadd.f32 0.0, %v7372
  %v7374 = vpop.f32.mrf.mxu0
  %7375 = vmatprep.mubr.f32.mxu0 0.0
  %7376 = vmatmul.mubr.f32.gmra.mxu0 %v7107
  %v7377 = vpop.f32.mrf.mxu0
  %v7378 = vadd.f32 0.0, %v7377
  %v7379 = vpop.f32.mrf.mxu0
  %7380 = vmatprep.mubr.f32.mxu0 0.0
  %7381 = vmatmul.mubr.f32.gmra.mxu0 %v7110
  %v7382 = vpop.f32.mrf.mxu0
  %v7383 = vadd.f32 0.0, %v7382
  %v7384 = vpop.f32.mrf.mxu0
  %7385 = vmatprep.mubr.f32.mxu0 0.0
  %7386 = vmatmul.mubr.f32.gmra.mxu0 %v7113
  %v7387 = vpop.f32.mrf.mxu0
  %v7388 = vadd.f32 0.0, %v7387
  %v7389 = vpop.f32.mrf.mxu0
  %7390 = vmatprep.mubr.f32.mxu0 0.0
  %7391 = vmatmul.mubr.f32.gmra.mxu0 %v7116
  %v7392 = vpop.f32.mrf.mxu0
  %v7393 = vadd.f32 0.0, %v7392
  %v7394 = vpop.f32.mrf.mxu0
  %7395 = vmatprep.mubr.f32.mxu0 0.0
  %7396 = vmatmul.mubr.f32.gmra.mxu0 %v7119
  %v7397 = vpop.f32.mrf.mxu0
  %v7398 = vadd.f32 0.0, %v7397
  %v7399 = vpop.f32.mrf.mxu0
  %7400 = vmatprep.mubr.f32.mxu0 0.0
  %7401 = vmatmul.mubr.f32.gmra.mxu0 %v7122
  %v7402 = vpop.f32.mrf.mxu0
  %v7403 = vadd.f32 0.0, %v7402
  %v7404 = vpop.f32.mrf.mxu0
  %7405 = vmatprep.mubr.f32.mxu0 0.0
  %7406 = vmatmul.mubr.f32.gmra.mxu0 %v7125
  %v7407 = vpop.f32.mrf.mxu0
  %v7408 = vadd.f32 0.0, %v7407
  %v7409 = vpop.f32.mrf.mxu0
  %7410 = vmatprep.mubr.f32.mxu0 0.0
  %7411 = vmatmul.mubr.f32.gmra.mxu0 %v7128
  %v7412 = vpop.f32.mrf.mxu0
  %v7413 = vadd.f32 0.0, %v7412
  %v7414 = vpop.f32.mrf.mxu0
  %7415 = vmatprep.mubr.f32.mxu0 0.0
  %7416 = vmatmul.mubr.f32.gmra.mxu0 %v7131
  %v7417 = vpop.f32.mrf.mxu0
  %v7418 = vadd.f32 0.0, %v7417
  %v7419 = vpop.f32.mrf.mxu0
  %7420 = vmatprep.mubr.f32.mxu0 0.0
  %7421 = vmatmul.mubr.f32.gmra.mxu0 %v7134
  %v7422 = vpop.f32.mrf.mxu0
  %v7423 = vadd.f32 0.0, %v7422
  %v7424 = vpop.f32.mrf.mxu0
  %7425 = vmatprep.mubr.f32.mxu0 0.0
  %7426 = vmatmul.mubr.f32.gmra.mxu0 %v7137
  %v7427 = vpop.f32.mrf.mxu0
  %v7428 = vadd.f32 0.0, %v7427
  %v7429 = vpop.f32.mrf.mxu0
  %7430 = vmatprep.mubr.f32.mxu0 0.0
  %7431 = vmatmul.mubr.f32.gmra.mxu0 %v7140
  %v7432 = vpop.f32.mrf.mxu0
  %v7433 = vadd.f32 0.0, %v7432
  %v7434 = vpop.f32.mrf.mxu0
  %7435 = vmatprep.mubr.f32.mxu0 0.0
  %7436 = vmatmul.mubr.f32.gmra.mxu0 %v7143
  %v7437 = vpop.f32.mrf.mxu0
  %v7438 = vadd.f32 0.0, %v7437
  %v7439 = vpop.f32.mrf.mxu0
  %7440 = vmatprep.mubr.f32.mxu0 0.0
  %7441 = vmatmul.mubr.f32.gmra.mxu0 %v7146
  %v7442 = vpop.f32.mrf.mxu0
  %v7443 = vadd.f32 0.0, %v7442
  %v7444 = vpop.f32.mrf.mxu0
  %7445 = vmatprep.mubr.f32.mxu0 0.0
  %7446 = vmatmul.mubr.f32.gmra.mxu0 %v7149
  %v7447 = vpop.f32.mrf.mxu0
  %v7448 = vadd.f32 0.0, %v7447
  %v7449 = vpop.f32.mrf.mxu0
  %7450 = vmatprep.mubr.f32.mxu0 0.0
  %7451 = vmatmul.mubr.f32.gmra.mxu0 %v7152
  %v7452 = vpop.f32.mrf.mxu0
  %v7453 = vadd.f32 0.0, %v7452
  %v7454 = vpop.f32.mrf.mxu0
  %7455 = vmatprep.mubr.f32.mxu0 0.0
  %7456 = vmatmul.mubr.f32.gmra.mxu0 %v7155
  %v7457 = vpop.f32.mrf.mxu0
  %v7458 = vadd.f32 0.0, %v7457
  %v7459 = vpop.f32.mrf.mxu0
  %7460 = vmatprep.mubr.f32.mxu0 0.0
  %7461 = vmatmul.mubr.f32.gmra.mxu0 %v7158
  %v7462 = vpop.f32.mrf.mxu0
  %v7463 = vadd.f32 0.0, %v7462
  %v7464 = vpop.f32.mrf.mxu0
  %7465 = vmatprep.mubr.f32.mxu0 0.0
  %7466 = vmatmul.mubr.f32.gmra.mxu0 %v7161
  %v7467 = vpop.f32.mrf.mxu0
  %v7468 = vadd.f32 0.0, %v7467
  %v7469 = vpop.f32.mrf.mxu0
  %7470 = vmatprep.mubr.f32.mxu0 0.0
  %7471 = vmatmul.mubr.f32.gmra.mxu0 %v7164
  %v7472 = vpop.f32.mrf.mxu0
  %v7473 = vadd.f32 0.0, %v7472
  %v7474 = vpop.f32.mrf.mxu0
  %7475 = vmatprep.mubr.f32.mxu0 0.0
  %7476 = vmatmul.mubr.f32.gmra.mxu0 %v7167
  %v7477 = vpop.f32.mrf.mxu0
  %v7478 = vadd.f32 0.0, %v7477
  %v7479 = vpop.f32.mrf.mxu0
  %7480 = vmatprep.mubr.f32.mxu0 0.0
  %7481 = vmatmul.mubr.f32.gmra.mxu0 %v7170
  %v7482 = vpop.f32.mrf.mxu0
  %v7483 = vadd.f32 0.0, %v7482
  %v7484 = vpop.f32.mrf.mxu0
  %7485 = vmatprep.mubr.f32.mxu0 0.0
  %7486 = vmatmul.mubr.f32.gmra.mxu0 %v7173
  %v7487 = vpop.f32.mrf.mxu0
  %v7488 = vadd.f32 0.0, %v7487
  %v7489 = vpop.f32.mrf.mxu0
  %7490 = vmatprep.mubr.f32.mxu0 0.0
  %7491 = vmatmul.mubr.f32.gmra.mxu0 %v7176
  %v7492 = vpop.f32.mrf.mxu0
  %v7493 = vadd.f32 0.0, %v7492
  %v7494 = vpop.f32.mrf.mxu0
  %7495 = vmatprep.mubr.f32.mxu0 0.0
  %7496 = vmatmul.mubr.f32.gmra.mxu0 %v7179
  %v7497 = vpop.f32.mrf.mxu0
  %v7498 = vadd.f32 0.0, %v7497
  %v7499 = vpop.f32.mrf.mxu0
  %7500 = vmatprep.mubr.f32.mxu0 0.0
  %7501 = vmatmul.mubr.f32.gmra.mxu0 %v7182
  %v7502 = vpop.f32.mrf.mxu0
  %v7503 = vadd.f32 0.0, %v7502
  %v7504 = vpop.f32.mrf.mxu0
  %7505 = vmatprep.mubr.f32.mxu0 0.0
  %7506 = vmatmul.mubr.f32.gmra.mxu0 %v7185
  %v7507 = vpop.f32.mrf.mxu0
  %v7508 = vadd.f32 0.0, %v7507
  %v7509 = vpop.f32.mrf.mxu0
  %7510 = vmatprep.mubr.f32.mxu0 0.0
  %7511 = vmatmul.mubr.f32.gmra.mxu0 %v7188
  %v7512 = vpop.f32.mrf.mxu0
  %v7513 = vadd.f32 0.0, %v7512
  %v7514 = vpop.f32.mrf.mxu0
  %7515 = vmatprep.mubr.f32.mxu0 0.0
  %7516 = vmatmul.mubr.f32.gmra.mxu0 %v7191
  %v7517 = vpop.f32.mrf.mxu0
  %v7518 = vadd.f32 0.0, %v7517
  %v7519 = vpop.f32.mrf.mxu0
  %7520 = vmatprep.mubr.f32.mxu0 0.0
  %7521 = vmatmul.mubr.f32.gmra.mxu0 %v7194
  %v7522 = vpop.f32.mrf.mxu0
  %v7523 = vadd.f32 0.0, %v7522
  %v7524 = vpop.f32.mrf.mxu0
  %7525 = vmatprep.mubr.f32.mxu0 0.0
  %7526 = vmatmul.mubr.f32.gmra.mxu0 %v7197
  %v7527 = vpop.f32.mrf.mxu0
  %v7528 = vadd.f32 0.0, %v7527
  %v7529 = vpop.f32.mrf.mxu0
  %7530 = vmatprep.mubr.f32.mxu0 0.0
  %7531 = vmatmul.mubr.f32.gmra.mxu0 %v7200
  %v7532 = vpop.f32.mrf.mxu0
  %v7533 = vadd.f32 0.0, %v7532
  %v7534 = vpop.f32.mrf.mxu0
  %7535 = vmatprep.mubr.f32.mxu0 0.0
  %7536 = vmatmul.mubr.f32.gmra.mxu0 %v7203
  %v7537 = vpop.f32.mrf.mxu0
  %v7538 = vadd.f32 0.0, %v7537
  %v7539 = vpop.f32.mrf.mxu0
  %7540 = vmatprep.mubr.f32.mxu0 0.0
  %7541 = vmatmul.mubr.f32.gmra.mxu0 %v7206
  %v7542 = vpop.f32.mrf.mxu0
  %v7543 = vadd.f32 0.0, %v7542
  %v7544 = vpop.f32.mrf.mxu0
  %7545 = vmatprep.mubr.f32.mxu0 0.0
  %7546 = vmatmul.mubr.f32.gmra.mxu0 %v7209
  %v7547 = vpop.f32.mrf.mxu0
  %v7548 = vadd.f32 0.0, %v7547
  %v7549 = vpop.f32.mrf.mxu0
  %7550 = vmatprep.mubr.f32.mxu0 0.0
  %7551 = vmatmul.mubr.f32.gmra.mxu0 %v7212
  %v7552 = vpop.f32.mrf.mxu0
  %v7553 = vadd.f32 0.0, %v7552
  %v7554 = vpop.f32.mrf.mxu0
  %7555 = vmatprep.mubr.f32.mxu0 0.0
  %7556 = vmatmul.mubr.f32.gmra.mxu0 %v7215
  %v7557 = vpop.f32.mrf.mxu0
  %v7558 = vadd.f32 0.0, %v7557
  %v7559 = vpop.f32.mrf.mxu0
  %7560 = vmatprep.mubr.f32.mxu0 0.0
  %7561 = vmatmul.mubr.f32.gmra.mxu0 %v7218
  %v7562 = vpop.f32.mrf.mxu0
  %v7563 = vadd.f32 0.0, %v7562
  %v7564 = vpop.f32.mrf.mxu0
  %7565 = vmatprep.mubr.f32.mxu0 0.0
  %7566 = vmatmul.mubr.f32.gmra.mxu0 %v7221
  %v7567 = vpop.f32.mrf.mxu0
  %v7568 = vadd.f32 0.0, %v7567
  %v7569 = vpop.f32.mrf.mxu0
  %7570 = vmatprep.mubr.f32.mxu0 0.0
  %7571 = vmatmul.mubr.f32.gmra.mxu0 %v7224
  %v7572 = vpop.f32.mrf.mxu0
  %v7573 = vadd.f32 0.0, %v7572
  %v7574 = vpop.f32.mrf.mxu0
  %7575 = vmatprep.mubr.f32.mxu0 0.0
  %7576 = vmatmul.mubr.f32.gmra.mxu0 %v7227
  %v7577 = vpop.f32.mrf.mxu0
  %v7578 = vadd.f32 0.0, %v7577
  %v7579 = vpop.f32.mrf.mxu0
  %7580 = vmatprep.mubr.f32.mxu0 0.0
  %7581 = vmatmul.mubr.f32.gmra.mxu0 %v7230
  %v7582 = vpop.f32.mrf.mxu0
  %v7583 = vadd.f32 0.0, %v7582
  %v7584 = vpop.f32.mrf.mxu0
  %7585 = vmatprep.mubr.f32.mxu0 0.0
  %7586 = vmatmul.mubr.f32.gmra.mxu0 %v7233
  %v7587 = vpop.f32.mrf.mxu0
  %v7588 = vadd.f32 0.0, %v7587
  %v7589 = vpop.f32.mrf.mxu0
  %7590 = vmatprep.mubr.f32.mxu0 0.0
  %7591 = vmatmul.mubr.f32.gmra.mxu0 %v7236
  %v7592 = vpop.f32.mrf.mxu0
  %v7593 = vadd.f32 0.0, %v7592
  %v7594 = vpop.f32.mrf.mxu0
  %7595 = vmatprep.mubr.f32.mxu0 0.0
  %7596 = vmatmul.mubr.f32.gmra.mxu0 %v7239
  %v7597 = vpop.f32.mrf.mxu0
  %v7598 = vadd.f32 0.0, %v7597
  %v7599 = vpop.f32.mrf.mxu0
  %7600 = vmatprep.mubr.f32.mxu0 0.0
  %7601 = vmatmul.mubr.f32.gmra.mxu0 %v7242
  %v7602 = vpop.f32.mrf.mxu0
  %v7603 = vadd.f32 0.0, %v7602
  %v7604 = vpop.f32.mrf.mxu0
  %7605 = vmatprep.mubr.f32.mxu0 0.0
  %7606 = vmatmul.mubr.f32.gmra.mxu0 %v7245
  %v7607 = vpop.f32.mrf.mxu0
  %v7608 = vadd.f32 0.0, %v7607
  %v7609 = vpop.f32.mrf.mxu0
  %7610 = vmatprep.mubr.f32.mxu0 0.0
  %7611 = vmatmul.mubr.f32.gmra.mxu0 %v7248
  %v7612 = vpop.f32.mrf.mxu0
  %v7613 = vadd.f32 0.0, %v7612
  %v7614 = vpop.f32.mrf.mxu0
  %7615 = vmatprep.mubr.f32.mxu0 0.0
  %7616 = vmatmul.mubr.f32.gmra.mxu0 %v7251
  %v7617 = vpop.f32.mrf.mxu0
  %v7618 = vadd.f32 0.0, %v7617
  %v7619 = vpop.f32.mrf.mxu0
  %7620 = vmatprep.mubr.f32.mxu0 0.0
  %7621 = vmatmul.mubr.f32.gmra.mxu0 %v7254
  %v7622 = vpop.f32.mrf.mxu0
  %v7623 = vadd.f32 0.0, %v7622
  %v7624 = vpop.f32.mrf.mxu0
  %7625 = vmatprep.mubr.f32.mxu0 0.0
  %7626 = vmatmul.mubr.f32.gmra.mxu0 %v7257
  %v7627 = vpop.f32.mrf.mxu0
  %v7628 = vadd.f32 0.0, %v7627
  %v7629 = vpop.f32.mrf.mxu0
  %7630 = vmatprep.mubr.f32.mxu0 0.0
  %7631 = vmatmul.mubr.f32.gmra.mxu0 %v7260
  %v7632 = vpop.f32.mrf.mxu0
  %v7633 = vadd.f32 0.0, %v7632
  %v7634 = vpop.f32.mrf.mxu0
  %7635 = vmatprep.mubr.f32.mxu0 0.0
  %7636 = vmatmul.mubr.f32.gmra.mxu0 %v7263
  %v7637 = vpop.f32.mrf.mxu0
  %v7638 = vadd.f32 0.0, %v7637
  %v7639 = vpop.f32.mrf.mxu0
  %7640 = vmatprep.mubr.f32.mxu0 0.0
  %7641 = vmatmul.mubr.f32.gmra.mxu0 %v7266
  %v7642 = vpop.f32.mrf.mxu0
  %v7643 = vadd.f32 0.0, %v7642
  %v7644 = vpop.f32.mrf.mxu0
  %7645 = vmatprep.mubr.f32.mxu0 0.0
  %7646 = vmatmul.mubr.f32.gmra.mxu0 %v7269
  %v7647 = vpop.f32.mrf.mxu0
  %v7648 = vadd.f32 0.0, %v7647
  %v7649 = vpop.f32.mrf.mxu0
  %7650 = vmatprep.mubr.f32.mxu0 0.0
  %7651 = vmatmul.mubr.f32.gmra.mxu0 %v7272
  %v7652 = vpop.f32.mrf.mxu0
  %v7653 = vadd.f32 0.0, %v7652
  %v7654 = vpop.f32.mrf.mxu0
  %7655 = vmatprep.mubr.f32.mxu0 0.0
  %7656 = vmatmul.mubr.f32.gmra.mxu0 %v7275
  %v7657 = vpop.f32.mrf.mxu0
  %v7658 = vadd.f32 0.0, %v7657
  %v7659 = vpop.f32.mrf.mxu0
  %7660 = vmatprep.mubr.f32.mxu0 0.0
  %7661 = vmatmul.mubr.f32.gmra.mxu0 %v7278
  %v7662 = vpop.f32.mrf.mxu0
  %v7663 = vadd.f32 0.0, %v7662
  %v7664 = vpop.f32.mrf.mxu0
  %7665 = vmatprep.mubr.f32.mxu0 0.0
  %7666 = vmatmul.mubr.f32.gmra.mxu0 %v7281
  %v7667 = vpop.f32.mrf.mxu0
  %v7668 = vadd.f32 0.0, %v7667
  %v7669 = vpop.f32.mrf.mxu0
  %7670 = vmatprep.mubr.f32.mxu0 0.0
  %7671 = vmatmul.mubr.f32.gmra.mxu0 %v7284
  %v7672 = vpop.f32.mrf.mxu0
  %v7673 = vadd.f32 0.0, %v7672
  %v7674 = vpop.f32.mrf.mxu0
  %7675 = vmatprep.mubr.f32.mxu0 0.0
  %7676 = vmatmul.mubr.f32.gmra.mxu0 %v7287
  %v7677 = vpop.f32.mrf.mxu0
  %v7678 = vadd.f32 0.0, %v7677
  %v7679 = vpop.f32.mrf.mxu0
  %7680 = vmatprep.mubr.f32.mxu0 0.0
  %7681 = vmatmul.mubr.f32.gmra.mxu0 %v7290
  %v7682 = vpop.f32.mrf.mxu0
  %v7683 = vadd.f32 0.0, %v7682
  %v7684 = vpop.f32.mrf.mxu0
  %7685 = vmatprep.mubr.f32.mxu0 0.0
  %7686 = vmatmul.mubr.f32.gmra.mxu0 %v7293
  %v7687 = vpop.f32.mrf.mxu0
  %v7688 = vadd.f32 0.0, %v7687
  %v7689 = vpop.f32.mrf.mxu0
  %7690 = vmatprep.mubr.f32.mxu0 0.0
  %7691 = vmatmul.mubr.f32.gmra.mxu0 %v7296
  %v7692 = vpop.f32.mrf.mxu0
  %v7693 = vadd.f32 0.0, %v7692
  %v7694 = vpop.f32.mrf.mxu0
  %7695 = vdwg.mxu0
  %v7696 = vadd.f32 %v7029, %v7368
  %v7697 = vadd.f32 %v7030, %v7373
  %v7698 = vadd.f32 %v7031, %v7378
  %v7699 = vadd.f32 %v7032, %v7383
  %v7700 = vadd.f32 %v7033, %v7388
  %v7701 = vadd.f32 %v7034, %v7393
  %v7702 = vadd.f32 %v7035, %v7398
  %v7703 = vadd.f32 %v7036, %v7403
  %v7704 = vadd.f32 %v7037, %v7408
  %v7705 = vadd.f32 %v7038, %v7413
  %v7706 = vadd.f32 %v7039, %v7418
  %v7707 = vadd.f32 %v7040, %v7423
  %v7708 = vadd.f32 %v7041, %v7428
  %v7709 = vadd.f32 %v7042, %v7433
  %v7710 = vadd.f32 %v7043, %v7438
  %v7711 = vadd.f32 %v7044, %v7443
  %v7712 = vadd.f32 %v7045, %v7448
  %v7713 = vadd.f32 %v7046, %v7453
  %v7714 = vadd.f32 %v7047, %v7458
  %v7715 = vadd.f32 %v7048, %v7463
  %v7716 = vadd.f32 %v7049, %v7468
  %v7717 = vadd.f32 %v7050, %v7473
  %v7718 = vadd.f32 %v7051, %v7478
  %v7719 = vadd.f32 %v7052, %v7483
  %v7720 = vadd.f32 %v7053, %v7488
  %v7721 = vadd.f32 %v7054, %v7493
  %v7722 = vadd.f32 %v7055, %v7498
  %v7723 = vadd.f32 %v7056, %v7503
  %v7724 = vadd.f32 %v7057, %v7508
  %v7725 = vadd.f32 %v7058, %v7513
  %v7726 = vadd.f32 %v7059, %v7518
  %v7727 = vadd.f32 %v7060, %v7523
  %v7728 = vadd.f32 %v7061, %v7528
  %v7729 = vadd.f32 %v7062, %v7533
  %v7730 = vadd.f32 %v7063, %v7538
  %v7731 = vadd.f32 %v7064, %v7543
  %v7732 = vadd.f32 %v7065, %v7548
  %v7733 = vadd.f32 %v7066, %v7553
  %v7734 = vadd.f32 %v7067, %v7558
  %v7735 = vadd.f32 %v7068, %v7563
  %v7736 = vadd.f32 %v7069, %v7568
  %v7737 = vadd.f32 %v7070, %v7573
  %v7738 = vadd.f32 %v7071, %v7578
  %v7739 = vadd.f32 %v7072, %v7583
  %v7740 = vadd.f32 %v7073, %v7588
  %v7741 = vadd.f32 %v7074, %v7593
  %v7742 = vadd.f32 %v7075, %v7598
  %v7743 = vadd.f32 %v7076, %v7603
  %v7744 = vadd.f32 %v7077, %v7608
  %v7745 = vadd.f32 %v7078, %v7613
  %v7746 = vadd.f32 %v7079, %v7618
  %v7747 = vadd.f32 %v7080, %v7623
  %v7748 = vadd.f32 %v7081, %v7628
  %v7749 = vadd.f32 %v7082, %v7633
  %v7750 = vadd.f32 %v7083, %v7638
  %v7751 = vadd.f32 %v7084, %v7643
  %v7752 = vadd.f32 %v7085, %v7648
  %v7753 = vadd.f32 %v7086, %v7653
  %v7754 = vadd.f32 %v7087, %v7658
  %v7755 = vadd.f32 %v7088, %v7663
  %v7756 = vadd.f32 %v7089, %v7668
  %v7757 = vadd.f32 %v7090, %v7673
  %v7758 = vadd.f32 %v7091, %v7678
  %v7759 = vadd.f32 %v7092, %v7683
  %v7760 = vadd.f32 %v7093, %v7688
  %v7761 = vadd.f32 %v7094, %v7693
  %v7762 = vld [vmem:[%s6] sm:$0x1]
  %v7764 = vlaneseq
  %v7765 = vshrl.u32 %v7764, 7
  %v7766 = vsub.s32 0, %v7765
  %v7767 = vrot.slane %v7762, %v7766
  %v7769 = vadd.f32 %v7696, %v7767
  %v7770 = vadd.f32 %v7697, %v7767
  %v7771 = vadd.f32 %v7698, %v7767
  %v7772 = vadd.f32 %v7699, %v7767
  %v7773 = vadd.f32 %v7700, %v7767
  %v7774 = vadd.f32 %v7701, %v7767
  %v7775 = vadd.f32 %v7702, %v7767
  %v7776 = vadd.f32 %v7703, %v7767
  %v7777 = vadd.f32 %v7704, %v7767
  %v7778 = vadd.f32 %v7705, %v7767
  %v7779 = vadd.f32 %v7706, %v7767
  %v7780 = vadd.f32 %v7707, %v7767
  %v7781 = vadd.f32 %v7708, %v7767
  %v7782 = vadd.f32 %v7709, %v7767
  %v7783 = vadd.f32 %v7710, %v7767
  %v7784 = vadd.f32 %v7711, %v7767
  %v7785 = vadd.f32 %v7712, %v7767
  %v7786 = vadd.f32 %v7713, %v7767
  %v7787 = vadd.f32 %v7714, %v7767
  %v7788 = vadd.f32 %v7715, %v7767
  %v7789 = vadd.f32 %v7716, %v7767
  %v7790 = vadd.f32 %v7717, %v7767
  %v7791 = vadd.f32 %v7718, %v7767
  %v7792 = vadd.f32 %v7719, %v7767
  %v7793 = vadd.f32 %v7720, %v7767
  %v7794 = vadd.f32 %v7721, %v7767
  %v7795 = vadd.f32 %v7722, %v7767
  %v7796 = vadd.f32 %v7723, %v7767
  %v7797 = vadd.f32 %v7724, %v7767
  %v7798 = vadd.f32 %v7725, %v7767
  %v7799 = vadd.f32 %v7726, %v7767
  %v7800 = vadd.f32 %v7727, %v7767
  %v7801 = vadd.f32 %v7728, %v7767
  %v7802 = vadd.f32 %v7729, %v7767
  %v7803 = vadd.f32 %v7730, %v7767
  %v7804 = vadd.f32 %v7731, %v7767
  %v7805 = vadd.f32 %v7732, %v7767
  %v7806 = vadd.f32 %v7733, %v7767
  %v7807 = vadd.f32 %v7734, %v7767
  %v7808 = vadd.f32 %v7735, %v7767
  %v7809 = vadd.f32 %v7736, %v7767
  %v7810 = vadd.f32 %v7737, %v7767
  %v7811 = vadd.f32 %v7738, %v7767
  %v7812 = vadd.f32 %v7739, %v7767
  %v7813 = vadd.f32 %v7740, %v7767
  %v7814 = vadd.f32 %v7741, %v7767
  %v7815 = vadd.f32 %v7742, %v7767
  %v7816 = vadd.f32 %v7743, %v7767
  %v7817 = vadd.f32 %v7744, %v7767
  %v7818 = vadd.f32 %v7745, %v7767
  %v7819 = vadd.f32 %v7746, %v7767
  %v7820 = vadd.f32 %v7747, %v7767
  %v7821 = vadd.f32 %v7748, %v7767
  %v7822 = vadd.f32 %v7749, %v7767
  %v7823 = vadd.f32 %v7750, %v7767
  %v7824 = vadd.f32 %v7751, %v7767
  %v7825 = vadd.f32 %v7752, %v7767
  %v7826 = vadd.f32 %v7753, %v7767
  %v7827 = vadd.f32 %v7754, %v7767
  %v7828 = vadd.f32 %v7755, %v7767
  %v7829 = vadd.f32 %v7756, %v7767
  %v7830 = vadd.f32 %v7757, %v7767
  %v7831 = vadd.f32 %v7758, %v7767
  %v7832 = vadd.f32 %v7759, %v7767
  %v7833 = vadd.f32 %v7760, %v7767
  %v7834 = vadd.f32 %v7761, %v7767
  %v7835 = vmax.f32 %v7769, 0.0
  %v7836 = vmax.f32 %v7770, 0.0
  %v7837 = vmax.f32 %v7771, 0.0
  %v7838 = vmax.f32 %v7772, 0.0
  %v7839 = vmax.f32 %v7773, 0.0
  %v7840 = vmax.f32 %v7774, 0.0
  %v7841 = vmax.f32 %v7775, 0.0
  %v7842 = vmax.f32 %v7776, 0.0
  %v7843 = vmax.f32 %v7777, 0.0
  %v7844 = vmax.f32 %v7778, 0.0
  %v7845 = vmax.f32 %v7779, 0.0
  %v7846 = vmax.f32 %v7780, 0.0
  %v7847 = vmax.f32 %v7781, 0.0
  %v7848 = vmax.f32 %v7782, 0.0
  %v7849 = vmax.f32 %v7783, 0.0
  %v7850 = vmax.f32 %v7784, 0.0
  %v7851 = vmax.f32 %v7785, 0.0
  %v7852 = vmax.f32 %v7786, 0.0
  %v7853 = vmax.f32 %v7787, 0.0
  %v7854 = vmax.f32 %v7788, 0.0
  %v7855 = vmax.f32 %v7789, 0.0
  %v7856 = vmax.f32 %v7790, 0.0
  %v7857 = vmax.f32 %v7791, 0.0
  %v7858 = vmax.f32 %v7792, 0.0
  %v7859 = vmax.f32 %v7793, 0.0
  %v7860 = vmax.f32 %v7794, 0.0
  %v7861 = vmax.f32 %v7795, 0.0
  %v7862 = vmax.f32 %v7796, 0.0
  %v7863 = vmax.f32 %v7797, 0.0
  %v7864 = vmax.f32 %v7798, 0.0
  %v7865 = vmax.f32 %v7799, 0.0
  %v7866 = vmax.f32 %v7800, 0.0
  %v7867 = vmax.f32 %v7801, 0.0
  %v7868 = vmax.f32 %v7802, 0.0
  %v7869 = vmax.f32 %v7803, 0.0
  %v7870 = vmax.f32 %v7804, 0.0
  %v7871 = vmax.f32 %v7805, 0.0
  %v7872 = vmax.f32 %v7806, 0.0
  %v7873 = vmax.f32 %v7807, 0.0
  %v7874 = vmax.f32 %v7808, 0.0
  %v7875 = vmax.f32 %v7809, 0.0
  %v7876 = vmax.f32 %v7810, 0.0
  %v7877 = vmax.f32 %v7811, 0.0
  %v7878 = vmax.f32 %v7812, 0.0
  %v7879 = vmax.f32 %v7813, 0.0
  %v7880 = vmax.f32 %v7814, 0.0
  %v7881 = vmax.f32 %v7815, 0.0
  %v7882 = vmax.f32 %v7816, 0.0
  %v7883 = vmax.f32 %v7817, 0.0
  %v7884 = vmax.f32 %v7818, 0.0
  %v7885 = vmax.f32 %v7819, 0.0
  %v7886 = vmax.f32 %v7820, 0.0
  %v7887 = vmax.f32 %v7821, 0.0
  %v7888 = vmax.f32 %v7822, 0.0
  %v7889 = vmax.f32 %v7823, 0.0
  %v7890 = vmax.f32 %v7824, 0.0
  %v7891 = vmax.f32 %v7825, 0.0
  %v7892 = vmax.f32 %v7826, 0.0
  %v7893 = vmax.f32 %v7827, 0.0
  %v7894 = vmax.f32 %v7828, 0.0
  %v7895 = vmax.f32 %v7829, 0.0
  %v7896 = vmax.f32 %v7830, 0.0
  %v7897 = vmax.f32 %v7831, 0.0
  %v7898 = vmax.f32 %v7832, 0.0
  %v7899 = vmax.f32 %v7833, 0.0
  %v7900 = vmax.f32 %v7834, 0.0
  %7901 = vst.msk [vmem:[#allocation2] sm:$0xff] %vm5234, %v7835
  %7903 = vrot.lane.b32.xlu0 %v7836, 30
  %v7904 = vpop.permute.xlu0 %7903
  %vm7906 = vcmask 490736
  %7907 = vst.msk [vmem:[#allocation2] sm:$0xff] %vm7906, %v7904
  %7909 = vrot.lane.b32.xlu0 %v7837, 60
  %v7910 = vpop.permute.xlu0 %7909
  %vm7912 = vcmask 736736
  %7913 = vst.msk [vmem:[#allocation2] sm:$0xff] %vm7912, %v7910
  %7915 = vrot.lane.b32.xlu0 %v7838, 90
  %v7916 = vpop.permute.xlu0 %7915
  %vm7918 = vcmask 982736
  %7919 = vst.msk [vmem:[#allocation2] sm:$0xff] %vm7918, %v7916
  %7921 = vrot.lane.b32.xlu0 %v7839, 120
  %v7922 = vpop.permute.xlu0 %7921
  %vm7924 = vcmask 1048512
  %7925 = vst.msk [vmem:[#allocation2] sm:$0xff] %vm7924, %v7922
  %vm7926 = vcmask 179200
  %7927 = vst.msk [vmem:[#allocation2 + $0x8] sm:$0xff] %vm7926, %v7922
  %7929 = vrot.lane.b32.xlu0 %v7840, 22
  %v7930 = vpop.permute.xlu0 %7929
  %vm7932 = vcmask 425136
  %7933 = vst.msk [vmem:[#allocation2 + $0x8] sm:$0xff] %vm7932, %v7930
  %7935 = vrot.lane.b32.xlu0 %v7841, 52
  %v7936 = vpop.permute.xlu0 %7935
  %vm7938 = vcmask 671136
  %7939 = vst.msk [vmem:[#allocation2 + $0x8] sm:$0xff] %vm7938, %v7936
  %7941 = vrot.lane.b32.xlu0 %v7842, 82
  %v7942 = vpop.permute.xlu0 %7941
  %vm7944 = vcmask 917136
  %7945 = vst.msk [vmem:[#allocation2 + $0x8] sm:$0xff] %vm7944, %v7942
  %7947 = vrot.lane.b32.xlu0 %v7843, 112
  %v7948 = vpop.permute.xlu0 %7947
  %vm7950 = vcmask 1048448
  %7951 = vst.msk [vmem:[#allocation2 + $0x8] sm:$0xff] %vm7950, %v7948
  %vm7952 = vcmask 113664
  %7953 = vst.msk [vmem:[#allocation2 + $0x10] sm:$0xff] %vm7952, %v7948
  %7955 = vrot.lane.b32.xlu0 %v7844, 14
  %v7956 = vpop.permute.xlu0 %7955
  %vm7958 = vcmask 359536
  %7959 = vst.msk [vmem:[#allocation2 + $0x10] sm:$0xff] %vm7958, %v7956
  %7961 = vrot.lane.b32.xlu0 %v7845, 44
  %v7962 = vpop.permute.xlu0 %7961
  %vm7964 = vcmask 605536
  %7965 = vst.msk [vmem:[#allocation2 + $0x10] sm:$0xff] %vm7964, %v7962
  %7967 = vrot.lane.b32.xlu0 %v7846, 74
  %v7968 = vpop.permute.xlu0 %7967
  %vm7970 = vcmask 851536
  %7971 = vst.msk [vmem:[#allocation2 + $0x10] sm:$0xff] %vm7970, %v7968
  %7973 = vrot.lane.b32.xlu0 %v7847, 104
  %v7974 = vpop.permute.xlu0 %7973
  %vm7976 = vcmask 1048384
  %7977 = vst.msk [vmem:[#allocation2 + $0x10] sm:$0xff] %vm7976, %v7974
  %vm7978 = vcmask 48128
  %7979 = vst.msk [vmem:[#allocation2 + $0x18] sm:$0xff] %vm7978, %v7974
  %7981 = vrot.lane.b32.xlu0 %v7848, 6
  %v7982 = vpop.permute.xlu0 %7981
  %vm7984 = vcmask 293936
  %7985 = vst.msk [vmem:[#allocation2 + $0x18] sm:$0xff] %vm7984, %v7982
  %7987 = vrot.lane.b32.xlu0 %v7849, 36
  %v7988 = vpop.permute.xlu0 %7987
  %vm7990 = vcmask 539936
  %7991 = vst.msk [vmem:[#allocation2 + $0x18] sm:$0xff] %vm7990, %v7988
  %7993 = vrot.lane.b32.xlu0 %v7850, 66
  %v7994 = vpop.permute.xlu0 %7993
  %vm7996 = vcmask 785936
  %7997 = vst.msk [vmem:[#allocation2 + $0x18] sm:$0xff] %vm7996, %v7994
  %7999 = vrot.lane.b32.xlu0 %v7851, 96
  %v8000 = vpop.permute.xlu0 %7999
  %vm8002 = vcmask 1031936
  %8003 = vst.msk [vmem:[#allocation2 + $0x18] sm:$0xff] %vm8002, %v8000
  %8005 = vrot.lane.b32.xlu0 %v7852, 126
  %v8006 = vpop.permute.xlu0 %8005
  %vm8008 = vcmask 1048560
  %8009 = vst.msk [vmem:[#allocation2 + $0x18] sm:$0xff] %vm8008, %v8006
  %vm8010 = vcmask 228352
  %8011 = vst.msk [vmem:[#allocation2 + $0x20] sm:$0xff] %vm8010, %v8006
  %8013 = vrot.lane.b32.xlu0 %v7853, 28
  %v8014 = vpop.permute.xlu0 %8013
  %vm8016 = vcmask 474336
  %8017 = vst.msk [vmem:[#allocation2 + $0x20] sm:$0xff] %vm8016, %v8014
  %8019 = vrot.lane.b32.xlu0 %v7854, 58
  %v8020 = vpop.permute.xlu0 %8019
  %vm8022 = vcmask 720336
  %8023 = vst.msk [vmem:[#allocation2 + $0x20] sm:$0xff] %vm8022, %v8020
  %8025 = vrot.lane.b32.xlu0 %v7855, 88
  %v8026 = vpop.permute.xlu0 %8025
  %vm8028 = vcmask 966336
  %8029 = vst.msk [vmem:[#allocation2 + $0x20] sm:$0xff] %vm8028, %v8026
  %8031 = vrot.lane.b32.xlu0 %v7856, 118
  %v8032 = vpop.permute.xlu0 %8031
  %vm8034 = vcmask 1048496
  %8035 = vst.msk [vmem:[#allocation2 + $0x20] sm:$0xff] %vm8034, %v8032
  %vm8036 = vcmask 162816
  %8037 = vst.msk [vmem:[#allocation2 + $0x28] sm:$0xff] %vm8036, %v8032
  %8039 = vrot.lane.b32.xlu0 %v7857, 20
  %v8040 = vpop.permute.xlu0 %8039
  %vm8042 = vcmask 408736
  %8043 = vst.msk [vmem:[#allocation2 + $0x28] sm:$0xff] %vm8042, %v8040
  %8045 = vrot.lane.b32.xlu0 %v7858, 50
  %v8046 = vpop.permute.xlu0 %8045
  %vm8048 = vcmask 654736
  %8049 = vst.msk [vmem:[#allocation2 + $0x28] sm:$0xff] %vm8048, %v8046
  %8051 = vrot.lane.b32.xlu0 %v7859, 80
  %v8052 = vpop.permute.xlu0 %8051
  %vm8054 = vcmask 900736
  %8055 = vst.msk [vmem:[#allocation2 + $0x28] sm:$0xff] %vm8054, %v8052
  %8057 = vrot.lane.b32.xlu0 %v7860, 110
  %v8058 = vpop.permute.xlu0 %8057
  %vm8060 = vcmask 1048432
  %8061 = vst.msk [vmem:[#allocation2 + $0x28] sm:$0xff] %vm8060, %v8058
  %vm8062 = vcmask 97280
  %8063 = vst.msk [vmem:[#allocation2 + $0x30] sm:$0xff] %vm8062, %v8058
  %8065 = vrot.lane.b32.xlu0 %v7861, 12
  %v8066 = vpop.permute.xlu0 %8065
  %vm8068 = vcmask 343136
  %8069 = vst.msk [vmem:[#allocation2 + $0x30] sm:$0xff] %vm8068, %v8066
  %8071 = vrot.lane.b32.xlu0 %v7862, 42
  %v8072 = vpop.permute.xlu0 %8071
  %vm8074 = vcmask 589136
  %8075 = vst.msk [vmem:[#allocation2 + $0x30] sm:$0xff] %vm8074, %v8072
  %8077 = vrot.lane.b32.xlu0 %v7863, 72
  %v8078 = vpop.permute.xlu0 %8077
  %vm8080 = vcmask 835136
  %8081 = vst.msk [vmem:[#allocation2 + $0x30] sm:$0xff] %vm8080, %v8078
  %8083 = vrot.lane.b32.xlu0 %v7864, 102
  %v8084 = vpop.permute.xlu0 %8083
  %vm8086 = vcmask 1048368
  %8087 = vst.msk [vmem:[#allocation2 + $0x30] sm:$0xff] %vm8086, %v8084
  %vm8088 = vcmask 31744
  %8089 = vst.msk [vmem:[#allocation2 + $0x38] sm:$0xff] %vm8088, %v8084
  %8091 = vrot.lane.b32.xlu0 %v7865, 4
  %v8092 = vpop.permute.xlu0 %8091
  %vm8094 = vcmask 277536
  %8095 = vst.msk [vmem:[#allocation2 + $0x38] sm:$0xff] %vm8094, %v8092
  %8097 = vrot.lane.b32.xlu0 %v7866, 34
  %v8098 = vpop.permute.xlu0 %8097
  %vm8100 = vcmask 523536
  %8101 = vst.msk [vmem:[#allocation2 + $0x38] sm:$0xff] %vm8100, %v8098
  %8103 = vrot.lane.b32.xlu0 %v7867, 64
  %v8104 = vpop.permute.xlu0 %8103
  %vm8106 = vcmask 769536
  %8107 = vst.msk [vmem:[#allocation2 + $0x38] sm:$0xff] %vm8106, %v8104
  %8109 = vrot.lane.b32.xlu0 %v7868, 94
  %v8110 = vpop.permute.xlu0 %8109
  %vm8112 = vcmask 1015536
  %8113 = vst.msk [vmem:[#allocation2 + $0x38] sm:$0xff] %vm8112, %v8110
  %8115 = vrot.lane.b32.xlu0 %v7869, 124
  %v8116 = vpop.permute.xlu0 %8115
  %vm8118 = vcmask 1048544
  %8119 = vst.msk [vmem:[#allocation2 + $0x38] sm:$0xff] %vm8118, %v8116
  %vm8120 = vcmask 211968
  %8121 = vst.msk [vmem:[#allocation2 + $0x40] sm:$0xff] %vm8120, %v8116
  %8123 = vrot.lane.b32.xlu0 %v7870, 26
  %v8124 = vpop.permute.xlu0 %8123
  %vm8126 = vcmask 457936
  %8127 = vst.msk [vmem:[#allocation2 + $0x40] sm:$0xff] %vm8126, %v8124
  %8129 = vrot.lane.b32.xlu0 %v7871, 56
  %v8130 = vpop.permute.xlu0 %8129
  %vm8132 = vcmask 703936
  %8133 = vst.msk [vmem:[#allocation2 + $0x40] sm:$0xff] %vm8132, %v8130
  %8135 = vrot.lane.b32.xlu0 %v7872, 86
  %v8136 = vpop.permute.xlu0 %8135
  %vm8138 = vcmask 949936
  %8139 = vst.msk [vmem:[#allocation2 + $0x40] sm:$0xff] %vm8138, %v8136
  %8141 = vrot.lane.b32.xlu0 %v7873, 116
  %v8142 = vpop.permute.xlu0 %8141
  %vm8144 = vcmask 1048480
  %8145 = vst.msk [vmem:[#allocation2 + $0x40] sm:$0xff] %vm8144, %v8142
  %vm8146 = vcmask 146432
  %8147 = vst.msk [vmem:[#allocation2 + $0x48] sm:$0xff] %vm8146, %v8142
  %8149 = vrot.lane.b32.xlu0 %v7874, 18
  %v8150 = vpop.permute.xlu0 %8149
  %vm8152 = vcmask 392336
  %8153 = vst.msk [vmem:[#allocation2 + $0x48] sm:$0xff] %vm8152, %v8150
  %8155 = vrot.lane.b32.xlu0 %v7875, 48
  %v8156 = vpop.permute.xlu0 %8155
  %vm8158 = vcmask 638336
  %8159 = vst.msk [vmem:[#allocation2 + $0x48] sm:$0xff] %vm8158, %v8156
  %8161 = vrot.lane.b32.xlu0 %v7876, 78
  %v8162 = vpop.permute.xlu0 %8161
  %vm8164 = vcmask 884336
  %8165 = vst.msk [vmem:[#allocation2 + $0x48] sm:$0xff] %vm8164, %v8162
  %8167 = vrot.lane.b32.xlu0 %v7877, 108
  %v8168 = vpop.permute.xlu0 %8167
  %vm8170 = vcmask 1048416
  %8171 = vst.msk [vmem:[#allocation2 + $0x48] sm:$0xff] %vm8170, %v8168
  %vm8172 = vcmask 80896
  %8173 = vst.msk [vmem:[#allocation2 + $0x50] sm:$0xff] %vm8172, %v8168
  %8175 = vrot.lane.b32.xlu0 %v7878, 10
  %v8176 = vpop.permute.xlu0 %8175
  %vm8178 = vcmask 326736
  %8179 = vst.msk [vmem:[#allocation2 + $0x50] sm:$0xff] %vm8178, %v8176
  %8181 = vrot.lane.b32.xlu0 %v7879, 40
  %v8182 = vpop.permute.xlu0 %8181
  %vm8184 = vcmask 572736
  %8185 = vst.msk [vmem:[#allocation2 + $0x50] sm:$0xff] %vm8184, %v8182
  %8187 = vrot.lane.b32.xlu0 %v7880, 70
  %v8188 = vpop.permute.xlu0 %8187
  %vm8190 = vcmask 818736
  %8191 = vst.msk [vmem:[#allocation2 + $0x50] sm:$0xff] %vm8190, %v8188
  %8193 = vrot.lane.b32.xlu0 %v7881, 100
  %v8194 = vpop.permute.xlu0 %8193
  %vm8196 = vcmask 1048352
  %8197 = vst.msk [vmem:[#allocation2 + $0x50] sm:$0xff] %vm8196, %v8194
  %vm8198 = vcmask 15360
  %8199 = vst.msk [vmem:[#allocation2 + $0x58] sm:$0xff] %vm8198, %v8194
  %8201 = vrot.lane.b32.xlu0 %v7882, 2
  %v8202 = vpop.permute.xlu0 %8201
  %vm8204 = vcmask 261136
  %8205 = vst.msk [vmem:[#allocation2 + $0x58] sm:$0xff] %vm8204, %v8202
  %8207 = vrot.lane.b32.xlu0 %v7883, 32
  %v8208 = vpop.permute.xlu0 %8207
  %vm8210 = vcmask 507136
  %8211 = vst.msk [vmem:[#allocation2 + $0x58] sm:$0xff] %vm8210, %v8208
  %8213 = vrot.lane.b32.xlu0 %v7884, 62
  %v8214 = vpop.permute.xlu0 %8213
  %vm8216 = vcmask 753136
  %8217 = vst.msk [vmem:[#allocation2 + $0x58] sm:$0xff] %vm8216, %v8214
  %8219 = vrot.lane.b32.xlu0 %v7885, 92
  %v8220 = vpop.permute.xlu0 %8219
  %vm8222 = vcmask 999136
  %8223 = vst.msk [vmem:[#allocation2 + $0x58] sm:$0xff] %vm8222, %v8220
  %8225 = vrot.lane.b32.xlu0 %v7886, 122
  %v8226 = vpop.permute.xlu0 %8225
  %vm8228 = vcmask 1048528
  %8229 = vst.msk [vmem:[#allocation2 + $0x58] sm:$0xff] %vm8228, %v8226
  %vm8230 = vcmask 195584
  %8231 = vst.msk [vmem:[#allocation2 + $0x60] sm:$0xff] %vm8230, %v8226
  %8233 = vrot.lane.b32.xlu0 %v7887, 24
  %v8234 = vpop.permute.xlu0 %8233
  %vm8236 = vcmask 441536
  %8237 = vst.msk [vmem:[#allocation2 + $0x60] sm:$0xff] %vm8236, %v8234
  %8239 = vrot.lane.b32.xlu0 %v7888, 54
  %v8240 = vpop.permute.xlu0 %8239
  %vm8242 = vcmask 687536
  %8243 = vst.msk [vmem:[#allocation2 + $0x60] sm:$0xff] %vm8242, %v8240
  %8245 = vrot.lane.b32.xlu0 %v7889, 84
  %v8246 = vpop.permute.xlu0 %8245
  %vm8248 = vcmask 933536
  %8249 = vst.msk [vmem:[#allocation2 + $0x60] sm:$0xff] %vm8248, %v8246
  %8251 = vrot.lane.b32.xlu0 %v7890, 114
  %v8252 = vpop.permute.xlu0 %8251
  %vm8254 = vcmask 1048464
  %8255 = vst.msk [vmem:[#allocation2 + $0x60] sm:$0xff] %vm8254, %v8252
  %vm8256 = vcmask 130048
  %8257 = vst.msk [vmem:[#allocation2 + $0x68] sm:$0xff] %vm8256, %v8252
  %8259 = vrot.lane.b32.xlu0 %v7891, 16
  %v8260 = vpop.permute.xlu0 %8259
  %vm8262 = vcmask 375936
  %8263 = vst.msk [vmem:[#allocation2 + $0x68] sm:$0xff] %vm8262, %v8260
  %8265 = vrot.lane.b32.xlu0 %v7892, 46
  %v8266 = vpop.permute.xlu0 %8265
  %vm8268 = vcmask 621936
  %8269 = vst.msk [vmem:[#allocation2 + $0x68] sm:$0xff] %vm8268, %v8266
  %8271 = vrot.lane.b32.xlu0 %v7893, 76
  %v8272 = vpop.permute.xlu0 %8271
  %vm8274 = vcmask 867936
  %8275 = vst.msk [vmem:[#allocation2 + $0x68] sm:$0xff] %vm8274, %v8272
  %8277 = vrot.lane.b32.xlu0 %v7894, 106
  %v8278 = vpop.permute.xlu0 %8277
  %vm8280 = vcmask 1048400
  %8281 = vst.msk [vmem:[#allocation2 + $0x68] sm:$0xff] %vm8280, %v8278
  %vm8282 = vcmask 64512
  %8283 = vst.msk [vmem:[#allocation2 + $0x70] sm:$0xff] %vm8282, %v8278
  %8285 = vrot.lane.b32.xlu0 %v7895, 8
  %v8286 = vpop.permute.xlu0 %8285
  %vm8288 = vcmask 310336
  %8289 = vst.msk [vmem:[#allocation2 + $0x70] sm:$0xff] %vm8288, %v8286
  %8291 = vrot.lane.b32.xlu0 %v7896, 38
  %v8292 = vpop.permute.xlu0 %8291
  %vm8294 = vcmask 556336
  %8295 = vst.msk [vmem:[#allocation2 + $0x70] sm:$0xff] %vm8294, %v8292
  %8297 = vrot.lane.b32.xlu0 %v7897, 68
  %v8298 = vpop.permute.xlu0 %8297
  %vm8300 = vcmask 802336
  %8301 = vst.msk [vmem:[#allocation2 + $0x70] sm:$0xff] %vm8300, %v8298
  %8303 = vrot.lane.b32.xlu0 %v7898, 98
  %v8304 = vpop.permute.xlu0 %8303
  %vm8306 = vcmask 1048336
  %8307 = vst.msk [vmem:[#allocation2 + $0x70] sm:$0xff] %vm8306, %v8304
  %8308 = vst.msk [vmem:[#allocation2 + $0x78] sm:$0xff] %vm5234, %v7899
  %8310 = vrot.lane.b32.xlu0 %v7900, 30
  %v8311 = vpop.permute.xlu0 %8310
  %8313 = vst.msk [vmem:[#allocation2 + $0x78] sm:$0xff] %vm7906, %v8311
  %v8314 = vld [vmem:[#allocation2] sm:$0xff]
  %v8315 = vld [vmem:[#allocation2 + $0x8] sm:$0xff]
  %v8316 = vld [vmem:[#allocation2 + $0x10] sm:$0xff]
  %v8317 = vld [vmem:[#allocation2 + $0x18] sm:$0xff]
  %v8318 = vld [vmem:[#allocation2 + $0x20] sm:$0xff]
  %v8319 = vld [vmem:[#allocation2 + $0x28] sm:$0xff]
  %v8320 = vld [vmem:[#allocation2 + $0x30] sm:$0xff]
  %v8321 = vld [vmem:[#allocation2 + $0x38] sm:$0xff]
  %v8322 = vld [vmem:[#allocation2 + $0x40] sm:$0xff]
  %v8323 = vld [vmem:[#allocation2 + $0x48] sm:$0xff]
  %v8324 = vld [vmem:[#allocation2 + $0x50] sm:$0xff]
  %v8325 = vld [vmem:[#allocation2 + $0x58] sm:$0xff]
  %v8326 = vld [vmem:[#allocation2 + $0x60] sm:$0xff]
  %v8327 = vld [vmem:[#allocation2 + $0x68] sm:$0xff]
  %v8328 = vld [vmem:[#allocation2 + $0x70] sm:$0xff]
  %v8329 = vld [vmem:[#allocation2 + $0x78] sm:$0xff]
  %v8330 = vld [vmem:[%s7] sm:$0xff]
  %v8331 = vld [vmem:[%s7 + $0x8] sm:$0xff]
  %v8332 = vld [vmem:[%s7 + $0x10] sm:$0xff]
  %v8333 = vld [vmem:[%s7 + $0x18] sm:$0xff]
  %v8334 = vld [vmem:[%s7 + $0x20] sm:$0xff]
  %v8335 = vld [vmem:[%s7 + $0x28] sm:$0xff]
  %v8336 = vld [vmem:[%s7 + $0x30] sm:$0xff]
  %v8337 = vld [vmem:[%s7 + $0x38] sm:$0xff]
  %v8338 = vld [vmem:[%s7 + $0x40] sm:$0xff]
  %v8339 = vld [vmem:[%s7 + $0x48] sm:$0xff]
  %v8340 = vld [vmem:[%s7 + $0x50] sm:$0xff]
  %v8341 = vld [vmem:[%s7 + $0x58] sm:$0xff]
  %v8342 = vld [vmem:[%s7 + $0x60] sm:$0xff]
  %v8343 = vld [vmem:[%s7 + $0x68] sm:$0xff]
  %v8344 = vld [vmem:[%s7 + $0x70] sm:$0xff]
  %v8345 = vld [vmem:[%s7 + $0x78] sm:$0xff]
  %v8346 = vld [vmem:[%s7 + $0x80] sm:$0xff]
  %v8347 = vld [vmem:[%s7 + $0x88] sm:$0xff]
  %v8348 = vld [vmem:[%s7 + $0x90] sm:$0xff]
  %v8349 = vld [vmem:[%s7 + $0x98] sm:$0xff]
  %v8350 = vld [vmem:[%s7 + $0xa0] sm:$0xff]
  %v8351 = vld [vmem:[%s7 + $0xa8] sm:$0xff]
  %v8352 = vld [vmem:[%s7 + $0xb0] sm:$0xff]
  %v8353 = vld [vmem:[%s7 + $0xb8] sm:$0xff]
  %v8354 = vld [vmem:[%s7 + $0xc0] sm:$0xff]
  %v8355 = vld [vmem:[%s7 + $0xc8] sm:$0xff]
  %v8356 = vld [vmem:[%s7 + $0xd0] sm:$0xff]
  %v8357 = vld [vmem:[%s7 + $0xd8] sm:$0xff]
  %v8358 = vld [vmem:[%s7 + $0xe0] sm:$0xff]
  %v8359 = vld [vmem:[%s7 + $0xe8] sm:$0xff]
  %v8360 = vld [vmem:[%s7 + $0xf0] sm:$0xff]
  %v8361 = vld [vmem:[%s7 + $0xf8] sm:$0xff]
  %v8362 = vld [vmem:[%s7 + $0x100] sm:$0xff]
  %v8363 = vld [vmem:[%s7 + $0x108] sm:$0xff]
  %v8364 = vld [vmem:[%s7 + $0x110] sm:$0xff]
  %v8365 = vld [vmem:[%s7 + $0x118] sm:$0xff]
  %v8366 = vld [vmem:[%s7 + $0x120] sm:$0xff]
  %v8367 = vld [vmem:[%s7 + $0x128] sm:$0xff]
  %v8368 = vld [vmem:[%s7 + $0x130] sm:$0xff]
  %v8369 = vld [vmem:[%s7 + $0x138] sm:$0xff]
  %v8370 = vld [vmem:[%s7 + $0x140] sm:$0xff]
  %v8371 = vld [vmem:[%s7 + $0x148] sm:$0xff]
  %v8372 = vld [vmem:[%s7 + $0x150] sm:$0xff]
  %v8373 = vld [vmem:[%s7 + $0x158] sm:$0xff]
  %v8374 = vld [vmem:[%s7 + $0x160] sm:$0xff]
  %v8375 = vld [vmem:[%s7 + $0x168] sm:$0xff]
  %v8376 = vld [vmem:[%s7 + $0x170] sm:$0xff]
  %v8377 = vld [vmem:[%s7 + $0x178] sm:$0xff]
  %v8378 = vld [vmem:[%s7 + $0x180] sm:$0xff]
  %v8379 = vld [vmem:[%s7 + $0x188] sm:$0xff]
  %v8380 = vld [vmem:[%s7 + $0x190] sm:$0xff]
  %v8381 = vld [vmem:[%s7 + $0x198] sm:$0xff]
  %v8382 = vld [vmem:[%s7 + $0x1a0] sm:$0xff]
  %v8383 = vld [vmem:[%s7 + $0x1a8] sm:$0xff]
  %v8384 = vld [vmem:[%s7 + $0x1b0] sm:$0xff]
  %v8385 = vld [vmem:[%s7 + $0x1b8] sm:$0xff]
  %v8386 = vld [vmem:[%s7 + $0x1c0] sm:$0xff]
  %v8387 = vld [vmem:[%s7 + $0x1c8] sm:$0xff]
  %v8388 = vld [vmem:[%s7 + $0x1d0] sm:$0xff]
  %v8389 = vld [vmem:[%s7 + $0x1d8] sm:$0xff]
  %v8390 = vld [vmem:[%s7 + $0x1e0] sm:$0xff]
  %v8391 = vld [vmem:[%s7 + $0x1e8] sm:$0xff]
  %v8392 = vld [vmem:[%s7 + $0x1f0] sm:$0xff]
  %v8393 = vld [vmem:[%s7 + $0x1f8] sm:$0xff]
  %v8394 = vld [vmem:[%s7 + $0x200] sm:$0xff]
  %v8395 = vld [vmem:[%s7 + $0x208] sm:$0xff]
  %v8396 = vld [vmem:[%s7 + $0x210] sm:$0xff]
  %v8397 = vld [vmem:[%s7 + $0x218] sm:$0xff]
  %v8398 = vld [vmem:[%s7 + $0x220] sm:$0xff]
  %v8399 = vld [vmem:[%s7 + $0x228] sm:$0xff]
  %v8400 = vld [vmem:[%s7 + $0x230] sm:$0xff]
  %v8401 = vld [vmem:[%s7 + $0x238] sm:$0xff]
  %v8402 = vld [vmem:[%s7 + $0x240] sm:$0xff]
  %v8403 = vld [vmem:[%s7 + $0x248] sm:$0xff]
  %v8404 = vld [vmem:[%s7 + $0x250] sm:$0xff]
  %v8405 = vld [vmem:[%s7 + $0x258] sm:$0xff]
  %v8406 = vld [vmem:[%s7 + $0x260] sm:$0xff]
  %v8407 = vld [vmem:[%s7 + $0x268] sm:$0xff]
  %v8408 = vld [vmem:[%s7 + $0x270] sm:$0xff]
  %v8409 = vld [vmem:[%s7 + $0x278] sm:$0xff]
  %v8410 = vld [vmem:[%s7 + $0x280] sm:$0xff]
  %v8411 = vld [vmem:[%s7 + $0x288] sm:$0xff]
  %v8412 = vld [vmem:[%s7 + $0x290] sm:$0xff]
  %v8413 = vld [vmem:[%s7 + $0x298] sm:$0xff]
  %v8414 = vld [vmem:[%s7 + $0x2a0] sm:$0xff]
  %v8415 = vld [vmem:[%s7 + $0x2a8] sm:$0xff]
  %v8416 = vld [vmem:[%s7 + $0x2b0] sm:$0xff]
  %v8417 = vld [vmem:[%s7 + $0x2b8] sm:$0xff]
  %v8418 = vld [vmem:[%s7 + $0x2c0] sm:$0xff]
  %v8419 = vld [vmem:[%s7 + $0x2c8] sm:$0xff]
  %v8420 = vld [vmem:[%s7 + $0x2d0] sm:$0xff]
  %v8421 = vld [vmem:[%s7 + $0x2d8] sm:$0xff]
  %v8422 = vld [vmem:[%s7 + $0x2e0] sm:$0xff]
  %v8423 = vld [vmem:[%s7 + $0x2e8] sm:$0xff]
  %v8424 = vld [vmem:[%s7 + $0x2f0] sm:$0xff]
  %v8425 = vld [vmem:[%s7 + $0x2f8] sm:$0xff]
  %v8426 = vld [vmem:[%s7 + $0x300] sm:$0xff]
  %v8427 = vld [vmem:[%s7 + $0x308] sm:$0xff]
  %v8428 = vld [vmem:[%s7 + $0x310] sm:$0xff]
  %v8429 = vld [vmem:[%s7 + $0x318] sm:$0xff]
  %v8430 = vld [vmem:[%s7 + $0x320] sm:$0xff]
  %v8431 = vld [vmem:[%s7 + $0x328] sm:$0xff]
  %v8432 = vld [vmem:[%s7 + $0x330] sm:$0xff]
  %v8433 = vld [vmem:[%s7 + $0x338] sm:$0xff]
  %v8434 = vld [vmem:[%s7 + $0x340] sm:$0xff]
  %v8435 = vld [vmem:[%s7 + $0x348] sm:$0xff]
  %v8436 = vld [vmem:[%s7 + $0x350] sm:$0xff]
  %v8437 = vld [vmem:[%s7 + $0x358] sm:$0xff]
  %v8438 = vld [vmem:[%s7 + $0x360] sm:$0xff]
  %v8439 = vld [vmem:[%s7 + $0x368] sm:$0xff]
  %v8440 = vld [vmem:[%s7 + $0x370] sm:$0xff]
  %v8441 = vld [vmem:[%s7 + $0x378] sm:$0xff]
  %v8442 = vld [vmem:[%s7 + $0x380] sm:$0xff]
  %v8443 = vld [vmem:[%s7 + $0x388] sm:$0xff]
  %v8444 = vld [vmem:[%s7 + $0x390] sm:$0xff]
  %v8445 = vld [vmem:[%s7 + $0x398] sm:$0xff]
  %v8446 = vld [vmem:[%s7 + $0x3a0] sm:$0xff]
  %v8447 = vld [vmem:[%s7 + $0x3a8] sm:$0xff]
  %v8448 = vld [vmem:[%s7 + $0x3b0] sm:$0xff]
  %v8449 = vld [vmem:[%s7 + $0x3b8] sm:$0xff]
  %v8450 = vld [vmem:[%s7 + $0x3c0] sm:$0xff]
  %v8451 = vld [vmem:[%s7 + $0x3c8] sm:$0xff]
  %v8452 = vld [vmem:[%s7 + $0x3d0] sm:$0xff]
  %v8453 = vld [vmem:[%s7 + $0x3d8] sm:$0xff]
  %v8454 = vld [vmem:[%s7 + $0x3e0] sm:$0xff]
  %v8455 = vld [vmem:[%s7 + $0x3e8] sm:$0xff]
  %v8456 = vld [vmem:[%s7 + $0x3f0] sm:$0xff]
  %v8457 = vld [vmem:[%s7 + $0x3f8] sm:$0xff]
  %v8458 = vld [vmem:[%s7 + $0x400] sm:$0xff]
  %v8459 = vld [vmem:[%s7 + $0x408] sm:$0xff]
  %v8460 = vld [vmem:[%s7 + $0x410] sm:$0xff]
  %v8461 = vld [vmem:[%s7 + $0x418] sm:$0xff]
  %v8462 = vld [vmem:[%s7 + $0x420] sm:$0xff]
  %v8463 = vld [vmem:[%s7 + $0x428] sm:$0xff]
  %v8464 = vld [vmem:[%s7 + $0x430] sm:$0xff]
  %v8465 = vld [vmem:[%s7 + $0x438] sm:$0xff]
  %v8466 = vld [vmem:[%s7 + $0x440] sm:$0xff]
  %v8467 = vld [vmem:[%s7 + $0x448] sm:$0xff]
  %v8468 = vld [vmem:[%s7 + $0x450] sm:$0xff]
  %v8469 = vld [vmem:[%s7 + $0x458] sm:$0xff]
  %v8470 = vld [vmem:[%s7 + $0x460] sm:$0xff]
  %v8471 = vld [vmem:[%s7 + $0x468] sm:$0xff]
  %v8472 = vld [vmem:[%s7 + $0x470] sm:$0xff]
  %v8473 = vld [vmem:[%s7 + $0x478] sm:$0xff]
  %v8474 = vld [vmem:[%s7 + $0x480] sm:$0xff]
  %v8475 = vld [vmem:[%s7 + $0x488] sm:$0xff]
  %v8476 = vld [vmem:[%s7 + $0x490] sm:$0xff]
  %v8477 = vld [vmem:[%s7 + $0x498] sm:$0xff]
  %v8478 = vld [vmem:[%s7 + $0x4a0] sm:$0xff]
  %v8479 = vld [vmem:[%s7 + $0x4a8] sm:$0xff]
  %v8480 = vld [vmem:[%s7 + $0x4b0] sm:$0xff]
  %v8481 = vld [vmem:[%s7 + $0x4b8] sm:$0xff]
  %v8482 = vld [vmem:[%s7 + $0x4c0] sm:$0xff]
  %v8483 = vld [vmem:[%s7 + $0x4c8] sm:$0xff]
  %v8484 = vld [vmem:[%s7 + $0x4d0] sm:$0xff]
  %v8485 = vld [vmem:[%s7 + $0x4d8] sm:$0xff]
  %v8486 = vld [vmem:[%s7 + $0x4e0] sm:$0xff]
  %v8487 = vld [vmem:[%s7 + $0x4e8] sm:$0xff]
  %v8488 = vld [vmem:[%s7 + $0x4f0] sm:$0xff]
  %v8489 = vld [vmem:[%s7 + $0x4f8] sm:$0xff]
  %v8490 = vld [vmem:[%s7 + $0x500] sm:$0xff]
  %v8491 = vld [vmem:[%s7 + $0x508] sm:$0xff]
  %v8492 = vld [vmem:[%s7 + $0x510] sm:$0xff]
  %v8493 = vld [vmem:[%s7 + $0x518] sm:$0xff]
  %v8494 = vld [vmem:[%s7 + $0x520] sm:$0xff]
  %v8495 = vld [vmem:[%s7 + $0x528] sm:$0xff]
  %v8496 = vld [vmem:[%s7 + $0x530] sm:$0xff]
  %v8497 = vld [vmem:[%s7 + $0x538] sm:$0xff]
  %v8498 = vld [vmem:[%s7 + $0x540] sm:$0xff]
  %v8499 = vld [vmem:[%s7 + $0x548] sm:$0xff]
  %v8500 = vld [vmem:[%s7 + $0x550] sm:$0xff]
  %v8501 = vld [vmem:[%s7 + $0x558] sm:$0xff]
  %v8502 = vld [vmem:[%s7 + $0x560] sm:$0xff]
  %v8503 = vld [vmem:[%s7 + $0x568] sm:$0xff]
  %v8504 = vld [vmem:[%s7 + $0x570] sm:$0xff]
  %v8505 = vld [vmem:[%s7 + $0x578] sm:$0xff]
  %v8506 = vld [vmem:[%s7 + $0x580] sm:$0xff]
  %v8507 = vld [vmem:[%s7 + $0x588] sm:$0xff]
  %v8508 = vld [vmem:[%s7 + $0x590] sm:$0xff]
  %v8509 = vld [vmem:[%s7 + $0x598] sm:$0xff]
  %v8510 = vld [vmem:[%s7 + $0x5a0] sm:$0xff]
  %v8511 = vld [vmem:[%s7 + $0x5a8] sm:$0xff]
  %v8512 = vld [vmem:[%s7 + $0x5b0] sm:$0xff]
  %v8513 = vld [vmem:[%s7 + $0x5b8] sm:$0xff]
  %v8514 = vld [vmem:[%s7 + $0x5c0] sm:$0xff]
  %v8515 = vld [vmem:[%s7 + $0x5c8] sm:$0xff]
  %v8516 = vld [vmem:[%s7 + $0x5d0] sm:$0xff]
  %v8517 = vld [vmem:[%s7 + $0x5d8] sm:$0xff]
  %v8518 = vld [vmem:[%s7 + $0x5e0] sm:$0xff]
  %v8519 = vld [vmem:[%s7 + $0x5e8] sm:$0xff]
  %v8520 = vld [vmem:[%s7 + $0x5f0] sm:$0xff]
  %v8521 = vld [vmem:[%s7 + $0x5f8] sm:$0xff]
  %v8522 = vld [vmem:[%s7 + $0x600] sm:$0xff]
  %v8523 = vld [vmem:[%s7 + $0x608] sm:$0xff]
  %v8524 = vld [vmem:[%s7 + $0x610] sm:$0xff]
  %v8525 = vld [vmem:[%s7 + $0x618] sm:$0xff]
  %v8526 = vld [vmem:[%s7 + $0x620] sm:$0xff]
  %v8527 = vld [vmem:[%s7 + $0x628] sm:$0xff]
  %v8528 = vld [vmem:[%s7 + $0x630] sm:$0xff]
  %v8529 = vld [vmem:[%s7 + $0x638] sm:$0xff]
  %v8530 = vld [vmem:[%s7 + $0x640] sm:$0xff]
  %v8531 = vld [vmem:[%s7 + $0x648] sm:$0xff]
  %v8532 = vld [vmem:[%s7 + $0x650] sm:$0xff]
  %v8533 = vld [vmem:[%s7 + $0x658] sm:$0xff]
  %v8534 = vld [vmem:[%s7 + $0x660] sm:$0xff]
  %v8535 = vld [vmem:[%s7 + $0x668] sm:$0xff]
  %v8536 = vld [vmem:[%s7 + $0x670] sm:$0xff]
  %v8537 = vld [vmem:[%s7 + $0x678] sm:$0xff]
  %v8538 = vld [vmem:[%s7 + $0x680] sm:$0xff]
  %v8539 = vld [vmem:[%s7 + $0x688] sm:$0xff]
  %v8540 = vld [vmem:[%s7 + $0x690] sm:$0xff]
  %v8541 = vld [vmem:[%s7 + $0x698] sm:$0xff]
  %v8542 = vld [vmem:[%s7 + $0x6a0] sm:$0xff]
  %v8543 = vld [vmem:[%s7 + $0x6a8] sm:$0xff]
  %v8544 = vld [vmem:[%s7 + $0x6b0] sm:$0xff]
  %v8545 = vld [vmem:[%s7 + $0x6b8] sm:$0xff]
  %v8546 = vld [vmem:[%s7 + $0x6c0] sm:$0xff]
  %v8547 = vld [vmem:[%s7 + $0x6c8] sm:$0xff]
  %v8548 = vld [vmem:[%s7 + $0x6d0] sm:$0xff]
  %v8549 = vld [vmem:[%s7 + $0x6d8] sm:$0xff]
  %v8550 = vld [vmem:[%s7 + $0x6e0] sm:$0xff]
  %v8551 = vld [vmem:[%s7 + $0x6e8] sm:$0xff]
  %v8552 = vld [vmem:[%s7 + $0x6f0] sm:$0xff]
  %v8553 = vld [vmem:[%s7 + $0x6f8] sm:$0xff]
  %v8554 = vld [vmem:[%s7 + $0x700] sm:$0xff]
  %v8555 = vld [vmem:[%s7 + $0x708] sm:$0xff]
  %v8556 = vld [vmem:[%s7 + $0x710] sm:$0xff]
  %v8557 = vld [vmem:[%s7 + $0x718] sm:$0xff]
  %v8558 = vld [vmem:[%s7 + $0x720] sm:$0xff]
  %v8559 = vld [vmem:[%s7 + $0x728] sm:$0xff]
  %v8560 = vld [vmem:[%s7 + $0x730] sm:$0xff]
  %v8561 = vld [vmem:[%s7 + $0x738] sm:$0xff]
  %v8562 = vld [vmem:[%s7 + $0x740] sm:$0xff]
  %v8563 = vld [vmem:[%s7 + $0x748] sm:$0xff]
  %v8564 = vld [vmem:[%s7 + $0x750] sm:$0xff]
  %v8565 = vld [vmem:[%s7 + $0x758] sm:$0xff]
  %v8566 = vld [vmem:[%s7 + $0x760] sm:$0xff]
  %v8567 = vld [vmem:[%s7 + $0x768] sm:$0xff]
  %v8568 = vld [vmem:[%s7 + $0x770] sm:$0xff]
  %v8569 = vld [vmem:[%s7 + $0x778] sm:$0xff]
  %v8570 = vld [vmem:[%s7 + $0x780] sm:$0xff]
  %v8571 = vld [vmem:[%s7 + $0x788] sm:$0xff]
  %v8572 = vld [vmem:[%s7 + $0x790] sm:$0xff]
  %v8573 = vld [vmem:[%s7 + $0x798] sm:$0xff]
  %v8574 = vld [vmem:[%s7 + $0x7a0] sm:$0xff]
  %v8575 = vld [vmem:[%s7 + $0x7a8] sm:$0xff]
  %v8576 = vld [vmem:[%s7 + $0x7b0] sm:$0xff]
  %v8577 = vld [vmem:[%s7 + $0x7b8] sm:$0xf]
  %v8578 = vld [vmem:[%s8] sm:$0x1]
  %v8580 = vlaneseq
  %v8581 = vshrl.u32 %v8580, 7
  %v8582 = vsub.s32 0, %v8581
  %v8583 = vrot.slane %v8578, %v8582
  %vm8585 = vcmask 490496
  %v8587 = vsel %vm8585, %v8329, 0
  %vm8589 = vcmask 1043456
  %v8591 = vsel %vm8589, %v8577, 0
  %8593 = vmatprep.subr.mxu0 0.0
  %8594 = vmatpush1.msra.mxu0 %v8345
  %8595 = vmatprep.subr.mxu0 0.0
  %8596 = vmatpush1.msra.mxu0 %v8344
  %8597 = vmatprep.subr.mxu0 0.0
  %8598 = vmatpush1.msra.mxu0 %v8343
  %8599 = vmatprep.subr.mxu0 0.0
  %8600 = vmatpush1.msra.mxu0 %v8342
  %8601 = vmatprep.subr.mxu0 0.0
  %8602 = vmatpush1.msra.mxu0 %v8341
  %8603 = vmatprep.subr.mxu0 0.0
  %8604 = vmatpush1.msra.mxu0 %v8340
  %8605 = vmatprep.subr.mxu0 0.0
  %8606 = vmatpush1.msra.mxu0 %v8339
  %8607 = vmatprep.subr.mxu0 0.0
  %8608 = vmatpush1.msra.mxu0 %v8338
  %8609 = vmatprep.subr.mxu0 0.0
  %8610 = vmatpush1.msra.mxu0 %v8337
  %8611 = vmatprep.subr.mxu0 0.0
  %8612 = vmatpush1.msra.mxu0 %v8336
  %8613 = vmatprep.subr.mxu0 0.0
  %8614 = vmatpush1.msra.mxu0 %v8335
  %8615 = vmatprep.subr.mxu0 0.0
  %8616 = vmatpush1.msra.mxu0 %v8334
  %8617 = vmatprep.subr.mxu0 0.0
  %8618 = vmatpush1.msra.mxu0 %v8333
  %8619 = vmatprep.subr.mxu0 0.0
  %8620 = vmatpush1.msra.mxu0 %v8332
  %8621 = vmatprep.subr.mxu0 0.0
  %8622 = vmatpush1.msra.mxu0 %v8331
  %8623 = vmatprep.subr.mxu0 0.0
  %8624 = vmatpush1.msra.mxu0 %v8330
  %8625 = vmatprep.subr.mxu0 0.0
  %8626 = vmatpush2.msra.mxu0 %v8361
  %8627 = vmatprep.subr.mxu0 0.0
  %8628 = vmatpush2.msra.mxu0 %v8360
  %8629 = vmatprep.subr.mxu0 0.0
  %8630 = vmatpush2.msra.mxu0 %v8359
  %8631 = vmatprep.subr.mxu0 0.0
  %8632 = vmatpush2.msra.mxu0 %v8358
  %8633 = vmatprep.subr.mxu0 0.0
  %8634 = vmatpush2.msra.mxu0 %v8357
  %8635 = vmatprep.subr.mxu0 0.0
  %8636 = vmatpush2.msra.mxu0 %v8356
  %8637 = vmatprep.subr.mxu0 0.0
  %8638 = vmatpush2.msra.mxu0 %v8355
  %8639 = vmatprep.subr.mxu0 0.0
  %8640 = vmatpush2.msra.mxu0 %v8354
  %8641 = vmatprep.subr.mxu0 0.0
  %8642 = vmatpush2.msra.mxu0 %v8353
  %8643 = vmatprep.subr.mxu0 0.0
  %8644 = vmatpush2.msra.mxu0 %v8352
  %8645 = vmatprep.subr.mxu0 0.0
  %8646 = vmatpush2.msra.mxu0 %v8351
  %8647 = vmatprep.subr.mxu0 0.0
  %8648 = vmatpush2.msra.mxu0 %v8350
  %8649 = vmatprep.subr.mxu0 0.0
  %8650 = vmatpush2.msra.mxu0 %v8349
  %8651 = vmatprep.subr.mxu0 0.0
  %8652 = vmatpush2.msra.mxu0 %v8348
  %8653 = vmatprep.subr.mxu0 0.0
  %8654 = vmatpush2.msra.mxu0 %v8347
  %8655 = vmatprep.subr.mxu0 0.0
  %8656 = vmatpush2.msra.mxu0 %v8346
  %8657 = vmatprep.mubr.f32.mxu0 %v8315
  %8658 = vmatmul.mubr.f32.gmra.mxu0 %v8314
  %v8659 = vpop.f32.mrf.mxu0
  %v8660 = vadd.f32 %v8583, %v8659
  %v8661 = vpop.f32.mrf.mxu0
  %8662 = vdwg.mxu0
  %8663 = vmatprep.subr.mxu0 0.0
  %8664 = vmatpush1.msra.mxu0 %v8377
  %8665 = vmatprep.subr.mxu0 0.0
  %8666 = vmatpush1.msra.mxu0 %v8376
  %8667 = vmatprep.subr.mxu0 0.0
  %8668 = vmatpush1.msra.mxu0 %v8375
  %8669 = vmatprep.subr.mxu0 0.0
  %8670 = vmatpush1.msra.mxu0 %v8374
  %8671 = vmatprep.subr.mxu0 0.0
  %8672 = vmatpush1.msra.mxu0 %v8373
  %8673 = vmatprep.subr.mxu0 0.0
  %8674 = vmatpush1.msra.mxu0 %v8372
  %8675 = vmatprep.subr.mxu0 0.0
  %8676 = vmatpush1.msra.mxu0 %v8371
  %8677 = vmatprep.subr.mxu0 0.0
  %8678 = vmatpush1.msra.mxu0 %v8370
  %8679 = vmatprep.subr.mxu0 0.0
  %8680 = vmatpush1.msra.mxu0 %v8369
  %8681 = vmatprep.subr.mxu0 0.0
  %8682 = vmatpush1.msra.mxu0 %v8368
  %8683 = vmatprep.subr.mxu0 0.0
  %8684 = vmatpush1.msra.mxu0 %v8367
  %8685 = vmatprep.subr.mxu0 0.0
  %8686 = vmatpush1.msra.mxu0 %v8366
  %8687 = vmatprep.subr.mxu0 0.0
  %8688 = vmatpush1.msra.mxu0 %v8365
  %8689 = vmatprep.subr.mxu0 0.0
  %8690 = vmatpush1.msra.mxu0 %v8364
  %8691 = vmatprep.subr.mxu0 0.0
  %8692 = vmatpush1.msra.mxu0 %v8363
  %8693 = vmatprep.subr.mxu0 0.0
  %8694 = vmatpush1.msra.mxu0 %v8362
  %8695 = vmatprep.subr.mxu0 0.0
  %8696 = vmatpush2.msra.mxu0 %v8393
  %8697 = vmatprep.subr.mxu0 0.0
  %8698 = vmatpush2.msra.mxu0 %v8392
  %8699 = vmatprep.subr.mxu0 0.0
  %8700 = vmatpush2.msra.mxu0 %v8391
  %8701 = vmatprep.subr.mxu0 0.0
  %8702 = vmatpush2.msra.mxu0 %v8390
  %8703 = vmatprep.subr.mxu0 0.0
  %8704 = vmatpush2.msra.mxu0 %v8389
  %8705 = vmatprep.subr.mxu0 0.0
  %8706 = vmatpush2.msra.mxu0 %v8388
  %8707 = vmatprep.subr.mxu0 0.0
  %8708 = vmatpush2.msra.mxu0 %v8387
  %8709 = vmatprep.subr.mxu0 0.0
  %8710 = vmatpush2.msra.mxu0 %v8386
  %8711 = vmatprep.subr.mxu0 0.0
  %8712 = vmatpush2.msra.mxu0 %v8385
  %8713 = vmatprep.subr.mxu0 0.0
  %8714 = vmatpush2.msra.mxu0 %v8384
  %8715 = vmatprep.subr.mxu0 0.0
  %8716 = vmatpush2.msra.mxu0 %v8383
  %8717 = vmatprep.subr.mxu0 0.0
  %8718 = vmatpush2.msra.mxu0 %v8382
  %8719 = vmatprep.subr.mxu0 0.0
  %8720 = vmatpush2.msra.mxu0 %v8381
  %8721 = vmatprep.subr.mxu0 0.0
  %8722 = vmatpush2.msra.mxu0 %v8380
  %8723 = vmatprep.subr.mxu0 0.0
  %8724 = vmatpush2.msra.mxu0 %v8379
  %8725 = vmatprep.subr.mxu0 0.0
  %8726 = vmatpush2.msra.mxu0 %v8378
  %8727 = vmatprep.mubr.f32.mxu0 %v8317
  %8728 = vmatmul.mubr.f32.gmra.mxu0 %v8316
  %v8729 = vpop.f32.mrf.mxu0
  %v8730 = vadd.f32 %v8660, %v8729
  %v8731 = vpop.f32.mrf.mxu0
  %8732 = vdwg.mxu0
  %8733 = vmatprep.subr.mxu0 0.0
  %8734 = vmatpush1.msra.mxu0 %v8409
  %8735 = vmatprep.subr.mxu0 0.0
  %8736 = vmatpush1.msra.mxu0 %v8408
  %8737 = vmatprep.subr.mxu0 0.0
  %8738 = vmatpush1.msra.mxu0 %v8407
  %8739 = vmatprep.subr.mxu0 0.0
  %8740 = vmatpush1.msra.mxu0 %v8406
  %8741 = vmatprep.subr.mxu0 0.0
  %8742 = vmatpush1.msra.mxu0 %v8405
  %8743 = vmatprep.subr.mxu0 0.0
  %8744 = vmatpush1.msra.mxu0 %v8404
  %8745 = vmatprep.subr.mxu0 0.0
  %8746 = vmatpush1.msra.mxu0 %v8403
  %8747 = vmatprep.subr.mxu0 0.0
  %8748 = vmatpush1.msra.mxu0 %v8402
  %8749 = vmatprep.subr.mxu0 0.0
  %8750 = vmatpush1.msra.mxu0 %v8401
  %8751 = vmatprep.subr.mxu0 0.0
  %8752 = vmatpush1.msra.mxu0 %v8400
  %8753 = vmatprep.subr.mxu0 0.0
  %8754 = vmatpush1.msra.mxu0 %v8399
  %8755 = vmatprep.subr.mxu0 0.0
  %8756 = vmatpush1.msra.mxu0 %v8398
  %8757 = vmatprep.subr.mxu0 0.0
  %8758 = vmatpush1.msra.mxu0 %v8397
  %8759 = vmatprep.subr.mxu0 0.0
  %8760 = vmatpush1.msra.mxu0 %v8396
  %8761 = vmatprep.subr.mxu0 0.0
  %8762 = vmatpush1.msra.mxu0 %v8395
  %8763 = vmatprep.subr.mxu0 0.0
  %8764 = vmatpush1.msra.mxu0 %v8394
  %8765 = vmatprep.subr.mxu0 0.0
  %8766 = vmatpush2.msra.mxu0 %v8425
  %8767 = vmatprep.subr.mxu0 0.0
  %8768 = vmatpush2.msra.mxu0 %v8424
  %8769 = vmatprep.subr.mxu0 0.0
  %8770 = vmatpush2.msra.mxu0 %v8423
  %8771 = vmatprep.subr.mxu0 0.0
  %8772 = vmatpush2.msra.mxu0 %v8422
  %8773 = vmatprep.subr.mxu0 0.0
  %8774 = vmatpush2.msra.mxu0 %v8421
  %8775 = vmatprep.subr.mxu0 0.0
  %8776 = vmatpush2.msra.mxu0 %v8420
  %8777 = vmatprep.subr.mxu0 0.0
  %8778 = vmatpush2.msra.mxu0 %v8419
  %8779 = vmatprep.subr.mxu0 0.0
  %8780 = vmatpush2.msra.mxu0 %v8418
  %8781 = vmatprep.subr.mxu0 0.0
  %8782 = vmatpush2.msra.mxu0 %v8417
  %8783 = vmatprep.subr.mxu0 0.0
  %8784 = vmatpush2.msra.mxu0 %v8416
  %8785 = vmatprep.subr.mxu0 0.0
  %8786 = vmatpush2.msra.mxu0 %v8415
  %8787 = vmatprep.subr.mxu0 0.0
  %8788 = vmatpush2.msra.mxu0 %v8414
  %8789 = vmatprep.subr.mxu0 0.0
  %8790 = vmatpush2.msra.mxu0 %v8413
  %8791 = vmatprep.subr.mxu0 0.0
  %8792 = vmatpush2.msra.mxu0 %v8412
  %8793 = vmatprep.subr.mxu0 0.0
  %8794 = vmatpush2.msra.mxu0 %v8411
  %8795 = vmatprep.subr.mxu0 0.0
  %8796 = vmatpush2.msra.mxu0 %v8410
  %8797 = vmatprep.mubr.f32.mxu0 %v8319
  %8798 = vmatmul.mubr.f32.gmra.mxu0 %v8318
  %v8799 = vpop.f32.mrf.mxu0
  %v8800 = vadd.f32 %v8730, %v8799
  %v8801 = vpop.f32.mrf.mxu0
  %8802 = vdwg.mxu0
  %8803 = vmatprep.subr.mxu0 0.0
  %8804 = vmatpush1.msra.mxu0 %v8441
  %8805 = vmatprep.subr.mxu0 0.0
  %8806 = vmatpush1.msra.mxu0 %v8440
  %8807 = vmatprep.subr.mxu0 0.0
  %8808 = vmatpush1.msra.mxu0 %v8439
  %8809 = vmatprep.subr.mxu0 0.0
  %8810 = vmatpush1.msra.mxu0 %v8438
  %8811 = vmatprep.subr.mxu0 0.0
  %8812 = vmatpush1.msra.mxu0 %v8437
  %8813 = vmatprep.subr.mxu0 0.0
  %8814 = vmatpush1.msra.mxu0 %v8436
  %8815 = vmatprep.subr.mxu0 0.0
  %8816 = vmatpush1.msra.mxu0 %v8435
  %8817 = vmatprep.subr.mxu0 0.0
  %8818 = vmatpush1.msra.mxu0 %v8434
  %8819 = vmatprep.subr.mxu0 0.0
  %8820 = vmatpush1.msra.mxu0 %v8433
  %8821 = vmatprep.subr.mxu0 0.0
  %8822 = vmatpush1.msra.mxu0 %v8432
  %8823 = vmatprep.subr.mxu0 0.0
  %8824 = vmatpush1.msra.mxu0 %v8431
  %8825 = vmatprep.subr.mxu0 0.0
  %8826 = vmatpush1.msra.mxu0 %v8430
  %8827 = vmatprep.subr.mxu0 0.0
  %8828 = vmatpush1.msra.mxu0 %v8429
  %8829 = vmatprep.subr.mxu0 0.0
  %8830 = vmatpush1.msra.mxu0 %v8428
  %8831 = vmatprep.subr.mxu0 0.0
  %8832 = vmatpush1.msra.mxu0 %v8427
  %8833 = vmatprep.subr.mxu0 0.0
  %8834 = vmatpush1.msra.mxu0 %v8426
  %8835 = vmatprep.subr.mxu0 0.0
  %8836 = vmatpush2.msra.mxu0 %v8457
  %8837 = vmatprep.subr.mxu0 0.0
  %8838 = vmatpush2.msra.mxu0 %v8456
  %8839 = vmatprep.subr.mxu0 0.0
  %8840 = vmatpush2.msra.mxu0 %v8455
  %8841 = vmatprep.subr.mxu0 0.0
  %8842 = vmatpush2.msra.mxu0 %v8454
  %8843 = vmatprep.subr.mxu0 0.0
  %8844 = vmatpush2.msra.mxu0 %v8453
  %8845 = vmatprep.subr.mxu0 0.0
  %8846 = vmatpush2.msra.mxu0 %v8452
  %8847 = vmatprep.subr.mxu0 0.0
  %8848 = vmatpush2.msra.mxu0 %v8451
  %8849 = vmatprep.subr.mxu0 0.0
  %8850 = vmatpush2.msra.mxu0 %v8450
  %8851 = vmatprep.subr.mxu0 0.0
  %8852 = vmatpush2.msra.mxu0 %v8449
  %8853 = vmatprep.subr.mxu0 0.0
  %8854 = vmatpush2.msra.mxu0 %v8448
  %8855 = vmatprep.subr.mxu0 0.0
  %8856 = vmatpush2.msra.mxu0 %v8447
  %8857 = vmatprep.subr.mxu0 0.0
  %8858 = vmatpush2.msra.mxu0 %v8446
  %8859 = vmatprep.subr.mxu0 0.0
  %8860 = vmatpush2.msra.mxu0 %v8445
  %8861 = vmatprep.subr.mxu0 0.0
  %8862 = vmatpush2.msra.mxu0 %v8444
  %8863 = vmatprep.subr.mxu0 0.0
  %8864 = vmatpush2.msra.mxu0 %v8443
  %8865 = vmatprep.subr.mxu0 0.0
  %8866 = vmatpush2.msra.mxu0 %v8442
  %8867 = vmatprep.mubr.f32.mxu0 %v8321
  %8868 = vmatmul.mubr.f32.gmra.mxu0 %v8320
  %v8869 = vpop.f32.mrf.mxu0
  %v8870 = vadd.f32 %v8800, %v8869
  %v8871 = vpop.f32.mrf.mxu0
  %8872 = vdwg.mxu0
  %8873 = vmatprep.subr.mxu0 0.0
  %8874 = vmatpush1.msra.mxu0 %v8473
  %8875 = vmatprep.subr.mxu0 0.0
  %8876 = vmatpush1.msra.mxu0 %v8472
  %8877 = vmatprep.subr.mxu0 0.0
  %8878 = vmatpush1.msra.mxu0 %v8471
  %8879 = vmatprep.subr.mxu0 0.0
  %8880 = vmatpush1.msra.mxu0 %v8470
  %8881 = vmatprep.subr.mxu0 0.0
  %8882 = vmatpush1.msra.mxu0 %v8469
  %8883 = vmatprep.subr.mxu0 0.0
  %8884 = vmatpush1.msra.mxu0 %v8468
  %8885 = vmatprep.subr.mxu0 0.0
  %8886 = vmatpush1.msra.mxu0 %v8467
  %8887 = vmatprep.subr.mxu0 0.0
  %8888 = vmatpush1.msra.mxu0 %v8466
  %8889 = vmatprep.subr.mxu0 0.0
  %8890 = vmatpush1.msra.mxu0 %v8465
  %8891 = vmatprep.subr.mxu0 0.0
  %8892 = vmatpush1.msra.mxu0 %v8464
  %8893 = vmatprep.subr.mxu0 0.0
  %8894 = vmatpush1.msra.mxu0 %v8463
  %8895 = vmatprep.subr.mxu0 0.0
  %8896 = vmatpush1.msra.mxu0 %v8462
  %8897 = vmatprep.subr.mxu0 0.0
  %8898 = vmatpush1.msra.mxu0 %v8461
  %8899 = vmatprep.subr.mxu0 0.0
  %8900 = vmatpush1.msra.mxu0 %v8460
  %8901 = vmatprep.subr.mxu0 0.0
  %8902 = vmatpush1.msra.mxu0 %v8459
  %8903 = vmatprep.subr.mxu0 0.0
  %8904 = vmatpush1.msra.mxu0 %v8458
  %8905 = vmatprep.subr.mxu0 0.0
  %8906 = vmatpush2.msra.mxu0 %v8489
  %8907 = vmatprep.subr.mxu0 0.0
  %8908 = vmatpush2.msra.mxu0 %v8488
  %8909 = vmatprep.subr.mxu0 0.0
  %8910 = vmatpush2.msra.mxu0 %v8487
  %8911 = vmatprep.subr.mxu0 0.0
  %8912 = vmatpush2.msra.mxu0 %v8486
  %8913 = vmatprep.subr.mxu0 0.0
  %8914 = vmatpush2.msra.mxu0 %v8485
  %8915 = vmatprep.subr.mxu0 0.0
  %8916 = vmatpush2.msra.mxu0 %v8484
  %8917 = vmatprep.subr.mxu0 0.0
  %8918 = vmatpush2.msra.mxu0 %v8483
  %8919 = vmatprep.subr.mxu0 0.0
  %8920 = vmatpush2.msra.mxu0 %v8482
  %8921 = vmatprep.subr.mxu0 0.0
  %8922 = vmatpush2.msra.mxu0 %v8481
  %8923 = vmatprep.subr.mxu0 0.0
  %8924 = vmatpush2.msra.mxu0 %v8480
  %8925 = vmatprep.subr.mxu0 0.0
  %8926 = vmatpush2.msra.mxu0 %v8479
  %8927 = vmatprep.subr.mxu0 0.0
  %8928 = vmatpush2.msra.mxu0 %v8478
  %8929 = vmatprep.subr.mxu0 0.0
  %8930 = vmatpush2.msra.mxu0 %v8477
  %8931 = vmatprep.subr.mxu0 0.0
  %8932 = vmatpush2.msra.mxu0 %v8476
  %8933 = vmatprep.subr.mxu0 0.0
  %8934 = vmatpush2.msra.mxu0 %v8475
  %8935 = vmatprep.subr.mxu0 0.0
  %8936 = vmatpush2.msra.mxu0 %v8474
  %8937 = vmatprep.mubr.f32.mxu0 %v8323
  %8938 = vmatmul.mubr.f32.gmra.mxu0 %v8322
  %v8939 = vpop.f32.mrf.mxu0
  %v8940 = vadd.f32 %v8870, %v8939
  %v8941 = vpop.f32.mrf.mxu0
  %8942 = vdwg.mxu0
  %8943 = vmatprep.subr.mxu0 0.0
  %8944 = vmatpush1.msra.mxu0 %v8505
  %8945 = vmatprep.subr.mxu0 0.0
  %8946 = vmatpush1.msra.mxu0 %v8504
  %8947 = vmatprep.subr.mxu0 0.0
  %8948 = vmatpush1.msra.mxu0 %v8503
  %8949 = vmatprep.subr.mxu0 0.0
  %8950 = vmatpush1.msra.mxu0 %v8502
  %8951 = vmatprep.subr.mxu0 0.0
  %8952 = vmatpush1.msra.mxu0 %v8501
  %8953 = vmatprep.subr.mxu0 0.0
  %8954 = vmatpush1.msra.mxu0 %v8500
  %8955 = vmatprep.subr.mxu0 0.0
  %8956 = vmatpush1.msra.mxu0 %v8499
  %8957 = vmatprep.subr.mxu0 0.0
  %8958 = vmatpush1.msra.mxu0 %v8498
  %8959 = vmatprep.subr.mxu0 0.0
  %8960 = vmatpush1.msra.mxu0 %v8497
  %8961 = vmatprep.subr.mxu0 0.0
  %8962 = vmatpush1.msra.mxu0 %v8496
  %8963 = vmatprep.subr.mxu0 0.0
  %8964 = vmatpush1.msra.mxu0 %v8495
  %8965 = vmatprep.subr.mxu0 0.0
  %8966 = vmatpush1.msra.mxu0 %v8494
  %8967 = vmatprep.subr.mxu0 0.0
  %8968 = vmatpush1.msra.mxu0 %v8493
  %8969 = vmatprep.subr.mxu0 0.0
  %8970 = vmatpush1.msra.mxu0 %v8492
  %8971 = vmatprep.subr.mxu0 0.0
  %8972 = vmatpush1.msra.mxu0 %v8491
  %8973 = vmatprep.subr.mxu0 0.0
  %8974 = vmatpush1.msra.mxu0 %v8490
  %8975 = vmatprep.subr.mxu0 0.0
  %8976 = vmatpush2.msra.mxu0 %v8521
  %8977 = vmatprep.subr.mxu0 0.0
  %8978 = vmatpush2.msra.mxu0 %v8520
  %8979 = vmatprep.subr.mxu0 0.0
  %8980 = vmatpush2.msra.mxu0 %v8519
  %8981 = vmatprep.subr.mxu0 0.0
  %8982 = vmatpush2.msra.mxu0 %v8518
  %8983 = vmatprep.subr.mxu0 0.0
  %8984 = vmatpush2.msra.mxu0 %v8517
  %8985 = vmatprep.subr.mxu0 0.0
  %8986 = vmatpush2.msra.mxu0 %v8516
  %8987 = vmatprep.subr.mxu0 0.0
  %8988 = vmatpush2.msra.mxu0 %v8515
  %8989 = vmatprep.subr.mxu0 0.0
  %8990 = vmatpush2.msra.mxu0 %v8514
  %8991 = vmatprep.subr.mxu0 0.0
  %8992 = vmatpush2.msra.mxu0 %v8513
  %8993 = vmatprep.subr.mxu0 0.0
  %8994 = vmatpush2.msra.mxu0 %v8512
  %8995 = vmatprep.subr.mxu0 0.0
  %8996 = vmatpush2.msra.mxu0 %v8511
  %8997 = vmatprep.subr.mxu0 0.0
  %8998 = vmatpush2.msra.mxu0 %v8510
  %8999 = vmatprep.subr.mxu0 0.0
  %9000 = vmatpush2.msra.mxu0 %v8509
  %9001 = vmatprep.subr.mxu0 0.0
  %9002 = vmatpush2.msra.mxu0 %v8508
  %9003 = vmatprep.subr.mxu0 0.0
  %9004 = vmatpush2.msra.mxu0 %v8507
  %9005 = vmatprep.subr.mxu0 0.0
  %9006 = vmatpush2.msra.mxu0 %v8506
  %9007 = vmatprep.mubr.f32.mxu0 %v8325
  %9008 = vmatmul.mubr.f32.gmra.mxu0 %v8324
  %v9009 = vpop.f32.mrf.mxu0
  %v9010 = vadd.f32 %v8940, %v9009
  %v9011 = vpop.f32.mrf.mxu0
  %9012 = vdwg.mxu0
  %9013 = vmatprep.subr.mxu0 0.0
  %9014 = vmatpush1.msra.mxu0 %v8537
  %9015 = vmatprep.subr.mxu0 0.0
  %9016 = vmatpush1.msra.mxu0 %v8536
  %9017 = vmatprep.subr.mxu0 0.0
  %9018 = vmatpush1.msra.mxu0 %v8535
  %9019 = vmatprep.subr.mxu0 0.0
  %9020 = vmatpush1.msra.mxu0 %v8534
  %9021 = vmatprep.subr.mxu0 0.0
  %9022 = vmatpush1.msra.mxu0 %v8533
  %9023 = vmatprep.subr.mxu0 0.0
  %9024 = vmatpush1.msra.mxu0 %v8532
  %9025 = vmatprep.subr.mxu0 0.0
  %9026 = vmatpush1.msra.mxu0 %v8531
  %9027 = vmatprep.subr.mxu0 0.0
  %9028 = vmatpush1.msra.mxu0 %v8530
  %9029 = vmatprep.subr.mxu0 0.0
  %9030 = vmatpush1.msra.mxu0 %v8529
  %9031 = vmatprep.subr.mxu0 0.0
  %9032 = vmatpush1.msra.mxu0 %v8528
  %9033 = vmatprep.subr.mxu0 0.0
  %9034 = vmatpush1.msra.mxu0 %v8527
  %9035 = vmatprep.subr.mxu0 0.0
  %9036 = vmatpush1.msra.mxu0 %v8526
  %9037 = vmatprep.subr.mxu0 0.0
  %9038 = vmatpush1.msra.mxu0 %v8525
  %9039 = vmatprep.subr.mxu0 0.0
  %9040 = vmatpush1.msra.mxu0 %v8524
  %9041 = vmatprep.subr.mxu0 0.0
  %9042 = vmatpush1.msra.mxu0 %v8523
  %9043 = vmatprep.subr.mxu0 0.0
  %9044 = vmatpush1.msra.mxu0 %v8522
  %9045 = vmatprep.subr.mxu0 0.0
  %9046 = vmatpush2.msra.mxu0 %v8553
  %9047 = vmatprep.subr.mxu0 0.0
  %9048 = vmatpush2.msra.mxu0 %v8552
  %9049 = vmatprep.subr.mxu0 0.0
  %9050 = vmatpush2.msra.mxu0 %v8551
  %9051 = vmatprep.subr.mxu0 0.0
  %9052 = vmatpush2.msra.mxu0 %v8550
  %9053 = vmatprep.subr.mxu0 0.0
  %9054 = vmatpush2.msra.mxu0 %v8549
  %9055 = vmatprep.subr.mxu0 0.0
  %9056 = vmatpush2.msra.mxu0 %v8548
  %9057 = vmatprep.subr.mxu0 0.0
  %9058 = vmatpush2.msra.mxu0 %v8547
  %9059 = vmatprep.subr.mxu0 0.0
  %9060 = vmatpush2.msra.mxu0 %v8546
  %9061 = vmatprep.subr.mxu0 0.0
  %9062 = vmatpush2.msra.mxu0 %v8545
  %9063 = vmatprep.subr.mxu0 0.0
  %9064 = vmatpush2.msra.mxu0 %v8544
  %9065 = vmatprep.subr.mxu0 0.0
  %9066 = vmatpush2.msra.mxu0 %v8543
  %9067 = vmatprep.subr.mxu0 0.0
  %9068 = vmatpush2.msra.mxu0 %v8542
  %9069 = vmatprep.subr.mxu0 0.0
  %9070 = vmatpush2.msra.mxu0 %v8541
  %9071 = vmatprep.subr.mxu0 0.0
  %9072 = vmatpush2.msra.mxu0 %v8540
  %9073 = vmatprep.subr.mxu0 0.0
  %9074 = vmatpush2.msra.mxu0 %v8539
  %9075 = vmatprep.subr.mxu0 0.0
  %9076 = vmatpush2.msra.mxu0 %v8538
  %9077 = vmatprep.mubr.f32.mxu0 %v8327
  %9078 = vmatmul.mubr.f32.gmra.mxu0 %v8326
  %v9079 = vpop.f32.mrf.mxu0
  %v9080 = vadd.f32 %v9010, %v9079
  %v9081 = vpop.f32.mrf.mxu0
  %9082 = vdwg.mxu0
  %9083 = vmatprep.subr.mxu0 0.0
  %9084 = vmatpush1.msra.mxu0 %v8569
  %9085 = vmatprep.subr.mxu0 0.0
  %9086 = vmatpush1.msra.mxu0 %v8568
  %9087 = vmatprep.subr.mxu0 0.0
  %9088 = vmatpush1.msra.mxu0 %v8567
  %9089 = vmatprep.subr.mxu0 0.0
  %9090 = vmatpush1.msra.mxu0 %v8566
  %9091 = vmatprep.subr.mxu0 0.0
  %9092 = vmatpush1.msra.mxu0 %v8565
  %9093 = vmatprep.subr.mxu0 0.0
  %9094 = vmatpush1.msra.mxu0 %v8564
  %9095 = vmatprep.subr.mxu0 0.0
  %9096 = vmatpush1.msra.mxu0 %v8563
  %9097 = vmatprep.subr.mxu0 0.0
  %9098 = vmatpush1.msra.mxu0 %v8562
  %9099 = vmatprep.subr.mxu0 0.0
  %9100 = vmatpush1.msra.mxu0 %v8561
  %9101 = vmatprep.subr.mxu0 0.0
  %9102 = vmatpush1.msra.mxu0 %v8560
  %9103 = vmatprep.subr.mxu0 0.0
  %9104 = vmatpush1.msra.mxu0 %v8559
  %9105 = vmatprep.subr.mxu0 0.0
  %9106 = vmatpush1.msra.mxu0 %v8558
  %9107 = vmatprep.subr.mxu0 0.0
  %9108 = vmatpush1.msra.mxu0 %v8557
  %9109 = vmatprep.subr.mxu0 0.0
  %9110 = vmatpush1.msra.mxu0 %v8556
  %9111 = vmatprep.subr.mxu0 0.0
  %9112 = vmatpush1.msra.mxu0 %v8555
  %9113 = vmatprep.subr.mxu0 0.0
  %9114 = vmatpush1.msra.mxu0 %v8554
  %9115 = vmatprep.subr.mxu0 0.0
  %9116 = vmatpush2.msra.mxu0 0.0
  %9117 = vmatprep.subr.mxu0 0.0
  %9118 = vmatpush2.msra.mxu0 0.0
  %9119 = vmatprep.subr.mxu0 0.0
  %9120 = vmatpush2.msra.mxu0 0.0
  %9121 = vmatprep.subr.mxu0 0.0
  %9122 = vmatpush2.msra.mxu0 0.0
  %9123 = vmatprep.subr.mxu0 0.0
  %9124 = vmatpush2.msra.mxu0 0.0
  %9125 = vmatprep.subr.mxu0 0.0
  %9126 = vmatpush2.msra.mxu0 0.0
  %9127 = vmatprep.subr.mxu0 0.0
  %9128 = vmatpush2.msra.mxu0 0.0
  %9129 = vmatprep.subr.mxu0 0.0
  %9130 = vmatpush2.msra.mxu0 0.0
  %9131 = vmatprep.subr.mxu0 0.0
  %9132 = vmatpush2.msra.mxu0 %v8591
  %9133 = vmatprep.subr.mxu0 0.0
  %9134 = vmatpush2.msra.mxu0 %v8576
  %9135 = vmatprep.subr.mxu0 0.0
  %9136 = vmatpush2.msra.mxu0 %v8575
  %9137 = vmatprep.subr.mxu0 0.0
  %9138 = vmatpush2.msra.mxu0 %v8574
  %9139 = vmatprep.subr.mxu0 0.0
  %9140 = vmatpush2.msra.mxu0 %v8573
  %9141 = vmatprep.subr.mxu0 0.0
  %9142 = vmatpush2.msra.mxu0 %v8572
  %9143 = vmatprep.subr.mxu0 0.0
  %9144 = vmatpush2.msra.mxu0 %v8571
  %9145 = vmatprep.subr.mxu0 0.0
  %9146 = vmatpush2.msra.mxu0 %v8570
  %9147 = vmatprep.mubr.f32.mxu0 %v8587
  %9148 = vmatmul.mubr.f32.gmra.mxu0 %v8328
  %v9149 = vpop.f32.mrf.mxu0
  %v9150 = vadd.f32 %v9080, %v9149
  %v9151 = vpop.f32.mrf.mxu0
  %9152 = vdwg.mxu0
  %v9153 = vmax.f32 %v9150, 0.0
  %v9154 = vld [vmem:[%s9] sm:$0xff]
  %v9155 = vld [vmem:[%s9 + $0x8] sm:$0xff]
  %v9156 = vld [vmem:[%s9 + $0x10] sm:$0xff]
  %v9157 = vld [vmem:[%s9 + $0x18] sm:$0xff]
  %v9158 = vld [vmem:[%s9 + $0x20] sm:$0xff]
  %v9159 = vld [vmem:[%s9 + $0x28] sm:$0xff]
  %v9160 = vld [vmem:[%s9 + $0x30] sm:$0x3]
  %v9161 = vld [vmem:[%s10] sm:$0x1]
  %v9163 = vlaneseq
  %v9164 = vshrl.u32 %v9163, 7
  %v9165 = vsub.s32 0, %v9164
  %v9166 = vrot.slane %v9161, %v9165
  %vm9168 = vcmask 408576
  %v9170 = vsel %vm9168, %v9153, 0
  %vm9172 = vcmask 1041408
  %v9174 = vsel %vm9172, %v9160, 0
  %9176 = vmatprep.subr.mxu0 0.0
  %9177 = vmatpush1.msra.mxu0 0.0
  %9178 = vmatprep.subr.mxu0 0.0
  %9179 = vmatpush1.msra.mxu0 0.0
  %9180 = vmatprep.subr.mxu0 0.0
  %9181 = vmatpush1.msra.mxu0 0.0
  %9182 = vmatprep.subr.mxu0 0.0
  %9183 = vmatpush1.msra.mxu0 0.0
  %9184 = vmatprep.subr.mxu0 0.0
  %9185 = vmatpush1.msra.mxu0 0.0
  %9186 = vmatprep.subr.mxu0 0.0
  %9187 = vmatpush1.msra.mxu0 0.0
  %9188 = vmatprep.subr.mxu0 0.0
  %9189 = vmatpush1.msra.mxu0 0.0
  %9190 = vmatprep.subr.mxu0 0.0
  %9191 = vmatpush1.msra.mxu0 0.0
  %9192 = vmatprep.subr.mxu0 0.0
  %9193 = vmatpush1.msra.mxu0 0.0
  %9194 = vmatprep.subr.mxu0 0.0
  %9195 = vmatpush1.msra.mxu0 %v9174
  %9196 = vmatprep.subr.mxu0 0.0
  %9197 = vmatpush1.msra.mxu0 %v9159
  %9198 = vmatprep.subr.mxu0 0.0
  %9199 = vmatpush1.msra.mxu0 %v9158
  %9200 = vmatprep.subr.mxu0 0.0
  %9201 = vmatpush1.msra.mxu0 %v9157
  %9202 = vmatprep.subr.mxu0 0.0
  %9203 = vmatpush1.msra.mxu0 %v9156
  %9204 = vmatprep.subr.mxu0 0.0
  %9205 = vmatpush1.msra.mxu0 %v9155
  %9206 = vmatprep.subr.mxu0 0.0
  %9207 = vmatpush1.msra.mxu0 %v9154
  %9208 = vmatprep.subr.mxu0 0.0
  %9209 = vmatpush2.msra.mxu0 0.0
  %9210 = vmatprep.subr.mxu0 0.0
  %9211 = vmatpush2.msra.mxu0 0.0
  %9212 = vmatprep.subr.mxu0 0.0
  %9213 = vmatpush2.msra.mxu0 0.0
  %9214 = vmatprep.subr.mxu0 0.0
  %9215 = vmatpush2.msra.mxu0 0.0
  %9216 = vmatprep.subr.mxu0 0.0
  %9217 = vmatpush2.msra.mxu0 0.0
  %9218 = vmatprep.subr.mxu0 0.0
  %9219 = vmatpush2.msra.mxu0 0.0
  %9220 = vmatprep.subr.mxu0 0.0
  %9221 = vmatpush2.msra.mxu0 0.0
  %9222 = vmatprep.subr.mxu0 0.0
  %9223 = vmatpush2.msra.mxu0 0.0
  %9224 = vmatprep.subr.mxu0 0.0
  %9225 = vmatpush2.msra.mxu0 0.0
  %9226 = vmatprep.subr.mxu0 0.0
  %9227 = vmatpush2.msra.mxu0 0.0
  %9228 = vmatprep.subr.mxu0 0.0
  %9229 = vmatpush2.msra.mxu0 0.0
  %9230 = vmatprep.subr.mxu0 0.0
  %9231 = vmatpush2.msra.mxu0 0.0
  %9232 = vmatprep.subr.mxu0 0.0
  %9233 = vmatpush2.msra.mxu0 0.0
  %9234 = vmatprep.subr.mxu0 0.0
  %9235 = vmatpush2.msra.mxu0 0.0
  %9236 = vmatprep.subr.mxu0 0.0
  %9237 = vmatpush2.msra.mxu0 0.0
  %9238 = vmatprep.subr.mxu0 0.0
  %9239 = vmatpush2.msra.mxu0 0.0
  %9240 = vmatprep.mubr.f32.mxu0 0.0
  %9241 = vmatmul.mubr.f32.gmra.mxu0 %v9170
  %v9242 = vpop.f32.mrf.mxu0
  %v9243 = vadd.f32 %v9166, %v9242
  %v9244 = vpop.f32.mrf.mxu0
  %9245 = vdwg.mxu0
  %9246 = vst.msk [vmem:[%s11] sm:$0xff] %vm8198, %v9243
  // Predicated region
  $region46: #{cnn_forward.1} parent=0 // pred_check
    _
  $region47: #{cnn_forward.1} parent=0 // pred_check_branch
    %9248 = sbr.rel (0) target = $region49
  $region48: #{cnn_forward.1} parent=0 // pred_region
    _
  $region49: #{cnn_forward.1} parent=0 // pred_fallthru
    _
  // Predicated region
  $region50: #{cnn_forward.1} parent=0 // pred_check
    _
  $region51: #{cnn_forward.1} parent=0 // pred_check_branch
    %9250 = sbr.rel (0) target = $region53
  $region52: #{cnn_forward.1} parent=0 // pred_region
    _
  $region53: #{cnn_forward.1} parent=0 // pred_fallthru
    _

</llo_original>
